<compile_context>
chip_gen: v7x
topology: tpu7x:2x2x1
jax: 0.10.0
libtpu: 0.0.40
codegen_flags: <defaults>
</compile_context>

<pallas_src>
import math

import jax
import jax.numpy as jnp
from jax.experimental import pallas as pl
from jax.experimental.pallas import tpu as pltpu  # noqa: F401  (kept for TPU params if needed)

# ---- model hyper-parameters (small, consistent with the module) -------------
D_MODEL = 32
NHEAD = 4
HEAD = D_MODEL // NHEAD          # per-head projection size
DFF = 64                         # dim_feedforward
LN_EPS = 1e-5
NEG = -1e30                      # additive mask value (exp() underflows to 0)


# ------------------------------- the kernel ----------------------------------
def _make_encoder_kernel(n_layers, batch, seq, d_model, n_heads, head_dim):
    n_rows = batch * seq

    def kernel(x_ref, bias_ref,
               wq_ref, wk_ref, wv_ref, wo_ref, w1_ref, w2_ref,
               ln1g_ref, ln1b_ref, ln2g_ref, ln2b_ref,
               out_ref):
        x = x_ref[...]                                     # (B*S, D) f32

        def layer_norm(v, g, b):
            mu = jnp.mean(v, axis=-1, keepdims=True)
            var = jnp.mean(jnp.square(v - mu), axis=-1, keepdims=True)
            return (v - mu) * jax.lax.rsqrt(var + LN_EPS) * g + b

        for l in range(n_layers):                          # static unroll over layers
            # ---- Q/K/V projections: all rows (flattened batch) and all heads
            # batched in a single dot_general each; head-major weights mean the
            # head axis is already a leading batch dim (no relayout needed).
            xb = jnp.broadcast_to(x[None], (n_heads, n_rows, d_model))
            q = jnp.einsum('hnd,hdp->hnp', xb, wq_ref[l],      # Wq pre-scaled
                           preferred_element_type=jnp.float32)  # (H, B*S, P)
            k = jnp.einsum('hnd,hdp->hnp', xb, wk_ref[l],
                           preferred_element_type=jnp.float32)
            v = jnp.einsum('hnd,hdp->hnp', xb, wv_ref[l],
                           preferred_element_type=jnp.float32)

            # ---- attention core: static loop over batch ONLY (heads batched)
            per_batch = []
            for b in range(batch):
                rows = slice(b * seq, (b + 1) * seq)        # 8-row aligned
                qb, kb, vb = q[:, rows, :], k[:, rows, :], v[:, rows, :]
                logits = jnp.einsum('hqp,hkp->hqk', qb, kb,
                                    preferred_element_type=jnp.float32)  # (H,S,S)
                logits = logits + bias_ref[b][None]          # (1,1,S) -> (H,S,S)
                m = jnp.max(logits, axis=-1, keepdims=True)
                p = jnp.exp(logits - m)
                denom = jnp.sum(p, axis=-1, keepdims=True)
                p = p * pl.reciprocal(denom, approx=True)    # EUP, not VALU divide
                ctx = jnp.einsum('hqk,hkp->hqp', p, vb,
                                 preferred_element_type=jnp.float32)     # (H,S,P)
                ob = jnp.einsum('hqp,hpd->hqd', ctx, wo_ref[l],
                                preferred_element_type=jnp.float32)      # (H,S,D)
                per_batch.append(jnp.sum(ob, axis=0))        # merge heads  (S,D)
            attn = jnp.concatenate(per_batch, axis=0)        # (B*S, D)

            # ---- post-LN residual blocks --------------------------------------
            x = layer_norm(x + attn, ln1g_ref[l], ln1b_ref[l])
            hid = jnp.maximum(
                jnp.dot(x, w1_ref[l], preferred_element_type=jnp.float32), 0.0)
            ff = jnp.dot(hid, w2_ref[l], preferred_element_type=jnp.float32)
            x = layer_norm(x + ff, ln2g_ref[l], ln2b_ref[l])

        # NOTE: output stays (B*S, 32). Repacking to a 128-lane slab in-kernel
        # would require a sublane->lane relayout that costs more than the few
        # masked stores it saves at D=32; worth revisiting only if D >= 128.
        out_ref[...] = x.astype(out_ref.dtype)

    return kernel


# ------------------------------- wrapper --------------------------------------
def transformer_encoder(x, params, src_length_mask=None):
    """x: (B, S, D); src_length_mask: (B, S) bool, True == masked (padding)."""
    B, S, D = x.shape
    L, H, Dw, P = params["wq"].shape
    assert D == D_MODEL and Dw == D and H * P == D

    if src_length_mask is not None:
        bias = jnp.where(src_length_mask, NEG, 0.0).astype(jnp.float32)[:, None, :]
    else:
        bias = jnp.zeros((B, 1, S), jnp.float32)

    x_flat = x.reshape(B * S, D)                       # flatten batch outside kernel
    kernel = _make_encoder_kernel(L, B, S, D, H, P)

    out = pl.pallas_call(
        kernel,
        out_shape=jax.ShapeDtypeStruct((B * S, D), x.dtype),
        # no grid: one invocation, every (tiny) operand resident in VMEM
    )(x_flat, bias,
      params["wq"], params["wk"], params["wv"], params["wo"],
      params["w1"], params["w2"],
      params["ln1_g"], params["ln1_b"], params["ln2_g"], params["ln2_b"])

    return out.reshape(B, S, D)


# --------------------------- parameter construction --------------------------
def _xavier_uniform(key, fan_in, fan_out, gain=1.0):
    limit = gain * math.sqrt(6.0 / (fan_in + fan_out))
    return jax.random.uniform(key, (fan_in, fan_out), jnp.float32,
                              minval=-limit, maxval=limit)


def init_params(key, n_layers):
    layers = []
    scale = 1.0 / math.sqrt(HEAD)
    for lk in jax.random.split(key, n_layers):
        ks = jax.random.split(lk, 6)
        wq = _xavier_uniform(ks[0], D_MODEL, D_MODEL)
        wk = _xavier_uniform(ks[1], D_MODEL, D_MODEL)
        wv = _xavier_uniform(ks[2], D_MODEL, D_MODEL)
        wo = _xavier_uniform(ks[3], D_MODEL, D_MODEL)
        layers.append(dict(
            # head-major layouts; 1/sqrt(head_dim) folded into wq host-side
            wq=wq.reshape(D_MODEL, NHEAD, HEAD).transpose(1, 0, 2) * scale,
            wk=wk.reshape(D_MODEL, NHEAD, HEAD).transpose(1, 0, 2),
            wv=wv.reshape(D_MODEL, NHEAD, HEAD).transpose(1, 0, 2),
            wo=wo.reshape(NHEAD, HEAD, D_MODEL),
            w1=_xavier_uniform(ks[4], D_MODEL, DFF, gain=math.sqrt(2.0)),
            w2=_xavier_uniform(ks[5], DFF, D_MODEL),
            ln1_g=jnp.ones((1, D_MODEL), jnp.float32),
            ln1_b=jnp.zeros((1, D_MODEL), jnp.float32),
            ln2_g=jnp.ones((1, D_MODEL), jnp.float32),
            ln2_b=jnp.zeros((1, D_MODEL), jnp.float32),
        ))
    return {k: jnp.stack([lp[k] for lp in layers]) for k in layers[0]}


# ------------------------------ pure-JAX reference ----------------------------
def _reference(x, params, src_length_mask):
    B, S, D = x.shape
    L = params["wq"].shape[0]
    if src_length_mask is not None:
        bias = jnp.where(src_length_mask, NEG, 0.0).astype(jnp.float32)
    else:
        bias = jnp.zeros((B, S), jnp.float32)

    def ln(v, g, b):
        mu = jnp.mean(v, -1, keepdims=True)
        var = jnp.mean(jnp.square(v - mu), -1, keepdims=True)
        return (v - mu) / jnp.sqrt(var + LN_EPS) * g + b

    for l in range(L):
        q = jnp.einsum("bsd,hdp->bhsp", x, params["wq"][l])   # wq pre-scaled
        k = jnp.einsum("bsd,hdp->bhsp", x, params["wk"][l])
        v = jnp.einsum("bsd,hdp->bhsp", x, params["wv"][l])
        logits = jnp.einsum("bhqp,bhkp->bhqk", q, k) + bias[:, None, None, :]
        p = jax.nn.softmax(logits, axis=-1)
        ctx = jnp.einsum("bhqk,bhkp->bhqp", p, v)
        attn = jnp.einsum("bhqp,hpd->bqd", ctx, params["wo"][l])
        x = ln(x + attn, params["ln1_g"][l], params["ln1_b"][l])
        ff = jnp.maximum(x @ params["w1"][l], 0.0) @ params["w2"][l]
        x = ln(x + ff, params["ln2_g"][l], params["ln2_b"][l])
    return x


# ----------------------------------- main --------------------------------------
if __name__ == "__main__":
    B, S, N_LAYERS = 2, 8, 2

    key = jax.random.PRNGKey(0)
    k_x, k_par = jax.random.split(key)

    x = jax.random.normal(k_x, (B, S, D_MODEL), jnp.float32)
    params = init_params(k_par, N_LAYERS)

    # key-padding mask (True == masked out): batch 1 has its last 3 tokens padded
    src_length_mask = jnp.stack([
        jnp.zeros((S,), jnp.bool_),
        jnp.arange(S) >= (S - 3),
    ])

    out = transformer_encoder(x, params, src_length_mask=src_length_mask)
    out = jax.block_until_ready(out)

    ref = _reference(x, params, src_length_mask)
    assert out.shape == (B, S, D_MODEL) and out.dtype == jnp.float32
    max_err = float(jnp.max(jnp.abs(out - ref)))
    # tolerance accounts for the EUP approximate reciprocal in the softmax
    assert jnp.allclose(out, ref, atol=2e-2, rtol=2e-2), max_err

    print("KERNEL_OK")
</pallas_src>

<mosaic_0001>
module attributes {stable_mosaic.version = 11 : i64} {
  func.func @kernel(%arg0: memref<16x32xf32, #tpu.memory_space<vmem>>, %arg1: memref<2x1x8xf32, #tpu.memory_space<vmem>>, %arg2: memref<2x4x32x8xf32, #tpu.memory_space<vmem>>, %arg3: memref<2x4x32x8xf32, #tpu.memory_space<vmem>>, %arg4: memref<2x4x32x8xf32, #tpu.memory_space<vmem>>, %arg5: memref<2x4x8x32xf32, #tpu.memory_space<vmem>>, %arg6: memref<2x32x64xf32, #tpu.memory_space<vmem>>, %arg7: memref<2x64x32xf32, #tpu.memory_space<vmem>>, %arg8: memref<2x1x32xf32, #tpu.memory_space<vmem>>, %arg9: memref<2x1x32xf32, #tpu.memory_space<vmem>>, %arg10: memref<2x1x32xf32, #tpu.memory_space<vmem>>, %arg11: memref<2x1x32xf32, #tpu.memory_space<vmem>>, %arg12: memref<16x32xf32, #tpu.memory_space<vmem>>) attributes {dimension_semantics = [], scalar_prefetch = 0 : i64, scratch_operands = 0 : i64, tpu.core_type = #tpu.core_type<tc>} {
    %c0 = arith.constant 0 : index
    %c0_0 = arith.constant 0 : index
    %0 = vector.load %arg0[%c0, %c0_0] : memref<16x32xf32, #tpu.memory_space<vmem>>, vector<16x32xf32>
    %1 = vector.shape_cast %0 : vector<16x32xf32> to vector<1x16x32xf32>
    %2 = vector.shape_cast %1 : vector<1x16x32xf32> to vector<1x16x32xf32>
    %3 = vector.broadcast %2 : vector<1x16x32xf32> to vector<4x16x32xf32>
    %c0_1 = arith.constant 0 : index
    %c0_2 = arith.constant 0 : index
    %c0_3 = arith.constant 0 : index
    %c0_4 = arith.constant 0 : index
    %4 = vector.load %arg2[%c0_1, %c0_2, %c0_3, %c0_4] : memref<2x4x32x8xf32, #tpu.memory_space<vmem>>, vector<1x4x32x8xf32>
    %5 = vector.shape_cast %4 : vector<1x4x32x8xf32> to vector<4x32x8xf32>
    "tpu.trace_start"() <{level = 10 : i32, message = "hnd,hdp->hnp"}> : () -> ()
    %cst = arith.constant dense<0.000000e+00> : vector<4x16x8xf32>
    %6 = tpu.matmul %3, %5, %cst {dimension_numbers = #tpu.dot_dimension_numbers<[2], [1], [1], [2], [0, 0, 0, 1, 1, 2], [0], [0]>} : vector<4x16x32xf32>, vector<4x32x8xf32>, vector<4x16x8xf32> -> vector<4x16x8xf32>
    "tpu.trace_stop"() : () -> ()
    %c0_5 = arith.constant 0 : index
    %c0_6 = arith.constant 0 : index
    %c0_7 = arith.constant 0 : index
    %c0_8 = arith.constant 0 : index
    %7 = vector.load %arg3[%c0_5, %c0_6, %c0_7, %c0_8] : memref<2x4x32x8xf32, #tpu.memory_space<vmem>>, vector<1x4x32x8xf32>
    %8 = vector.shape_cast %7 : vector<1x4x32x8xf32> to vector<4x32x8xf32>
    "tpu.trace_start"() <{level = 10 : i32, message = "hnd,hdp->hnp"}> : () -> ()
    %cst_9 = arith.constant dense<0.000000e+00> : vector<4x16x8xf32>
    %9 = tpu.matmul %3, %8, %cst_9 {dimension_numbers = #tpu.dot_dimension_numbers<[2], [1], [1], [2], [0, 0, 0, 1, 1, 2], [0], [0]>} : vector<4x16x32xf32>, vector<4x32x8xf32>, vector<4x16x8xf32> -> vector<4x16x8xf32>
    "tpu.trace_stop"() : () -> ()
    %c0_10 = arith.constant 0 : index
    %c0_11 = arith.constant 0 : index
    %c0_12 = arith.constant 0 : index
    %c0_13 = arith.constant 0 : index
    %10 = vector.load %arg4[%c0_10, %c0_11, %c0_12, %c0_13] : memref<2x4x32x8xf32, #tpu.memory_space<vmem>>, vector<1x4x32x8xf32>
    %11 = vector.shape_cast %10 : vector<1x4x32x8xf32> to vector<4x32x8xf32>
    "tpu.trace_start"() <{level = 10 : i32, message = "hnd,hdp->hnp"}> : () -> ()
    %cst_14 = arith.constant dense<0.000000e+00> : vector<4x16x8xf32>
    %12 = tpu.matmul %3, %11, %cst_14 {dimension_numbers = #tpu.dot_dimension_numbers<[2], [1], [1], [2], [0, 0, 0, 1, 1, 2], [0], [0]>} : vector<4x16x32xf32>, vector<4x32x8xf32>, vector<4x16x8xf32> -> vector<4x16x8xf32>
    "tpu.trace_stop"() : () -> ()
    %13 = vector.extract_strided_slice %6 {offsets = [0, 0, 0], sizes = [4, 8, 8], strides = [1, 1, 1]} : vector<4x16x8xf32> to vector<4x8x8xf32>
    %14 = vector.extract_strided_slice %9 {offsets = [0, 0, 0], sizes = [4, 8, 8], strides = [1, 1, 1]} : vector<4x16x8xf32> to vector<4x8x8xf32>
    %15 = vector.extract_strided_slice %12 {offsets = [0, 0, 0], sizes = [4, 8, 8], strides = [1, 1, 1]} : vector<4x16x8xf32> to vector<4x8x8xf32>
    "tpu.trace_start"() <{level = 10 : i32, message = "hqp,hkp->hqk"}> : () -> ()
    %cst_15 = arith.constant dense<0.000000e+00> : vector<4x8x8xf32>
    %16 = tpu.matmul %13, %14, %cst_15 {dimension_numbers = #tpu.dot_dimension_numbers<[2], [2], [1], [1], [0, 0, 0, 1, 1, 1], [0], [0]>} : vector<4x8x8xf32>, vector<4x8x8xf32>, vector<4x8x8xf32> -> vector<4x8x8xf32>
    "tpu.trace_stop"() : () -> ()
    %c0_16 = arith.constant 0 : index
    %c0_17 = arith.constant 0 : index
    %c0_18 = arith.constant 0 : index
    %17 = vector.load %arg1[%c0_16, %c0_17, %c0_18] : memref<2x1x8xf32, #tpu.memory_space<vmem>>, vector<1x1x8xf32>
    %18 = vector.shape_cast %17 : vector<1x1x8xf32> to vector<1x8xf32>
    %19 = vector.shape_cast %18 : vector<1x8xf32> to vector<1x1x8xf32>
    %20 = vector.broadcast %19 : vector<1x1x8xf32> to vector<4x8x8xf32>
    %21 = arith.addf %16, %20 : vector<4x8x8xf32>
    %cst_19 = arith.constant dense<0xFF800000> : vector<4x8xf32>
    %22 = vector.multi_reduction <maximumf>, %21, %cst_19 [2] : vector<4x8x8xf32> to vector<4x8xf32>
    %23 = vector.shape_cast %22 : vector<4x8xf32> to vector<4x8x1xf32>
    %24 = vector.broadcast %23 : vector<4x8x1xf32> to vector<4x8x8xf32>
    %25 = arith.subf %21, %24 : vector<4x8x8xf32>
    %26 = math.exp %25 : vector<4x8x8xf32>
    %cst_20 = arith.constant dense<0.000000e+00> : vector<4x8xf32>
    %27 = vector.multi_reduction <add>, %26, %cst_20 [2] : vector<4x8x8xf32> to vector<4x8xf32>
    %28 = vector.shape_cast %27 : vector<4x8xf32> to vector<4x8x1xf32>
    %29 = tpu.reciprocal %28 {approx = true} : vector<4x8x1xf32> -> vector<4x8x1xf32>
    %30 = vector.broadcast %29 : vector<4x8x1xf32> to vector<4x8x8xf32>
    %31 = arith.mulf %26, %30 : vector<4x8x8xf32>
    "tpu.trace_start"() <{level = 10 : i32, message = "hqk,hkp->hqp"}> : () -> ()
    %cst_21 = arith.constant dense<0.000000e+00> : vector<4x8x8xf32>
    %32 = tpu.matmul %31, %15, %cst_21 {dimension_numbers = #tpu.dot_dimension_numbers<[2], [1], [1], [2], [0, 0, 0, 1, 1, 2], [0], [0]>} : vector<4x8x8xf32>, vector<4x8x8xf32>, vector<4x8x8xf32> -> vector<4x8x8xf32>
    "tpu.trace_stop"() : () -> ()
    %c0_22 = arith.constant 0 : index
    %c0_23 = arith.constant 0 : index
    %c0_24 = arith.constant 0 : index
    %c0_25 = arith.constant 0 : index
    %33 = vector.load %arg5[%c0_22, %c0_23, %c0_24, %c0_25] : memref<2x4x8x32xf32, #tpu.memory_space<vmem>>, vector<1x4x8x32xf32>
    %34 = vector.shape_cast %33 : vector<1x4x8x32xf32> to vector<4x8x32xf32>
    "tpu.trace_start"() <{level = 10 : i32, message = "hqp,hpd->hqd"}> : () -> ()
    %cst_26 = arith.constant dense<0.000000e+00> : vector<4x8x32xf32>
    %35 = tpu.matmul %32, %34, %cst_26 {dimension_numbers = #tpu.dot_dimension_numbers<[2], [1], [1], [2], [0, 0, 0, 1, 1, 2], [0], [0]>} : vector<4x8x8xf32>, vector<4x8x32xf32>, vector<4x8x32xf32> -> vector<4x8x32xf32>
    "tpu.trace_stop"() : () -> ()
    %cst_27 = arith.constant dense<0.000000e+00> : vector<8x32xf32>
    %36 = vector.multi_reduction <add>, %35, %cst_27 [0] : vector<4x8x32xf32> to vector<8x32xf32>
    %37 = vector.extract_strided_slice %6 {offsets = [0, 8, 0], sizes = [4, 8, 8], strides = [1, 1, 1]} : vector<4x16x8xf32> to vector<4x8x8xf32>
    %38 = vector.extract_strided_slice %9 {offsets = [0, 8, 0], sizes = [4, 8, 8], strides = [1, 1, 1]} : vector<4x16x8xf32> to vector<4x8x8xf32>
    %39 = vector.extract_strided_slice %12 {offsets = [0, 8, 0], sizes = [4, 8, 8], strides = [1, 1, 1]} : vector<4x16x8xf32> to vector<4x8x8xf32>
    "tpu.trace_start"() <{level = 10 : i32, message = "hqp,hkp->hqk"}> : () -> ()
    %cst_28 = arith.constant dense<0.000000e+00> : vector<4x8x8xf32>
    %40 = tpu.matmul %37, %38, %cst_28 {dimension_numbers = #tpu.dot_dimension_numbers<[2], [2], [1], [1], [0, 0, 0, 1, 1, 1], [0], [0]>} : vector<4x8x8xf32>, vector<4x8x8xf32>, vector<4x8x8xf32> -> vector<4x8x8xf32>
    "tpu.trace_stop"() : () -> ()
    %c1 = arith.constant 1 : index
    %c0_29 = arith.constant 0 : index
    %c0_30 = arith.constant 0 : index
    %41 = vector.load %arg1[%c1, %c0_29, %c0_30] : memref<2x1x8xf32, #tpu.memory_space<vmem>>, vector<1x1x8xf32>
    %42 = vector.shape_cast %41 : vector<1x1x8xf32> to vector<1x8xf32>
    %43 = vector.shape_cast %42 : vector<1x8xf32> to vector<1x1x8xf32>
    %44 = vector.broadcast %43 : vector<1x1x8xf32> to vector<4x8x8xf32>
    %45 = arith.addf %40, %44 : vector<4x8x8xf32>
    %cst_31 = arith.constant dense<0xFF800000> : vector<4x8xf32>
    %46 = vector.multi_reduction <maximumf>, %45, %cst_31 [2] : vector<4x8x8xf32> to vector<4x8xf32>
    %47 = vector.shape_cast %46 : vector<4x8xf32> to vector<4x8x1xf32>
    %48 = vector.broadcast %47 : vector<4x8x1xf32> to vector<4x8x8xf32>
    %49 = arith.subf %45, %48 : vector<4x8x8xf32>
    %50 = math.exp %49 : vector<4x8x8xf32>
    %cst_32 = arith.constant dense<0.000000e+00> : vector<4x8xf32>
    %51 = vector.multi_reduction <add>, %50, %cst_32 [2] : vector<4x8x8xf32> to vector<4x8xf32>
    %52 = vector.shape_cast %51 : vector<4x8xf32> to vector<4x8x1xf32>
    %53 = tpu.reciprocal %52 {approx = true} : vector<4x8x1xf32> -> vector<4x8x1xf32>
    %54 = vector.broadcast %53 : vector<4x8x1xf32> to vector<4x8x8xf32>
    %55 = arith.mulf %50, %54 : vector<4x8x8xf32>
    "tpu.trace_start"() <{level = 10 : i32, message = "hqk,hkp->hqp"}> : () -> ()
    %cst_33 = arith.constant dense<0.000000e+00> : vector<4x8x8xf32>
    %56 = tpu.matmul %55, %39, %cst_33 {dimension_numbers = #tpu.dot_dimension_numbers<[2], [1], [1], [2], [0, 0, 0, 1, 1, 2], [0], [0]>} : vector<4x8x8xf32>, vector<4x8x8xf32>, vector<4x8x8xf32> -> vector<4x8x8xf32>
    "tpu.trace_stop"() : () -> ()
    %c0_34 = arith.constant 0 : index
    %c0_35 = arith.constant 0 : index
    %c0_36 = arith.constant 0 : index
    %c0_37 = arith.constant 0 : index
    %57 = vector.load %arg5[%c0_34, %c0_35, %c0_36, %c0_37] : memref<2x4x8x32xf32, #tpu.memory_space<vmem>>, vector<1x4x8x32xf32>
    %58 = vector.shape_cast %57 : vector<1x4x8x32xf32> to vector<4x8x32xf32>
    "tpu.trace_start"() <{level = 10 : i32, message = "hqp,hpd->hqd"}> : () -> ()
    %cst_38 = arith.constant dense<0.000000e+00> : vector<4x8x32xf32>
    %59 = tpu.matmul %56, %58, %cst_38 {dimension_numbers = #tpu.dot_dimension_numbers<[2], [1], [1], [2], [0, 0, 0, 1, 1, 2], [0], [0]>} : vector<4x8x8xf32>, vector<4x8x32xf32>, vector<4x8x32xf32> -> vector<4x8x32xf32>
    "tpu.trace_stop"() : () -> ()
    %cst_39 = arith.constant dense<0.000000e+00> : vector<8x32xf32>
    %60 = vector.multi_reduction <add>, %59, %cst_39 [0] : vector<4x8x32xf32> to vector<8x32xf32>
    %61 = tpu.concatenate %36, %60 in 0 : vector<8x32xf32>, vector<8x32xf32> -> vector<16x32xf32>
    %62 = arith.addf %0, %61 : vector<16x32xf32>
    %c0_40 = arith.constant 0 : index
    %c0_41 = arith.constant 0 : index
    %c0_42 = arith.constant 0 : index
    %63 = vector.load %arg8[%c0_40, %c0_41, %c0_42] : memref<2x1x32xf32, #tpu.memory_space<vmem>>, vector<1x1x32xf32>
    %64 = vector.shape_cast %63 : vector<1x1x32xf32> to vector<1x32xf32>
    %c0_43 = arith.constant 0 : index
    %c0_44 = arith.constant 0 : index
    %c0_45 = arith.constant 0 : index
    %65 = vector.load %arg9[%c0_43, %c0_44, %c0_45] : memref<2x1x32xf32, #tpu.memory_space<vmem>>, vector<1x1x32xf32>
    %66 = vector.shape_cast %65 : vector<1x1x32xf32> to vector<1x32xf32>
    %cst_46 = arith.constant dense<0.000000e+00> : vector<16xf32>
    %67 = vector.multi_reduction <add>, %62, %cst_46 [1] : vector<16x32xf32> to vector<16xf32>
    %68 = vector.shape_cast %67 : vector<16xf32> to vector<16x1xf32>
    %cst_47 = arith.constant 3.200000e+01 : f32
    %69 = vector.broadcast %cst_47 : f32 to vector<16x1xf32>
    %70 = arith.divf %68, %69 : vector<16x1xf32>
    %71 = vector.broadcast %70 : vector<16x1xf32> to vector<16x32xf32>
    %72 = arith.subf %62, %71 : vector<16x32xf32>
    %73 = arith.mulf %72, %72 : vector<16x32xf32>
    %cst_48 = arith.constant dense<0.000000e+00> : vector<16xf32>
    %74 = vector.multi_reduction <add>, %73, %cst_48 [1] : vector<16x32xf32> to vector<16xf32>
    %75 = vector.shape_cast %74 : vector<16xf32> to vector<16x1xf32>
    %cst_49 = arith.constant 3.200000e+01 : f32
    %76 = vector.broadcast %cst_49 : f32 to vector<16x1xf32>
    %77 = arith.divf %75, %76 : vector<16x1xf32>
    %78 = vector.broadcast %70 : vector<16x1xf32> to vector<16x32xf32>
    %79 = arith.subf %62, %78 : vector<16x32xf32>
    %cst_50 = arith.constant 9.99999974E-6 : f32
    %80 = vector.broadcast %cst_50 : f32 to vector<16x1xf32>
    %81 = arith.addf %77, %80 : vector<16x1xf32>
    %82 = math.rsqrt %81 : vector<16x1xf32>
    %83 = vector.broadcast %82 : vector<16x1xf32> to vector<16x32xf32>
    %84 = arith.mulf %79, %83 : vector<16x32xf32>
    %85 = vector.broadcast %64 : vector<1x32xf32> to vector<16x32xf32>
    %86 = arith.mulf %84, %85 : vector<16x32xf32>
    %87 = vector.broadcast %66 : vector<1x32xf32> to vector<16x32xf32>
    %88 = arith.addf %86, %87 : vector<16x32xf32>
    %c0_51 = arith.constant 0 : index
    %c0_52 = arith.constant 0 : index
    %c0_53 = arith.constant 0 : index
    %89 = vector.load %arg6[%c0_51, %c0_52, %c0_53] : memref<2x32x64xf32, #tpu.memory_space<vmem>>, vector<1x32x64xf32>
    %90 = vector.shape_cast %89 : vector<1x32x64xf32> to vector<32x64xf32>
    %cst_54 = arith.constant dense<0.000000e+00> : vector<16x64xf32>
    %91 = tpu.matmul %88, %90, %cst_54 {dimension_numbers = #tpu.dot_dimension_numbers<[1], [0], [0], [1], [0, 0, 1, 1], [], []>} : vector<16x32xf32>, vector<32x64xf32>, vector<16x64xf32> -> vector<16x64xf32>
    %cst_55 = arith.constant 0.000000e+00 : f32
    %92 = vector.broadcast %cst_55 : f32 to vector<16x64xf32>
    %93 = arith.maximumf %91, %92 : vector<16x64xf32>
    %c0_56 = arith.constant 0 : index
    %c0_57 = arith.constant 0 : index
    %c0_58 = arith.constant 0 : index
    %94 = vector.load %arg7[%c0_56, %c0_57, %c0_58] : memref<2x64x32xf32, #tpu.memory_space<vmem>>, vector<1x64x32xf32>
    %95 = vector.shape_cast %94 : vector<1x64x32xf32> to vector<64x32xf32>
    %cst_59 = arith.constant dense<0.000000e+00> : vector<16x32xf32>
    %96 = tpu.matmul %93, %95, %cst_59 {dimension_numbers = #tpu.dot_dimension_numbers<[1], [0], [0], [1], [0, 0, 1, 1], [], []>} : vector<16x64xf32>, vector<64x32xf32>, vector<16x32xf32> -> vector<16x32xf32>
    %97 = arith.addf %88, %96 : vector<16x32xf32>
    %c0_60 = arith.constant 0 : index
    %c0_61 = arith.constant 0 : index
    %c0_62 = arith.constant 0 : index
    %98 = vector.load %arg10[%c0_60, %c0_61, %c0_62] : memref<2x1x32xf32, #tpu.memory_space<vmem>>, vector<1x1x32xf32>
    %99 = vector.shape_cast %98 : vector<1x1x32xf32> to vector<1x32xf32>
    %c0_63 = arith.constant 0 : index
    %c0_64 = arith.constant 0 : index
    %c0_65 = arith.constant 0 : index
    %100 = vector.load %arg11[%c0_63, %c0_64, %c0_65] : memref<2x1x32xf32, #tpu.memory_space<vmem>>, vector<1x1x32xf32>
    %101 = vector.shape_cast %100 : vector<1x1x32xf32> to vector<1x32xf32>
    %cst_66 = arith.constant dense<0.000000e+00> : vector<16xf32>
    %102 = vector.multi_reduction <add>, %97, %cst_66 [1] : vector<16x32xf32> to vector<16xf32>
    %103 = vector.shape_cast %102 : vector<16xf32> to vector<16x1xf32>
    %cst_67 = arith.constant 3.200000e+01 : f32
    %104 = vector.broadcast %cst_67 : f32 to vector<16x1xf32>
    %105 = arith.divf %103, %104 : vector<16x1xf32>
    %106 = vector.broadcast %105 : vector<16x1xf32> to vector<16x32xf32>
    %107 = arith.subf %97, %106 : vector<16x32xf32>
    %108 = arith.mulf %107, %107 : vector<16x32xf32>
    %cst_68 = arith.constant dense<0.000000e+00> : vector<16xf32>
    %109 = vector.multi_reduction <add>, %108, %cst_68 [1] : vector<16x32xf32> to vector<16xf32>
    %110 = vector.shape_cast %109 : vector<16xf32> to vector<16x1xf32>
    %cst_69 = arith.constant 3.200000e+01 : f32
    %111 = vector.broadcast %cst_69 : f32 to vector<16x1xf32>
    %112 = arith.divf %110, %111 : vector<16x1xf32>
    %113 = vector.broadcast %105 : vector<16x1xf32> to vector<16x32xf32>
    %114 = arith.subf %97, %113 : vector<16x32xf32>
    %cst_70 = arith.constant 9.99999974E-6 : f32
    %115 = vector.broadcast %cst_70 : f32 to vector<16x1xf32>
    %116 = arith.addf %112, %115 : vector<16x1xf32>
    %117 = math.rsqrt %116 : vector<16x1xf32>
    %118 = vector.broadcast %117 : vector<16x1xf32> to vector<16x32xf32>
    %119 = arith.mulf %114, %118 : vector<16x32xf32>
    %120 = vector.broadcast %99 : vector<1x32xf32> to vector<16x32xf32>
    %121 = arith.mulf %119, %120 : vector<16x32xf32>
    %122 = vector.broadcast %101 : vector<1x32xf32> to vector<16x32xf32>
    %123 = arith.addf %121, %122 : vector<16x32xf32>
    %124 = vector.shape_cast %123 : vector<16x32xf32> to vector<1x16x32xf32>
    %125 = vector.shape_cast %124 : vector<1x16x32xf32> to vector<1x16x32xf32>
    %126 = vector.broadcast %125 : vector<1x16x32xf32> to vector<4x16x32xf32>
    %c1_71 = arith.constant 1 : index
    %c0_72 = arith.constant 0 : index
    %c0_73 = arith.constant 0 : index
    %c0_74 = arith.constant 0 : index
    %127 = vector.load %arg2[%c1_71, %c0_72, %c0_73, %c0_74] : memref<2x4x32x8xf32, #tpu.memory_space<vmem>>, vector<1x4x32x8xf32>
    %128 = vector.shape_cast %127 : vector<1x4x32x8xf32> to vector<4x32x8xf32>
    "tpu.trace_start"() <{level = 10 : i32, message = "hnd,hdp->hnp"}> : () -> ()
    %cst_75 = arith.constant dense<0.000000e+00> : vector<4x16x8xf32>
    %129 = tpu.matmul %126, %128, %cst_75 {dimension_numbers = #tpu.dot_dimension_numbers<[2], [1], [1], [2], [0, 0, 0, 1, 1, 2], [0], [0]>} : vector<4x16x32xf32>, vector<4x32x8xf32>, vector<4x16x8xf32> -> vector<4x16x8xf32>
    "tpu.trace_stop"() : () -> ()
    %c1_76 = arith.constant 1 : index
    %c0_77 = arith.constant 0 : index
    %c0_78 = arith.constant 0 : index
    %c0_79 = arith.constant 0 : index
    %130 = vector.load %arg3[%c1_76, %c0_77, %c0_78, %c0_79] : memref<2x4x32x8xf32, #tpu.memory_space<vmem>>, vector<1x4x32x8xf32>
    %131 = vector.shape_cast %130 : vector<1x4x32x8xf32> to vector<4x32x8xf32>
    "tpu.trace_start"() <{level = 10 : i32, message = "hnd,hdp->hnp"}> : () -> ()
    %cst_80 = arith.constant dense<0.000000e+00> : vector<4x16x8xf32>
    %132 = tpu.matmul %126, %131, %cst_80 {dimension_numbers = #tpu.dot_dimension_numbers<[2], [1], [1], [2], [0, 0, 0, 1, 1, 2], [0], [0]>} : vector<4x16x32xf32>, vector<4x32x8xf32>, vector<4x16x8xf32> -> vector<4x16x8xf32>
    "tpu.trace_stop"() : () -> ()
    %c1_81 = arith.constant 1 : index
    %c0_82 = arith.constant 0 : index
    %c0_83 = arith.constant 0 : index
    %c0_84 = arith.constant 0 : index
    %133 = vector.load %arg4[%c1_81, %c0_82, %c0_83, %c0_84] : memref<2x4x32x8xf32, #tpu.memory_space<vmem>>, vector<1x4x32x8xf32>
    %134 = vector.shape_cast %133 : vector<1x4x32x8xf32> to vector<4x32x8xf32>
    "tpu.trace_start"() <{level = 10 : i32, message = "hnd,hdp->hnp"}> : () -> ()
    %cst_85 = arith.constant dense<0.000000e+00> : vector<4x16x8xf32>
    %135 = tpu.matmul %126, %134, %cst_85 {dimension_numbers = #tpu.dot_dimension_numbers<[2], [1], [1], [2], [0, 0, 0, 1, 1, 2], [0], [0]>} : vector<4x16x32xf32>, vector<4x32x8xf32>, vector<4x16x8xf32> -> vector<4x16x8xf32>
    "tpu.trace_stop"() : () -> ()
    %136 = vector.extract_strided_slice %129 {offsets = [0, 0, 0], sizes = [4, 8, 8], strides = [1, 1, 1]} : vector<4x16x8xf32> to vector<4x8x8xf32>
    %137 = vector.extract_strided_slice %132 {offsets = [0, 0, 0], sizes = [4, 8, 8], strides = [1, 1, 1]} : vector<4x16x8xf32> to vector<4x8x8xf32>
    %138 = vector.extract_strided_slice %135 {offsets = [0, 0, 0], sizes = [4, 8, 8], strides = [1, 1, 1]} : vector<4x16x8xf32> to vector<4x8x8xf32>
    "tpu.trace_start"() <{level = 10 : i32, message = "hqp,hkp->hqk"}> : () -> ()
    %cst_86 = arith.constant dense<0.000000e+00> : vector<4x8x8xf32>
    %139 = tpu.matmul %136, %137, %cst_86 {dimension_numbers = #tpu.dot_dimension_numbers<[2], [2], [1], [1], [0, 0, 0, 1, 1, 1], [0], [0]>} : vector<4x8x8xf32>, vector<4x8x8xf32>, vector<4x8x8xf32> -> vector<4x8x8xf32>
    "tpu.trace_stop"() : () -> ()
    %c0_87 = arith.constant 0 : index
    %c0_88 = arith.constant 0 : index
    %c0_89 = arith.constant 0 : index
    %140 = vector.load %arg1[%c0_87, %c0_88, %c0_89] : memref<2x1x8xf32, #tpu.memory_space<vmem>>, vector<1x1x8xf32>
    %141 = vector.shape_cast %140 : vector<1x1x8xf32> to vector<1x8xf32>
    %142 = vector.shape_cast %141 : vector<1x8xf32> to vector<1x1x8xf32>
    %143 = vector.broadcast %142 : vector<1x1x8xf32> to vector<4x8x8xf32>
    %144 = arith.addf %139, %143 : vector<4x8x8xf32>
    %cst_90 = arith.constant dense<0xFF800000> : vector<4x8xf32>
    %145 = vector.multi_reduction <maximumf>, %144, %cst_90 [2] : vector<4x8x8xf32> to vector<4x8xf32>
    %146 = vector.shape_cast %145 : vector<4x8xf32> to vector<4x8x1xf32>
    %147 = vector.broadcast %146 : vector<4x8x1xf32> to vector<4x8x8xf32>
    %148 = arith.subf %144, %147 : vector<4x8x8xf32>
    %149 = math.exp %148 : vector<4x8x8xf32>
    %cst_91 = arith.constant dense<0.000000e+00> : vector<4x8xf32>
    %150 = vector.multi_reduction <add>, %149, %cst_91 [2] : vector<4x8x8xf32> to vector<4x8xf32>
    %151 = vector.shape_cast %150 : vector<4x8xf32> to vector<4x8x1xf32>
    %152 = tpu.reciprocal %151 {approx = true} : vector<4x8x1xf32> -> vector<4x8x1xf32>
    %153 = vector.broadcast %152 : vector<4x8x1xf32> to vector<4x8x8xf32>
    %154 = arith.mulf %149, %153 : vector<4x8x8xf32>
    "tpu.trace_start"() <{level = 10 : i32, message = "hqk,hkp->hqp"}> : () -> ()
    %cst_92 = arith.constant dense<0.000000e+00> : vector<4x8x8xf32>
    %155 = tpu.matmul %154, %138, %cst_92 {dimension_numbers = #tpu.dot_dimension_numbers<[2], [1], [1], [2], [0, 0, 0, 1, 1, 2], [0], [0]>} : vector<4x8x8xf32>, vector<4x8x8xf32>, vector<4x8x8xf32> -> vector<4x8x8xf32>
    "tpu.trace_stop"() : () -> ()
    %c1_93 = arith.constant 1 : index
    %c0_94 = arith.constant 0 : index
    %c0_95 = arith.constant 0 : index
    %c0_96 = arith.constant 0 : index
    %156 = vector.load %arg5[%c1_93, %c0_94, %c0_95, %c0_96] : memref<2x4x8x32xf32, #tpu.memory_space<vmem>>, vector<1x4x8x32xf32>
    %157 = vector.shape_cast %156 : vector<1x4x8x32xf32> to vector<4x8x32xf32>
    "tpu.trace_start"() <{level = 10 : i32, message = "hqp,hpd->hqd"}> : () -> ()
    %cst_97 = arith.constant dense<0.000000e+00> : vector<4x8x32xf32>
    %158 = tpu.matmul %155, %157, %cst_97 {dimension_numbers = #tpu.dot_dimension_numbers<[2], [1], [1], [2], [0, 0, 0, 1, 1, 2], [0], [0]>} : vector<4x8x8xf32>, vector<4x8x32xf32>, vector<4x8x32xf32> -> vector<4x8x32xf32>
    "tpu.trace_stop"() : () -> ()
    %cst_98 = arith.constant dense<0.000000e+00> : vector<8x32xf32>
    %159 = vector.multi_reduction <add>, %158, %cst_98 [0] : vector<4x8x32xf32> to vector<8x32xf32>
    %160 = vector.extract_strided_slice %129 {offsets = [0, 8, 0], sizes = [4, 8, 8], strides = [1, 1, 1]} : vector<4x16x8xf32> to vector<4x8x8xf32>
    %161 = vector.extract_strided_slice %132 {offsets = [0, 8, 0], sizes = [4, 8, 8], strides = [1, 1, 1]} : vector<4x16x8xf32> to vector<4x8x8xf32>
    %162 = vector.extract_strided_slice %135 {offsets = [0, 8, 0], sizes = [4, 8, 8], strides = [1, 1, 1]} : vector<4x16x8xf32> to vector<4x8x8xf32>
    "tpu.trace_start"() <{level = 10 : i32, message = "hqp,hkp->hqk"}> : () -> ()
    %cst_99 = arith.constant dense<0.000000e+00> : vector<4x8x8xf32>
    %163 = tpu.matmul %160, %161, %cst_99 {dimension_numbers = #tpu.dot_dimension_numbers<[2], [2], [1], [1], [0, 0, 0, 1, 1, 1], [0], [0]>} : vector<4x8x8xf32>, vector<4x8x8xf32>, vector<4x8x8xf32> -> vector<4x8x8xf32>
    "tpu.trace_stop"() : () -> ()
    %c1_100 = arith.constant 1 : index
    %c0_101 = arith.constant 0 : index
    %c0_102 = arith.constant 0 : index
    %164 = vector.load %arg1[%c1_100, %c0_101, %c0_102] : memref<2x1x8xf32, #tpu.memory_space<vmem>>, vector<1x1x8xf32>
    %165 = vector.shape_cast %164 : vector<1x1x8xf32> to vector<1x8xf32>
    %166 = vector.shape_cast %165 : vector<1x8xf32> to vector<1x1x8xf32>
    %167 = vector.broadcast %166 : vector<1x1x8xf32> to vector<4x8x8xf32>
    %168 = arith.addf %163, %167 : vector<4x8x8xf32>
    %cst_103 = arith.constant dense<0xFF800000> : vector<4x8xf32>
    %169 = vector.multi_reduction <maximumf>, %168, %cst_103 [2] : vector<4x8x8xf32> to vector<4x8xf32>
    %170 = vector.shape_cast %169 : vector<4x8xf32> to vector<4x8x1xf32>
    %171 = vector.broadcast %170 : vector<4x8x1xf32> to vector<4x8x8xf32>
    %172 = arith.subf %168, %171 : vector<4x8x8xf32>
    %173 = math.exp %172 : vector<4x8x8xf32>
    %cst_104 = arith.constant dense<0.000000e+00> : vector<4x8xf32>
    %174 = vector.multi_reduction <add>, %173, %cst_104 [2] : vector<4x8x8xf32> to vector<4x8xf32>
    %175 = vector.shape_cast %174 : vector<4x8xf32> to vector<4x8x1xf32>
    %176 = tpu.reciprocal %175 {approx = true} : vector<4x8x1xf32> -> vector<4x8x1xf32>
    %177 = vector.broadcast %176 : vector<4x8x1xf32> to vector<4x8x8xf32>
    %178 = arith.mulf %173, %177 : vector<4x8x8xf32>
    "tpu.trace_start"() <{level = 10 : i32, message = "hqk,hkp->hqp"}> : () -> ()
    %cst_105 = arith.constant dense<0.000000e+00> : vector<4x8x8xf32>
    %179 = tpu.matmul %178, %162, %cst_105 {dimension_numbers = #tpu.dot_dimension_numbers<[2], [1], [1], [2], [0, 0, 0, 1, 1, 2], [0], [0]>} : vector<4x8x8xf32>, vector<4x8x8xf32>, vector<4x8x8xf32> -> vector<4x8x8xf32>
    "tpu.trace_stop"() : () -> ()
    %c1_106 = arith.constant 1 : index
    %c0_107 = arith.constant 0 : index
    %c0_108 = arith.constant 0 : index
    %c0_109 = arith.constant 0 : index
    %180 = vector.load %arg5[%c1_106, %c0_107, %c0_108, %c0_109] : memref<2x4x8x32xf32, #tpu.memory_space<vmem>>, vector<1x4x8x32xf32>
    %181 = vector.shape_cast %180 : vector<1x4x8x32xf32> to vector<4x8x32xf32>
    "tpu.trace_start"() <{level = 10 : i32, message = "hqp,hpd->hqd"}> : () -> ()
    %cst_110 = arith.constant dense<0.000000e+00> : vector<4x8x32xf32>
    %182 = tpu.matmul %179, %181, %cst_110 {dimension_numbers = #tpu.dot_dimension_numbers<[2], [1], [1], [2], [0, 0, 0, 1, 1, 2], [0], [0]>} : vector<4x8x8xf32>, vector<4x8x32xf32>, vector<4x8x32xf32> -> vector<4x8x32xf32>
    "tpu.trace_stop"() : () -> ()
    %cst_111 = arith.constant dense<0.000000e+00> : vector<8x32xf32>
    %183 = vector.multi_reduction <add>, %182, %cst_111 [0] : vector<4x8x32xf32> to vector<8x32xf32>
    %184 = tpu.concatenate %159, %183 in 0 : vector<8x32xf32>, vector<8x32xf32> -> vector<16x32xf32>
    %185 = arith.addf %123, %184 : vector<16x32xf32>
    %c1_112 = arith.constant 1 : index
    %c0_113 = arith.constant 0 : index
    %c0_114 = arith.constant 0 : index
    %186 = vector.load %arg8[%c1_112, %c0_113, %c0_114] : memref<2x1x32xf32, #tpu.memory_space<vmem>>, vector<1x1x32xf32>
    %187 = vector.shape_cast %186 : vector<1x1x32xf32> to vector<1x32xf32>
    %c1_115 = arith.constant 1 : index
    %c0_116 = arith.constant 0 : index
    %c0_117 = arith.constant 0 : index
    %188 = vector.load %arg9[%c1_115, %c0_116, %c0_117] : memref<2x1x32xf32, #tpu.memory_space<vmem>>, vector<1x1x32xf32>
    %189 = vector.shape_cast %188 : vector<1x1x32xf32> to vector<1x32xf32>
    %cst_118 = arith.constant dense<0.000000e+00> : vector<16xf32>
    %190 = vector.multi_reduction <add>, %185, %cst_118 [1] : vector<16x32xf32> to vector<16xf32>
    %191 = vector.shape_cast %190 : vector<16xf32> to vector<16x1xf32>
    %cst_119 = arith.constant 3.200000e+01 : f32
    %192 = vector.broadcast %cst_119 : f32 to vector<16x1xf32>
    %193 = arith.divf %191, %192 : vector<16x1xf32>
    %194 = vector.broadcast %193 : vector<16x1xf32> to vector<16x32xf32>
    %195 = arith.subf %185, %194 : vector<16x32xf32>
    %196 = arith.mulf %195, %195 : vector<16x32xf32>
    %cst_120 = arith.constant dense<0.000000e+00> : vector<16xf32>
    %197 = vector.multi_reduction <add>, %196, %cst_120 [1] : vector<16x32xf32> to vector<16xf32>
    %198 = vector.shape_cast %197 : vector<16xf32> to vector<16x1xf32>
    %cst_121 = arith.constant 3.200000e+01 : f32
    %199 = vector.broadcast %cst_121 : f32 to vector<16x1xf32>
    %200 = arith.divf %198, %199 : vector<16x1xf32>
    %201 = vector.broadcast %193 : vector<16x1xf32> to vector<16x32xf32>
    %202 = arith.subf %185, %201 : vector<16x32xf32>
    %cst_122 = arith.constant 9.99999974E-6 : f32
    %203 = vector.broadcast %cst_122 : f32 to vector<16x1xf32>
    %204 = arith.addf %200, %203 : vector<16x1xf32>
    %205 = math.rsqrt %204 : vector<16x1xf32>
    %206 = vector.broadcast %205 : vector<16x1xf32> to vector<16x32xf32>
    %207 = arith.mulf %202, %206 : vector<16x32xf32>
    %208 = vector.broadcast %187 : vector<1x32xf32> to vector<16x32xf32>
    %209 = arith.mulf %207, %208 : vector<16x32xf32>
    %210 = vector.broadcast %189 : vector<1x32xf32> to vector<16x32xf32>
    %211 = arith.addf %209, %210 : vector<16x32xf32>
    %c1_123 = arith.constant 1 : index
    %c0_124 = arith.constant 0 : index
    %c0_125 = arith.constant 0 : index
    %212 = vector.load %arg6[%c1_123, %c0_124, %c0_125] : memref<2x32x64xf32, #tpu.memory_space<vmem>>, vector<1x32x64xf32>
    %213 = vector.shape_cast %212 : vector<1x32x64xf32> to vector<32x64xf32>
    %cst_126 = arith.constant dense<0.000000e+00> : vector<16x64xf32>
    %214 = tpu.matmul %211, %213, %cst_126 {dimension_numbers = #tpu.dot_dimension_numbers<[1], [0], [0], [1], [0, 0, 1, 1], [], []>} : vector<16x32xf32>, vector<32x64xf32>, vector<16x64xf32> -> vector<16x64xf32>
    %cst_127 = arith.constant 0.000000e+00 : f32
    %215 = vector.broadcast %cst_127 : f32 to vector<16x64xf32>
    %216 = arith.maximumf %214, %215 : vector<16x64xf32>
    %c1_128 = arith.constant 1 : index
    %c0_129 = arith.constant 0 : index
    %c0_130 = arith.constant 0 : index
    %217 = vector.load %arg7[%c1_128, %c0_129, %c0_130] : memref<2x64x32xf32, #tpu.memory_space<vmem>>, vector<1x64x32xf32>
    %218 = vector.shape_cast %217 : vector<1x64x32xf32> to vector<64x32xf32>
    %cst_131 = arith.constant dense<0.000000e+00> : vector<16x32xf32>
    %219 = tpu.matmul %216, %218, %cst_131 {dimension_numbers = #tpu.dot_dimension_numbers<[1], [0], [0], [1], [0, 0, 1, 1], [], []>} : vector<16x64xf32>, vector<64x32xf32>, vector<16x32xf32> -> vector<16x32xf32>
    %220 = arith.addf %211, %219 : vector<16x32xf32>
    %c1_132 = arith.constant 1 : index
    %c0_133 = arith.constant 0 : index
    %c0_134 = arith.constant 0 : index
    %221 = vector.load %arg10[%c1_132, %c0_133, %c0_134] : memref<2x1x32xf32, #tpu.memory_space<vmem>>, vector<1x1x32xf32>
    %222 = vector.shape_cast %221 : vector<1x1x32xf32> to vector<1x32xf32>
    %c1_135 = arith.constant 1 : index
    %c0_136 = arith.constant 0 : index
    %c0_137 = arith.constant 0 : index
    %223 = vector.load %arg11[%c1_135, %c0_136, %c0_137] : memref<2x1x32xf32, #tpu.memory_space<vmem>>, vector<1x1x32xf32>
    %224 = vector.shape_cast %223 : vector<1x1x32xf32> to vector<1x32xf32>
    %cst_138 = arith.constant dense<0.000000e+00> : vector<16xf32>
    %225 = vector.multi_reduction <add>, %220, %cst_138 [1] : vector<16x32xf32> to vector<16xf32>
    %226 = vector.shape_cast %225 : vector<16xf32> to vector<16x1xf32>
    %cst_139 = arith.constant 3.200000e+01 : f32
    %227 = vector.broadcast %cst_139 : f32 to vector<16x1xf32>
    %228 = arith.divf %226, %227 : vector<16x1xf32>
    %229 = vector.broadcast %228 : vector<16x1xf32> to vector<16x32xf32>
    %230 = arith.subf %220, %229 : vector<16x32xf32>
    %231 = arith.mulf %230, %230 : vector<16x32xf32>
    %cst_140 = arith.constant dense<0.000000e+00> : vector<16xf32>
    %232 = vector.multi_reduction <add>, %231, %cst_140 [1] : vector<16x32xf32> to vector<16xf32>
    %233 = vector.shape_cast %232 : vector<16xf32> to vector<16x1xf32>
    %cst_141 = arith.constant 3.200000e+01 : f32
    %234 = vector.broadcast %cst_141 : f32 to vector<16x1xf32>
    %235 = arith.divf %233, %234 : vector<16x1xf32>
    %236 = vector.broadcast %228 : vector<16x1xf32> to vector<16x32xf32>
    %237 = arith.subf %220, %236 : vector<16x32xf32>
    %cst_142 = arith.constant 9.99999974E-6 : f32
    %238 = vector.broadcast %cst_142 : f32 to vector<16x1xf32>
    %239 = arith.addf %235, %238 : vector<16x1xf32>
    %240 = math.rsqrt %239 : vector<16x1xf32>
    %241 = vector.broadcast %240 : vector<16x1xf32> to vector<16x32xf32>
    %242 = arith.mulf %237, %241 : vector<16x32xf32>
    %243 = vector.broadcast %222 : vector<1x32xf32> to vector<16x32xf32>
    %244 = arith.mulf %242, %243 : vector<16x32xf32>
    %245 = vector.broadcast %224 : vector<1x32xf32> to vector<16x32xf32>
    %246 = arith.addf %244, %245 : vector<16x32xf32>
    %c0_143 = arith.constant 0 : index
    %c0_144 = arith.constant 0 : index
    %247 = vector.load %arg12[%c0_143, %c0_144] : memref<16x32xf32, #tpu.memory_space<vmem>>, vector<16x32xf32>
    tpu.vector_store %arg12[%c0_143, %c0_144], %246 {strides = array<i32>} : memref<16x32xf32, #tpu.memory_space<vmem>>, vector<16x32xf32>,
    return
  }
}

</mosaic_0001>

<llo_original>
// kernel: tpu_custom_call.1
$region0: #{tpu_custom_call.1}
  #allocation0 [shape = 'u32[]', space=smem, size = 0x4, offset = 0x4, fixed_abs, tag = 'smem constant byte address 0x4 - core index']
  #allocation1 [shape = 'u32[144,128]{1,0:T(1,128)}', space=vmem, size = 0x12000, scoped, tag = 'internal scratch']
  %s0 = inlined_call_operand.vmem [shape: f32[16,32], index: 0, kind: input, shape index: {}]
  %s1 = inlined_call_operand.vmem [shape: f32[2,1,8], index: 1, kind: input, shape index: {}]
  %s2 = inlined_call_operand.vmem [shape: f32[2,4,32,8], index: 2, kind: input, shape index: {}]
  %s3 = inlined_call_operand.vmem [shape: f32[2,4,32,8], index: 3, kind: input, shape index: {}]
  %s4 = inlined_call_operand.vmem [shape: f32[2,4,32,8], index: 4, kind: input, shape index: {}]
  %s5 = inlined_call_operand.vmem [shape: f32[2,4,8,32], index: 5, kind: input, shape index: {}]
  %s6 = inlined_call_operand.vmem [shape: f32[2,32,64], index: 6, kind: input, shape index: {}]
  %s7 = inlined_call_operand.vmem [shape: f32[2,64,32], index: 7, kind: input, shape index: {}]
  %s8 = inlined_call_operand.vmem [shape: f32[2,1,32], index: 8, kind: input, shape index: {}]
  %s9 = inlined_call_operand.vmem [shape: f32[2,1,32], index: 9, kind: input, shape index: {}]
  %s10 = inlined_call_operand.vmem [shape: f32[2,1,32], index: 10, kind: input, shape index: {}]
  %s11 = inlined_call_operand.vmem [shape: f32[2,1,32], index: 11, kind: input, shape index: {}]
  %s12 = inlined_call_operand.hbm [shape: f32[16,32], index: 12, kind: output, shape index: {}]
  %s13 = sld [smem:[#allocation0]]
  $region58: #{tpu_custom_call.1} parent=0
    _
  %s15 = ssub.s32 1, %s13
  %s16 = scalar_select 0, %s15, %s13
  $region1: #{tpu_custom_call.1} parent=0
    #allocation2 [shape = 'u8[8192]{0}', space=vmem, size = 0x2000, scoped, tag = 'output window, operand 0, single buffered']
    #allocation3 [shape = 's32[1]{0}', space=sflag, size = 0x4, scoped, tag = 'scoped memory for tpu_custom_call.1']
    %17 = vsyncpa [#allocation3], 0
    // Predicated region
    $region2: #{tpu_custom_call.1} parent=1 // pred_check
      _
    $region3: #{tpu_custom_call.1} parent=1 // pred_check_branch
      %19 = sbr.rel (0) target = $region5
    $region4: #{tpu_custom_call.1} parent=1 // pred_region
      _
    $region5: #{tpu_custom_call.1} parent=1 // pred_fallthru
      _
    // Predicated region
    $region6: #{tpu_custom_call.1} parent=1 // pred_check
      _
    $region7: #{tpu_custom_call.1} parent=1 // pred_check_branch
      %21 = sbr.rel (0) target = $region9
    $region8: #{tpu_custom_call.1} parent=1 // pred_region
      _
    $region9: #{tpu_custom_call.1} parent=1 // pred_fallthru
      _
    // Predicated region
    $region10: #{tpu_custom_call.1} parent=1 // pred_check
      _
    $region11: #{tpu_custom_call.1} parent=1 // pred_check_branch
      %23 = sbr.rel (0) target = $region13
    $region12: #{tpu_custom_call.1} parent=1 // pred_region
      _
    $region13: #{tpu_custom_call.1} parent=1 // pred_fallthru
      _
    // Predicated region
    $region14: #{tpu_custom_call.1} parent=1 // pred_check
      _
    $region15: #{tpu_custom_call.1} parent=1 // pred_check_branch
      %25 = sbr.rel (0) target = $region17
    $region16: #{tpu_custom_call.1} parent=1 // pred_region
      _
    $region17: #{tpu_custom_call.1} parent=1 // pred_fallthru
      _
    // Predicated region
    $region18: #{tpu_custom_call.1} parent=1 // pred_check
      _
    $region19: #{tpu_custom_call.1} parent=1 // pred_check_branch
      %27 = sbr.rel (0) target = $region21
    $region20: #{tpu_custom_call.1} parent=1 // pred_region
      _
    $region21: #{tpu_custom_call.1} parent=1 // pred_fallthru
      _
    // Predicated region
    $region22: #{tpu_custom_call.1} parent=1 // pred_check
      _
    $region23: #{tpu_custom_call.1} parent=1 // pred_check_branch
      %29 = sbr.rel (0) target = $region25
    $region24: #{tpu_custom_call.1} parent=1 // pred_region
      _
    $region25: #{tpu_custom_call.1} parent=1 // pred_fallthru
      _
    // Predicated region
    $region26: #{tpu_custom_call.1} parent=1 // pred_check
      _
    $region27: #{tpu_custom_call.1} parent=1 // pred_check_branch
      %31 = sbr.rel (0) target = $region29
    $region28: #{tpu_custom_call.1} parent=1 // pred_region
      _
    $region29: #{tpu_custom_call.1} parent=1 // pred_fallthru
      _
    // Predicated region
    $region30: #{tpu_custom_call.1} parent=1 // pred_check
      _
    $region31: #{tpu_custom_call.1} parent=1 // pred_check_branch
      %33 = sbr.rel (0) target = $region33
    $region32: #{tpu_custom_call.1} parent=1 // pred_region
      _
    $region33: #{tpu_custom_call.1} parent=1 // pred_fallthru
      _
    // Predicated region
    $region34: #{tpu_custom_call.1} parent=1 // pred_check
      _
    $region35: #{tpu_custom_call.1} parent=1 // pred_check_branch
      %35 = sbr.rel (0) target = $region37
    $region36: #{tpu_custom_call.1} parent=1 // pred_region
      _
    $region37: #{tpu_custom_call.1} parent=1 // pred_fallthru
      _
    // Predicated region
    $region38: #{tpu_custom_call.1} parent=1 // pred_check
      _
    $region39: #{tpu_custom_call.1} parent=1 // pred_check_branch
      %37 = sbr.rel (0) target = $region41
    $region40: #{tpu_custom_call.1} parent=1 // pred_region
      _
    $region41: #{tpu_custom_call.1} parent=1 // pred_fallthru
      _
    // Predicated region
    $region42: #{tpu_custom_call.1} parent=1 // pred_check
      _
    $region43: #{tpu_custom_call.1} parent=1 // pred_check_branch
      %39 = sbr.rel (0) target = $region45
    $region44: #{tpu_custom_call.1} parent=1 // pred_region
      _
    $region45: #{tpu_custom_call.1} parent=1 // pred_fallthru
      _
    // Predicated region
    $region46: #{tpu_custom_call.1} parent=1 // pred_check
      _
    $region47: #{tpu_custom_call.1} parent=1 // pred_check_branch
      %41 = sbr.rel (0) target = $region49
    $region48: #{tpu_custom_call.1} parent=1 // pred_region
      _
    $region49: #{tpu_custom_call.1} parent=1 // pred_fallthru
      _
    %v42 = vld [vmem:[%s0] sm:$0xff]
    %v43 = vld [vmem:[%s0 + $0x8] sm:$0xff]
    %v44 = vld [vmem:[%s2] sm:$0xff]
    %v45 = vld [vmem:[%s2 + $0x8] sm:$0xff]
    %v46 = vld [vmem:[%s2 + $0x10] sm:$0xff]
    %v47 = vld [vmem:[%s2 + $0x18] sm:$0xff]
    %v48 = vld [vmem:[%s2 + $0x20] sm:$0xff]
    %v49 = vld [vmem:[%s2 + $0x28] sm:$0xff]
    %v50 = vld [vmem:[%s2 + $0x30] sm:$0xff]
    %v51 = vld [vmem:[%s2 + $0x38] sm:$0xff]
    %v52 = vld [vmem:[%s2 + $0x40] sm:$0xff]
    %v53 = vld [vmem:[%s2 + $0x48] sm:$0xff]
    %v54 = vld [vmem:[%s2 + $0x50] sm:$0xff]
    %v55 = vld [vmem:[%s2 + $0x58] sm:$0xff]
    %v56 = vld [vmem:[%s2 + $0x60] sm:$0xff]
    %v57 = vld [vmem:[%s2 + $0x68] sm:$0xff]
    %v58 = vld [vmem:[%s2 + $0x70] sm:$0xff]
    %v59 = vld [vmem:[%s2 + $0x78] sm:$0xff]
    %vm60 = vcmask 261120
    %v62 = vsel %vm60, %v42, 0
    %v65 = vsel %vm60, %v43, 0
    %67 = vmatprep.subr.mxu0 0.0
    %68 = vmatpush1.msra.mxu0 %v44
    %69 = vmatprep.subr.mxu0 0.0
    %70 = vmatpush1.msra.mxu0 %v45
    %71 = vmatprep.subr.mxu0 0.0
    %72 = vmatpush1.msra.mxu0 %v46
    %73 = vmatprep.subr.mxu0 0.0
    %74 = vmatpush1.msra.mxu0 %v47
    %75 = vmatprep.subr.mxu0 0.0
    %76 = vmatpush1.msra.mxu0 0.0
    %77 = vmatprep.subr.mxu0 0.0
    %78 = vmatpush1.msra.mxu0 0.0
    %79 = vmatprep.subr.mxu0 0.0
    %80 = vmatpush1.msra.mxu0 0.0
    %81 = vmatprep.subr.mxu0 0.0
    %82 = vmatpush1.msra.mxu0 0.0
    %83 = vmatprep.subr.mxu0 0.0
    %84 = vmatpush1.msra.mxu0 0.0
    %85 = vmatprep.subr.mxu0 0.0
    %86 = vmatpush1.msra.mxu0 0.0
    %87 = vmatprep.subr.mxu0 0.0
    %88 = vmatpush1.msra.mxu0 0.0
    %89 = vmatprep.subr.mxu0 0.0
    %90 = vmatpush1.msra.mxu0 0.0
    %91 = vmatprep.subr.mxu0 0.0
    %92 = vmatpush1.msra.mxu0 0.0
    %93 = vmatprep.subr.mxu0 0.0
    %94 = vmatpush1.msra.mxu0 0.0
    %95 = vmatprep.subr.mxu0 0.0
    %96 = vmatpush1.msra.mxu0 0.0
    %97 = vmatprep.subr.mxu0 0.0
    %98 = vmatpush1.msra.mxu0 0.0
    %99 = vmatprep.subr.mxu0 0.0
    %100 = vmatpush1.msra.mxu0 0.0
    %101 = vmatprep.subr.mxu0 0.0
    %102 = vmatpush1.msra.mxu0 0.0
    %103 = vmatprep.subr.mxu0 0.0
    %104 = vmatpush1.msra.mxu0 0.0
    %105 = vmatprep.subr.mxu0 0.0
    %106 = vmatpush1.msra.mxu0 0.0
    %107 = vmatprep.subr.mxu0 0.0
    %108 = vmatpush1.msra.mxu0 0.0
    %109 = vmatprep.subr.mxu0 0.0
    %110 = vmatpush1.msra.mxu0 0.0
    %111 = vmatprep.subr.mxu0 0.0
    %112 = vmatpush1.msra.mxu0 0.0
    %113 = vmatprep.subr.mxu0 0.0
    %114 = vmatpush1.msra.mxu0 0.0
    %115 = vmatprep.subr.mxu0 0.0
    %116 = vmatpush1.msra.mxu0 0.0
    %117 = vmatprep.subr.mxu0 0.0
    %118 = vmatpush1.msra.mxu0 0.0
    %119 = vmatprep.subr.mxu0 0.0
    %120 = vmatpush1.msra.mxu0 0.0
    %121 = vmatprep.subr.mxu0 0.0
    %122 = vmatpush1.msra.mxu0 0.0
    %123 = vmatprep.subr.mxu0 0.0
    %124 = vmatpush1.msra.mxu0 0.0
    %125 = vmatprep.subr.mxu0 0.0
    %126 = vmatpush1.msra.mxu0 0.0
    %127 = vmatprep.subr.mxu0 0.0
    %128 = vmatpush1.msra.mxu0 0.0
    %129 = vmatprep.subr.mxu0 0.0
    %130 = vmatpush1.msra.mxu0 0.0
    %131 = vmatprep.mubr.f32.mxu0 0.0
    %132 = vmatmul.mubr.f32.gmra.mrb[0].mxu0 %v62
    %v133 = vpop.f32.mrb[0].mxu0
    %v134 = vadd.f32 0.0, %v133
    %v135 = vpop.f32.mrb[0].mxu0
    %136 = vmatprep.mubr.f32.mxu0 0.0
    %137 = vmatmul.mubr.f32.gmra.mrb[0].mxu0 %v65
    %v138 = vpop.f32.mrb[0].mxu0
    %v139 = vadd.f32 0.0, %v138
    %v140 = vpop.f32.mrb[0].mxu0
    %141 = vdwg.mxu0
    %142 = vmatprep.subr.mxu0 0.0
    %143 = vmatpush1.msra.mxu0 %v48
    %144 = vmatprep.subr.mxu0 0.0
    %145 = vmatpush1.msra.mxu0 %v49
    %146 = vmatprep.subr.mxu0 0.0
    %147 = vmatpush1.msra.mxu0 %v50
    %148 = vmatprep.subr.mxu0 0.0
    %149 = vmatpush1.msra.mxu0 %v51
    %150 = vmatprep.subr.mxu0 0.0
    %151 = vmatpush1.msra.mxu0 0.0
    %152 = vmatprep.subr.mxu0 0.0
    %153 = vmatpush1.msra.mxu0 0.0
    %154 = vmatprep.subr.mxu0 0.0
    %155 = vmatpush1.msra.mxu0 0.0
    %156 = vmatprep.subr.mxu0 0.0
    %157 = vmatpush1.msra.mxu0 0.0
    %158 = vmatprep.subr.mxu0 0.0
    %159 = vmatpush1.msra.mxu0 0.0
    %160 = vmatprep.subr.mxu0 0.0
    %161 = vmatpush1.msra.mxu0 0.0
    %162 = vmatprep.subr.mxu0 0.0
    %163 = vmatpush1.msra.mxu0 0.0
    %164 = vmatprep.subr.mxu0 0.0
    %165 = vmatpush1.msra.mxu0 0.0
    %166 = vmatprep.subr.mxu0 0.0
    %167 = vmatpush1.msra.mxu0 0.0
    %168 = vmatprep.subr.mxu0 0.0
    %169 = vmatpush1.msra.mxu0 0.0
    %170 = vmatprep.subr.mxu0 0.0
    %171 = vmatpush1.msra.mxu0 0.0
    %172 = vmatprep.subr.mxu0 0.0
    %173 = vmatpush1.msra.mxu0 0.0
    %174 = vmatprep.subr.mxu0 0.0
    %175 = vmatpush1.msra.mxu0 0.0
    %176 = vmatprep.subr.mxu0 0.0
    %177 = vmatpush1.msra.mxu0 0.0
    %178 = vmatprep.subr.mxu0 0.0
    %179 = vmatpush1.msra.mxu0 0.0
    %180 = vmatprep.subr.mxu0 0.0
    %181 = vmatpush1.msra.mxu0 0.0
    %182 = vmatprep.subr.mxu0 0.0
    %183 = vmatpush1.msra.mxu0 0.0
    %184 = vmatprep.subr.mxu0 0.0
    %185 = vmatpush1.msra.mxu0 0.0
    %186 = vmatprep.subr.mxu0 0.0
    %187 = vmatpush1.msra.mxu0 0.0
    %188 = vmatprep.subr.mxu0 0.0
    %189 = vmatpush1.msra.mxu0 0.0
    %190 = vmatprep.subr.mxu0 0.0
    %191 = vmatpush1.msra.mxu0 0.0
    %192 = vmatprep.subr.mxu0 0.0
    %193 = vmatpush1.msra.mxu0 0.0
    %194 = vmatprep.subr.mxu0 0.0
    %195 = vmatpush1.msra.mxu0 0.0
    %196 = vmatprep.subr.mxu0 0.0
    %197 = vmatpush1.msra.mxu0 0.0
    %198 = vmatprep.subr.mxu0 0.0
    %199 = vmatpush1.msra.mxu0 0.0
    %200 = vmatprep.subr.mxu0 0.0
    %201 = vmatpush1.msra.mxu0 0.0
    %202 = vmatprep.subr.mxu0 0.0
    %203 = vmatpush1.msra.mxu0 0.0
    %204 = vmatprep.subr.mxu0 0.0
    %205 = vmatpush1.msra.mxu0 0.0
    %206 = vmatprep.mubr.f32.mxu0 0.0
    %207 = vmatmul.mubr.f32.gmra.mrb[0].mxu0 %v62
    %v208 = vpop.f32.mrb[0].mxu0
    %v209 = vadd.f32 0.0, %v208
    %v210 = vpop.f32.mrb[0].mxu0
    %211 = vmatprep.mubr.f32.mxu0 0.0
    %212 = vmatmul.mubr.f32.gmra.mrb[0].mxu0 %v65
    %v213 = vpop.f32.mrb[0].mxu0
    %v214 = vadd.f32 0.0, %v213
    %v215 = vpop.f32.mrb[0].mxu0
    %216 = vdwg.mxu0
    %217 = vmatprep.subr.mxu0 0.0
    %218 = vmatpush1.msra.mxu0 %v52
    %219 = vmatprep.subr.mxu0 0.0
    %220 = vmatpush1.msra.mxu0 %v53
    %221 = vmatprep.subr.mxu0 0.0
    %222 = vmatpush1.msra.mxu0 %v54
    %223 = vmatprep.subr.mxu0 0.0
    %224 = vmatpush1.msra.mxu0 %v55
    %225 = vmatprep.subr.mxu0 0.0
    %226 = vmatpush1.msra.mxu0 0.0
    %227 = vmatprep.subr.mxu0 0.0
    %228 = vmatpush1.msra.mxu0 0.0
    %229 = vmatprep.subr.mxu0 0.0
    %230 = vmatpush1.msra.mxu0 0.0
    %231 = vmatprep.subr.mxu0 0.0
    %232 = vmatpush1.msra.mxu0 0.0
    %233 = vmatprep.subr.mxu0 0.0
    %234 = vmatpush1.msra.mxu0 0.0
    %235 = vmatprep.subr.mxu0 0.0
    %236 = vmatpush1.msra.mxu0 0.0
    %237 = vmatprep.subr.mxu0 0.0
    %238 = vmatpush1.msra.mxu0 0.0
    %239 = vmatprep.subr.mxu0 0.0
    %240 = vmatpush1.msra.mxu0 0.0
    %241 = vmatprep.subr.mxu0 0.0
    %242 = vmatpush1.msra.mxu0 0.0
    %243 = vmatprep.subr.mxu0 0.0
    %244 = vmatpush1.msra.mxu0 0.0
    %245 = vmatprep.subr.mxu0 0.0
    %246 = vmatpush1.msra.mxu0 0.0
    %247 = vmatprep.subr.mxu0 0.0
    %248 = vmatpush1.msra.mxu0 0.0
    %249 = vmatprep.subr.mxu0 0.0
    %250 = vmatpush1.msra.mxu0 0.0
    %251 = vmatprep.subr.mxu0 0.0
    %252 = vmatpush1.msra.mxu0 0.0
    %253 = vmatprep.subr.mxu0 0.0
    %254 = vmatpush1.msra.mxu0 0.0
    %255 = vmatprep.subr.mxu0 0.0
    %256 = vmatpush1.msra.mxu0 0.0
    %257 = vmatprep.subr.mxu0 0.0
    %258 = vmatpush1.msra.mxu0 0.0
    %259 = vmatprep.subr.mxu0 0.0
    %260 = vmatpush1.msra.mxu0 0.0
    %261 = vmatprep.subr.mxu0 0.0
    %262 = vmatpush1.msra.mxu0 0.0
    %263 = vmatprep.subr.mxu0 0.0
    %264 = vmatpush1.msra.mxu0 0.0
    %265 = vmatprep.subr.mxu0 0.0
    %266 = vmatpush1.msra.mxu0 0.0
    %267 = vmatprep.subr.mxu0 0.0
    %268 = vmatpush1.msra.mxu0 0.0
    %269 = vmatprep.subr.mxu0 0.0
    %270 = vmatpush1.msra.mxu0 0.0
    %271 = vmatprep.subr.mxu0 0.0
    %272 = vmatpush1.msra.mxu0 0.0
    %273 = vmatprep.subr.mxu0 0.0
    %274 = vmatpush1.msra.mxu0 0.0
    %275 = vmatprep.subr.mxu0 0.0
    %276 = vmatpush1.msra.mxu0 0.0
    %277 = vmatprep.subr.mxu0 0.0
    %278 = vmatpush1.msra.mxu0 0.0
    %279 = vmatprep.subr.mxu0 0.0
    %280 = vmatpush1.msra.mxu0 0.0
    %281 = vmatprep.mubr.f32.mxu0 0.0
    %282 = vmatmul.mubr.f32.gmra.mrb[0].mxu0 %v62
    %v283 = vpop.f32.mrb[0].mxu0
    %v284 = vadd.f32 0.0, %v283
    %v285 = vpop.f32.mrb[0].mxu0
    %286 = vmatprep.mubr.f32.mxu0 0.0
    %287 = vmatmul.mubr.f32.gmra.mrb[0].mxu0 %v65
    %v288 = vpop.f32.mrb[0].mxu0
    %v289 = vadd.f32 0.0, %v288
    %v290 = vpop.f32.mrb[0].mxu0
    %291 = vdwg.mxu0
    %292 = vmatprep.subr.mxu0 0.0
    %293 = vmatpush1.msra.mxu0 %v56
    %294 = vmatprep.subr.mxu0 0.0
    %295 = vmatpush1.msra.mxu0 %v57
    %296 = vmatprep.subr.mxu0 0.0
    %297 = vmatpush1.msra.mxu0 %v58
    %298 = vmatprep.subr.mxu0 0.0
    %299 = vmatpush1.msra.mxu0 %v59
    %300 = vmatprep.subr.mxu0 0.0
    %301 = vmatpush1.msra.mxu0 0.0
    %302 = vmatprep.subr.mxu0 0.0
    %303 = vmatpush1.msra.mxu0 0.0
    %304 = vmatprep.subr.mxu0 0.0
    %305 = vmatpush1.msra.mxu0 0.0
    %306 = vmatprep.subr.mxu0 0.0
    %307 = vmatpush1.msra.mxu0 0.0
    %308 = vmatprep.subr.mxu0 0.0
    %309 = vmatpush1.msra.mxu0 0.0
    %310 = vmatprep.subr.mxu0 0.0
    %311 = vmatpush1.msra.mxu0 0.0
    %312 = vmatprep.subr.mxu0 0.0
    %313 = vmatpush1.msra.mxu0 0.0
    %314 = vmatprep.subr.mxu0 0.0
    %315 = vmatpush1.msra.mxu0 0.0
    %316 = vmatprep.subr.mxu0 0.0
    %317 = vmatpush1.msra.mxu0 0.0
    %318 = vmatprep.subr.mxu0 0.0
    %319 = vmatpush1.msra.mxu0 0.0
    %320 = vmatprep.subr.mxu0 0.0
    %321 = vmatpush1.msra.mxu0 0.0
    %322 = vmatprep.subr.mxu0 0.0
    %323 = vmatpush1.msra.mxu0 0.0
    %324 = vmatprep.subr.mxu0 0.0
    %325 = vmatpush1.msra.mxu0 0.0
    %326 = vmatprep.subr.mxu0 0.0
    %327 = vmatpush1.msra.mxu0 0.0
    %328 = vmatprep.subr.mxu0 0.0
    %329 = vmatpush1.msra.mxu0 0.0
    %330 = vmatprep.subr.mxu0 0.0
    %331 = vmatpush1.msra.mxu0 0.0
    %332 = vmatprep.subr.mxu0 0.0
    %333 = vmatpush1.msra.mxu0 0.0
    %334 = vmatprep.subr.mxu0 0.0
    %335 = vmatpush1.msra.mxu0 0.0
    %336 = vmatprep.subr.mxu0 0.0
    %337 = vmatpush1.msra.mxu0 0.0
    %338 = vmatprep.subr.mxu0 0.0
    %339 = vmatpush1.msra.mxu0 0.0
    %340 = vmatprep.subr.mxu0 0.0
    %341 = vmatpush1.msra.mxu0 0.0
    %342 = vmatprep.subr.mxu0 0.0
    %343 = vmatpush1.msra.mxu0 0.0
    %344 = vmatprep.subr.mxu0 0.0
    %345 = vmatpush1.msra.mxu0 0.0
    %346 = vmatprep.subr.mxu0 0.0
    %347 = vmatpush1.msra.mxu0 0.0
    %348 = vmatprep.subr.mxu0 0.0
    %349 = vmatpush1.msra.mxu0 0.0
    %350 = vmatprep.subr.mxu0 0.0
    %351 = vmatpush1.msra.mxu0 0.0
    %352 = vmatprep.subr.mxu0 0.0
    %353 = vmatpush1.msra.mxu0 0.0
    %354 = vmatprep.subr.mxu0 0.0
    %355 = vmatpush1.msra.mxu0 0.0
    %356 = vmatprep.mubr.f32.mxu0 0.0
    %357 = vmatmul.mubr.f32.gmra.mrb[0].mxu0 %v62
    %v358 = vpop.f32.mrb[0].mxu0
    %v359 = vadd.f32 0.0, %v358
    %v360 = vpop.f32.mrb[0].mxu0
    %361 = vmatprep.mubr.f32.mxu0 0.0
    %362 = vmatmul.mubr.f32.gmra.mrb[0].mxu0 %v65
    %v363 = vpop.f32.mrb[0].mxu0
    %v364 = vadd.f32 0.0, %v363
    %v365 = vpop.f32.mrb[0].mxu0
    %366 = vdwg.mxu0
    %v367 = vld [vmem:[%s3] sm:$0xff]
    %v368 = vld [vmem:[%s3 + $0x8] sm:$0xff]
    %v369 = vld [vmem:[%s3 + $0x10] sm:$0xff]
    %v370 = vld [vmem:[%s3 + $0x18] sm:$0xff]
    %v371 = vld [vmem:[%s3 + $0x20] sm:$0xff]
    %v372 = vld [vmem:[%s3 + $0x28] sm:$0xff]
    %v373 = vld [vmem:[%s3 + $0x30] sm:$0xff]
    %v374 = vld [vmem:[%s3 + $0x38] sm:$0xff]
    %v375 = vld [vmem:[%s3 + $0x40] sm:$0xff]
    %v376 = vld [vmem:[%s3 + $0x48] sm:$0xff]
    %v377 = vld [vmem:[%s3 + $0x50] sm:$0xff]
    %v378 = vld [vmem:[%s3 + $0x58] sm:$0xff]
    %v379 = vld [vmem:[%s3 + $0x60] sm:$0xff]
    %v380 = vld [vmem:[%s3 + $0x68] sm:$0xff]
    %v381 = vld [vmem:[%s3 + $0x70] sm:$0xff]
    %v382 = vld [vmem:[%s3 + $0x78] sm:$0xff]
    %383 = vmatprep.subr.mxu0 0.0
    %384 = vmatpush1.msra.mxu0 %v367
    %385 = vmatprep.subr.mxu0 0.0
    %386 = vmatpush1.msra.mxu0 %v368
    %387 = vmatprep.subr.mxu0 0.0
    %388 = vmatpush1.msra.mxu0 %v369
    %389 = vmatprep.subr.mxu0 0.0
    %390 = vmatpush1.msra.mxu0 %v370
    %391 = vmatprep.subr.mxu0 0.0
    %392 = vmatpush1.msra.mxu0 0.0
    %393 = vmatprep.subr.mxu0 0.0
    %394 = vmatpush1.msra.mxu0 0.0
    %395 = vmatprep.subr.mxu0 0.0
    %396 = vmatpush1.msra.mxu0 0.0
    %397 = vmatprep.subr.mxu0 0.0
    %398 = vmatpush1.msra.mxu0 0.0
    %399 = vmatprep.subr.mxu0 0.0
    %400 = vmatpush1.msra.mxu0 0.0
    %401 = vmatprep.subr.mxu0 0.0
    %402 = vmatpush1.msra.mxu0 0.0
    %403 = vmatprep.subr.mxu0 0.0
    %404 = vmatpush1.msra.mxu0 0.0
    %405 = vmatprep.subr.mxu0 0.0
    %406 = vmatpush1.msra.mxu0 0.0
    %407 = vmatprep.subr.mxu0 0.0
    %408 = vmatpush1.msra.mxu0 0.0
    %409 = vmatprep.subr.mxu0 0.0
    %410 = vmatpush1.msra.mxu0 0.0
    %411 = vmatprep.subr.mxu0 0.0
    %412 = vmatpush1.msra.mxu0 0.0
    %413 = vmatprep.subr.mxu0 0.0
    %414 = vmatpush1.msra.mxu0 0.0
    %415 = vmatprep.subr.mxu0 0.0
    %416 = vmatpush1.msra.mxu0 0.0
    %417 = vmatprep.subr.mxu0 0.0
    %418 = vmatpush1.msra.mxu0 0.0
    %419 = vmatprep.subr.mxu0 0.0
    %420 = vmatpush1.msra.mxu0 0.0
    %421 = vmatprep.subr.mxu0 0.0
    %422 = vmatpush1.msra.mxu0 0.0
    %423 = vmatprep.subr.mxu0 0.0
    %424 = vmatpush1.msra.mxu0 0.0
    %425 = vmatprep.subr.mxu0 0.0
    %426 = vmatpush1.msra.mxu0 0.0
    %427 = vmatprep.subr.mxu0 0.0
    %428 = vmatpush1.msra.mxu0 0.0
    %429 = vmatprep.subr.mxu0 0.0
    %430 = vmatpush1.msra.mxu0 0.0
    %431 = vmatprep.subr.mxu0 0.0
    %432 = vmatpush1.msra.mxu0 0.0
    %433 = vmatprep.subr.mxu0 0.0
    %434 = vmatpush1.msra.mxu0 0.0
    %435 = vmatprep.subr.mxu0 0.0
    %436 = vmatpush1.msra.mxu0 0.0
    %437 = vmatprep.subr.mxu0 0.0
    %438 = vmatpush1.msra.mxu0 0.0
    %439 = vmatprep.subr.mxu0 0.0
    %440 = vmatpush1.msra.mxu0 0.0
    %441 = vmatprep.subr.mxu0 0.0
    %442 = vmatpush1.msra.mxu0 0.0
    %443 = vmatprep.subr.mxu0 0.0
    %444 = vmatpush1.msra.mxu0 0.0
    %445 = vmatprep.subr.mxu0 0.0
    %446 = vmatpush1.msra.mxu0 0.0
    %447 = vmatprep.mubr.f32.mxu0 0.0
    %448 = vmatmul.mubr.f32.gmra.mrb[0].mxu0 %v62
    %v449 = vpop.f32.mrb[0].mxu0
    %v450 = vadd.f32 0.0, %v449
    %v451 = vpop.f32.mrb[0].mxu0
    %452 = vmatprep.mubr.f32.mxu0 0.0
    %453 = vmatmul.mubr.f32.gmra.mrb[0].mxu0 %v65
    %v454 = vpop.f32.mrb[0].mxu0
    %v455 = vadd.f32 0.0, %v454
    %v456 = vpop.f32.mrb[0].mxu0
    %457 = vdwg.mxu0
    %458 = vmatprep.subr.mxu0 0.0
    %459 = vmatpush1.msra.mxu0 %v371
    %460 = vmatprep.subr.mxu0 0.0
    %461 = vmatpush1.msra.mxu0 %v372
    %462 = vmatprep.subr.mxu0 0.0
    %463 = vmatpush1.msra.mxu0 %v373
    %464 = vmatprep.subr.mxu0 0.0
    %465 = vmatpush1.msra.mxu0 %v374
    %466 = vmatprep.subr.mxu0 0.0
    %467 = vmatpush1.msra.mxu0 0.0
    %468 = vmatprep.subr.mxu0 0.0
    %469 = vmatpush1.msra.mxu0 0.0
    %470 = vmatprep.subr.mxu0 0.0
    %471 = vmatpush1.msra.mxu0 0.0
    %472 = vmatprep.subr.mxu0 0.0
    %473 = vmatpush1.msra.mxu0 0.0
    %474 = vmatprep.subr.mxu0 0.0
    %475 = vmatpush1.msra.mxu0 0.0
    %476 = vmatprep.subr.mxu0 0.0
    %477 = vmatpush1.msra.mxu0 0.0
    %478 = vmatprep.subr.mxu0 0.0
    %479 = vmatpush1.msra.mxu0 0.0
    %480 = vmatprep.subr.mxu0 0.0
    %481 = vmatpush1.msra.mxu0 0.0
    %482 = vmatprep.subr.mxu0 0.0
    %483 = vmatpush1.msra.mxu0 0.0
    %484 = vmatprep.subr.mxu0 0.0
    %485 = vmatpush1.msra.mxu0 0.0
    %486 = vmatprep.subr.mxu0 0.0
    %487 = vmatpush1.msra.mxu0 0.0
    %488 = vmatprep.subr.mxu0 0.0
    %489 = vmatpush1.msra.mxu0 0.0
    %490 = vmatprep.subr.mxu0 0.0
    %491 = vmatpush1.msra.mxu0 0.0
    %492 = vmatprep.subr.mxu0 0.0
    %493 = vmatpush1.msra.mxu0 0.0
    %494 = vmatprep.subr.mxu0 0.0
    %495 = vmatpush1.msra.mxu0 0.0
    %496 = vmatprep.subr.mxu0 0.0
    %497 = vmatpush1.msra.mxu0 0.0
    %498 = vmatprep.subr.mxu0 0.0
    %499 = vmatpush1.msra.mxu0 0.0
    %500 = vmatprep.subr.mxu0 0.0
    %501 = vmatpush1.msra.mxu0 0.0
    %502 = vmatprep.subr.mxu0 0.0
    %503 = vmatpush1.msra.mxu0 0.0
    %504 = vmatprep.subr.mxu0 0.0
    %505 = vmatpush1.msra.mxu0 0.0
    %506 = vmatprep.subr.mxu0 0.0
    %507 = vmatpush1.msra.mxu0 0.0
    %508 = vmatprep.subr.mxu0 0.0
    %509 = vmatpush1.msra.mxu0 0.0
    %510 = vmatprep.subr.mxu0 0.0
    %511 = vmatpush1.msra.mxu0 0.0
    %512 = vmatprep.subr.mxu0 0.0
    %513 = vmatpush1.msra.mxu0 0.0
    %514 = vmatprep.subr.mxu0 0.0
    %515 = vmatpush1.msra.mxu0 0.0
    %516 = vmatprep.subr.mxu0 0.0
    %517 = vmatpush1.msra.mxu0 0.0
    %518 = vmatprep.subr.mxu0 0.0
    %519 = vmatpush1.msra.mxu0 0.0
    %520 = vmatprep.subr.mxu0 0.0
    %521 = vmatpush1.msra.mxu0 0.0
    %522 = vmatprep.mubr.f32.mxu0 0.0
    %523 = vmatmul.mubr.f32.gmra.mrb[0].mxu0 %v62
    %v524 = vpop.f32.mrb[0].mxu0
    %v525 = vadd.f32 0.0, %v524
    %v526 = vpop.f32.mrb[0].mxu0
    %527 = vmatprep.mubr.f32.mxu0 0.0
    %528 = vmatmul.mubr.f32.gmra.mrb[0].mxu0 %v65
    %v529 = vpop.f32.mrb[0].mxu0
    %v530 = vadd.f32 0.0, %v529
    %v531 = vpop.f32.mrb[0].mxu0
    %532 = vdwg.mxu0
    %533 = vmatprep.subr.mxu0 0.0
    %534 = vmatpush1.msra.mxu0 %v375
    %535 = vmatprep.subr.mxu0 0.0
    %536 = vmatpush1.msra.mxu0 %v376
    %537 = vmatprep.subr.mxu0 0.0
    %538 = vmatpush1.msra.mxu0 %v377
    %539 = vmatprep.subr.mxu0 0.0
    %540 = vmatpush1.msra.mxu0 %v378
    %541 = vmatprep.subr.mxu0 0.0
    %542 = vmatpush1.msra.mxu0 0.0
    %543 = vmatprep.subr.mxu0 0.0
    %544 = vmatpush1.msra.mxu0 0.0
    %545 = vmatprep.subr.mxu0 0.0
    %546 = vmatpush1.msra.mxu0 0.0
    %547 = vmatprep.subr.mxu0 0.0
    %548 = vmatpush1.msra.mxu0 0.0
    %549 = vmatprep.subr.mxu0 0.0
    %550 = vmatpush1.msra.mxu0 0.0
    %551 = vmatprep.subr.mxu0 0.0
    %552 = vmatpush1.msra.mxu0 0.0
    %553 = vmatprep.subr.mxu0 0.0
    %554 = vmatpush1.msra.mxu0 0.0
    %555 = vmatprep.subr.mxu0 0.0
    %556 = vmatpush1.msra.mxu0 0.0
    %557 = vmatprep.subr.mxu0 0.0
    %558 = vmatpush1.msra.mxu0 0.0
    %559 = vmatprep.subr.mxu0 0.0
    %560 = vmatpush1.msra.mxu0 0.0
    %561 = vmatprep.subr.mxu0 0.0
    %562 = vmatpush1.msra.mxu0 0.0
    %563 = vmatprep.subr.mxu0 0.0
    %564 = vmatpush1.msra.mxu0 0.0
    %565 = vmatprep.subr.mxu0 0.0
    %566 = vmatpush1.msra.mxu0 0.0
    %567 = vmatprep.subr.mxu0 0.0
    %568 = vmatpush1.msra.mxu0 0.0
    %569 = vmatprep.subr.mxu0 0.0
    %570 = vmatpush1.msra.mxu0 0.0
    %571 = vmatprep.subr.mxu0 0.0
    %572 = vmatpush1.msra.mxu0 0.0
    %573 = vmatprep.subr.mxu0 0.0
    %574 = vmatpush1.msra.mxu0 0.0
    %575 = vmatprep.subr.mxu0 0.0
    %576 = vmatpush1.msra.mxu0 0.0
    %577 = vmatprep.subr.mxu0 0.0
    %578 = vmatpush1.msra.mxu0 0.0
    %579 = vmatprep.subr.mxu0 0.0
    %580 = vmatpush1.msra.mxu0 0.0
    %581 = vmatprep.subr.mxu0 0.0
    %582 = vmatpush1.msra.mxu0 0.0
    %583 = vmatprep.subr.mxu0 0.0
    %584 = vmatpush1.msra.mxu0 0.0
    %585 = vmatprep.subr.mxu0 0.0
    %586 = vmatpush1.msra.mxu0 0.0
    %587 = vmatprep.subr.mxu0 0.0
    %588 = vmatpush1.msra.mxu0 0.0
    %589 = vmatprep.subr.mxu0 0.0
    %590 = vmatpush1.msra.mxu0 0.0
    %591 = vmatprep.subr.mxu0 0.0
    %592 = vmatpush1.msra.mxu0 0.0
    %593 = vmatprep.subr.mxu0 0.0
    %594 = vmatpush1.msra.mxu0 0.0
    %595 = vmatprep.subr.mxu0 0.0
    %596 = vmatpush1.msra.mxu0 0.0
    %597 = vmatprep.mubr.f32.mxu0 0.0
    %598 = vmatmul.mubr.f32.gmra.mrb[0].mxu0 %v62
    %v599 = vpop.f32.mrb[0].mxu0
    %v600 = vadd.f32 0.0, %v599
    %v601 = vpop.f32.mrb[0].mxu0
    %602 = vmatprep.mubr.f32.mxu0 0.0
    %603 = vmatmul.mubr.f32.gmra.mrb[0].mxu0 %v65
    %v604 = vpop.f32.mrb[0].mxu0
    %v605 = vadd.f32 0.0, %v604
    %v606 = vpop.f32.mrb[0].mxu0
    %607 = vdwg.mxu0
    %608 = vmatprep.subr.mxu0 0.0
    %609 = vmatpush1.msra.mxu0 %v379
    %610 = vmatprep.subr.mxu0 0.0
    %611 = vmatpush1.msra.mxu0 %v380
    %612 = vmatprep.subr.mxu0 0.0
    %613 = vmatpush1.msra.mxu0 %v381
    %614 = vmatprep.subr.mxu0 0.0
    %615 = vmatpush1.msra.mxu0 %v382
    %616 = vmatprep.subr.mxu0 0.0
    %617 = vmatpush1.msra.mxu0 0.0
    %618 = vmatprep.subr.mxu0 0.0
    %619 = vmatpush1.msra.mxu0 0.0
    %620 = vmatprep.subr.mxu0 0.0
    %621 = vmatpush1.msra.mxu0 0.0
    %622 = vmatprep.subr.mxu0 0.0
    %623 = vmatpush1.msra.mxu0 0.0
    %624 = vmatprep.subr.mxu0 0.0
    %625 = vmatpush1.msra.mxu0 0.0
    %626 = vmatprep.subr.mxu0 0.0
    %627 = vmatpush1.msra.mxu0 0.0
    %628 = vmatprep.subr.mxu0 0.0
    %629 = vmatpush1.msra.mxu0 0.0
    %630 = vmatprep.subr.mxu0 0.0
    %631 = vmatpush1.msra.mxu0 0.0
    %632 = vmatprep.subr.mxu0 0.0
    %633 = vmatpush1.msra.mxu0 0.0
    %634 = vmatprep.subr.mxu0 0.0
    %635 = vmatpush1.msra.mxu0 0.0
    %636 = vmatprep.subr.mxu0 0.0
    %637 = vmatpush1.msra.mxu0 0.0
    %638 = vmatprep.subr.mxu0 0.0
    %639 = vmatpush1.msra.mxu0 0.0
    %640 = vmatprep.subr.mxu0 0.0
    %641 = vmatpush1.msra.mxu0 0.0
    %642 = vmatprep.subr.mxu0 0.0
    %643 = vmatpush1.msra.mxu0 0.0
    %644 = vmatprep.subr.mxu0 0.0
    %645 = vmatpush1.msra.mxu0 0.0
    %646 = vmatprep.subr.mxu0 0.0
    %647 = vmatpush1.msra.mxu0 0.0
    %648 = vmatprep.subr.mxu0 0.0
    %649 = vmatpush1.msra.mxu0 0.0
    %650 = vmatprep.subr.mxu0 0.0
    %651 = vmatpush1.msra.mxu0 0.0
    %652 = vmatprep.subr.mxu0 0.0
    %653 = vmatpush1.msra.mxu0 0.0
    %654 = vmatprep.subr.mxu0 0.0
    %655 = vmatpush1.msra.mxu0 0.0
    %656 = vmatprep.subr.mxu0 0.0
    %657 = vmatpush1.msra.mxu0 0.0
    %658 = vmatprep.subr.mxu0 0.0
    %659 = vmatpush1.msra.mxu0 0.0
    %660 = vmatprep.subr.mxu0 0.0
    %661 = vmatpush1.msra.mxu0 0.0
    %662 = vmatprep.subr.mxu0 0.0
    %663 = vmatpush1.msra.mxu0 0.0
    %664 = vmatprep.subr.mxu0 0.0
    %665 = vmatpush1.msra.mxu0 0.0
    %666 = vmatprep.subr.mxu0 0.0
    %667 = vmatpush1.msra.mxu0 0.0
    %668 = vmatprep.subr.mxu0 0.0
    %669 = vmatpush1.msra.mxu0 0.0
    %670 = vmatprep.subr.mxu0 0.0
    %671 = vmatpush1.msra.mxu0 0.0
    %672 = vmatprep.mubr.f32.mxu0 0.0
    %673 = vmatmul.mubr.f32.gmra.mrb[0].mxu0 %v62
    %v674 = vpop.f32.mrb[0].mxu0
    %v675 = vadd.f32 0.0, %v674
    %v676 = vpop.f32.mrb[0].mxu0
    %677 = vmatprep.mubr.f32.mxu0 0.0
    %678 = vmatmul.mubr.f32.gmra.mrb[0].mxu0 %v65
    %v679 = vpop.f32.mrb[0].mxu0
    %v680 = vadd.f32 0.0, %v679
    %v681 = vpop.f32.mrb[0].mxu0
    %682 = vdwg.mxu0
    %v683 = vld [vmem:[%s4] sm:$0xff]
    %v684 = vld [vmem:[%s4 + $0x8] sm:$0xff]
    %v685 = vld [vmem:[%s4 + $0x10] sm:$0xff]
    %v686 = vld [vmem:[%s4 + $0x18] sm:$0xff]
    %v687 = vld [vmem:[%s4 + $0x20] sm:$0xff]
    %v688 = vld [vmem:[%s4 + $0x28] sm:$0xff]
    %v689 = vld [vmem:[%s4 + $0x30] sm:$0xff]
    %v690 = vld [vmem:[%s4 + $0x38] sm:$0xff]
    %v691 = vld [vmem:[%s4 + $0x40] sm:$0xff]
    %v692 = vld [vmem:[%s4 + $0x48] sm:$0xff]
    %v693 = vld [vmem:[%s4 + $0x50] sm:$0xff]
    %v694 = vld [vmem:[%s4 + $0x58] sm:$0xff]
    %v695 = vld [vmem:[%s4 + $0x60] sm:$0xff]
    %v696 = vld [vmem:[%s4 + $0x68] sm:$0xff]
    %v697 = vld [vmem:[%s4 + $0x70] sm:$0xff]
    %v698 = vld [vmem:[%s4 + $0x78] sm:$0xff]
    %699 = vmatprep.subr.mxu0 0.0
    %700 = vmatpush1.msra.mxu0 %v683
    %701 = vmatprep.subr.mxu0 0.0
    %702 = vmatpush1.msra.mxu0 %v684
    %703 = vmatprep.subr.mxu0 0.0
    %704 = vmatpush1.msra.mxu0 %v685
    %705 = vmatprep.subr.mxu0 0.0
    %706 = vmatpush1.msra.mxu0 %v686
    %707 = vmatprep.subr.mxu0 0.0
    %708 = vmatpush1.msra.mxu0 0.0
    %709 = vmatprep.subr.mxu0 0.0
    %710 = vmatpush1.msra.mxu0 0.0
    %711 = vmatprep.subr.mxu0 0.0
    %712 = vmatpush1.msra.mxu0 0.0
    %713 = vmatprep.subr.mxu0 0.0
    %714 = vmatpush1.msra.mxu0 0.0
    %715 = vmatprep.subr.mxu0 0.0
    %716 = vmatpush1.msra.mxu0 0.0
    %717 = vmatprep.subr.mxu0 0.0
    %718 = vmatpush1.msra.mxu0 0.0
    %719 = vmatprep.subr.mxu0 0.0
    %720 = vmatpush1.msra.mxu0 0.0
    %721 = vmatprep.subr.mxu0 0.0
    %722 = vmatpush1.msra.mxu0 0.0
    %723 = vmatprep.subr.mxu0 0.0
    %724 = vmatpush1.msra.mxu0 0.0
    %725 = vmatprep.subr.mxu0 0.0
    %726 = vmatpush1.msra.mxu0 0.0
    %727 = vmatprep.subr.mxu0 0.0
    %728 = vmatpush1.msra.mxu0 0.0
    %729 = vmatprep.subr.mxu0 0.0
    %730 = vmatpush1.msra.mxu0 0.0
    %731 = vmatprep.subr.mxu0 0.0
    %732 = vmatpush1.msra.mxu0 0.0
    %733 = vmatprep.subr.mxu0 0.0
    %734 = vmatpush1.msra.mxu0 0.0
    %735 = vmatprep.subr.mxu0 0.0
    %736 = vmatpush1.msra.mxu0 0.0
    %737 = vmatprep.subr.mxu0 0.0
    %738 = vmatpush1.msra.mxu0 0.0
    %739 = vmatprep.subr.mxu0 0.0
    %740 = vmatpush1.msra.mxu0 0.0
    %741 = vmatprep.subr.mxu0 0.0
    %742 = vmatpush1.msra.mxu0 0.0
    %743 = vmatprep.subr.mxu0 0.0
    %744 = vmatpush1.msra.mxu0 0.0
    %745 = vmatprep.subr.mxu0 0.0
    %746 = vmatpush1.msra.mxu0 0.0
    %747 = vmatprep.subr.mxu0 0.0
    %748 = vmatpush1.msra.mxu0 0.0
    %749 = vmatprep.subr.mxu0 0.0
    %750 = vmatpush1.msra.mxu0 0.0
    %751 = vmatprep.subr.mxu0 0.0
    %752 = vmatpush1.msra.mxu0 0.0
    %753 = vmatprep.subr.mxu0 0.0
    %754 = vmatpush1.msra.mxu0 0.0
    %755 = vmatprep.subr.mxu0 0.0
    %756 = vmatpush1.msra.mxu0 0.0
    %757 = vmatprep.subr.mxu0 0.0
    %758 = vmatpush1.msra.mxu0 0.0
    %759 = vmatprep.subr.mxu0 0.0
    %760 = vmatpush1.msra.mxu0 0.0
    %761 = vmatprep.subr.mxu0 0.0
    %762 = vmatpush1.msra.mxu0 0.0
    %763 = vmatprep.mubr.f32.mxu0 0.0
    %764 = vmatmul.mubr.f32.gmra.mrb[0].mxu0 %v62
    %v765 = vpop.f32.mrb[0].mxu0
    %v766 = vadd.f32 0.0, %v765
    %v767 = vpop.f32.mrb[0].mxu0
    %768 = vmatprep.mubr.f32.mxu0 0.0
    %769 = vmatmul.mubr.f32.gmra.mrb[0].mxu0 %v65
    %v770 = vpop.f32.mrb[0].mxu0
    %v771 = vadd.f32 0.0, %v770
    %v772 = vpop.f32.mrb[0].mxu0
    %773 = vdwg.mxu0
    %774 = vmatprep.subr.mxu0 0.0
    %775 = vmatpush1.msra.mxu0 %v687
    %776 = vmatprep.subr.mxu0 0.0
    %777 = vmatpush1.msra.mxu0 %v688
    %778 = vmatprep.subr.mxu0 0.0
    %779 = vmatpush1.msra.mxu0 %v689
    %780 = vmatprep.subr.mxu0 0.0
    %781 = vmatpush1.msra.mxu0 %v690
    %782 = vmatprep.subr.mxu0 0.0
    %783 = vmatpush1.msra.mxu0 0.0
    %784 = vmatprep.subr.mxu0 0.0
    %785 = vmatpush1.msra.mxu0 0.0
    %786 = vmatprep.subr.mxu0 0.0
    %787 = vmatpush1.msra.mxu0 0.0
    %788 = vmatprep.subr.mxu0 0.0
    %789 = vmatpush1.msra.mxu0 0.0
    %790 = vmatprep.subr.mxu0 0.0
    %791 = vmatpush1.msra.mxu0 0.0
    %792 = vmatprep.subr.mxu0 0.0
    %793 = vmatpush1.msra.mxu0 0.0
    %794 = vmatprep.subr.mxu0 0.0
    %795 = vmatpush1.msra.mxu0 0.0
    %796 = vmatprep.subr.mxu0 0.0
    %797 = vmatpush1.msra.mxu0 0.0
    %798 = vmatprep.subr.mxu0 0.0
    %799 = vmatpush1.msra.mxu0 0.0
    %800 = vmatprep.subr.mxu0 0.0
    %801 = vmatpush1.msra.mxu0 0.0
    %802 = vmatprep.subr.mxu0 0.0
    %803 = vmatpush1.msra.mxu0 0.0
    %804 = vmatprep.subr.mxu0 0.0
    %805 = vmatpush1.msra.mxu0 0.0
    %806 = vmatprep.subr.mxu0 0.0
    %807 = vmatpush1.msra.mxu0 0.0
    %808 = vmatprep.subr.mxu0 0.0
    %809 = vmatpush1.msra.mxu0 0.0
    %810 = vmatprep.subr.mxu0 0.0
    %811 = vmatpush1.msra.mxu0 0.0
    %812 = vmatprep.subr.mxu0 0.0
    %813 = vmatpush1.msra.mxu0 0.0
    %814 = vmatprep.subr.mxu0 0.0
    %815 = vmatpush1.msra.mxu0 0.0
    %816 = vmatprep.subr.mxu0 0.0
    %817 = vmatpush1.msra.mxu0 0.0
    %818 = vmatprep.subr.mxu0 0.0
    %819 = vmatpush1.msra.mxu0 0.0
    %820 = vmatprep.subr.mxu0 0.0
    %821 = vmatpush1.msra.mxu0 0.0
    %822 = vmatprep.subr.mxu0 0.0
    %823 = vmatpush1.msra.mxu0 0.0
    %824 = vmatprep.subr.mxu0 0.0
    %825 = vmatpush1.msra.mxu0 0.0
    %826 = vmatprep.subr.mxu0 0.0
    %827 = vmatpush1.msra.mxu0 0.0
    %828 = vmatprep.subr.mxu0 0.0
    %829 = vmatpush1.msra.mxu0 0.0
    %830 = vmatprep.subr.mxu0 0.0
    %831 = vmatpush1.msra.mxu0 0.0
    %832 = vmatprep.subr.mxu0 0.0
    %833 = vmatpush1.msra.mxu0 0.0
    %834 = vmatprep.subr.mxu0 0.0
    %835 = vmatpush1.msra.mxu0 0.0
    %836 = vmatprep.subr.mxu0 0.0
    %837 = vmatpush1.msra.mxu0 0.0
    %838 = vmatprep.mubr.f32.mxu0 0.0
    %839 = vmatmul.mubr.f32.gmra.mrb[0].mxu0 %v62
    %v840 = vpop.f32.mrb[0].mxu0
    %v841 = vadd.f32 0.0, %v840
    %v842 = vpop.f32.mrb[0].mxu0
    %843 = vmatprep.mubr.f32.mxu0 0.0
    %844 = vmatmul.mubr.f32.gmra.mrb[0].mxu0 %v65
    %v845 = vpop.f32.mrb[0].mxu0
    %v846 = vadd.f32 0.0, %v845
    %v847 = vpop.f32.mrb[0].mxu0
    %848 = vdwg.mxu0
    %849 = vmatprep.subr.mxu0 0.0
    %850 = vmatpush1.msra.mxu0 %v691
    %851 = vmatprep.subr.mxu0 0.0
    %852 = vmatpush1.msra.mxu0 %v692
    %853 = vmatprep.subr.mxu0 0.0
    %854 = vmatpush1.msra.mxu0 %v693
    %855 = vmatprep.subr.mxu0 0.0
    %856 = vmatpush1.msra.mxu0 %v694
    %857 = vmatprep.subr.mxu0 0.0
    %858 = vmatpush1.msra.mxu0 0.0
    %859 = vmatprep.subr.mxu0 0.0
    %860 = vmatpush1.msra.mxu0 0.0
    %861 = vmatprep.subr.mxu0 0.0
    %862 = vmatpush1.msra.mxu0 0.0
    %863 = vmatprep.subr.mxu0 0.0
    %864 = vmatpush1.msra.mxu0 0.0
    %865 = vmatprep.subr.mxu0 0.0
    %866 = vmatpush1.msra.mxu0 0.0
    %867 = vmatprep.subr.mxu0 0.0
    %868 = vmatpush1.msra.mxu0 0.0
    %869 = vmatprep.subr.mxu0 0.0
    %870 = vmatpush1.msra.mxu0 0.0
    %871 = vmatprep.subr.mxu0 0.0
    %872 = vmatpush1.msra.mxu0 0.0
    %873 = vmatprep.subr.mxu0 0.0
    %874 = vmatpush1.msra.mxu0 0.0
    %875 = vmatprep.subr.mxu0 0.0
    %876 = vmatpush1.msra.mxu0 0.0
    %877 = vmatprep.subr.mxu0 0.0
    %878 = vmatpush1.msra.mxu0 0.0
    %879 = vmatprep.subr.mxu0 0.0
    %880 = vmatpush1.msra.mxu0 0.0
    %881 = vmatprep.subr.mxu0 0.0
    %882 = vmatpush1.msra.mxu0 0.0
    %883 = vmatprep.subr.mxu0 0.0
    %884 = vmatpush1.msra.mxu0 0.0
    %885 = vmatprep.subr.mxu0 0.0
    %886 = vmatpush1.msra.mxu0 0.0
    %887 = vmatprep.subr.mxu0 0.0
    %888 = vmatpush1.msra.mxu0 0.0
    %889 = vmatprep.subr.mxu0 0.0
    %890 = vmatpush1.msra.mxu0 0.0
    %891 = vmatprep.subr.mxu0 0.0
    %892 = vmatpush1.msra.mxu0 0.0
    %893 = vmatprep.subr.mxu0 0.0
    %894 = vmatpush1.msra.mxu0 0.0
    %895 = vmatprep.subr.mxu0 0.0
    %896 = vmatpush1.msra.mxu0 0.0
    %897 = vmatprep.subr.mxu0 0.0
    %898 = vmatpush1.msra.mxu0 0.0
    %899 = vmatprep.subr.mxu0 0.0
    %900 = vmatpush1.msra.mxu0 0.0
    %901 = vmatprep.subr.mxu0 0.0
    %902 = vmatpush1.msra.mxu0 0.0
    %903 = vmatprep.subr.mxu0 0.0
    %904 = vmatpush1.msra.mxu0 0.0
    %905 = vmatprep.subr.mxu0 0.0
    %906 = vmatpush1.msra.mxu0 0.0
    %907 = vmatprep.subr.mxu0 0.0
    %908 = vmatpush1.msra.mxu0 0.0
    %909 = vmatprep.subr.mxu0 0.0
    %910 = vmatpush1.msra.mxu0 0.0
    %911 = vmatprep.subr.mxu0 0.0
    %912 = vmatpush1.msra.mxu0 0.0
    %913 = vmatprep.mubr.f32.mxu0 0.0
    %914 = vmatmul.mubr.f32.gmra.mrb[0].mxu0 %v62
    %v915 = vpop.f32.mrb[0].mxu0
    %v916 = vadd.f32 0.0, %v915
    %v917 = vpop.f32.mrb[0].mxu0
    %918 = vmatprep.mubr.f32.mxu0 0.0
    %919 = vmatmul.mubr.f32.gmra.mrb[0].mxu0 %v65
    %v920 = vpop.f32.mrb[0].mxu0
    %v921 = vadd.f32 0.0, %v920
    %v922 = vpop.f32.mrb[0].mxu0
    %923 = vdwg.mxu0
    %924 = vmatprep.subr.mxu0 0.0
    %925 = vmatpush1.msra.mxu0 %v695
    %926 = vmatprep.subr.mxu0 0.0
    %927 = vmatpush1.msra.mxu0 %v696
    %928 = vmatprep.subr.mxu0 0.0
    %929 = vmatpush1.msra.mxu0 %v697
    %930 = vmatprep.subr.mxu0 0.0
    %931 = vmatpush1.msra.mxu0 %v698
    %932 = vmatprep.subr.mxu0 0.0
    %933 = vmatpush1.msra.mxu0 0.0
    %934 = vmatprep.subr.mxu0 0.0
    %935 = vmatpush1.msra.mxu0 0.0
    %936 = vmatprep.subr.mxu0 0.0
    %937 = vmatpush1.msra.mxu0 0.0
    %938 = vmatprep.subr.mxu0 0.0
    %939 = vmatpush1.msra.mxu0 0.0
    %940 = vmatprep.subr.mxu0 0.0
    %941 = vmatpush1.msra.mxu0 0.0
    %942 = vmatprep.subr.mxu0 0.0
    %943 = vmatpush1.msra.mxu0 0.0
    %944 = vmatprep.subr.mxu0 0.0
    %945 = vmatpush1.msra.mxu0 0.0
    %946 = vmatprep.subr.mxu0 0.0
    %947 = vmatpush1.msra.mxu0 0.0
    %948 = vmatprep.subr.mxu0 0.0
    %949 = vmatpush1.msra.mxu0 0.0
    %950 = vmatprep.subr.mxu0 0.0
    %951 = vmatpush1.msra.mxu0 0.0
    %952 = vmatprep.subr.mxu0 0.0
    %953 = vmatpush1.msra.mxu0 0.0
    %954 = vmatprep.subr.mxu0 0.0
    %955 = vmatpush1.msra.mxu0 0.0
    %956 = vmatprep.subr.mxu0 0.0
    %957 = vmatpush1.msra.mxu0 0.0
    %958 = vmatprep.subr.mxu0 0.0
    %959 = vmatpush1.msra.mxu0 0.0
    %960 = vmatprep.subr.mxu0 0.0
    %961 = vmatpush1.msra.mxu0 0.0
    %962 = vmatprep.subr.mxu0 0.0
    %963 = vmatpush1.msra.mxu0 0.0
    %964 = vmatprep.subr.mxu0 0.0
    %965 = vmatpush1.msra.mxu0 0.0
    %966 = vmatprep.subr.mxu0 0.0
    %967 = vmatpush1.msra.mxu0 0.0
    %968 = vmatprep.subr.mxu0 0.0
    %969 = vmatpush1.msra.mxu0 0.0
    %970 = vmatprep.subr.mxu0 0.0
    %971 = vmatpush1.msra.mxu0 0.0
    %972 = vmatprep.subr.mxu0 0.0
    %973 = vmatpush1.msra.mxu0 0.0
    %974 = vmatprep.subr.mxu0 0.0
    %975 = vmatpush1.msra.mxu0 0.0
    %976 = vmatprep.subr.mxu0 0.0
    %977 = vmatpush1.msra.mxu0 0.0
    %978 = vmatprep.subr.mxu0 0.0
    %979 = vmatpush1.msra.mxu0 0.0
    %980 = vmatprep.subr.mxu0 0.0
    %981 = vmatpush1.msra.mxu0 0.0
    %982 = vmatprep.subr.mxu0 0.0
    %983 = vmatpush1.msra.mxu0 0.0
    %984 = vmatprep.subr.mxu0 0.0
    %985 = vmatpush1.msra.mxu0 0.0
    %986 = vmatprep.subr.mxu0 0.0
    %987 = vmatpush1.msra.mxu0 0.0
    %988 = vmatprep.mubr.f32.mxu0 0.0
    %989 = vmatmul.mubr.f32.gmra.mrb[0].mxu0 %v62
    %v990 = vpop.f32.mrb[0].mxu0
    %v991 = vadd.f32 0.0, %v990
    %v992 = vpop.f32.mrb[0].mxu0
    %993 = vmatprep.mubr.f32.mxu0 0.0
    %994 = vmatmul.mubr.f32.gmra.mrb[0].mxu0 %v65
    %v995 = vpop.f32.mrb[0].mxu0
    %v996 = vadd.f32 0.0, %v995
    %v997 = vpop.f32.mrb[0].mxu0
    %998 = vdwg.mxu0
    %v999 = vld [vmem:[%s1] sm:$0x1]
    %v1001 = vlaneseq
    %v1002 = vshrl.u32 %v1001, 7
    %v1003 = vsub.s32 0, %v1002
    %v1004 = vrot.slane %v999, %v1003
    %vm1006 = vcmask 64512
    %v1008 = vsel %vm1006, %v134, 0
    %v1011 = vsel %vm1006, %v450, 0
    %1013 = vmatprep.subr.mxu0 0.0
    %1014 = vmatpush1.xpose.msra.mxu0 %v1011
    %1015 = vmatprep.subr.mxu0 0.0
    %1016 = vmatpush1.xpose.msra.mxu0 0.0
    %1017 = vmatprep.subr.mxu0 0.0
    %1018 = vmatpush1.xpose.msra.mxu0 0.0
    %1019 = vmatprep.subr.mxu0 0.0
    %1020 = vmatpush1.xpose.msra.mxu0 0.0
    %1021 = vmatprep.subr.mxu0 0.0
    %1022 = vmatpush1.xpose.msra.mxu0 0.0
    %1023 = vmatprep.subr.mxu0 0.0
    %1024 = vmatpush1.xpose.msra.mxu0 0.0
    %1025 = vmatprep.subr.mxu0 0.0
    %1026 = vmatpush1.xpose.msra.mxu0 0.0
    %1027 = vmatprep.subr.mxu0 0.0
    %1028 = vmatpush1.xpose.msra.mxu0 0.0
    %1029 = vmatprep.subr.mxu0 0.0
    %1030 = vmatpush1.xpose.msra.mxu0 0.0
    %1031 = vmatprep.subr.mxu0 0.0
    %1032 = vmatpush1.xpose.msra.mxu0 0.0
    %1033 = vmatprep.subr.mxu0 0.0
    %1034 = vmatpush1.xpose.msra.mxu0 0.0
    %1035 = vmatprep.subr.mxu0 0.0
    %1036 = vmatpush1.xpose.msra.mxu0 0.0
    %1037 = vmatprep.subr.mxu0 0.0
    %1038 = vmatpush1.xpose.msra.mxu0 0.0
    %1039 = vmatprep.subr.mxu0 0.0
    %1040 = vmatpush1.xpose.msra.mxu0 0.0
    %1041 = vmatprep.subr.mxu0 0.0
    %1042 = vmatpush1.xpose.msra.mxu0 0.0
    %1043 = vmatprep.subr.mxu0 0.0
    %1044 = vmatpush1.xpose.msra.mxu0 0.0
    %1045 = vmatprep.subr.mxu0 0.0
    %1046 = vmatpush1.xpose.msra.mxu0 0.0
    %1047 = vmatprep.subr.mxu0 0.0
    %1048 = vmatpush1.xpose.msra.mxu0 0.0
    %1049 = vmatprep.subr.mxu0 0.0
    %1050 = vmatpush1.xpose.msra.mxu0 0.0
    %1051 = vmatprep.subr.mxu0 0.0
    %1052 = vmatpush1.xpose.msra.mxu0 0.0
    %1053 = vmatprep.subr.mxu0 0.0
    %1054 = vmatpush1.xpose.msra.mxu0 0.0
    %1055 = vmatprep.subr.mxu0 0.0
    %1056 = vmatpush1.xpose.msra.mxu0 0.0
    %1057 = vmatprep.subr.mxu0 0.0
    %1058 = vmatpush1.xpose.msra.mxu0 0.0
    %1059 = vmatprep.subr.mxu0 0.0
    %1060 = vmatpush1.xpose.msra.mxu0 0.0
    %1061 = vmatprep.subr.mxu0 0.0
    %1062 = vmatpush1.xpose.msra.mxu0 0.0
    %1063 = vmatprep.subr.mxu0 0.0
    %1064 = vmatpush1.xpose.msra.mxu0 0.0
    %1065 = vmatprep.subr.mxu0 0.0
    %1066 = vmatpush1.xpose.msra.mxu0 0.0
    %1067 = vmatprep.subr.mxu0 0.0
    %1068 = vmatpush1.xpose.msra.mxu0 0.0
    %1069 = vmatprep.subr.mxu0 0.0
    %1070 = vmatpush1.xpose.msra.mxu0 0.0
    %1071 = vmatprep.subr.mxu0 0.0
    %1072 = vmatpush1.xpose.msra.mxu0 0.0
    %1073 = vmatprep.subr.mxu0 0.0
    %1074 = vmatpush1.xpose.msra.mxu0 0.0
    %1075 = vmatprep.subr.mxu0 0.0
    %1076 = vmatpush1.xpose.msra.mxu0 0.0
    %1077 = vmatprep.mubr.f32.mxu0 0.0
    %1078 = vmatmul.mubr.f32.gmra.mrb[0].mxu0 %v1008
    %v1079 = vpop.f32.mrb[0].mxu0
    %v1080 = vadd.f32 %v1004, %v1079
    %v1081 = vpop.f32.mrb[0].mxu0
    %1082 = vdwg.mxu0
    %v1084 = vsel %vm1006, %v209, 0
    %v1087 = vsel %vm1006, %v525, 0
    %1089 = vmatprep.subr.mxu0 0.0
    %1090 = vmatpush1.xpose.msra.mxu0 %v1087
    %1091 = vmatprep.subr.mxu0 0.0
    %1092 = vmatpush1.xpose.msra.mxu0 0.0
    %1093 = vmatprep.subr.mxu0 0.0
    %1094 = vmatpush1.xpose.msra.mxu0 0.0
    %1095 = vmatprep.subr.mxu0 0.0
    %1096 = vmatpush1.xpose.msra.mxu0 0.0
    %1097 = vmatprep.subr.mxu0 0.0
    %1098 = vmatpush1.xpose.msra.mxu0 0.0
    %1099 = vmatprep.subr.mxu0 0.0
    %1100 = vmatpush1.xpose.msra.mxu0 0.0
    %1101 = vmatprep.subr.mxu0 0.0
    %1102 = vmatpush1.xpose.msra.mxu0 0.0
    %1103 = vmatprep.subr.mxu0 0.0
    %1104 = vmatpush1.xpose.msra.mxu0 0.0
    %1105 = vmatprep.subr.mxu0 0.0
    %1106 = vmatpush1.xpose.msra.mxu0 0.0
    %1107 = vmatprep.subr.mxu0 0.0
    %1108 = vmatpush1.xpose.msra.mxu0 0.0
    %1109 = vmatprep.subr.mxu0 0.0
    %1110 = vmatpush1.xpose.msra.mxu0 0.0
    %1111 = vmatprep.subr.mxu0 0.0
    %1112 = vmatpush1.xpose.msra.mxu0 0.0
    %1113 = vmatprep.subr.mxu0 0.0
    %1114 = vmatpush1.xpose.msra.mxu0 0.0
    %1115 = vmatprep.subr.mxu0 0.0
    %1116 = vmatpush1.xpose.msra.mxu0 0.0
    %1117 = vmatprep.subr.mxu0 0.0
    %1118 = vmatpush1.xpose.msra.mxu0 0.0
    %1119 = vmatprep.subr.mxu0 0.0
    %1120 = vmatpush1.xpose.msra.mxu0 0.0
    %1121 = vmatprep.subr.mxu0 0.0
    %1122 = vmatpush1.xpose.msra.mxu0 0.0
    %1123 = vmatprep.subr.mxu0 0.0
    %1124 = vmatpush1.xpose.msra.mxu0 0.0
    %1125 = vmatprep.subr.mxu0 0.0
    %1126 = vmatpush1.xpose.msra.mxu0 0.0
    %1127 = vmatprep.subr.mxu0 0.0
    %1128 = vmatpush1.xpose.msra.mxu0 0.0
    %1129 = vmatprep.subr.mxu0 0.0
    %1130 = vmatpush1.xpose.msra.mxu0 0.0
    %1131 = vmatprep.subr.mxu0 0.0
    %1132 = vmatpush1.xpose.msra.mxu0 0.0
    %1133 = vmatprep.subr.mxu0 0.0
    %1134 = vmatpush1.xpose.msra.mxu0 0.0
    %1135 = vmatprep.subr.mxu0 0.0
    %1136 = vmatpush1.xpose.msra.mxu0 0.0
    %1137 = vmatprep.subr.mxu0 0.0
    %1138 = vmatpush1.xpose.msra.mxu0 0.0
    %1139 = vmatprep.subr.mxu0 0.0
    %1140 = vmatpush1.xpose.msra.mxu0 0.0
    %1141 = vmatprep.subr.mxu0 0.0
    %1142 = vmatpush1.xpose.msra.mxu0 0.0
    %1143 = vmatprep.subr.mxu0 0.0
    %1144 = vmatpush1.xpose.msra.mxu0 0.0
    %1145 = vmatprep.subr.mxu0 0.0
    %1146 = vmatpush1.xpose.msra.mxu0 0.0
    %1147 = vmatprep.subr.mxu0 0.0
    %1148 = vmatpush1.xpose.msra.mxu0 0.0
    %1149 = vmatprep.subr.mxu0 0.0
    %1150 = vmatpush1.xpose.msra.mxu0 0.0
    %1151 = vmatprep.subr.mxu0 0.0
    %1152 = vmatpush1.xpose.msra.mxu0 0.0
    %1153 = vmatprep.mubr.f32.mxu0 0.0
    %1154 = vmatmul.mubr.f32.gmra.mrb[0].mxu0 %v1084
    %v1155 = vpop.f32.mrb[0].mxu0
    %v1156 = vadd.f32 %v1004, %v1155
    %v1157 = vpop.f32.mrb[0].mxu0
    %1158 = vdwg.mxu0
    %v1160 = vsel %vm1006, %v284, 0
    %v1163 = vsel %vm1006, %v600, 0
    %1165 = vmatprep.subr.mxu0 0.0
    %1166 = vmatpush1.xpose.msra.mxu0 %v1163
    %1167 = vmatprep.subr.mxu0 0.0
    %1168 = vmatpush1.xpose.msra.mxu0 0.0
    %1169 = vmatprep.subr.mxu0 0.0
    %1170 = vmatpush1.xpose.msra.mxu0 0.0
    %1171 = vmatprep.subr.mxu0 0.0
    %1172 = vmatpush1.xpose.msra.mxu0 0.0
    %1173 = vmatprep.subr.mxu0 0.0
    %1174 = vmatpush1.xpose.msra.mxu0 0.0
    %1175 = vmatprep.subr.mxu0 0.0
    %1176 = vmatpush1.xpose.msra.mxu0 0.0
    %1177 = vmatprep.subr.mxu0 0.0
    %1178 = vmatpush1.xpose.msra.mxu0 0.0
    %1179 = vmatprep.subr.mxu0 0.0
    %1180 = vmatpush1.xpose.msra.mxu0 0.0
    %1181 = vmatprep.subr.mxu0 0.0
    %1182 = vmatpush1.xpose.msra.mxu0 0.0
    %1183 = vmatprep.subr.mxu0 0.0
    %1184 = vmatpush1.xpose.msra.mxu0 0.0
    %1185 = vmatprep.subr.mxu0 0.0
    %1186 = vmatpush1.xpose.msra.mxu0 0.0
    %1187 = vmatprep.subr.mxu0 0.0
    %1188 = vmatpush1.xpose.msra.mxu0 0.0
    %1189 = vmatprep.subr.mxu0 0.0
    %1190 = vmatpush1.xpose.msra.mxu0 0.0
    %1191 = vmatprep.subr.mxu0 0.0
    %1192 = vmatpush1.xpose.msra.mxu0 0.0
    %1193 = vmatprep.subr.mxu0 0.0
    %1194 = vmatpush1.xpose.msra.mxu0 0.0
    %1195 = vmatprep.subr.mxu0 0.0
    %1196 = vmatpush1.xpose.msra.mxu0 0.0
    %1197 = vmatprep.subr.mxu0 0.0
    %1198 = vmatpush1.xpose.msra.mxu0 0.0
    %1199 = vmatprep.subr.mxu0 0.0
    %1200 = vmatpush1.xpose.msra.mxu0 0.0
    %1201 = vmatprep.subr.mxu0 0.0
    %1202 = vmatpush1.xpose.msra.mxu0 0.0
    %1203 = vmatprep.subr.mxu0 0.0
    %1204 = vmatpush1.xpose.msra.mxu0 0.0
    %1205 = vmatprep.subr.mxu0 0.0
    %1206 = vmatpush1.xpose.msra.mxu0 0.0
    %1207 = vmatprep.subr.mxu0 0.0
    %1208 = vmatpush1.xpose.msra.mxu0 0.0
    %1209 = vmatprep.subr.mxu0 0.0
    %1210 = vmatpush1.xpose.msra.mxu0 0.0
    %1211 = vmatprep.subr.mxu0 0.0
    %1212 = vmatpush1.xpose.msra.mxu0 0.0
    %1213 = vmatprep.subr.mxu0 0.0
    %1214 = vmatpush1.xpose.msra.mxu0 0.0
    %1215 = vmatprep.subr.mxu0 0.0
    %1216 = vmatpush1.xpose.msra.mxu0 0.0
    %1217 = vmatprep.subr.mxu0 0.0
    %1218 = vmatpush1.xpose.msra.mxu0 0.0
    %1219 = vmatprep.subr.mxu0 0.0
    %1220 = vmatpush1.xpose.msra.mxu0 0.0
    %1221 = vmatprep.subr.mxu0 0.0
    %1222 = vmatpush1.xpose.msra.mxu0 0.0
    %1223 = vmatprep.subr.mxu0 0.0
    %1224 = vmatpush1.xpose.msra.mxu0 0.0
    %1225 = vmatprep.subr.mxu0 0.0
    %1226 = vmatpush1.xpose.msra.mxu0 0.0
    %1227 = vmatprep.subr.mxu0 0.0
    %1228 = vmatpush1.xpose.msra.mxu0 0.0
    %1229 = vmatprep.mubr.f32.mxu0 0.0
    %1230 = vmatmul.mubr.f32.gmra.mrb[0].mxu0 %v1160
    %v1231 = vpop.f32.mrb[0].mxu0
    %v1232 = vadd.f32 %v1004, %v1231
    %v1233 = vpop.f32.mrb[0].mxu0
    %1234 = vdwg.mxu0
    %v1236 = vsel %vm1006, %v359, 0
    %v1239 = vsel %vm1006, %v675, 0
    %1241 = vmatprep.subr.mxu0 0.0
    %1242 = vmatpush1.xpose.msra.mxu0 %v1239
    %1243 = vmatprep.subr.mxu0 0.0
    %1244 = vmatpush1.xpose.msra.mxu0 0.0
    %1245 = vmatprep.subr.mxu0 0.0
    %1246 = vmatpush1.xpose.msra.mxu0 0.0
    %1247 = vmatprep.subr.mxu0 0.0
    %1248 = vmatpush1.xpose.msra.mxu0 0.0
    %1249 = vmatprep.subr.mxu0 0.0
    %1250 = vmatpush1.xpose.msra.mxu0 0.0
    %1251 = vmatprep.subr.mxu0 0.0
    %1252 = vmatpush1.xpose.msra.mxu0 0.0
    %1253 = vmatprep.subr.mxu0 0.0
    %1254 = vmatpush1.xpose.msra.mxu0 0.0
    %1255 = vmatprep.subr.mxu0 0.0
    %1256 = vmatpush1.xpose.msra.mxu0 0.0
    %1257 = vmatprep.subr.mxu0 0.0
    %1258 = vmatpush1.xpose.msra.mxu0 0.0
    %1259 = vmatprep.subr.mxu0 0.0
    %1260 = vmatpush1.xpose.msra.mxu0 0.0
    %1261 = vmatprep.subr.mxu0 0.0
    %1262 = vmatpush1.xpose.msra.mxu0 0.0
    %1263 = vmatprep.subr.mxu0 0.0
    %1264 = vmatpush1.xpose.msra.mxu0 0.0
    %1265 = vmatprep.subr.mxu0 0.0
    %1266 = vmatpush1.xpose.msra.mxu0 0.0
    %1267 = vmatprep.subr.mxu0 0.0
    %1268 = vmatpush1.xpose.msra.mxu0 0.0
    %1269 = vmatprep.subr.mxu0 0.0
    %1270 = vmatpush1.xpose.msra.mxu0 0.0
    %1271 = vmatprep.subr.mxu0 0.0
    %1272 = vmatpush1.xpose.msra.mxu0 0.0
    %1273 = vmatprep.subr.mxu0 0.0
    %1274 = vmatpush1.xpose.msra.mxu0 0.0
    %1275 = vmatprep.subr.mxu0 0.0
    %1276 = vmatpush1.xpose.msra.mxu0 0.0
    %1277 = vmatprep.subr.mxu0 0.0
    %1278 = vmatpush1.xpose.msra.mxu0 0.0
    %1279 = vmatprep.subr.mxu0 0.0
    %1280 = vmatpush1.xpose.msra.mxu0 0.0
    %1281 = vmatprep.subr.mxu0 0.0
    %1282 = vmatpush1.xpose.msra.mxu0 0.0
    %1283 = vmatprep.subr.mxu0 0.0
    %1284 = vmatpush1.xpose.msra.mxu0 0.0
    %1285 = vmatprep.subr.mxu0 0.0
    %1286 = vmatpush1.xpose.msra.mxu0 0.0
    %1287 = vmatprep.subr.mxu0 0.0
    %1288 = vmatpush1.xpose.msra.mxu0 0.0
    %1289 = vmatprep.subr.mxu0 0.0
    %1290 = vmatpush1.xpose.msra.mxu0 0.0
    %1291 = vmatprep.subr.mxu0 0.0
    %1292 = vmatpush1.xpose.msra.mxu0 0.0
    %1293 = vmatprep.subr.mxu0 0.0
    %1294 = vmatpush1.xpose.msra.mxu0 0.0
    %1295 = vmatprep.subr.mxu0 0.0
    %1296 = vmatpush1.xpose.msra.mxu0 0.0
    %1297 = vmatprep.subr.mxu0 0.0
    %1298 = vmatpush1.xpose.msra.mxu0 0.0
    %1299 = vmatprep.subr.mxu0 0.0
    %1300 = vmatpush1.xpose.msra.mxu0 0.0
    %1301 = vmatprep.subr.mxu0 0.0
    %1302 = vmatpush1.xpose.msra.mxu0 0.0
    %1303 = vmatprep.subr.mxu0 0.0
    %1304 = vmatpush1.xpose.msra.mxu0 0.0
    %1305 = vmatprep.mubr.f32.mxu0 0.0
    %1306 = vmatmul.mubr.f32.gmra.mrb[0].mxu0 %v1236
    %v1307 = vpop.f32.mrb[0].mxu0
    %v1308 = vadd.f32 %v1004, %v1307
    %v1309 = vpop.f32.mrb[0].mxu0
    %1310 = vdwg.mxu0
    %v1311 = vsel %vm1006, %v1080, -inf
    %1312 = vmax.xlane.f32.xlu0 %v1311
    %v1313 = vpop.xlane.xlu0 %1312
    %v1314 = vsel %vm1006, %v1156, -inf
    %1315 = vmax.xlane.f32.xlu0 %v1314
    %v1316 = vpop.xlane.xlu0 %1315
    %v1317 = vsel %vm1006, %v1232, -inf
    %1318 = vmax.xlane.f32.xlu0 %v1317
    %v1319 = vpop.xlane.xlu0 %1318
    %v1320 = vsel %vm1006, %v1308, -inf
    %1321 = vmax.xlane.f32.xlu0 %v1320
    %v1322 = vpop.xlane.xlu0 %1321
    %v1323 = vsub.f32 %v1080, %v1313
    %v1324 = vsub.f32 %v1156, %v1316
    %v1325 = vsub.f32 %v1232, %v1319
    %v1326 = vsub.f32 %v1308, %v1322
    %v1327 = vmul.f32 %v1323, 1.442695
    %v1328 = vpow.pop %v1327
    %v1329 = vmul.f32 %v1324, 1.442695
    %v1330 = vpow.pop %v1329
    %v1331 = vmul.f32 %v1325, 1.442695
    %v1332 = vpow.pop %v1331
    %v1333 = vmul.f32 %v1326, 1.442695
    %v1334 = vpow.pop %v1333
    %v1335 = vsel %vm1006, %v1328, 0.0
    %1336 = vadd.xlane.f32.xlu0 %v1335
    %v1337 = vpop.xlane.xlu0 %1336
    %v1338 = vsel %vm1006, %v1330, 0.0
    %1339 = vadd.xlane.f32.xlu0 %v1338
    %v1340 = vpop.xlane.xlu0 %1339
    %v1341 = vsel %vm1006, %v1332, 0.0
    %1342 = vadd.xlane.f32.xlu0 %v1341
    %v1343 = vpop.xlane.xlu0 %1342
    %v1344 = vsel %vm1006, %v1334, 0.0
    %1345 = vadd.xlane.f32.xlu0 %v1344
    %v1346 = vpop.xlane.xlu0 %1345
    %v1347 = vrcp.pop %v1337
    %v1348 = vrcp.pop %v1340
    %v1349 = vrcp.pop %v1343
    %v1350 = vrcp.pop %v1346
    %v1351 = vmul.f32 %v1328, %v1347
    %v1352 = vmul.f32 %v1330, %v1348
    %v1353 = vmul.f32 %v1332, %v1349
    %v1354 = vmul.f32 %v1334, %v1350
    %v1356 = vsel %vm1006, %v1351, 0
    %1358 = vmatprep.subr.mxu0 0.0
    %1359 = vmatpush1.msra.mxu0 %v766
    %1360 = vmatprep.subr.mxu0 0.0
    %1361 = vmatpush1.msra.mxu0 0.0
    %1362 = vmatprep.subr.mxu0 0.0
    %1363 = vmatpush1.msra.mxu0 0.0
    %1364 = vmatprep.subr.mxu0 0.0
    %1365 = vmatpush1.msra.mxu0 0.0
    %1366 = vmatprep.subr.mxu0 0.0
    %1367 = vmatpush1.msra.mxu0 0.0
    %1368 = vmatprep.subr.mxu0 0.0
    %1369 = vmatpush1.msra.mxu0 0.0
    %1370 = vmatprep.subr.mxu0 0.0
    %1371 = vmatpush1.msra.mxu0 0.0
    %1372 = vmatprep.subr.mxu0 0.0
    %1373 = vmatpush1.msra.mxu0 0.0
    %1374 = vmatprep.subr.mxu0 0.0
    %1375 = vmatpush1.msra.mxu0 0.0
    %1376 = vmatprep.subr.mxu0 0.0
    %1377 = vmatpush1.msra.mxu0 0.0
    %1378 = vmatprep.subr.mxu0 0.0
    %1379 = vmatpush1.msra.mxu0 0.0
    %1380 = vmatprep.subr.mxu0 0.0
    %1381 = vmatpush1.msra.mxu0 0.0
    %1382 = vmatprep.subr.mxu0 0.0
    %1383 = vmatpush1.msra.mxu0 0.0
    %1384 = vmatprep.subr.mxu0 0.0
    %1385 = vmatpush1.msra.mxu0 0.0
    %1386 = vmatprep.subr.mxu0 0.0
    %1387 = vmatpush1.msra.mxu0 0.0
    %1388 = vmatprep.subr.mxu0 0.0
    %1389 = vmatpush1.msra.mxu0 0.0
    %1390 = vmatprep.subr.mxu0 0.0
    %1391 = vmatpush1.msra.mxu0 0.0
    %1392 = vmatprep.subr.mxu0 0.0
    %1393 = vmatpush1.msra.mxu0 0.0
    %1394 = vmatprep.subr.mxu0 0.0
    %1395 = vmatpush1.msra.mxu0 0.0
    %1396 = vmatprep.subr.mxu0 0.0
    %1397 = vmatpush1.msra.mxu0 0.0
    %1398 = vmatprep.subr.mxu0 0.0
    %1399 = vmatpush1.msra.mxu0 0.0
    %1400 = vmatprep.subr.mxu0 0.0
    %1401 = vmatpush1.msra.mxu0 0.0
    %1402 = vmatprep.subr.mxu0 0.0
    %1403 = vmatpush1.msra.mxu0 0.0
    %1404 = vmatprep.subr.mxu0 0.0
    %1405 = vmatpush1.msra.mxu0 0.0
    %1406 = vmatprep.subr.mxu0 0.0
    %1407 = vmatpush1.msra.mxu0 0.0
    %1408 = vmatprep.subr.mxu0 0.0
    %1409 = vmatpush1.msra.mxu0 0.0
    %1410 = vmatprep.subr.mxu0 0.0
    %1411 = vmatpush1.msra.mxu0 0.0
    %1412 = vmatprep.subr.mxu0 0.0
    %1413 = vmatpush1.msra.mxu0 0.0
    %1414 = vmatprep.subr.mxu0 0.0
    %1415 = vmatpush1.msra.mxu0 0.0
    %1416 = vmatprep.subr.mxu0 0.0
    %1417 = vmatpush1.msra.mxu0 0.0
    %1418 = vmatprep.subr.mxu0 0.0
    %1419 = vmatpush1.msra.mxu0 0.0
    %1420 = vmatprep.subr.mxu0 0.0
    %1421 = vmatpush1.msra.mxu0 0.0
    %1422 = vmatprep.mubr.f32.mxu0 0.0
    %1423 = vmatmul.mubr.f32.gmra.mrb[0].mxu0 %v1356
    %v1424 = vpop.f32.mrb[0].mxu0
    %v1425 = vadd.f32 0.0, %v1424
    %v1426 = vpop.f32.mrb[0].mxu0
    %1427 = vdwg.mxu0
    %v1429 = vsel %vm1006, %v1352, 0
    %1431 = vmatprep.subr.mxu0 0.0
    %1432 = vmatpush1.msra.mxu0 %v841
    %1433 = vmatprep.subr.mxu0 0.0
    %1434 = vmatpush1.msra.mxu0 0.0
    %1435 = vmatprep.subr.mxu0 0.0
    %1436 = vmatpush1.msra.mxu0 0.0
    %1437 = vmatprep.subr.mxu0 0.0
    %1438 = vmatpush1.msra.mxu0 0.0
    %1439 = vmatprep.subr.mxu0 0.0
    %1440 = vmatpush1.msra.mxu0 0.0
    %1441 = vmatprep.subr.mxu0 0.0
    %1442 = vmatpush1.msra.mxu0 0.0
    %1443 = vmatprep.subr.mxu0 0.0
    %1444 = vmatpush1.msra.mxu0 0.0
    %1445 = vmatprep.subr.mxu0 0.0
    %1446 = vmatpush1.msra.mxu0 0.0
    %1447 = vmatprep.subr.mxu0 0.0
    %1448 = vmatpush1.msra.mxu0 0.0
    %1449 = vmatprep.subr.mxu0 0.0
    %1450 = vmatpush1.msra.mxu0 0.0
    %1451 = vmatprep.subr.mxu0 0.0
    %1452 = vmatpush1.msra.mxu0 0.0
    %1453 = vmatprep.subr.mxu0 0.0
    %1454 = vmatpush1.msra.mxu0 0.0
    %1455 = vmatprep.subr.mxu0 0.0
    %1456 = vmatpush1.msra.mxu0 0.0
    %1457 = vmatprep.subr.mxu0 0.0
    %1458 = vmatpush1.msra.mxu0 0.0
    %1459 = vmatprep.subr.mxu0 0.0
    %1460 = vmatpush1.msra.mxu0 0.0
    %1461 = vmatprep.subr.mxu0 0.0
    %1462 = vmatpush1.msra.mxu0 0.0
    %1463 = vmatprep.subr.mxu0 0.0
    %1464 = vmatpush1.msra.mxu0 0.0
    %1465 = vmatprep.subr.mxu0 0.0
    %1466 = vmatpush1.msra.mxu0 0.0
    %1467 = vmatprep.subr.mxu0 0.0
    %1468 = vmatpush1.msra.mxu0 0.0
    %1469 = vmatprep.subr.mxu0 0.0
    %1470 = vmatpush1.msra.mxu0 0.0
    %1471 = vmatprep.subr.mxu0 0.0
    %1472 = vmatpush1.msra.mxu0 0.0
    %1473 = vmatprep.subr.mxu0 0.0
    %1474 = vmatpush1.msra.mxu0 0.0
    %1475 = vmatprep.subr.mxu0 0.0
    %1476 = vmatpush1.msra.mxu0 0.0
    %1477 = vmatprep.subr.mxu0 0.0
    %1478 = vmatpush1.msra.mxu0 0.0
    %1479 = vmatprep.subr.mxu0 0.0
    %1480 = vmatpush1.msra.mxu0 0.0
    %1481 = vmatprep.subr.mxu0 0.0
    %1482 = vmatpush1.msra.mxu0 0.0
    %1483 = vmatprep.subr.mxu0 0.0
    %1484 = vmatpush1.msra.mxu0 0.0
    %1485 = vmatprep.subr.mxu0 0.0
    %1486 = vmatpush1.msra.mxu0 0.0
    %1487 = vmatprep.subr.mxu0 0.0
    %1488 = vmatpush1.msra.mxu0 0.0
    %1489 = vmatprep.subr.mxu0 0.0
    %1490 = vmatpush1.msra.mxu0 0.0
    %1491 = vmatprep.subr.mxu0 0.0
    %1492 = vmatpush1.msra.mxu0 0.0
    %1493 = vmatprep.subr.mxu0 0.0
    %1494 = vmatpush1.msra.mxu0 0.0
    %1495 = vmatprep.mubr.f32.mxu0 0.0
    %1496 = vmatmul.mubr.f32.gmra.mrb[0].mxu0 %v1429
    %v1497 = vpop.f32.mrb[0].mxu0
    %v1498 = vadd.f32 0.0, %v1497
    %v1499 = vpop.f32.mrb[0].mxu0
    %1500 = vdwg.mxu0
    %v1502 = vsel %vm1006, %v1353, 0
    %1504 = vmatprep.subr.mxu0 0.0
    %1505 = vmatpush1.msra.mxu0 %v916
    %1506 = vmatprep.subr.mxu0 0.0
    %1507 = vmatpush1.msra.mxu0 0.0
    %1508 = vmatprep.subr.mxu0 0.0
    %1509 = vmatpush1.msra.mxu0 0.0
    %1510 = vmatprep.subr.mxu0 0.0
    %1511 = vmatpush1.msra.mxu0 0.0
    %1512 = vmatprep.subr.mxu0 0.0
    %1513 = vmatpush1.msra.mxu0 0.0
    %1514 = vmatprep.subr.mxu0 0.0
    %1515 = vmatpush1.msra.mxu0 0.0
    %1516 = vmatprep.subr.mxu0 0.0
    %1517 = vmatpush1.msra.mxu0 0.0
    %1518 = vmatprep.subr.mxu0 0.0
    %1519 = vmatpush1.msra.mxu0 0.0
    %1520 = vmatprep.subr.mxu0 0.0
    %1521 = vmatpush1.msra.mxu0 0.0
    %1522 = vmatprep.subr.mxu0 0.0
    %1523 = vmatpush1.msra.mxu0 0.0
    %1524 = vmatprep.subr.mxu0 0.0
    %1525 = vmatpush1.msra.mxu0 0.0
    %1526 = vmatprep.subr.mxu0 0.0
    %1527 = vmatpush1.msra.mxu0 0.0
    %1528 = vmatprep.subr.mxu0 0.0
    %1529 = vmatpush1.msra.mxu0 0.0
    %1530 = vmatprep.subr.mxu0 0.0
    %1531 = vmatpush1.msra.mxu0 0.0
    %1532 = vmatprep.subr.mxu0 0.0
    %1533 = vmatpush1.msra.mxu0 0.0
    %1534 = vmatprep.subr.mxu0 0.0
    %1535 = vmatpush1.msra.mxu0 0.0
    %1536 = vmatprep.subr.mxu0 0.0
    %1537 = vmatpush1.msra.mxu0 0.0
    %1538 = vmatprep.subr.mxu0 0.0
    %1539 = vmatpush1.msra.mxu0 0.0
    %1540 = vmatprep.subr.mxu0 0.0
    %1541 = vmatpush1.msra.mxu0 0.0
    %1542 = vmatprep.subr.mxu0 0.0
    %1543 = vmatpush1.msra.mxu0 0.0
    %1544 = vmatprep.subr.mxu0 0.0
    %1545 = vmatpush1.msra.mxu0 0.0
    %1546 = vmatprep.subr.mxu0 0.0
    %1547 = vmatpush1.msra.mxu0 0.0
    %1548 = vmatprep.subr.mxu0 0.0
    %1549 = vmatpush1.msra.mxu0 0.0
    %1550 = vmatprep.subr.mxu0 0.0
    %1551 = vmatpush1.msra.mxu0 0.0
    %1552 = vmatprep.subr.mxu0 0.0
    %1553 = vmatpush1.msra.mxu0 0.0
    %1554 = vmatprep.subr.mxu0 0.0
    %1555 = vmatpush1.msra.mxu0 0.0
    %1556 = vmatprep.subr.mxu0 0.0
    %1557 = vmatpush1.msra.mxu0 0.0
    %1558 = vmatprep.subr.mxu0 0.0
    %1559 = vmatpush1.msra.mxu0 0.0
    %1560 = vmatprep.subr.mxu0 0.0
    %1561 = vmatpush1.msra.mxu0 0.0
    %1562 = vmatprep.subr.mxu0 0.0
    %1563 = vmatpush1.msra.mxu0 0.0
    %1564 = vmatprep.subr.mxu0 0.0
    %1565 = vmatpush1.msra.mxu0 0.0
    %1566 = vmatprep.subr.mxu0 0.0
    %1567 = vmatpush1.msra.mxu0 0.0
    %1568 = vmatprep.mubr.f32.mxu0 0.0
    %1569 = vmatmul.mubr.f32.gmra.mrb[0].mxu0 %v1502
    %v1570 = vpop.f32.mrb[0].mxu0
    %v1571 = vadd.f32 0.0, %v1570
    %v1572 = vpop.f32.mrb[0].mxu0
    %1573 = vdwg.mxu0
    %v1575 = vsel %vm1006, %v1354, 0
    %1577 = vmatprep.subr.mxu0 0.0
    %1578 = vmatpush1.msra.mxu0 %v991
    %1579 = vmatprep.subr.mxu0 0.0
    %1580 = vmatpush1.msra.mxu0 0.0
    %1581 = vmatprep.subr.mxu0 0.0
    %1582 = vmatpush1.msra.mxu0 0.0
    %1583 = vmatprep.subr.mxu0 0.0
    %1584 = vmatpush1.msra.mxu0 0.0
    %1585 = vmatprep.subr.mxu0 0.0
    %1586 = vmatpush1.msra.mxu0 0.0
    %1587 = vmatprep.subr.mxu0 0.0
    %1588 = vmatpush1.msra.mxu0 0.0
    %1589 = vmatprep.subr.mxu0 0.0
    %1590 = vmatpush1.msra.mxu0 0.0
    %1591 = vmatprep.subr.mxu0 0.0
    %1592 = vmatpush1.msra.mxu0 0.0
    %1593 = vmatprep.subr.mxu0 0.0
    %1594 = vmatpush1.msra.mxu0 0.0
    %1595 = vmatprep.subr.mxu0 0.0
    %1596 = vmatpush1.msra.mxu0 0.0
    %1597 = vmatprep.subr.mxu0 0.0
    %1598 = vmatpush1.msra.mxu0 0.0
    %1599 = vmatprep.subr.mxu0 0.0
    %1600 = vmatpush1.msra.mxu0 0.0
    %1601 = vmatprep.subr.mxu0 0.0
    %1602 = vmatpush1.msra.mxu0 0.0
    %1603 = vmatprep.subr.mxu0 0.0
    %1604 = vmatpush1.msra.mxu0 0.0
    %1605 = vmatprep.subr.mxu0 0.0
    %1606 = vmatpush1.msra.mxu0 0.0
    %1607 = vmatprep.subr.mxu0 0.0
    %1608 = vmatpush1.msra.mxu0 0.0
    %1609 = vmatprep.subr.mxu0 0.0
    %1610 = vmatpush1.msra.mxu0 0.0
    %1611 = vmatprep.subr.mxu0 0.0
    %1612 = vmatpush1.msra.mxu0 0.0
    %1613 = vmatprep.subr.mxu0 0.0
    %1614 = vmatpush1.msra.mxu0 0.0
    %1615 = vmatprep.subr.mxu0 0.0
    %1616 = vmatpush1.msra.mxu0 0.0
    %1617 = vmatprep.subr.mxu0 0.0
    %1618 = vmatpush1.msra.mxu0 0.0
    %1619 = vmatprep.subr.mxu0 0.0
    %1620 = vmatpush1.msra.mxu0 0.0
    %1621 = vmatprep.subr.mxu0 0.0
    %1622 = vmatpush1.msra.mxu0 0.0
    %1623 = vmatprep.subr.mxu0 0.0
    %1624 = vmatpush1.msra.mxu0 0.0
    %1625 = vmatprep.subr.mxu0 0.0
    %1626 = vmatpush1.msra.mxu0 0.0
    %1627 = vmatprep.subr.mxu0 0.0
    %1628 = vmatpush1.msra.mxu0 0.0
    %1629 = vmatprep.subr.mxu0 0.0
    %1630 = vmatpush1.msra.mxu0 0.0
    %1631 = vmatprep.subr.mxu0 0.0
    %1632 = vmatpush1.msra.mxu0 0.0
    %1633 = vmatprep.subr.mxu0 0.0
    %1634 = vmatpush1.msra.mxu0 0.0
    %1635 = vmatprep.subr.mxu0 0.0
    %1636 = vmatpush1.msra.mxu0 0.0
    %1637 = vmatprep.subr.mxu0 0.0
    %1638 = vmatpush1.msra.mxu0 0.0
    %1639 = vmatprep.subr.mxu0 0.0
    %1640 = vmatpush1.msra.mxu0 0.0
    %1641 = vmatprep.mubr.f32.mxu0 0.0
    %1642 = vmatmul.mubr.f32.gmra.mrb[0].mxu0 %v1575
    %v1643 = vpop.f32.mrb[0].mxu0
    %v1644 = vadd.f32 0.0, %v1643
    %v1645 = vpop.f32.mrb[0].mxu0
    %1646 = vdwg.mxu0
    %v1647 = vld [vmem:[%s5] sm:$0xff]
    %v1648 = vld [vmem:[%s5 + $0x8] sm:$0xff]
    %v1649 = vld [vmem:[%s5 + $0x10] sm:$0xff]
    %v1650 = vld [vmem:[%s5 + $0x18] sm:$0xff]
    %v1652 = vsel %vm1006, %v1425, 0
    %1654 = vmatprep.subr.mxu0 0.0
    %1655 = vmatpush1.msra.mxu0 %v1647
    %1656 = vmatprep.subr.mxu0 0.0
    %1657 = vmatpush1.msra.mxu0 0.0
    %1658 = vmatprep.subr.mxu0 0.0
    %1659 = vmatpush1.msra.mxu0 0.0
    %1660 = vmatprep.subr.mxu0 0.0
    %1661 = vmatpush1.msra.mxu0 0.0
    %1662 = vmatprep.subr.mxu0 0.0
    %1663 = vmatpush1.msra.mxu0 0.0
    %1664 = vmatprep.subr.mxu0 0.0
    %1665 = vmatpush1.msra.mxu0 0.0
    %1666 = vmatprep.subr.mxu0 0.0
    %1667 = vmatpush1.msra.mxu0 0.0
    %1668 = vmatprep.subr.mxu0 0.0
    %1669 = vmatpush1.msra.mxu0 0.0
    %1670 = vmatprep.subr.mxu0 0.0
    %1671 = vmatpush1.msra.mxu0 0.0
    %1672 = vmatprep.subr.mxu0 0.0
    %1673 = vmatpush1.msra.mxu0 0.0
    %1674 = vmatprep.subr.mxu0 0.0
    %1675 = vmatpush1.msra.mxu0 0.0
    %1676 = vmatprep.subr.mxu0 0.0
    %1677 = vmatpush1.msra.mxu0 0.0
    %1678 = vmatprep.subr.mxu0 0.0
    %1679 = vmatpush1.msra.mxu0 0.0
    %1680 = vmatprep.subr.mxu0 0.0
    %1681 = vmatpush1.msra.mxu0 0.0
    %1682 = vmatprep.subr.mxu0 0.0
    %1683 = vmatpush1.msra.mxu0 0.0
    %1684 = vmatprep.subr.mxu0 0.0
    %1685 = vmatpush1.msra.mxu0 0.0
    %1686 = vmatprep.subr.mxu0 0.0
    %1687 = vmatpush1.msra.mxu0 0.0
    %1688 = vmatprep.subr.mxu0 0.0
    %1689 = vmatpush1.msra.mxu0 0.0
    %1690 = vmatprep.subr.mxu0 0.0
    %1691 = vmatpush1.msra.mxu0 0.0
    %1692 = vmatprep.subr.mxu0 0.0
    %1693 = vmatpush1.msra.mxu0 0.0
    %1694 = vmatprep.subr.mxu0 0.0
    %1695 = vmatpush1.msra.mxu0 0.0
    %1696 = vmatprep.subr.mxu0 0.0
    %1697 = vmatpush1.msra.mxu0 0.0
    %1698 = vmatprep.subr.mxu0 0.0
    %1699 = vmatpush1.msra.mxu0 0.0
    %1700 = vmatprep.subr.mxu0 0.0
    %1701 = vmatpush1.msra.mxu0 0.0
    %1702 = vmatprep.subr.mxu0 0.0
    %1703 = vmatpush1.msra.mxu0 0.0
    %1704 = vmatprep.subr.mxu0 0.0
    %1705 = vmatpush1.msra.mxu0 0.0
    %1706 = vmatprep.subr.mxu0 0.0
    %1707 = vmatpush1.msra.mxu0 0.0
    %1708 = vmatprep.subr.mxu0 0.0
    %1709 = vmatpush1.msra.mxu0 0.0
    %1710 = vmatprep.subr.mxu0 0.0
    %1711 = vmatpush1.msra.mxu0 0.0
    %1712 = vmatprep.subr.mxu0 0.0
    %1713 = vmatpush1.msra.mxu0 0.0
    %1714 = vmatprep.subr.mxu0 0.0
    %1715 = vmatpush1.msra.mxu0 0.0
    %1716 = vmatprep.subr.mxu0 0.0
    %1717 = vmatpush1.msra.mxu0 0.0
    %1718 = vmatprep.mubr.f32.mxu0 0.0
    %1719 = vmatmul.mubr.f32.gmra.mrb[0].mxu0 %v1652
    %v1720 = vpop.f32.mrb[0].mxu0
    %v1721 = vadd.f32 0.0, %v1720
    %v1722 = vpop.f32.mrb[0].mxu0
    %1723 = vdwg.mxu0
    %v1725 = vsel %vm1006, %v1498, 0
    %1727 = vmatprep.subr.mxu0 0.0
    %1728 = vmatpush1.msra.mxu0 %v1648
    %1729 = vmatprep.subr.mxu0 0.0
    %1730 = vmatpush1.msra.mxu0 0.0
    %1731 = vmatprep.subr.mxu0 0.0
    %1732 = vmatpush1.msra.mxu0 0.0
    %1733 = vmatprep.subr.mxu0 0.0
    %1734 = vmatpush1.msra.mxu0 0.0
    %1735 = vmatprep.subr.mxu0 0.0
    %1736 = vmatpush1.msra.mxu0 0.0
    %1737 = vmatprep.subr.mxu0 0.0
    %1738 = vmatpush1.msra.mxu0 0.0
    %1739 = vmatprep.subr.mxu0 0.0
    %1740 = vmatpush1.msra.mxu0 0.0
    %1741 = vmatprep.subr.mxu0 0.0
    %1742 = vmatpush1.msra.mxu0 0.0
    %1743 = vmatprep.subr.mxu0 0.0
    %1744 = vmatpush1.msra.mxu0 0.0
    %1745 = vmatprep.subr.mxu0 0.0
    %1746 = vmatpush1.msra.mxu0 0.0
    %1747 = vmatprep.subr.mxu0 0.0
    %1748 = vmatpush1.msra.mxu0 0.0
    %1749 = vmatprep.subr.mxu0 0.0
    %1750 = vmatpush1.msra.mxu0 0.0
    %1751 = vmatprep.subr.mxu0 0.0
    %1752 = vmatpush1.msra.mxu0 0.0
    %1753 = vmatprep.subr.mxu0 0.0
    %1754 = vmatpush1.msra.mxu0 0.0
    %1755 = vmatprep.subr.mxu0 0.0
    %1756 = vmatpush1.msra.mxu0 0.0
    %1757 = vmatprep.subr.mxu0 0.0
    %1758 = vmatpush1.msra.mxu0 0.0
    %1759 = vmatprep.subr.mxu0 0.0
    %1760 = vmatpush1.msra.mxu0 0.0
    %1761 = vmatprep.subr.mxu0 0.0
    %1762 = vmatpush1.msra.mxu0 0.0
    %1763 = vmatprep.subr.mxu0 0.0
    %1764 = vmatpush1.msra.mxu0 0.0
    %1765 = vmatprep.subr.mxu0 0.0
    %1766 = vmatpush1.msra.mxu0 0.0
    %1767 = vmatprep.subr.mxu0 0.0
    %1768 = vmatpush1.msra.mxu0 0.0
    %1769 = vmatprep.subr.mxu0 0.0
    %1770 = vmatpush1.msra.mxu0 0.0
    %1771 = vmatprep.subr.mxu0 0.0
    %1772 = vmatpush1.msra.mxu0 0.0
    %1773 = vmatprep.subr.mxu0 0.0
    %1774 = vmatpush1.msra.mxu0 0.0
    %1775 = vmatprep.subr.mxu0 0.0
    %1776 = vmatpush1.msra.mxu0 0.0
    %1777 = vmatprep.subr.mxu0 0.0
    %1778 = vmatpush1.msra.mxu0 0.0
    %1779 = vmatprep.subr.mxu0 0.0
    %1780 = vmatpush1.msra.mxu0 0.0
    %1781 = vmatprep.subr.mxu0 0.0
    %1782 = vmatpush1.msra.mxu0 0.0
    %1783 = vmatprep.subr.mxu0 0.0
    %1784 = vmatpush1.msra.mxu0 0.0
    %1785 = vmatprep.subr.mxu0 0.0
    %1786 = vmatpush1.msra.mxu0 0.0
    %1787 = vmatprep.subr.mxu0 0.0
    %1788 = vmatpush1.msra.mxu0 0.0
    %1789 = vmatprep.subr.mxu0 0.0
    %1790 = vmatpush1.msra.mxu0 0.0
    %1791 = vmatprep.mubr.f32.mxu0 0.0
    %1792 = vmatmul.mubr.f32.gmra.mrb[0].mxu0 %v1725
    %v1793 = vpop.f32.mrb[0].mxu0
    %v1794 = vadd.f32 0.0, %v1793
    %v1795 = vpop.f32.mrb[0].mxu0
    %1796 = vdwg.mxu0
    %v1798 = vsel %vm1006, %v1571, 0
    %1800 = vmatprep.subr.mxu0 0.0
    %1801 = vmatpush1.msra.mxu0 %v1649
    %1802 = vmatprep.subr.mxu0 0.0
    %1803 = vmatpush1.msra.mxu0 0.0
    %1804 = vmatprep.subr.mxu0 0.0
    %1805 = vmatpush1.msra.mxu0 0.0
    %1806 = vmatprep.subr.mxu0 0.0
    %1807 = vmatpush1.msra.mxu0 0.0
    %1808 = vmatprep.subr.mxu0 0.0
    %1809 = vmatpush1.msra.mxu0 0.0
    %1810 = vmatprep.subr.mxu0 0.0
    %1811 = vmatpush1.msra.mxu0 0.0
    %1812 = vmatprep.subr.mxu0 0.0
    %1813 = vmatpush1.msra.mxu0 0.0
    %1814 = vmatprep.subr.mxu0 0.0
    %1815 = vmatpush1.msra.mxu0 0.0
    %1816 = vmatprep.subr.mxu0 0.0
    %1817 = vmatpush1.msra.mxu0 0.0
    %1818 = vmatprep.subr.mxu0 0.0
    %1819 = vmatpush1.msra.mxu0 0.0
    %1820 = vmatprep.subr.mxu0 0.0
    %1821 = vmatpush1.msra.mxu0 0.0
    %1822 = vmatprep.subr.mxu0 0.0
    %1823 = vmatpush1.msra.mxu0 0.0
    %1824 = vmatprep.subr.mxu0 0.0
    %1825 = vmatpush1.msra.mxu0 0.0
    %1826 = vmatprep.subr.mxu0 0.0
    %1827 = vmatpush1.msra.mxu0 0.0
    %1828 = vmatprep.subr.mxu0 0.0
    %1829 = vmatpush1.msra.mxu0 0.0
    %1830 = vmatprep.subr.mxu0 0.0
    %1831 = vmatpush1.msra.mxu0 0.0
    %1832 = vmatprep.subr.mxu0 0.0
    %1833 = vmatpush1.msra.mxu0 0.0
    %1834 = vmatprep.subr.mxu0 0.0
    %1835 = vmatpush1.msra.mxu0 0.0
    %1836 = vmatprep.subr.mxu0 0.0
    %1837 = vmatpush1.msra.mxu0 0.0
    %1838 = vmatprep.subr.mxu0 0.0
    %1839 = vmatpush1.msra.mxu0 0.0
    %1840 = vmatprep.subr.mxu0 0.0
    %1841 = vmatpush1.msra.mxu0 0.0
    %1842 = vmatprep.subr.mxu0 0.0
    %1843 = vmatpush1.msra.mxu0 0.0
    %1844 = vmatprep.subr.mxu0 0.0
    %1845 = vmatpush1.msra.mxu0 0.0
    %1846 = vmatprep.subr.mxu0 0.0
    %1847 = vmatpush1.msra.mxu0 0.0
    %1848 = vmatprep.subr.mxu0 0.0
    %1849 = vmatpush1.msra.mxu0 0.0
    %1850 = vmatprep.subr.mxu0 0.0
    %1851 = vmatpush1.msra.mxu0 0.0
    %1852 = vmatprep.subr.mxu0 0.0
    %1853 = vmatpush1.msra.mxu0 0.0
    %1854 = vmatprep.subr.mxu0 0.0
    %1855 = vmatpush1.msra.mxu0 0.0
    %1856 = vmatprep.subr.mxu0 0.0
    %1857 = vmatpush1.msra.mxu0 0.0
    %1858 = vmatprep.subr.mxu0 0.0
    %1859 = vmatpush1.msra.mxu0 0.0
    %1860 = vmatprep.subr.mxu0 0.0
    %1861 = vmatpush1.msra.mxu0 0.0
    %1862 = vmatprep.subr.mxu0 0.0
    %1863 = vmatpush1.msra.mxu0 0.0
    %1864 = vmatprep.mubr.f32.mxu0 0.0
    %1865 = vmatmul.mubr.f32.gmra.mrb[0].mxu0 %v1798
    %v1866 = vpop.f32.mrb[0].mxu0
    %v1867 = vadd.f32 0.0, %v1866
    %v1868 = vpop.f32.mrb[0].mxu0
    %1869 = vdwg.mxu0
    %v1871 = vsel %vm1006, %v1644, 0
    %1873 = vmatprep.subr.mxu0 0.0
    %1874 = vmatpush1.msra.mxu0 %v1650
    %1875 = vmatprep.subr.mxu0 0.0
    %1876 = vmatpush1.msra.mxu0 0.0
    %1877 = vmatprep.subr.mxu0 0.0
    %1878 = vmatpush1.msra.mxu0 0.0
    %1879 = vmatprep.subr.mxu0 0.0
    %1880 = vmatpush1.msra.mxu0 0.0
    %1881 = vmatprep.subr.mxu0 0.0
    %1882 = vmatpush1.msra.mxu0 0.0
    %1883 = vmatprep.subr.mxu0 0.0
    %1884 = vmatpush1.msra.mxu0 0.0
    %1885 = vmatprep.subr.mxu0 0.0
    %1886 = vmatpush1.msra.mxu0 0.0
    %1887 = vmatprep.subr.mxu0 0.0
    %1888 = vmatpush1.msra.mxu0 0.0
    %1889 = vmatprep.subr.mxu0 0.0
    %1890 = vmatpush1.msra.mxu0 0.0
    %1891 = vmatprep.subr.mxu0 0.0
    %1892 = vmatpush1.msra.mxu0 0.0
    %1893 = vmatprep.subr.mxu0 0.0
    %1894 = vmatpush1.msra.mxu0 0.0
    %1895 = vmatprep.subr.mxu0 0.0
    %1896 = vmatpush1.msra.mxu0 0.0
    %1897 = vmatprep.subr.mxu0 0.0
    %1898 = vmatpush1.msra.mxu0 0.0
    %1899 = vmatprep.subr.mxu0 0.0
    %1900 = vmatpush1.msra.mxu0 0.0
    %1901 = vmatprep.subr.mxu0 0.0
    %1902 = vmatpush1.msra.mxu0 0.0
    %1903 = vmatprep.subr.mxu0 0.0
    %1904 = vmatpush1.msra.mxu0 0.0
    %1905 = vmatprep.subr.mxu0 0.0
    %1906 = vmatpush1.msra.mxu0 0.0
    %1907 = vmatprep.subr.mxu0 0.0
    %1908 = vmatpush1.msra.mxu0 0.0
    %1909 = vmatprep.subr.mxu0 0.0
    %1910 = vmatpush1.msra.mxu0 0.0
    %1911 = vmatprep.subr.mxu0 0.0
    %1912 = vmatpush1.msra.mxu0 0.0
    %1913 = vmatprep.subr.mxu0 0.0
    %1914 = vmatpush1.msra.mxu0 0.0
    %1915 = vmatprep.subr.mxu0 0.0
    %1916 = vmatpush1.msra.mxu0 0.0
    %1917 = vmatprep.subr.mxu0 0.0
    %1918 = vmatpush1.msra.mxu0 0.0
    %1919 = vmatprep.subr.mxu0 0.0
    %1920 = vmatpush1.msra.mxu0 0.0
    %1921 = vmatprep.subr.mxu0 0.0
    %1922 = vmatpush1.msra.mxu0 0.0
    %1923 = vmatprep.subr.mxu0 0.0
    %1924 = vmatpush1.msra.mxu0 0.0
    %1925 = vmatprep.subr.mxu0 0.0
    %1926 = vmatpush1.msra.mxu0 0.0
    %1927 = vmatprep.subr.mxu0 0.0
    %1928 = vmatpush1.msra.mxu0 0.0
    %1929 = vmatprep.subr.mxu0 0.0
    %1930 = vmatpush1.msra.mxu0 0.0
    %1931 = vmatprep.subr.mxu0 0.0
    %1932 = vmatpush1.msra.mxu0 0.0
    %1933 = vmatprep.subr.mxu0 0.0
    %1934 = vmatpush1.msra.mxu0 0.0
    %1935 = vmatprep.subr.mxu0 0.0
    %1936 = vmatpush1.msra.mxu0 0.0
    %1937 = vmatprep.mubr.f32.mxu0 0.0
    %1938 = vmatmul.mubr.f32.gmra.mrb[0].mxu0 %v1871
    %v1939 = vpop.f32.mrb[0].mxu0
    %v1940 = vadd.f32 0.0, %v1939
    %v1941 = vpop.f32.mrb[0].mxu0
    %1942 = vdwg.mxu0
    %v1943 = vsel %vm60, %v1721, 0.0
    %v1944 = vsel %vm60, %v1794, 0.0
    %v1945 = vadd.f32 %v1943, %v1944
    %v1946 = vsel %vm60, %v1867, 0.0
    %v1947 = vadd.f32 %v1945, %v1946
    %v1948 = vsel %vm60, %v1940, 0.0
    %v1949 = vadd.f32 %v1947, %v1948
    %s1950 = scalar_lea.vmem %s1, 1
    %v1951 = vld [vmem:[%s1950] sm:$0x1]
    %v1953 = vlaneseq
    %v1954 = vshrl.u32 %v1953, 7
    %v1955 = vsub.s32 0, %v1954
    %v1956 = vrot.slane %v1951, %v1955
    %v1959 = vsel %vm1006, %v139, 0
    %v1962 = vsel %vm1006, %v455, 0
    %1964 = vmatprep.subr.mxu0 0.0
    %1965 = vmatpush1.xpose.msra.mxu0 %v1962
    %1966 = vmatprep.subr.mxu0 0.0
    %1967 = vmatpush1.xpose.msra.mxu0 0.0
    %1968 = vmatprep.subr.mxu0 0.0
    %1969 = vmatpush1.xpose.msra.mxu0 0.0
    %1970 = vmatprep.subr.mxu0 0.0
    %1971 = vmatpush1.xpose.msra.mxu0 0.0
    %1972 = vmatprep.subr.mxu0 0.0
    %1973 = vmatpush1.xpose.msra.mxu0 0.0
    %1974 = vmatprep.subr.mxu0 0.0
    %1975 = vmatpush1.xpose.msra.mxu0 0.0
    %1976 = vmatprep.subr.mxu0 0.0
    %1977 = vmatpush1.xpose.msra.mxu0 0.0
    %1978 = vmatprep.subr.mxu0 0.0
    %1979 = vmatpush1.xpose.msra.mxu0 0.0
    %1980 = vmatprep.subr.mxu0 0.0
    %1981 = vmatpush1.xpose.msra.mxu0 0.0
    %1982 = vmatprep.subr.mxu0 0.0
    %1983 = vmatpush1.xpose.msra.mxu0 0.0
    %1984 = vmatprep.subr.mxu0 0.0
    %1985 = vmatpush1.xpose.msra.mxu0 0.0
    %1986 = vmatprep.subr.mxu0 0.0
    %1987 = vmatpush1.xpose.msra.mxu0 0.0
    %1988 = vmatprep.subr.mxu0 0.0
    %1989 = vmatpush1.xpose.msra.mxu0 0.0
    %1990 = vmatprep.subr.mxu0 0.0
    %1991 = vmatpush1.xpose.msra.mxu0 0.0
    %1992 = vmatprep.subr.mxu0 0.0
    %1993 = vmatpush1.xpose.msra.mxu0 0.0
    %1994 = vmatprep.subr.mxu0 0.0
    %1995 = vmatpush1.xpose.msra.mxu0 0.0
    %1996 = vmatprep.subr.mxu0 0.0
    %1997 = vmatpush1.xpose.msra.mxu0 0.0
    %1998 = vmatprep.subr.mxu0 0.0
    %1999 = vmatpush1.xpose.msra.mxu0 0.0
    %2000 = vmatprep.subr.mxu0 0.0
    %2001 = vmatpush1.xpose.msra.mxu0 0.0
    %2002 = vmatprep.subr.mxu0 0.0
    %2003 = vmatpush1.xpose.msra.mxu0 0.0
    %2004 = vmatprep.subr.mxu0 0.0
    %2005 = vmatpush1.xpose.msra.mxu0 0.0
    %2006 = vmatprep.subr.mxu0 0.0
    %2007 = vmatpush1.xpose.msra.mxu0 0.0
    %2008 = vmatprep.subr.mxu0 0.0
    %2009 = vmatpush1.xpose.msra.mxu0 0.0
    %2010 = vmatprep.subr.mxu0 0.0
    %2011 = vmatpush1.xpose.msra.mxu0 0.0
    %2012 = vmatprep.subr.mxu0 0.0
    %2013 = vmatpush1.xpose.msra.mxu0 0.0
    %2014 = vmatprep.subr.mxu0 0.0
    %2015 = vmatpush1.xpose.msra.mxu0 0.0
    %2016 = vmatprep.subr.mxu0 0.0
    %2017 = vmatpush1.xpose.msra.mxu0 0.0
    %2018 = vmatprep.subr.mxu0 0.0
    %2019 = vmatpush1.xpose.msra.mxu0 0.0
    %2020 = vmatprep.subr.mxu0 0.0
    %2021 = vmatpush1.xpose.msra.mxu0 0.0
    %2022 = vmatprep.subr.mxu0 0.0
    %2023 = vmatpush1.xpose.msra.mxu0 0.0
    %2024 = vmatprep.subr.mxu0 0.0
    %2025 = vmatpush1.xpose.msra.mxu0 0.0
    %2026 = vmatprep.subr.mxu0 0.0
    %2027 = vmatpush1.xpose.msra.mxu0 0.0
    %2028 = vmatprep.mubr.f32.mxu0 0.0
    %2029 = vmatmul.mubr.f32.gmra.mrb[0].mxu0 %v1959
    %v2030 = vpop.f32.mrb[0].mxu0
    %v2031 = vadd.f32 %v1956, %v2030
    %v2032 = vpop.f32.mrb[0].mxu0
    %2033 = vdwg.mxu0
    %v2035 = vsel %vm1006, %v214, 0
    %v2038 = vsel %vm1006, %v530, 0
    %2040 = vmatprep.subr.mxu0 0.0
    %2041 = vmatpush1.xpose.msra.mxu0 %v2038
    %2042 = vmatprep.subr.mxu0 0.0
    %2043 = vmatpush1.xpose.msra.mxu0 0.0
    %2044 = vmatprep.subr.mxu0 0.0
    %2045 = vmatpush1.xpose.msra.mxu0 0.0
    %2046 = vmatprep.subr.mxu0 0.0
    %2047 = vmatpush1.xpose.msra.mxu0 0.0
    %2048 = vmatprep.subr.mxu0 0.0
    %2049 = vmatpush1.xpose.msra.mxu0 0.0
    %2050 = vmatprep.subr.mxu0 0.0
    %2051 = vmatpush1.xpose.msra.mxu0 0.0
    %2052 = vmatprep.subr.mxu0 0.0
    %2053 = vmatpush1.xpose.msra.mxu0 0.0
    %2054 = vmatprep.subr.mxu0 0.0
    %2055 = vmatpush1.xpose.msra.mxu0 0.0
    %2056 = vmatprep.subr.mxu0 0.0
    %2057 = vmatpush1.xpose.msra.mxu0 0.0
    %2058 = vmatprep.subr.mxu0 0.0
    %2059 = vmatpush1.xpose.msra.mxu0 0.0
    %2060 = vmatprep.subr.mxu0 0.0
    %2061 = vmatpush1.xpose.msra.mxu0 0.0
    %2062 = vmatprep.subr.mxu0 0.0
    %2063 = vmatpush1.xpose.msra.mxu0 0.0
    %2064 = vmatprep.subr.mxu0 0.0
    %2065 = vmatpush1.xpose.msra.mxu0 0.0
    %2066 = vmatprep.subr.mxu0 0.0
    %2067 = vmatpush1.xpose.msra.mxu0 0.0
    %2068 = vmatprep.subr.mxu0 0.0
    %2069 = vmatpush1.xpose.msra.mxu0 0.0
    %2070 = vmatprep.subr.mxu0 0.0
    %2071 = vmatpush1.xpose.msra.mxu0 0.0
    %2072 = vmatprep.subr.mxu0 0.0
    %2073 = vmatpush1.xpose.msra.mxu0 0.0
    %2074 = vmatprep.subr.mxu0 0.0
    %2075 = vmatpush1.xpose.msra.mxu0 0.0
    %2076 = vmatprep.subr.mxu0 0.0
    %2077 = vmatpush1.xpose.msra.mxu0 0.0
    %2078 = vmatprep.subr.mxu0 0.0
    %2079 = vmatpush1.xpose.msra.mxu0 0.0
    %2080 = vmatprep.subr.mxu0 0.0
    %2081 = vmatpush1.xpose.msra.mxu0 0.0
    %2082 = vmatprep.subr.mxu0 0.0
    %2083 = vmatpush1.xpose.msra.mxu0 0.0
    %2084 = vmatprep.subr.mxu0 0.0
    %2085 = vmatpush1.xpose.msra.mxu0 0.0
    %2086 = vmatprep.subr.mxu0 0.0
    %2087 = vmatpush1.xpose.msra.mxu0 0.0
    %2088 = vmatprep.subr.mxu0 0.0
    %2089 = vmatpush1.xpose.msra.mxu0 0.0
    %2090 = vmatprep.subr.mxu0 0.0
    %2091 = vmatpush1.xpose.msra.mxu0 0.0
    %2092 = vmatprep.subr.mxu0 0.0
    %2093 = vmatpush1.xpose.msra.mxu0 0.0
    %2094 = vmatprep.subr.mxu0 0.0
    %2095 = vmatpush1.xpose.msra.mxu0 0.0
    %2096 = vmatprep.subr.mxu0 0.0
    %2097 = vmatpush1.xpose.msra.mxu0 0.0
    %2098 = vmatprep.subr.mxu0 0.0
    %2099 = vmatpush1.xpose.msra.mxu0 0.0
    %2100 = vmatprep.subr.mxu0 0.0
    %2101 = vmatpush1.xpose.msra.mxu0 0.0
    %2102 = vmatprep.subr.mxu0 0.0
    %2103 = vmatpush1.xpose.msra.mxu0 0.0
    %2104 = vmatprep.mubr.f32.mxu0 0.0
    %2105 = vmatmul.mubr.f32.gmra.mrb[0].mxu0 %v2035
    %v2106 = vpop.f32.mrb[0].mxu0
    %v2107 = vadd.f32 %v1956, %v2106
    %v2108 = vpop.f32.mrb[0].mxu0
    %2109 = vdwg.mxu0
    %v2111 = vsel %vm1006, %v289, 0
    %v2114 = vsel %vm1006, %v605, 0
    %2116 = vmatprep.subr.mxu0 0.0
    %2117 = vmatpush1.xpose.msra.mxu0 %v2114
    %2118 = vmatprep.subr.mxu0 0.0
    %2119 = vmatpush1.xpose.msra.mxu0 0.0
    %2120 = vmatprep.subr.mxu0 0.0
    %2121 = vmatpush1.xpose.msra.mxu0 0.0
    %2122 = vmatprep.subr.mxu0 0.0
    %2123 = vmatpush1.xpose.msra.mxu0 0.0
    %2124 = vmatprep.subr.mxu0 0.0
    %2125 = vmatpush1.xpose.msra.mxu0 0.0
    %2126 = vmatprep.subr.mxu0 0.0
    %2127 = vmatpush1.xpose.msra.mxu0 0.0
    %2128 = vmatprep.subr.mxu0 0.0
    %2129 = vmatpush1.xpose.msra.mxu0 0.0
    %2130 = vmatprep.subr.mxu0 0.0
    %2131 = vmatpush1.xpose.msra.mxu0 0.0
    %2132 = vmatprep.subr.mxu0 0.0
    %2133 = vmatpush1.xpose.msra.mxu0 0.0
    %2134 = vmatprep.subr.mxu0 0.0
    %2135 = vmatpush1.xpose.msra.mxu0 0.0
    %2136 = vmatprep.subr.mxu0 0.0
    %2137 = vmatpush1.xpose.msra.mxu0 0.0
    %2138 = vmatprep.subr.mxu0 0.0
    %2139 = vmatpush1.xpose.msra.mxu0 0.0
    %2140 = vmatprep.subr.mxu0 0.0
    %2141 = vmatpush1.xpose.msra.mxu0 0.0
    %2142 = vmatprep.subr.mxu0 0.0
    %2143 = vmatpush1.xpose.msra.mxu0 0.0
    %2144 = vmatprep.subr.mxu0 0.0
    %2145 = vmatpush1.xpose.msra.mxu0 0.0
    %2146 = vmatprep.subr.mxu0 0.0
    %2147 = vmatpush1.xpose.msra.mxu0 0.0
    %2148 = vmatprep.subr.mxu0 0.0
    %2149 = vmatpush1.xpose.msra.mxu0 0.0
    %2150 = vmatprep.subr.mxu0 0.0
    %2151 = vmatpush1.xpose.msra.mxu0 0.0
    %2152 = vmatprep.subr.mxu0 0.0
    %2153 = vmatpush1.xpose.msra.mxu0 0.0
    %2154 = vmatprep.subr.mxu0 0.0
    %2155 = vmatpush1.xpose.msra.mxu0 0.0
    %2156 = vmatprep.subr.mxu0 0.0
    %2157 = vmatpush1.xpose.msra.mxu0 0.0
    %2158 = vmatprep.subr.mxu0 0.0
    %2159 = vmatpush1.xpose.msra.mxu0 0.0
    %2160 = vmatprep.subr.mxu0 0.0
    %2161 = vmatpush1.xpose.msra.mxu0 0.0
    %2162 = vmatprep.subr.mxu0 0.0
    %2163 = vmatpush1.xpose.msra.mxu0 0.0
    %2164 = vmatprep.subr.mxu0 0.0
    %2165 = vmatpush1.xpose.msra.mxu0 0.0
    %2166 = vmatprep.subr.mxu0 0.0
    %2167 = vmatpush1.xpose.msra.mxu0 0.0
    %2168 = vmatprep.subr.mxu0 0.0
    %2169 = vmatpush1.xpose.msra.mxu0 0.0
    %2170 = vmatprep.subr.mxu0 0.0
    %2171 = vmatpush1.xpose.msra.mxu0 0.0
    %2172 = vmatprep.subr.mxu0 0.0
    %2173 = vmatpush1.xpose.msra.mxu0 0.0
    %2174 = vmatprep.subr.mxu0 0.0
    %2175 = vmatpush1.xpose.msra.mxu0 0.0
    %2176 = vmatprep.subr.mxu0 0.0
    %2177 = vmatpush1.xpose.msra.mxu0 0.0
    %2178 = vmatprep.subr.mxu0 0.0
    %2179 = vmatpush1.xpose.msra.mxu0 0.0
    %2180 = vmatprep.mubr.f32.mxu0 0.0
    %2181 = vmatmul.mubr.f32.gmra.mrb[0].mxu0 %v2111
    %v2182 = vpop.f32.mrb[0].mxu0
    %v2183 = vadd.f32 %v1956, %v2182
    %v2184 = vpop.f32.mrb[0].mxu0
    %2185 = vdwg.mxu0
    %v2187 = vsel %vm1006, %v364, 0
    %v2190 = vsel %vm1006, %v680, 0
    %2192 = vmatprep.subr.mxu0 0.0
    %2193 = vmatpush1.xpose.msra.mxu0 %v2190
    %2194 = vmatprep.subr.mxu0 0.0
    %2195 = vmatpush1.xpose.msra.mxu0 0.0
    %2196 = vmatprep.subr.mxu0 0.0
    %2197 = vmatpush1.xpose.msra.mxu0 0.0
    %2198 = vmatprep.subr.mxu0 0.0
    %2199 = vmatpush1.xpose.msra.mxu0 0.0
    %2200 = vmatprep.subr.mxu0 0.0
    %2201 = vmatpush1.xpose.msra.mxu0 0.0
    %2202 = vmatprep.subr.mxu0 0.0
    %2203 = vmatpush1.xpose.msra.mxu0 0.0
    %2204 = vmatprep.subr.mxu0 0.0
    %2205 = vmatpush1.xpose.msra.mxu0 0.0
    %2206 = vmatprep.subr.mxu0 0.0
    %2207 = vmatpush1.xpose.msra.mxu0 0.0
    %2208 = vmatprep.subr.mxu0 0.0
    %2209 = vmatpush1.xpose.msra.mxu0 0.0
    %2210 = vmatprep.subr.mxu0 0.0
    %2211 = vmatpush1.xpose.msra.mxu0 0.0
    %2212 = vmatprep.subr.mxu0 0.0
    %2213 = vmatpush1.xpose.msra.mxu0 0.0
    %2214 = vmatprep.subr.mxu0 0.0
    %2215 = vmatpush1.xpose.msra.mxu0 0.0
    %2216 = vmatprep.subr.mxu0 0.0
    %2217 = vmatpush1.xpose.msra.mxu0 0.0
    %2218 = vmatprep.subr.mxu0 0.0
    %2219 = vmatpush1.xpose.msra.mxu0 0.0
    %2220 = vmatprep.subr.mxu0 0.0
    %2221 = vmatpush1.xpose.msra.mxu0 0.0
    %2222 = vmatprep.subr.mxu0 0.0
    %2223 = vmatpush1.xpose.msra.mxu0 0.0
    %2224 = vmatprep.subr.mxu0 0.0
    %2225 = vmatpush1.xpose.msra.mxu0 0.0
    %2226 = vmatprep.subr.mxu0 0.0
    %2227 = vmatpush1.xpose.msra.mxu0 0.0
    %2228 = vmatprep.subr.mxu0 0.0
    %2229 = vmatpush1.xpose.msra.mxu0 0.0
    %2230 = vmatprep.subr.mxu0 0.0
    %2231 = vmatpush1.xpose.msra.mxu0 0.0
    %2232 = vmatprep.subr.mxu0 0.0
    %2233 = vmatpush1.xpose.msra.mxu0 0.0
    %2234 = vmatprep.subr.mxu0 0.0
    %2235 = vmatpush1.xpose.msra.mxu0 0.0
    %2236 = vmatprep.subr.mxu0 0.0
    %2237 = vmatpush1.xpose.msra.mxu0 0.0
    %2238 = vmatprep.subr.mxu0 0.0
    %2239 = vmatpush1.xpose.msra.mxu0 0.0
    %2240 = vmatprep.subr.mxu0 0.0
    %2241 = vmatpush1.xpose.msra.mxu0 0.0
    %2242 = vmatprep.subr.mxu0 0.0
    %2243 = vmatpush1.xpose.msra.mxu0 0.0
    %2244 = vmatprep.subr.mxu0 0.0
    %2245 = vmatpush1.xpose.msra.mxu0 0.0
    %2246 = vmatprep.subr.mxu0 0.0
    %2247 = vmatpush1.xpose.msra.mxu0 0.0
    %2248 = vmatprep.subr.mxu0 0.0
    %2249 = vmatpush1.xpose.msra.mxu0 0.0
    %2250 = vmatprep.subr.mxu0 0.0
    %2251 = vmatpush1.xpose.msra.mxu0 0.0
    %2252 = vmatprep.subr.mxu0 0.0
    %2253 = vmatpush1.xpose.msra.mxu0 0.0
    %2254 = vmatprep.subr.mxu0 0.0
    %2255 = vmatpush1.xpose.msra.mxu0 0.0
    %2256 = vmatprep.mubr.f32.mxu0 0.0
    %2257 = vmatmul.mubr.f32.gmra.mrb[0].mxu0 %v2187
    %v2258 = vpop.f32.mrb[0].mxu0
    %v2259 = vadd.f32 %v1956, %v2258
    %v2260 = vpop.f32.mrb[0].mxu0
    %2261 = vdwg.mxu0
    %v2262 = vsel %vm1006, %v2031, -inf
    %2263 = vmax.xlane.f32.xlu0 %v2262
    %v2264 = vpop.xlane.xlu0 %2263
    %v2265 = vsel %vm1006, %v2107, -inf
    %2266 = vmax.xlane.f32.xlu0 %v2265
    %v2267 = vpop.xlane.xlu0 %2266
    %v2268 = vsel %vm1006, %v2183, -inf
    %2269 = vmax.xlane.f32.xlu0 %v2268
    %v2270 = vpop.xlane.xlu0 %2269
    %v2271 = vsel %vm1006, %v2259, -inf
    %2272 = vmax.xlane.f32.xlu0 %v2271
    %v2273 = vpop.xlane.xlu0 %2272
    %v2274 = vsub.f32 %v2031, %v2264
    %v2275 = vsub.f32 %v2107, %v2267
    %v2276 = vsub.f32 %v2183, %v2270
    %v2277 = vsub.f32 %v2259, %v2273
    %v2278 = vmul.f32 %v2274, 1.442695
    %v2279 = vpow.pop %v2278
    %v2280 = vmul.f32 %v2275, 1.442695
    %v2281 = vpow.pop %v2280
    %v2282 = vmul.f32 %v2276, 1.442695
    %v2283 = vpow.pop %v2282
    %v2284 = vmul.f32 %v2277, 1.442695
    %v2285 = vpow.pop %v2284
    %v2286 = vsel %vm1006, %v2279, 0.0
    %2287 = vadd.xlane.f32.xlu0 %v2286
    %v2288 = vpop.xlane.xlu0 %2287
    %v2289 = vsel %vm1006, %v2281, 0.0
    %2290 = vadd.xlane.f32.xlu0 %v2289
    %v2291 = vpop.xlane.xlu0 %2290
    %v2292 = vsel %vm1006, %v2283, 0.0
    %2293 = vadd.xlane.f32.xlu0 %v2292
    %v2294 = vpop.xlane.xlu0 %2293
    %v2295 = vsel %vm1006, %v2285, 0.0
    %2296 = vadd.xlane.f32.xlu0 %v2295
    %v2297 = vpop.xlane.xlu0 %2296
    %v2298 = vrcp.pop %v2288
    %v2299 = vrcp.pop %v2291
    %v2300 = vrcp.pop %v2294
    %v2301 = vrcp.pop %v2297
    %v2302 = vmul.f32 %v2279, %v2298
    %v2303 = vmul.f32 %v2281, %v2299
    %v2304 = vmul.f32 %v2283, %v2300
    %v2305 = vmul.f32 %v2285, %v2301
    %v2307 = vsel %vm1006, %v2302, 0
    %2309 = vmatprep.subr.mxu0 0.0
    %2310 = vmatpush1.msra.mxu0 %v771
    %2311 = vmatprep.subr.mxu0 0.0
    %2312 = vmatpush1.msra.mxu0 0.0
    %2313 = vmatprep.subr.mxu0 0.0
    %2314 = vmatpush1.msra.mxu0 0.0
    %2315 = vmatprep.subr.mxu0 0.0
    %2316 = vmatpush1.msra.mxu0 0.0
    %2317 = vmatprep.subr.mxu0 0.0
    %2318 = vmatpush1.msra.mxu0 0.0
    %2319 = vmatprep.subr.mxu0 0.0
    %2320 = vmatpush1.msra.mxu0 0.0
    %2321 = vmatprep.subr.mxu0 0.0
    %2322 = vmatpush1.msra.mxu0 0.0
    %2323 = vmatprep.subr.mxu0 0.0
    %2324 = vmatpush1.msra.mxu0 0.0
    %2325 = vmatprep.subr.mxu0 0.0
    %2326 = vmatpush1.msra.mxu0 0.0
    %2327 = vmatprep.subr.mxu0 0.0
    %2328 = vmatpush1.msra.mxu0 0.0
    %2329 = vmatprep.subr.mxu0 0.0
    %2330 = vmatpush1.msra.mxu0 0.0
    %2331 = vmatprep.subr.mxu0 0.0
    %2332 = vmatpush1.msra.mxu0 0.0
    %2333 = vmatprep.subr.mxu0 0.0
    %2334 = vmatpush1.msra.mxu0 0.0
    %2335 = vmatprep.subr.mxu0 0.0
    %2336 = vmatpush1.msra.mxu0 0.0
    %2337 = vmatprep.subr.mxu0 0.0
    %2338 = vmatpush1.msra.mxu0 0.0
    %2339 = vmatprep.subr.mxu0 0.0
    %2340 = vmatpush1.msra.mxu0 0.0
    %2341 = vmatprep.subr.mxu0 0.0
    %2342 = vmatpush1.msra.mxu0 0.0
    %2343 = vmatprep.subr.mxu0 0.0
    %2344 = vmatpush1.msra.mxu0 0.0
    %2345 = vmatprep.subr.mxu0 0.0
    %2346 = vmatpush1.msra.mxu0 0.0
    %2347 = vmatprep.subr.mxu0 0.0
    %2348 = vmatpush1.msra.mxu0 0.0
    %2349 = vmatprep.subr.mxu0 0.0
    %2350 = vmatpush1.msra.mxu0 0.0
    %2351 = vmatprep.subr.mxu0 0.0
    %2352 = vmatpush1.msra.mxu0 0.0
    %2353 = vmatprep.subr.mxu0 0.0
    %2354 = vmatpush1.msra.mxu0 0.0
    %2355 = vmatprep.subr.mxu0 0.0
    %2356 = vmatpush1.msra.mxu0 0.0
    %2357 = vmatprep.subr.mxu0 0.0
    %2358 = vmatpush1.msra.mxu0 0.0
    %2359 = vmatprep.subr.mxu0 0.0
    %2360 = vmatpush1.msra.mxu0 0.0
    %2361 = vmatprep.subr.mxu0 0.0
    %2362 = vmatpush1.msra.mxu0 0.0
    %2363 = vmatprep.subr.mxu0 0.0
    %2364 = vmatpush1.msra.mxu0 0.0
    %2365 = vmatprep.subr.mxu0 0.0
    %2366 = vmatpush1.msra.mxu0 0.0
    %2367 = vmatprep.subr.mxu0 0.0
    %2368 = vmatpush1.msra.mxu0 0.0
    %2369 = vmatprep.subr.mxu0 0.0
    %2370 = vmatpush1.msra.mxu0 0.0
    %2371 = vmatprep.subr.mxu0 0.0
    %2372 = vmatpush1.msra.mxu0 0.0
    %2373 = vmatprep.mubr.f32.mxu0 0.0
    %2374 = vmatmul.mubr.f32.gmra.mrb[0].mxu0 %v2307
    %v2375 = vpop.f32.mrb[0].mxu0
    %v2376 = vadd.f32 0.0, %v2375
    %v2377 = vpop.f32.mrb[0].mxu0
    %2378 = vdwg.mxu0
    %v2380 = vsel %vm1006, %v2303, 0
    %2382 = vmatprep.subr.mxu0 0.0
    %2383 = vmatpush1.msra.mxu0 %v846
    %2384 = vmatprep.subr.mxu0 0.0
    %2385 = vmatpush1.msra.mxu0 0.0
    %2386 = vmatprep.subr.mxu0 0.0
    %2387 = vmatpush1.msra.mxu0 0.0
    %2388 = vmatprep.subr.mxu0 0.0
    %2389 = vmatpush1.msra.mxu0 0.0
    %2390 = vmatprep.subr.mxu0 0.0
    %2391 = vmatpush1.msra.mxu0 0.0
    %2392 = vmatprep.subr.mxu0 0.0
    %2393 = vmatpush1.msra.mxu0 0.0
    %2394 = vmatprep.subr.mxu0 0.0
    %2395 = vmatpush1.msra.mxu0 0.0
    %2396 = vmatprep.subr.mxu0 0.0
    %2397 = vmatpush1.msra.mxu0 0.0
    %2398 = vmatprep.subr.mxu0 0.0
    %2399 = vmatpush1.msra.mxu0 0.0
    %2400 = vmatprep.subr.mxu0 0.0
    %2401 = vmatpush1.msra.mxu0 0.0
    %2402 = vmatprep.subr.mxu0 0.0
    %2403 = vmatpush1.msra.mxu0 0.0
    %2404 = vmatprep.subr.mxu0 0.0
    %2405 = vmatpush1.msra.mxu0 0.0
    %2406 = vmatprep.subr.mxu0 0.0
    %2407 = vmatpush1.msra.mxu0 0.0
    %2408 = vmatprep.subr.mxu0 0.0
    %2409 = vmatpush1.msra.mxu0 0.0
    %2410 = vmatprep.subr.mxu0 0.0
    %2411 = vmatpush1.msra.mxu0 0.0
    %2412 = vmatprep.subr.mxu0 0.0
    %2413 = vmatpush1.msra.mxu0 0.0
    %2414 = vmatprep.subr.mxu0 0.0
    %2415 = vmatpush1.msra.mxu0 0.0
    %2416 = vmatprep.subr.mxu0 0.0
    %2417 = vmatpush1.msra.mxu0 0.0
    %2418 = vmatprep.subr.mxu0 0.0
    %2419 = vmatpush1.msra.mxu0 0.0
    %2420 = vmatprep.subr.mxu0 0.0
    %2421 = vmatpush1.msra.mxu0 0.0
    %2422 = vmatprep.subr.mxu0 0.0
    %2423 = vmatpush1.msra.mxu0 0.0
    %2424 = vmatprep.subr.mxu0 0.0
    %2425 = vmatpush1.msra.mxu0 0.0
    %2426 = vmatprep.subr.mxu0 0.0
    %2427 = vmatpush1.msra.mxu0 0.0
    %2428 = vmatprep.subr.mxu0 0.0
    %2429 = vmatpush1.msra.mxu0 0.0
    %2430 = vmatprep.subr.mxu0 0.0
    %2431 = vmatpush1.msra.mxu0 0.0
    %2432 = vmatprep.subr.mxu0 0.0
    %2433 = vmatpush1.msra.mxu0 0.0
    %2434 = vmatprep.subr.mxu0 0.0
    %2435 = vmatpush1.msra.mxu0 0.0
    %2436 = vmatprep.subr.mxu0 0.0
    %2437 = vmatpush1.msra.mxu0 0.0
    %2438 = vmatprep.subr.mxu0 0.0
    %2439 = vmatpush1.msra.mxu0 0.0
    %2440 = vmatprep.subr.mxu0 0.0
    %2441 = vmatpush1.msra.mxu0 0.0
    %2442 = vmatprep.subr.mxu0 0.0
    %2443 = vmatpush1.msra.mxu0 0.0
    %2444 = vmatprep.subr.mxu0 0.0
    %2445 = vmatpush1.msra.mxu0 0.0
    %2446 = vmatprep.mubr.f32.mxu0 0.0
    %2447 = vmatmul.mubr.f32.gmra.mrb[0].mxu0 %v2380
    %v2448 = vpop.f32.mrb[0].mxu0
    %v2449 = vadd.f32 0.0, %v2448
    %v2450 = vpop.f32.mrb[0].mxu0
    %2451 = vdwg.mxu0
    %v2453 = vsel %vm1006, %v2304, 0
    %2455 = vmatprep.subr.mxu0 0.0
    %2456 = vmatpush1.msra.mxu0 %v921
    %2457 = vmatprep.subr.mxu0 0.0
    %2458 = vmatpush1.msra.mxu0 0.0
    %2459 = vmatprep.subr.mxu0 0.0
    %2460 = vmatpush1.msra.mxu0 0.0
    %2461 = vmatprep.subr.mxu0 0.0
    %2462 = vmatpush1.msra.mxu0 0.0
    %2463 = vmatprep.subr.mxu0 0.0
    %2464 = vmatpush1.msra.mxu0 0.0
    %2465 = vmatprep.subr.mxu0 0.0
    %2466 = vmatpush1.msra.mxu0 0.0
    %2467 = vmatprep.subr.mxu0 0.0
    %2468 = vmatpush1.msra.mxu0 0.0
    %2469 = vmatprep.subr.mxu0 0.0
    %2470 = vmatpush1.msra.mxu0 0.0
    %2471 = vmatprep.subr.mxu0 0.0
    %2472 = vmatpush1.msra.mxu0 0.0
    %2473 = vmatprep.subr.mxu0 0.0
    %2474 = vmatpush1.msra.mxu0 0.0
    %2475 = vmatprep.subr.mxu0 0.0
    %2476 = vmatpush1.msra.mxu0 0.0
    %2477 = vmatprep.subr.mxu0 0.0
    %2478 = vmatpush1.msra.mxu0 0.0
    %2479 = vmatprep.subr.mxu0 0.0
    %2480 = vmatpush1.msra.mxu0 0.0
    %2481 = vmatprep.subr.mxu0 0.0
    %2482 = vmatpush1.msra.mxu0 0.0
    %2483 = vmatprep.subr.mxu0 0.0
    %2484 = vmatpush1.msra.mxu0 0.0
    %2485 = vmatprep.subr.mxu0 0.0
    %2486 = vmatpush1.msra.mxu0 0.0
    %2487 = vmatprep.subr.mxu0 0.0
    %2488 = vmatpush1.msra.mxu0 0.0
    %2489 = vmatprep.subr.mxu0 0.0
    %2490 = vmatpush1.msra.mxu0 0.0
    %2491 = vmatprep.subr.mxu0 0.0
    %2492 = vmatpush1.msra.mxu0 0.0
    %2493 = vmatprep.subr.mxu0 0.0
    %2494 = vmatpush1.msra.mxu0 0.0
    %2495 = vmatprep.subr.mxu0 0.0
    %2496 = vmatpush1.msra.mxu0 0.0
    %2497 = vmatprep.subr.mxu0 0.0
    %2498 = vmatpush1.msra.mxu0 0.0
    %2499 = vmatprep.subr.mxu0 0.0
    %2500 = vmatpush1.msra.mxu0 0.0
    %2501 = vmatprep.subr.mxu0 0.0
    %2502 = vmatpush1.msra.mxu0 0.0
    %2503 = vmatprep.subr.mxu0 0.0
    %2504 = vmatpush1.msra.mxu0 0.0
    %2505 = vmatprep.subr.mxu0 0.0
    %2506 = vmatpush1.msra.mxu0 0.0
    %2507 = vmatprep.subr.mxu0 0.0
    %2508 = vmatpush1.msra.mxu0 0.0
    %2509 = vmatprep.subr.mxu0 0.0
    %2510 = vmatpush1.msra.mxu0 0.0
    %2511 = vmatprep.subr.mxu0 0.0
    %2512 = vmatpush1.msra.mxu0 0.0
    %2513 = vmatprep.subr.mxu0 0.0
    %2514 = vmatpush1.msra.mxu0 0.0
    %2515 = vmatprep.subr.mxu0 0.0
    %2516 = vmatpush1.msra.mxu0 0.0
    %2517 = vmatprep.subr.mxu0 0.0
    %2518 = vmatpush1.msra.mxu0 0.0
    %2519 = vmatprep.mubr.f32.mxu0 0.0
    %2520 = vmatmul.mubr.f32.gmra.mrb[0].mxu0 %v2453
    %v2521 = vpop.f32.mrb[0].mxu0
    %v2522 = vadd.f32 0.0, %v2521
    %v2523 = vpop.f32.mrb[0].mxu0
    %2524 = vdwg.mxu0
    %v2526 = vsel %vm1006, %v2305, 0
    %2528 = vmatprep.subr.mxu0 0.0
    %2529 = vmatpush1.msra.mxu0 %v996
    %2530 = vmatprep.subr.mxu0 0.0
    %2531 = vmatpush1.msra.mxu0 0.0
    %2532 = vmatprep.subr.mxu0 0.0
    %2533 = vmatpush1.msra.mxu0 0.0
    %2534 = vmatprep.subr.mxu0 0.0
    %2535 = vmatpush1.msra.mxu0 0.0
    %2536 = vmatprep.subr.mxu0 0.0
    %2537 = vmatpush1.msra.mxu0 0.0
    %2538 = vmatprep.subr.mxu0 0.0
    %2539 = vmatpush1.msra.mxu0 0.0
    %2540 = vmatprep.subr.mxu0 0.0
    %2541 = vmatpush1.msra.mxu0 0.0
    %2542 = vmatprep.subr.mxu0 0.0
    %2543 = vmatpush1.msra.mxu0 0.0
    %2544 = vmatprep.subr.mxu0 0.0
    %2545 = vmatpush1.msra.mxu0 0.0
    %2546 = vmatprep.subr.mxu0 0.0
    %2547 = vmatpush1.msra.mxu0 0.0
    %2548 = vmatprep.subr.mxu0 0.0
    %2549 = vmatpush1.msra.mxu0 0.0
    %2550 = vmatprep.subr.mxu0 0.0
    %2551 = vmatpush1.msra.mxu0 0.0
    %2552 = vmatprep.subr.mxu0 0.0
    %2553 = vmatpush1.msra.mxu0 0.0
    %2554 = vmatprep.subr.mxu0 0.0
    %2555 = vmatpush1.msra.mxu0 0.0
    %2556 = vmatprep.subr.mxu0 0.0
    %2557 = vmatpush1.msra.mxu0 0.0
    %2558 = vmatprep.subr.mxu0 0.0
    %2559 = vmatpush1.msra.mxu0 0.0
    %2560 = vmatprep.subr.mxu0 0.0
    %2561 = vmatpush1.msra.mxu0 0.0
    %2562 = vmatprep.subr.mxu0 0.0
    %2563 = vmatpush1.msra.mxu0 0.0
    %2564 = vmatprep.subr.mxu0 0.0
    %2565 = vmatpush1.msra.mxu0 0.0
    %2566 = vmatprep.subr.mxu0 0.0
    %2567 = vmatpush1.msra.mxu0 0.0
    %2568 = vmatprep.subr.mxu0 0.0
    %2569 = vmatpush1.msra.mxu0 0.0
    %2570 = vmatprep.subr.mxu0 0.0
    %2571 = vmatpush1.msra.mxu0 0.0
    %2572 = vmatprep.subr.mxu0 0.0
    %2573 = vmatpush1.msra.mxu0 0.0
    %2574 = vmatprep.subr.mxu0 0.0
    %2575 = vmatpush1.msra.mxu0 0.0
    %2576 = vmatprep.subr.mxu0 0.0
    %2577 = vmatpush1.msra.mxu0 0.0
    %2578 = vmatprep.subr.mxu0 0.0
    %2579 = vmatpush1.msra.mxu0 0.0
    %2580 = vmatprep.subr.mxu0 0.0
    %2581 = vmatpush1.msra.mxu0 0.0
    %2582 = vmatprep.subr.mxu0 0.0
    %2583 = vmatpush1.msra.mxu0 0.0
    %2584 = vmatprep.subr.mxu0 0.0
    %2585 = vmatpush1.msra.mxu0 0.0
    %2586 = vmatprep.subr.mxu0 0.0
    %2587 = vmatpush1.msra.mxu0 0.0
    %2588 = vmatprep.subr.mxu0 0.0
    %2589 = vmatpush1.msra.mxu0 0.0
    %2590 = vmatprep.subr.mxu0 0.0
    %2591 = vmatpush1.msra.mxu0 0.0
    %2592 = vmatprep.mubr.f32.mxu0 0.0
    %2593 = vmatmul.mubr.f32.gmra.mrb[0].mxu0 %v2526
    %v2594 = vpop.f32.mrb[0].mxu0
    %v2595 = vadd.f32 0.0, %v2594
    %v2596 = vpop.f32.mrb[0].mxu0
    %2597 = vdwg.mxu0
    %v2598 = vld [vmem:[%s5] sm:$0xff]
    %v2599 = vld [vmem:[%s5 + $0x8] sm:$0xff]
    %v2600 = vld [vmem:[%s5 + $0x10] sm:$0xff]
    %v2601 = vld [vmem:[%s5 + $0x18] sm:$0xff]
    %v2603 = vsel %vm1006, %v2376, 0
    %2605 = vmatprep.subr.mxu0 0.0
    %2606 = vmatpush1.msra.mxu0 %v2598
    %2607 = vmatprep.subr.mxu0 0.0
    %2608 = vmatpush1.msra.mxu0 0.0
    %2609 = vmatprep.subr.mxu0 0.0
    %2610 = vmatpush1.msra.mxu0 0.0
    %2611 = vmatprep.subr.mxu0 0.0
    %2612 = vmatpush1.msra.mxu0 0.0
    %2613 = vmatprep.subr.mxu0 0.0
    %2614 = vmatpush1.msra.mxu0 0.0
    %2615 = vmatprep.subr.mxu0 0.0
    %2616 = vmatpush1.msra.mxu0 0.0
    %2617 = vmatprep.subr.mxu0 0.0
    %2618 = vmatpush1.msra.mxu0 0.0
    %2619 = vmatprep.subr.mxu0 0.0
    %2620 = vmatpush1.msra.mxu0 0.0
    %2621 = vmatprep.subr.mxu0 0.0
    %2622 = vmatpush1.msra.mxu0 0.0
    %2623 = vmatprep.subr.mxu0 0.0
    %2624 = vmatpush1.msra.mxu0 0.0
    %2625 = vmatprep.subr.mxu0 0.0
    %2626 = vmatpush1.msra.mxu0 0.0
    %2627 = vmatprep.subr.mxu0 0.0
    %2628 = vmatpush1.msra.mxu0 0.0
    %2629 = vmatprep.subr.mxu0 0.0
    %2630 = vmatpush1.msra.mxu0 0.0
    %2631 = vmatprep.subr.mxu0 0.0
    %2632 = vmatpush1.msra.mxu0 0.0
    %2633 = vmatprep.subr.mxu0 0.0
    %2634 = vmatpush1.msra.mxu0 0.0
    %2635 = vmatprep.subr.mxu0 0.0
    %2636 = vmatpush1.msra.mxu0 0.0
    %2637 = vmatprep.subr.mxu0 0.0
    %2638 = vmatpush1.msra.mxu0 0.0
    %2639 = vmatprep.subr.mxu0 0.0
    %2640 = vmatpush1.msra.mxu0 0.0
    %2641 = vmatprep.subr.mxu0 0.0
    %2642 = vmatpush1.msra.mxu0 0.0
    %2643 = vmatprep.subr.mxu0 0.0
    %2644 = vmatpush1.msra.mxu0 0.0
    %2645 = vmatprep.subr.mxu0 0.0
    %2646 = vmatpush1.msra.mxu0 0.0
    %2647 = vmatprep.subr.mxu0 0.0
    %2648 = vmatpush1.msra.mxu0 0.0
    %2649 = vmatprep.subr.mxu0 0.0
    %2650 = vmatpush1.msra.mxu0 0.0
    %2651 = vmatprep.subr.mxu0 0.0
    %2652 = vmatpush1.msra.mxu0 0.0
    %2653 = vmatprep.subr.mxu0 0.0
    %2654 = vmatpush1.msra.mxu0 0.0
    %2655 = vmatprep.subr.mxu0 0.0
    %2656 = vmatpush1.msra.mxu0 0.0
    %2657 = vmatprep.subr.mxu0 0.0
    %2658 = vmatpush1.msra.mxu0 0.0
    %2659 = vmatprep.subr.mxu0 0.0
    %2660 = vmatpush1.msra.mxu0 0.0
    %2661 = vmatprep.subr.mxu0 0.0
    %2662 = vmatpush1.msra.mxu0 0.0
    %2663 = vmatprep.subr.mxu0 0.0
    %2664 = vmatpush1.msra.mxu0 0.0
    %2665 = vmatprep.subr.mxu0 0.0
    %2666 = vmatpush1.msra.mxu0 0.0
    %2667 = vmatprep.subr.mxu0 0.0
    %2668 = vmatpush1.msra.mxu0 0.0
    %2669 = vmatprep.mubr.f32.mxu0 0.0
    %2670 = vmatmul.mubr.f32.gmra.mrb[0].mxu0 %v2603
    %v2671 = vpop.f32.mrb[0].mxu0
    %v2672 = vadd.f32 0.0, %v2671
    %v2673 = vpop.f32.mrb[0].mxu0
    %2674 = vdwg.mxu0
    %v2676 = vsel %vm1006, %v2449, 0
    %2678 = vmatprep.subr.mxu0 0.0
    %2679 = vmatpush1.msra.mxu0 %v2599
    %2680 = vmatprep.subr.mxu0 0.0
    %2681 = vmatpush1.msra.mxu0 0.0
    %2682 = vmatprep.subr.mxu0 0.0
    %2683 = vmatpush1.msra.mxu0 0.0
    %2684 = vmatprep.subr.mxu0 0.0
    %2685 = vmatpush1.msra.mxu0 0.0
    %2686 = vmatprep.subr.mxu0 0.0
    %2687 = vmatpush1.msra.mxu0 0.0
    %2688 = vmatprep.subr.mxu0 0.0
    %2689 = vmatpush1.msra.mxu0 0.0
    %2690 = vmatprep.subr.mxu0 0.0
    %2691 = vmatpush1.msra.mxu0 0.0
    %2692 = vmatprep.subr.mxu0 0.0
    %2693 = vmatpush1.msra.mxu0 0.0
    %2694 = vmatprep.subr.mxu0 0.0
    %2695 = vmatpush1.msra.mxu0 0.0
    %2696 = vmatprep.subr.mxu0 0.0
    %2697 = vmatpush1.msra.mxu0 0.0
    %2698 = vmatprep.subr.mxu0 0.0
    %2699 = vmatpush1.msra.mxu0 0.0
    %2700 = vmatprep.subr.mxu0 0.0
    %2701 = vmatpush1.msra.mxu0 0.0
    %2702 = vmatprep.subr.mxu0 0.0
    %2703 = vmatpush1.msra.mxu0 0.0
    %2704 = vmatprep.subr.mxu0 0.0
    %2705 = vmatpush1.msra.mxu0 0.0
    %2706 = vmatprep.subr.mxu0 0.0
    %2707 = vmatpush1.msra.mxu0 0.0
    %2708 = vmatprep.subr.mxu0 0.0
    %2709 = vmatpush1.msra.mxu0 0.0
    %2710 = vmatprep.subr.mxu0 0.0
    %2711 = vmatpush1.msra.mxu0 0.0
    %2712 = vmatprep.subr.mxu0 0.0
    %2713 = vmatpush1.msra.mxu0 0.0
    %2714 = vmatprep.subr.mxu0 0.0
    %2715 = vmatpush1.msra.mxu0 0.0
    %2716 = vmatprep.subr.mxu0 0.0
    %2717 = vmatpush1.msra.mxu0 0.0
    %2718 = vmatprep.subr.mxu0 0.0
    %2719 = vmatpush1.msra.mxu0 0.0
    %2720 = vmatprep.subr.mxu0 0.0
    %2721 = vmatpush1.msra.mxu0 0.0
    %2722 = vmatprep.subr.mxu0 0.0
    %2723 = vmatpush1.msra.mxu0 0.0
    %2724 = vmatprep.subr.mxu0 0.0
    %2725 = vmatpush1.msra.mxu0 0.0
    %2726 = vmatprep.subr.mxu0 0.0
    %2727 = vmatpush1.msra.mxu0 0.0
    %2728 = vmatprep.subr.mxu0 0.0
    %2729 = vmatpush1.msra.mxu0 0.0
    %2730 = vmatprep.subr.mxu0 0.0
    %2731 = vmatpush1.msra.mxu0 0.0
    %2732 = vmatprep.subr.mxu0 0.0
    %2733 = vmatpush1.msra.mxu0 0.0
    %2734 = vmatprep.subr.mxu0 0.0
    %2735 = vmatpush1.msra.mxu0 0.0
    %2736 = vmatprep.subr.mxu0 0.0
    %2737 = vmatpush1.msra.mxu0 0.0
    %2738 = vmatprep.subr.mxu0 0.0
    %2739 = vmatpush1.msra.mxu0 0.0
    %2740 = vmatprep.subr.mxu0 0.0
    %2741 = vmatpush1.msra.mxu0 0.0
    %2742 = vmatprep.mubr.f32.mxu0 0.0
    %2743 = vmatmul.mubr.f32.gmra.mrb[0].mxu0 %v2676
    %v2744 = vpop.f32.mrb[0].mxu0
    %v2745 = vadd.f32 0.0, %v2744
    %v2746 = vpop.f32.mrb[0].mxu0
    %2747 = vdwg.mxu0
    %v2749 = vsel %vm1006, %v2522, 0
    %2751 = vmatprep.subr.mxu0 0.0
    %2752 = vmatpush1.msra.mxu0 %v2600
    %2753 = vmatprep.subr.mxu0 0.0
    %2754 = vmatpush1.msra.mxu0 0.0
    %2755 = vmatprep.subr.mxu0 0.0
    %2756 = vmatpush1.msra.mxu0 0.0
    %2757 = vmatprep.subr.mxu0 0.0
    %2758 = vmatpush1.msra.mxu0 0.0
    %2759 = vmatprep.subr.mxu0 0.0
    %2760 = vmatpush1.msra.mxu0 0.0
    %2761 = vmatprep.subr.mxu0 0.0
    %2762 = vmatpush1.msra.mxu0 0.0
    %2763 = vmatprep.subr.mxu0 0.0
    %2764 = vmatpush1.msra.mxu0 0.0
    %2765 = vmatprep.subr.mxu0 0.0
    %2766 = vmatpush1.msra.mxu0 0.0
    %2767 = vmatprep.subr.mxu0 0.0
    %2768 = vmatpush1.msra.mxu0 0.0
    %2769 = vmatprep.subr.mxu0 0.0
    %2770 = vmatpush1.msra.mxu0 0.0
    %2771 = vmatprep.subr.mxu0 0.0
    %2772 = vmatpush1.msra.mxu0 0.0
    %2773 = vmatprep.subr.mxu0 0.0
    %2774 = vmatpush1.msra.mxu0 0.0
    %2775 = vmatprep.subr.mxu0 0.0
    %2776 = vmatpush1.msra.mxu0 0.0
    %2777 = vmatprep.subr.mxu0 0.0
    %2778 = vmatpush1.msra.mxu0 0.0
    %2779 = vmatprep.subr.mxu0 0.0
    %2780 = vmatpush1.msra.mxu0 0.0
    %2781 = vmatprep.subr.mxu0 0.0
    %2782 = vmatpush1.msra.mxu0 0.0
    %2783 = vmatprep.subr.mxu0 0.0
    %2784 = vmatpush1.msra.mxu0 0.0
    %2785 = vmatprep.subr.mxu0 0.0
    %2786 = vmatpush1.msra.mxu0 0.0
    %2787 = vmatprep.subr.mxu0 0.0
    %2788 = vmatpush1.msra.mxu0 0.0
    %2789 = vmatprep.subr.mxu0 0.0
    %2790 = vmatpush1.msra.mxu0 0.0
    %2791 = vmatprep.subr.mxu0 0.0
    %2792 = vmatpush1.msra.mxu0 0.0
    %2793 = vmatprep.subr.mxu0 0.0
    %2794 = vmatpush1.msra.mxu0 0.0
    %2795 = vmatprep.subr.mxu0 0.0
    %2796 = vmatpush1.msra.mxu0 0.0
    %2797 = vmatprep.subr.mxu0 0.0
    %2798 = vmatpush1.msra.mxu0 0.0
    %2799 = vmatprep.subr.mxu0 0.0
    %2800 = vmatpush1.msra.mxu0 0.0
    %2801 = vmatprep.subr.mxu0 0.0
    %2802 = vmatpush1.msra.mxu0 0.0
    %2803 = vmatprep.subr.mxu0 0.0
    %2804 = vmatpush1.msra.mxu0 0.0
    %2805 = vmatprep.subr.mxu0 0.0
    %2806 = vmatpush1.msra.mxu0 0.0
    %2807 = vmatprep.subr.mxu0 0.0
    %2808 = vmatpush1.msra.mxu0 0.0
    %2809 = vmatprep.subr.mxu0 0.0
    %2810 = vmatpush1.msra.mxu0 0.0
    %2811 = vmatprep.subr.mxu0 0.0
    %2812 = vmatpush1.msra.mxu0 0.0
    %2813 = vmatprep.subr.mxu0 0.0
    %2814 = vmatpush1.msra.mxu0 0.0
    %2815 = vmatprep.mubr.f32.mxu0 0.0
    %2816 = vmatmul.mubr.f32.gmra.mrb[0].mxu0 %v2749
    %v2817 = vpop.f32.mrb[0].mxu0
    %v2818 = vadd.f32 0.0, %v2817
    %v2819 = vpop.f32.mrb[0].mxu0
    %2820 = vdwg.mxu0
    %v2822 = vsel %vm1006, %v2595, 0
    %2824 = vmatprep.subr.mxu0 0.0
    %2825 = vmatpush1.msra.mxu0 %v2601
    %2826 = vmatprep.subr.mxu0 0.0
    %2827 = vmatpush1.msra.mxu0 0.0
    %2828 = vmatprep.subr.mxu0 0.0
    %2829 = vmatpush1.msra.mxu0 0.0
    %2830 = vmatprep.subr.mxu0 0.0
    %2831 = vmatpush1.msra.mxu0 0.0
    %2832 = vmatprep.subr.mxu0 0.0
    %2833 = vmatpush1.msra.mxu0 0.0
    %2834 = vmatprep.subr.mxu0 0.0
    %2835 = vmatpush1.msra.mxu0 0.0
    %2836 = vmatprep.subr.mxu0 0.0
    %2837 = vmatpush1.msra.mxu0 0.0
    %2838 = vmatprep.subr.mxu0 0.0
    %2839 = vmatpush1.msra.mxu0 0.0
    %2840 = vmatprep.subr.mxu0 0.0
    %2841 = vmatpush1.msra.mxu0 0.0
    %2842 = vmatprep.subr.mxu0 0.0
    %2843 = vmatpush1.msra.mxu0 0.0
    %2844 = vmatprep.subr.mxu0 0.0
    %2845 = vmatpush1.msra.mxu0 0.0
    %2846 = vmatprep.subr.mxu0 0.0
    %2847 = vmatpush1.msra.mxu0 0.0
    %2848 = vmatprep.subr.mxu0 0.0
    %2849 = vmatpush1.msra.mxu0 0.0
    %2850 = vmatprep.subr.mxu0 0.0
    %2851 = vmatpush1.msra.mxu0 0.0
    %2852 = vmatprep.subr.mxu0 0.0
    %2853 = vmatpush1.msra.mxu0 0.0
    %2854 = vmatprep.subr.mxu0 0.0
    %2855 = vmatpush1.msra.mxu0 0.0
    %2856 = vmatprep.subr.mxu0 0.0
    %2857 = vmatpush1.msra.mxu0 0.0
    %2858 = vmatprep.subr.mxu0 0.0
    %2859 = vmatpush1.msra.mxu0 0.0
    %2860 = vmatprep.subr.mxu0 0.0
    %2861 = vmatpush1.msra.mxu0 0.0
    %2862 = vmatprep.subr.mxu0 0.0
    %2863 = vmatpush1.msra.mxu0 0.0
    %2864 = vmatprep.subr.mxu0 0.0
    %2865 = vmatpush1.msra.mxu0 0.0
    %2866 = vmatprep.subr.mxu0 0.0
    %2867 = vmatpush1.msra.mxu0 0.0
    %2868 = vmatprep.subr.mxu0 0.0
    %2869 = vmatpush1.msra.mxu0 0.0
    %2870 = vmatprep.subr.mxu0 0.0
    %2871 = vmatpush1.msra.mxu0 0.0
    %2872 = vmatprep.subr.mxu0 0.0
    %2873 = vmatpush1.msra.mxu0 0.0
    %2874 = vmatprep.subr.mxu0 0.0
    %2875 = vmatpush1.msra.mxu0 0.0
    %2876 = vmatprep.subr.mxu0 0.0
    %2877 = vmatpush1.msra.mxu0 0.0
    %2878 = vmatprep.subr.mxu0 0.0
    %2879 = vmatpush1.msra.mxu0 0.0
    %2880 = vmatprep.subr.mxu0 0.0
    %2881 = vmatpush1.msra.mxu0 0.0
    %2882 = vmatprep.subr.mxu0 0.0
    %2883 = vmatpush1.msra.mxu0 0.0
    %2884 = vmatprep.subr.mxu0 0.0
    %2885 = vmatpush1.msra.mxu0 0.0
    %2886 = vmatprep.subr.mxu0 0.0
    %2887 = vmatpush1.msra.mxu0 0.0
    %2888 = vmatprep.mubr.f32.mxu0 0.0
    %2889 = vmatmul.mubr.f32.gmra.mrb[0].mxu0 %v2822
    %v2890 = vpop.f32.mrb[0].mxu0
    %v2891 = vadd.f32 0.0, %v2890
    %v2892 = vpop.f32.mrb[0].mxu0
    %2893 = vdwg.mxu0
    %v2894 = vsel %vm60, %v2672, 0.0
    %v2895 = vsel %vm60, %v2745, 0.0
    %v2896 = vadd.f32 %v2894, %v2895
    %v2897 = vsel %vm60, %v2818, 0.0
    %v2898 = vadd.f32 %v2896, %v2897
    %v2899 = vsel %vm60, %v2891, 0.0
    %v2900 = vadd.f32 %v2898, %v2899
    %v2901 = vadd.f32 %v42, %v1949
    %v2902 = vadd.f32 %v43, %v2900
    %v2903 = vld [vmem:[%s8] sm:$0x1]
    %v2904 = vld [vmem:[%s9] sm:$0x1]
    %v2905 = vsel %vm60, %v2901, 0.0
    %2906 = vadd.xlane.f32.xlu0 %v2905
    %v2907 = vpop.xlane.xlu0 %2906
    %v2908 = vsel %vm60, %v2902, 0.0
    %2909 = vadd.xlane.f32.xlu0 %v2908
    %v2910 = vpop.xlane.xlu0 %2909
    %v2911 = vrcp.pop 32.0
    %v2912 = vmul.f32 %v2907, %v2911
    %v2913 = vmul.f32 %v2910, %v2911
    %v2914 = vsub.f32 %v2901, %v2912
    %v2915 = vsub.f32 %v2902, %v2913
    %v2916 = vmul.f32 %v2914, %v2914
    %v2917 = vmul.f32 %v2915, %v2915
    %v2918 = vsel %vm60, %v2916, 0.0
    %2919 = vadd.xlane.f32.xlu0 %v2918
    %v2920 = vpop.xlane.xlu0 %2919
    %v2921 = vsel %vm60, %v2917, 0.0
    %2922 = vadd.xlane.f32.xlu0 %v2921
    %v2923 = vpop.xlane.xlu0 %2922
    %v2924 = vmul.f32 %v2920, %v2911
    %v2925 = vmul.f32 %v2923, %v2911
    %v2926 = vadd.f32 %v2924, 1e-05
    %v2927 = vadd.f32 %v2925, 1e-05
    %v2928 = vrsqrt.pop %v2926
    %v2929 = vrsqrt.pop %v2927
    %v2930 = vmul.f32 %v2914, %v2928
    %v2931 = vmul.f32 %v2915, %v2929
    %v2933 = vlaneseq
    %v2934 = vshrl.u32 %v2933, 7
    %v2935 = vsub.s32 0, %v2934
    %v2936 = vrot.slane %v2903, %v2935
    %v2938 = vmul.f32 %v2930, %v2936
    %v2939 = vmul.f32 %v2931, %v2936
    %v2941 = vlaneseq
    %v2942 = vshrl.u32 %v2941, 7
    %v2943 = vsub.s32 0, %v2942
    %v2944 = vrot.slane %v2904, %v2943
    %v2946 = vadd.f32 %v2938, %v2944
    %v2947 = vadd.f32 %v2939, %v2944
    %v2948 = vld [vmem:[%s6] sm:$0xff]
    %v2949 = vld [vmem:[%s6 + $0x8] sm:$0xff]
    %v2950 = vld [vmem:[%s6 + $0x10] sm:$0xff]
    %v2951 = vld [vmem:[%s6 + $0x18] sm:$0xff]
    %v2953 = vsel %vm60, %v2946, 0
    %v2956 = vsel %vm60, %v2947, 0
    %2958 = vmatprep.subr.mxu0 0.0
    %2959 = vmatpush1.msra.mxu0 %v2948
    %2960 = vmatprep.subr.mxu0 0.0
    %2961 = vmatpush1.msra.mxu0 %v2949
    %2962 = vmatprep.subr.mxu0 0.0
    %2963 = vmatpush1.msra.mxu0 %v2950
    %2964 = vmatprep.subr.mxu0 0.0
    %2965 = vmatpush1.msra.mxu0 %v2951
    %2966 = vmatprep.subr.mxu0 0.0
    %2967 = vmatpush1.msra.mxu0 0.0
    %2968 = vmatprep.subr.mxu0 0.0
    %2969 = vmatpush1.msra.mxu0 0.0
    %2970 = vmatprep.subr.mxu0 0.0
    %2971 = vmatpush1.msra.mxu0 0.0
    %2972 = vmatprep.subr.mxu0 0.0
    %2973 = vmatpush1.msra.mxu0 0.0
    %2974 = vmatprep.subr.mxu0 0.0
    %2975 = vmatpush1.msra.mxu0 0.0
    %2976 = vmatprep.subr.mxu0 0.0
    %2977 = vmatpush1.msra.mxu0 0.0
    %2978 = vmatprep.subr.mxu0 0.0
    %2979 = vmatpush1.msra.mxu0 0.0
    %2980 = vmatprep.subr.mxu0 0.0
    %2981 = vmatpush1.msra.mxu0 0.0
    %2982 = vmatprep.subr.mxu0 0.0
    %2983 = vmatpush1.msra.mxu0 0.0
    %2984 = vmatprep.subr.mxu0 0.0
    %2985 = vmatpush1.msra.mxu0 0.0
    %2986 = vmatprep.subr.mxu0 0.0
    %2987 = vmatpush1.msra.mxu0 0.0
    %2988 = vmatprep.subr.mxu0 0.0
    %2989 = vmatpush1.msra.mxu0 0.0
    %2990 = vmatprep.subr.mxu0 0.0
    %2991 = vmatpush1.msra.mxu0 0.0
    %2992 = vmatprep.subr.mxu0 0.0
    %2993 = vmatpush1.msra.mxu0 0.0
    %2994 = vmatprep.subr.mxu0 0.0
    %2995 = vmatpush1.msra.mxu0 0.0
    %2996 = vmatprep.subr.mxu0 0.0
    %2997 = vmatpush1.msra.mxu0 0.0
    %2998 = vmatprep.subr.mxu0 0.0
    %2999 = vmatpush1.msra.mxu0 0.0
    %3000 = vmatprep.subr.mxu0 0.0
    %3001 = vmatpush1.msra.mxu0 0.0
    %3002 = vmatprep.subr.mxu0 0.0
    %3003 = vmatpush1.msra.mxu0 0.0
    %3004 = vmatprep.subr.mxu0 0.0
    %3005 = vmatpush1.msra.mxu0 0.0
    %3006 = vmatprep.subr.mxu0 0.0
    %3007 = vmatpush1.msra.mxu0 0.0
    %3008 = vmatprep.subr.mxu0 0.0
    %3009 = vmatpush1.msra.mxu0 0.0
    %3010 = vmatprep.subr.mxu0 0.0
    %3011 = vmatpush1.msra.mxu0 0.0
    %3012 = vmatprep.subr.mxu0 0.0
    %3013 = vmatpush1.msra.mxu0 0.0
    %3014 = vmatprep.subr.mxu0 0.0
    %3015 = vmatpush1.msra.mxu0 0.0
    %3016 = vmatprep.subr.mxu0 0.0
    %3017 = vmatpush1.msra.mxu0 0.0
    %3018 = vmatprep.subr.mxu0 0.0
    %3019 = vmatpush1.msra.mxu0 0.0
    %3020 = vmatprep.subr.mxu0 0.0
    %3021 = vmatpush1.msra.mxu0 0.0
    %3022 = vmatprep.mubr.f32.mxu0 0.0
    %3023 = vmatmul.mubr.f32.gmra.mrb[0].mxu0 %v2953
    %v3024 = vpop.f32.mrb[0].mxu0
    %v3025 = vadd.f32 0.0, %v3024
    %v3026 = vpop.f32.mrb[0].mxu0
    %3027 = vmatprep.mubr.f32.mxu0 0.0
    %3028 = vmatmul.mubr.f32.gmra.mrb[0].mxu0 %v2956
    %v3029 = vpop.f32.mrb[0].mxu0
    %v3030 = vadd.f32 0.0, %v3029
    %v3031 = vpop.f32.mrb[0].mxu0
    %3032 = vdwg.mxu0
    %v3033 = vmax.f32 %v3025, 0.0
    %v3034 = vmax.f32 %v3030, 0.0
    %v3035 = vld [vmem:[%s7] sm:$0xff]
    %v3036 = vld [vmem:[%s7 + $0x8] sm:$0xff]
    %v3037 = vld [vmem:[%s7 + $0x10] sm:$0xff]
    %v3038 = vld [vmem:[%s7 + $0x18] sm:$0xff]
    %v3039 = vld [vmem:[%s7 + $0x20] sm:$0xff]
    %v3040 = vld [vmem:[%s7 + $0x28] sm:$0xff]
    %v3041 = vld [vmem:[%s7 + $0x30] sm:$0xff]
    %v3042 = vld [vmem:[%s7 + $0x38] sm:$0xff]
    %vm3043 = vcmask 523264
    %v3045 = vsel %vm3043, %v3033, 0
    %v3048 = vsel %vm3043, %v3034, 0
    %3050 = vmatprep.subr.mxu0 0.0
    %3051 = vmatpush1.msra.mxu0 %v3035
    %3052 = vmatprep.subr.mxu0 0.0
    %3053 = vmatpush1.msra.mxu0 %v3036
    %3054 = vmatprep.subr.mxu0 0.0
    %3055 = vmatpush1.msra.mxu0 %v3037
    %3056 = vmatprep.subr.mxu0 0.0
    %3057 = vmatpush1.msra.mxu0 %v3038
    %3058 = vmatprep.subr.mxu0 0.0
    %3059 = vmatpush1.msra.mxu0 %v3039
    %3060 = vmatprep.subr.mxu0 0.0
    %3061 = vmatpush1.msra.mxu0 %v3040
    %3062 = vmatprep.subr.mxu0 0.0
    %3063 = vmatpush1.msra.mxu0 %v3041
    %3064 = vmatprep.subr.mxu0 0.0
    %3065 = vmatpush1.msra.mxu0 %v3042
    %3066 = vmatprep.subr.mxu0 0.0
    %3067 = vmatpush1.msra.mxu0 0.0
    %3068 = vmatprep.subr.mxu0 0.0
    %3069 = vmatpush1.msra.mxu0 0.0
    %3070 = vmatprep.subr.mxu0 0.0
    %3071 = vmatpush1.msra.mxu0 0.0
    %3072 = vmatprep.subr.mxu0 0.0
    %3073 = vmatpush1.msra.mxu0 0.0
    %3074 = vmatprep.subr.mxu0 0.0
    %3075 = vmatpush1.msra.mxu0 0.0
    %3076 = vmatprep.subr.mxu0 0.0
    %3077 = vmatpush1.msra.mxu0 0.0
    %3078 = vmatprep.subr.mxu0 0.0
    %3079 = vmatpush1.msra.mxu0 0.0
    %3080 = vmatprep.subr.mxu0 0.0
    %3081 = vmatpush1.msra.mxu0 0.0
    %3082 = vmatprep.subr.mxu0 0.0
    %3083 = vmatpush1.msra.mxu0 0.0
    %3084 = vmatprep.subr.mxu0 0.0
    %3085 = vmatpush1.msra.mxu0 0.0
    %3086 = vmatprep.subr.mxu0 0.0
    %3087 = vmatpush1.msra.mxu0 0.0
    %3088 = vmatprep.subr.mxu0 0.0
    %3089 = vmatpush1.msra.mxu0 0.0
    %3090 = vmatprep.subr.mxu0 0.0
    %3091 = vmatpush1.msra.mxu0 0.0
    %3092 = vmatprep.subr.mxu0 0.0
    %3093 = vmatpush1.msra.mxu0 0.0
    %3094 = vmatprep.subr.mxu0 0.0
    %3095 = vmatpush1.msra.mxu0 0.0
    %3096 = vmatprep.subr.mxu0 0.0
    %3097 = vmatpush1.msra.mxu0 0.0
    %3098 = vmatprep.subr.mxu0 0.0
    %3099 = vmatpush1.msra.mxu0 0.0
    %3100 = vmatprep.subr.mxu0 0.0
    %3101 = vmatpush1.msra.mxu0 0.0
    %3102 = vmatprep.subr.mxu0 0.0
    %3103 = vmatpush1.msra.mxu0 0.0
    %3104 = vmatprep.subr.mxu0 0.0
    %3105 = vmatpush1.msra.mxu0 0.0
    %3106 = vmatprep.subr.mxu0 0.0
    %3107 = vmatpush1.msra.mxu0 0.0
    %3108 = vmatprep.subr.mxu0 0.0
    %3109 = vmatpush1.msra.mxu0 0.0
    %3110 = vmatprep.subr.mxu0 0.0
    %3111 = vmatpush1.msra.mxu0 0.0
    %3112 = vmatprep.subr.mxu0 0.0
    %3113 = vmatpush1.msra.mxu0 0.0
    %3114 = vmatprep.mubr.f32.mxu0 0.0
    %3115 = vmatmul.mubr.f32.gmra.mrb[0].mxu0 %v3045
    %v3116 = vpop.f32.mrb[0].mxu0
    %v3117 = vadd.f32 0.0, %v3116
    %v3118 = vpop.f32.mrb[0].mxu0
    %3119 = vmatprep.mubr.f32.mxu0 0.0
    %3120 = vmatmul.mubr.f32.gmra.mrb[0].mxu0 %v3048
    %v3121 = vpop.f32.mrb[0].mxu0
    %v3122 = vadd.f32 0.0, %v3121
    %v3123 = vpop.f32.mrb[0].mxu0
    %3124 = vdwg.mxu0
    %v3125 = vadd.f32 %v2946, %v3117
    %v3126 = vadd.f32 %v2947, %v3122
    %v3127 = vld [vmem:[%s10] sm:$0x1]
    %v3128 = vld [vmem:[%s11] sm:$0x1]
    %v3129 = vsel %vm60, %v3125, 0.0
    %3130 = vadd.xlane.f32.xlu0 %v3129
    %v3131 = vpop.xlane.xlu0 %3130
    %v3132 = vsel %vm60, %v3126, 0.0
    %3133 = vadd.xlane.f32.xlu0 %v3132
    %v3134 = vpop.xlane.xlu0 %3133
    %v3135 = vmul.f32 %v3131, %v2911
    %v3136 = vmul.f32 %v3134, %v2911
    %v3137 = vsub.f32 %v3125, %v3135
    %v3138 = vsub.f32 %v3126, %v3136
    %v3139 = vmul.f32 %v3137, %v3137
    %v3140 = vmul.f32 %v3138, %v3138
    %v3141 = vsel %vm60, %v3139, 0.0
    %3142 = vadd.xlane.f32.xlu0 %v3141
    %v3143 = vpop.xlane.xlu0 %3142
    %v3144 = vsel %vm60, %v3140, 0.0
    %3145 = vadd.xlane.f32.xlu0 %v3144
    %v3146 = vpop.xlane.xlu0 %3145
    %v3147 = vmul.f32 %v3143, %v2911
    %v3148 = vmul.f32 %v3146, %v2911
    %v3149 = vadd.f32 %v3147, 1e-05
    %v3150 = vadd.f32 %v3148, 1e-05
    %v3151 = vrsqrt.pop %v3149
    %v3152 = vrsqrt.pop %v3150
    %v3153 = vmul.f32 %v3137, %v3151
    %v3154 = vmul.f32 %v3138, %v3152
    %v3156 = vlaneseq
    %v3157 = vshrl.u32 %v3156, 7
    %v3158 = vsub.s32 0, %v3157
    %v3159 = vrot.slane %v3127, %v3158
    %v3161 = vmul.f32 %v3153, %v3159
    %v3162 = vmul.f32 %v3154, %v3159
    %v3164 = vlaneseq
    %v3165 = vshrl.u32 %v3164, 7
    %v3166 = vsub.s32 0, %v3165
    %v3167 = vrot.slane %v3128, %v3166
    %v3169 = vadd.f32 %v3161, %v3167
    %v3170 = vadd.f32 %v3162, %v3167
    %s3171 = scalar_lea.vmem %s2, 128
    %v3172 = vld [vmem:[%s3171] sm:$0xff]
    %v3173 = vld [vmem:[%s3171 + $0x8] sm:$0xff]
    %v3174 = vld [vmem:[%s3171 + $0x10] sm:$0xff]
    %v3175 = vld [vmem:[%s3171 + $0x18] sm:$0xff]
    %v3176 = vld [vmem:[%s3171 + $0x20] sm:$0xff]
    %v3177 = vld [vmem:[%s3171 + $0x28] sm:$0xff]
    %v3178 = vld [vmem:[%s3171 + $0x30] sm:$0xff]
    %v3179 = vld [vmem:[%s3171 + $0x38] sm:$0xff]
    %v3180 = vld [vmem:[%s3171 + $0x40] sm:$0xff]
    %v3181 = vld [vmem:[%s3171 + $0x48] sm:$0xff]
    %v3182 = vld [vmem:[%s3171 + $0x50] sm:$0xff]
    %v3183 = vld [vmem:[%s3171 + $0x58] sm:$0xff]
    %v3184 = vld [vmem:[%s3171 + $0x60] sm:$0xff]
    %v3185 = vld [vmem:[%s3171 + $0x68] sm:$0xff]
    %v3186 = vld [vmem:[%s3171 + $0x70] sm:$0xff]
    %v3187 = vld [vmem:[%s3171 + $0x78] sm:$0xff]
    %v3189 = vsel %vm60, %v3169, 0
    %v3192 = vsel %vm60, %v3170, 0
    %3194 = vmatprep.subr.mxu0 0.0
    %3195 = vmatpush1.msra.mxu0 %v3172
    %3196 = vmatprep.subr.mxu0 0.0
    %3197 = vmatpush1.msra.mxu0 %v3173
    %3198 = vmatprep.subr.mxu0 0.0
    %3199 = vmatpush1.msra.mxu0 %v3174
    %3200 = vmatprep.subr.mxu0 0.0
    %3201 = vmatpush1.msra.mxu0 %v3175
    %3202 = vmatprep.subr.mxu0 0.0
    %3203 = vmatpush1.msra.mxu0 0.0
    %3204 = vmatprep.subr.mxu0 0.0
    %3205 = vmatpush1.msra.mxu0 0.0
    %3206 = vmatprep.subr.mxu0 0.0
    %3207 = vmatpush1.msra.mxu0 0.0
    %3208 = vmatprep.subr.mxu0 0.0
    %3209 = vmatpush1.msra.mxu0 0.0
    %3210 = vmatprep.subr.mxu0 0.0
    %3211 = vmatpush1.msra.mxu0 0.0
    %3212 = vmatprep.subr.mxu0 0.0
    %3213 = vmatpush1.msra.mxu0 0.0
    %3214 = vmatprep.subr.mxu0 0.0
    %3215 = vmatpush1.msra.mxu0 0.0
    %3216 = vmatprep.subr.mxu0 0.0
    %3217 = vmatpush1.msra.mxu0 0.0
    %3218 = vmatprep.subr.mxu0 0.0
    %3219 = vmatpush1.msra.mxu0 0.0
    %3220 = vmatprep.subr.mxu0 0.0
    %3221 = vmatpush1.msra.mxu0 0.0
    %3222 = vmatprep.subr.mxu0 0.0
    %3223 = vmatpush1.msra.mxu0 0.0
    %3224 = vmatprep.subr.mxu0 0.0
    %3225 = vmatpush1.msra.mxu0 0.0
    %3226 = vmatprep.subr.mxu0 0.0
    %3227 = vmatpush1.msra.mxu0 0.0
    %3228 = vmatprep.subr.mxu0 0.0
    %3229 = vmatpush1.msra.mxu0 0.0
    %3230 = vmatprep.subr.mxu0 0.0
    %3231 = vmatpush1.msra.mxu0 0.0
    %3232 = vmatprep.subr.mxu0 0.0
    %3233 = vmatpush1.msra.mxu0 0.0
    %3234 = vmatprep.subr.mxu0 0.0
    %3235 = vmatpush1.msra.mxu0 0.0
    %3236 = vmatprep.subr.mxu0 0.0
    %3237 = vmatpush1.msra.mxu0 0.0
    %3238 = vmatprep.subr.mxu0 0.0
    %3239 = vmatpush1.msra.mxu0 0.0
    %3240 = vmatprep.subr.mxu0 0.0
    %3241 = vmatpush1.msra.mxu0 0.0
    %3242 = vmatprep.subr.mxu0 0.0
    %3243 = vmatpush1.msra.mxu0 0.0
    %3244 = vmatprep.subr.mxu0 0.0
    %3245 = vmatpush1.msra.mxu0 0.0
    %3246 = vmatprep.subr.mxu0 0.0
    %3247 = vmatpush1.msra.mxu0 0.0
    %3248 = vmatprep.subr.mxu0 0.0
    %3249 = vmatpush1.msra.mxu0 0.0
    %3250 = vmatprep.subr.mxu0 0.0
    %3251 = vmatpush1.msra.mxu0 0.0
    %3252 = vmatprep.subr.mxu0 0.0
    %3253 = vmatpush1.msra.mxu0 0.0
    %3254 = vmatprep.subr.mxu0 0.0
    %3255 = vmatpush1.msra.mxu0 0.0
    %3256 = vmatprep.subr.mxu0 0.0
    %3257 = vmatpush1.msra.mxu0 0.0
    %3258 = vmatprep.mubr.f32.mxu0 0.0
    %3259 = vmatmul.mubr.f32.gmra.mrb[0].mxu0 %v3189
    %v3260 = vpop.f32.mrb[0].mxu0
    %v3261 = vadd.f32 0.0, %v3260
    %v3262 = vpop.f32.mrb[0].mxu0
    %3263 = vmatprep.mubr.f32.mxu0 0.0
    %3264 = vmatmul.mubr.f32.gmra.mrb[0].mxu0 %v3192
    %v3265 = vpop.f32.mrb[0].mxu0
    %v3266 = vadd.f32 0.0, %v3265
    %v3267 = vpop.f32.mrb[0].mxu0
    %3268 = vdwg.mxu0
    %3269 = vmatprep.subr.mxu0 0.0
    %3270 = vmatpush1.msra.mxu0 %v3176
    %3271 = vmatprep.subr.mxu0 0.0
    %3272 = vmatpush1.msra.mxu0 %v3177
    %3273 = vmatprep.subr.mxu0 0.0
    %3274 = vmatpush1.msra.mxu0 %v3178
    %3275 = vmatprep.subr.mxu0 0.0
    %3276 = vmatpush1.msra.mxu0 %v3179
    %3277 = vmatprep.subr.mxu0 0.0
    %3278 = vmatpush1.msra.mxu0 0.0
    %3279 = vmatprep.subr.mxu0 0.0
    %3280 = vmatpush1.msra.mxu0 0.0
    %3281 = vmatprep.subr.mxu0 0.0
    %3282 = vmatpush1.msra.mxu0 0.0
    %3283 = vmatprep.subr.mxu0 0.0
    %3284 = vmatpush1.msra.mxu0 0.0
    %3285 = vmatprep.subr.mxu0 0.0
    %3286 = vmatpush1.msra.mxu0 0.0
    %3287 = vmatprep.subr.mxu0 0.0
    %3288 = vmatpush1.msra.mxu0 0.0
    %3289 = vmatprep.subr.mxu0 0.0
    %3290 = vmatpush1.msra.mxu0 0.0
    %3291 = vmatprep.subr.mxu0 0.0
    %3292 = vmatpush1.msra.mxu0 0.0
    %3293 = vmatprep.subr.mxu0 0.0
    %3294 = vmatpush1.msra.mxu0 0.0
    %3295 = vmatprep.subr.mxu0 0.0
    %3296 = vmatpush1.msra.mxu0 0.0
    %3297 = vmatprep.subr.mxu0 0.0
    %3298 = vmatpush1.msra.mxu0 0.0
    %3299 = vmatprep.subr.mxu0 0.0
    %3300 = vmatpush1.msra.mxu0 0.0
    %3301 = vmatprep.subr.mxu0 0.0
    %3302 = vmatpush1.msra.mxu0 0.0
    %3303 = vmatprep.subr.mxu0 0.0
    %3304 = vmatpush1.msra.mxu0 0.0
    %3305 = vmatprep.subr.mxu0 0.0
    %3306 = vmatpush1.msra.mxu0 0.0
    %3307 = vmatprep.subr.mxu0 0.0
    %3308 = vmatpush1.msra.mxu0 0.0
    %3309 = vmatprep.subr.mxu0 0.0
    %3310 = vmatpush1.msra.mxu0 0.0
    %3311 = vmatprep.subr.mxu0 0.0
    %3312 = vmatpush1.msra.mxu0 0.0
    %3313 = vmatprep.subr.mxu0 0.0
    %3314 = vmatpush1.msra.mxu0 0.0
    %3315 = vmatprep.subr.mxu0 0.0
    %3316 = vmatpush1.msra.mxu0 0.0
    %3317 = vmatprep.subr.mxu0 0.0
    %3318 = vmatpush1.msra.mxu0 0.0
    %3319 = vmatprep.subr.mxu0 0.0
    %3320 = vmatpush1.msra.mxu0 0.0
    %3321 = vmatprep.subr.mxu0 0.0
    %3322 = vmatpush1.msra.mxu0 0.0
    %3323 = vmatprep.subr.mxu0 0.0
    %3324 = vmatpush1.msra.mxu0 0.0
    %3325 = vmatprep.subr.mxu0 0.0
    %3326 = vmatpush1.msra.mxu0 0.0
    %3327 = vmatprep.subr.mxu0 0.0
    %3328 = vmatpush1.msra.mxu0 0.0
    %3329 = vmatprep.subr.mxu0 0.0
    %3330 = vmatpush1.msra.mxu0 0.0
    %3331 = vmatprep.subr.mxu0 0.0
    %3332 = vmatpush1.msra.mxu0 0.0
    %3333 = vmatprep.mubr.f32.mxu0 0.0
    %3334 = vmatmul.mubr.f32.gmra.mrb[0].mxu0 %v3189
    %v3335 = vpop.f32.mrb[0].mxu0
    %v3336 = vadd.f32 0.0, %v3335
    %v3337 = vpop.f32.mrb[0].mxu0
    %3338 = vmatprep.mubr.f32.mxu0 0.0
    %3339 = vmatmul.mubr.f32.gmra.mrb[0].mxu0 %v3192
    %v3340 = vpop.f32.mrb[0].mxu0
    %v3341 = vadd.f32 0.0, %v3340
    %v3342 = vpop.f32.mrb[0].mxu0
    %3343 = vdwg.mxu0
    %3344 = vmatprep.subr.mxu0 0.0
    %3345 = vmatpush1.msra.mxu0 %v3180
    %3346 = vmatprep.subr.mxu0 0.0
    %3347 = vmatpush1.msra.mxu0 %v3181
    %3348 = vmatprep.subr.mxu0 0.0
    %3349 = vmatpush1.msra.mxu0 %v3182
    %3350 = vmatprep.subr.mxu0 0.0
    %3351 = vmatpush1.msra.mxu0 %v3183
    %3352 = vmatprep.subr.mxu0 0.0
    %3353 = vmatpush1.msra.mxu0 0.0
    %3354 = vmatprep.subr.mxu0 0.0
    %3355 = vmatpush1.msra.mxu0 0.0
    %3356 = vmatprep.subr.mxu0 0.0
    %3357 = vmatpush1.msra.mxu0 0.0
    %3358 = vmatprep.subr.mxu0 0.0
    %3359 = vmatpush1.msra.mxu0 0.0
    %3360 = vmatprep.subr.mxu0 0.0
    %3361 = vmatpush1.msra.mxu0 0.0
    %3362 = vmatprep.subr.mxu0 0.0
    %3363 = vmatpush1.msra.mxu0 0.0
    %3364 = vmatprep.subr.mxu0 0.0
    %3365 = vmatpush1.msra.mxu0 0.0
    %3366 = vmatprep.subr.mxu0 0.0
    %3367 = vmatpush1.msra.mxu0 0.0
    %3368 = vmatprep.subr.mxu0 0.0
    %3369 = vmatpush1.msra.mxu0 0.0
    %3370 = vmatprep.subr.mxu0 0.0
    %3371 = vmatpush1.msra.mxu0 0.0
    %3372 = vmatprep.subr.mxu0 0.0
    %3373 = vmatpush1.msra.mxu0 0.0
    %3374 = vmatprep.subr.mxu0 0.0
    %3375 = vmatpush1.msra.mxu0 0.0
    %3376 = vmatprep.subr.mxu0 0.0
    %3377 = vmatpush1.msra.mxu0 0.0
    %3378 = vmatprep.subr.mxu0 0.0
    %3379 = vmatpush1.msra.mxu0 0.0
    %3380 = vmatprep.subr.mxu0 0.0
    %3381 = vmatpush1.msra.mxu0 0.0
    %3382 = vmatprep.subr.mxu0 0.0
    %3383 = vmatpush1.msra.mxu0 0.0
    %3384 = vmatprep.subr.mxu0 0.0
    %3385 = vmatpush1.msra.mxu0 0.0
    %3386 = vmatprep.subr.mxu0 0.0
    %3387 = vmatpush1.msra.mxu0 0.0
    %3388 = vmatprep.subr.mxu0 0.0
    %3389 = vmatpush1.msra.mxu0 0.0
    %3390 = vmatprep.subr.mxu0 0.0
    %3391 = vmatpush1.msra.mxu0 0.0
    %3392 = vmatprep.subr.mxu0 0.0
    %3393 = vmatpush1.msra.mxu0 0.0
    %3394 = vmatprep.subr.mxu0 0.0
    %3395 = vmatpush1.msra.mxu0 0.0
    %3396 = vmatprep.subr.mxu0 0.0
    %3397 = vmatpush1.msra.mxu0 0.0
    %3398 = vmatprep.subr.mxu0 0.0
    %3399 = vmatpush1.msra.mxu0 0.0
    %3400 = vmatprep.subr.mxu0 0.0
    %3401 = vmatpush1.msra.mxu0 0.0
    %3402 = vmatprep.subr.mxu0 0.0
    %3403 = vmatpush1.msra.mxu0 0.0
    %3404 = vmatprep.subr.mxu0 0.0
    %3405 = vmatpush1.msra.mxu0 0.0
    %3406 = vmatprep.subr.mxu0 0.0
    %3407 = vmatpush1.msra.mxu0 0.0
    %3408 = vmatprep.mubr.f32.mxu0 0.0
    %3409 = vmatmul.mubr.f32.gmra.mrb[0].mxu0 %v3189
    %v3410 = vpop.f32.mrb[0].mxu0
    %v3411 = vadd.f32 0.0, %v3410
    %v3412 = vpop.f32.mrb[0].mxu0
    %3413 = vmatprep.mubr.f32.mxu0 0.0
    %3414 = vmatmul.mubr.f32.gmra.mrb[0].mxu0 %v3192
    %v3415 = vpop.f32.mrb[0].mxu0
    %v3416 = vadd.f32 0.0, %v3415
    %v3417 = vpop.f32.mrb[0].mxu0
    %3418 = vdwg.mxu0
    %3419 = vmatprep.subr.mxu0 0.0
    %3420 = vmatpush1.msra.mxu0 %v3184
    %3421 = vmatprep.subr.mxu0 0.0
    %3422 = vmatpush1.msra.mxu0 %v3185
    %3423 = vmatprep.subr.mxu0 0.0
    %3424 = vmatpush1.msra.mxu0 %v3186
    %3425 = vmatprep.subr.mxu0 0.0
    %3426 = vmatpush1.msra.mxu0 %v3187
    %3427 = vmatprep.subr.mxu0 0.0
    %3428 = vmatpush1.msra.mxu0 0.0
    %3429 = vmatprep.subr.mxu0 0.0
    %3430 = vmatpush1.msra.mxu0 0.0
    %3431 = vmatprep.subr.mxu0 0.0
    %3432 = vmatpush1.msra.mxu0 0.0
    %3433 = vmatprep.subr.mxu0 0.0
    %3434 = vmatpush1.msra.mxu0 0.0
    %3435 = vmatprep.subr.mxu0 0.0
    %3436 = vmatpush1.msra.mxu0 0.0
    %3437 = vmatprep.subr.mxu0 0.0
    %3438 = vmatpush1.msra.mxu0 0.0
    %3439 = vmatprep.subr.mxu0 0.0
    %3440 = vmatpush1.msra.mxu0 0.0
    %3441 = vmatprep.subr.mxu0 0.0
    %3442 = vmatpush1.msra.mxu0 0.0
    %3443 = vmatprep.subr.mxu0 0.0
    %3444 = vmatpush1.msra.mxu0 0.0
    %3445 = vmatprep.subr.mxu0 0.0
    %3446 = vmatpush1.msra.mxu0 0.0
    %3447 = vmatprep.subr.mxu0 0.0
    %3448 = vmatpush1.msra.mxu0 0.0
    %3449 = vmatprep.subr.mxu0 0.0
    %3450 = vmatpush1.msra.mxu0 0.0
    %3451 = vmatprep.subr.mxu0 0.0
    %3452 = vmatpush1.msra.mxu0 0.0
    %3453 = vmatprep.subr.mxu0 0.0
    %3454 = vmatpush1.msra.mxu0 0.0
    %3455 = vmatprep.subr.mxu0 0.0
    %3456 = vmatpush1.msra.mxu0 0.0
    %3457 = vmatprep.subr.mxu0 0.0
    %3458 = vmatpush1.msra.mxu0 0.0
    %3459 = vmatprep.subr.mxu0 0.0
    %3460 = vmatpush1.msra.mxu0 0.0
    %3461 = vmatprep.subr.mxu0 0.0
    %3462 = vmatpush1.msra.mxu0 0.0
    %3463 = vmatprep.subr.mxu0 0.0
    %3464 = vmatpush1.msra.mxu0 0.0
    %3465 = vmatprep.subr.mxu0 0.0
    %3466 = vmatpush1.msra.mxu0 0.0
    %3467 = vmatprep.subr.mxu0 0.0
    %3468 = vmatpush1.msra.mxu0 0.0
    %3469 = vmatprep.subr.mxu0 0.0
    %3470 = vmatpush1.msra.mxu0 0.0
    %3471 = vmatprep.subr.mxu0 0.0
    %3472 = vmatpush1.msra.mxu0 0.0
    %3473 = vmatprep.subr.mxu0 0.0
    %3474 = vmatpush1.msra.mxu0 0.0
    %3475 = vmatprep.subr.mxu0 0.0
    %3476 = vmatpush1.msra.mxu0 0.0
    %3477 = vmatprep.subr.mxu0 0.0
    %3478 = vmatpush1.msra.mxu0 0.0
    %3479 = vmatprep.subr.mxu0 0.0
    %3480 = vmatpush1.msra.mxu0 0.0
    %3481 = vmatprep.subr.mxu0 0.0
    %3482 = vmatpush1.msra.mxu0 0.0
    %3483 = vmatprep.mubr.f32.mxu0 0.0
    %3484 = vmatmul.mubr.f32.gmra.mrb[0].mxu0 %v3189
    %v3485 = vpop.f32.mrb[0].mxu0
    %v3486 = vadd.f32 0.0, %v3485
    %v3487 = vpop.f32.mrb[0].mxu0
    %3488 = vmatprep.mubr.f32.mxu0 0.0
    %3489 = vmatmul.mubr.f32.gmra.mrb[0].mxu0 %v3192
    %v3490 = vpop.f32.mrb[0].mxu0
    %v3491 = vadd.f32 0.0, %v3490
    %v3492 = vpop.f32.mrb[0].mxu0
    %3493 = vdwg.mxu0
    %s3494 = scalar_lea.vmem %s3, 128
    %v3495 = vld [vmem:[%s3494] sm:$0xff]
    %v3496 = vld [vmem:[%s3494 + $0x8] sm:$0xff]
    %v3497 = vld [vmem:[%s3494 + $0x10] sm:$0xff]
    %v3498 = vld [vmem:[%s3494 + $0x18] sm:$0xff]
    %v3499 = vld [vmem:[%s3494 + $0x20] sm:$0xff]
    %v3500 = vld [vmem:[%s3494 + $0x28] sm:$0xff]
    %v3501 = vld [vmem:[%s3494 + $0x30] sm:$0xff]
    %v3502 = vld [vmem:[%s3494 + $0x38] sm:$0xff]
    %v3503 = vld [vmem:[%s3494 + $0x40] sm:$0xff]
    %v3504 = vld [vmem:[%s3494 + $0x48] sm:$0xff]
    %v3505 = vld [vmem:[%s3494 + $0x50] sm:$0xff]
    %v3506 = vld [vmem:[%s3494 + $0x58] sm:$0xff]
    %v3507 = vld [vmem:[%s3494 + $0x60] sm:$0xff]
    %v3508 = vld [vmem:[%s3494 + $0x68] sm:$0xff]
    %v3509 = vld [vmem:[%s3494 + $0x70] sm:$0xff]
    %v3510 = vld [vmem:[%s3494 + $0x78] sm:$0xff]
    %3511 = vmatprep.subr.mxu0 0.0
    %3512 = vmatpush1.msra.mxu0 %v3495
    %3513 = vmatprep.subr.mxu0 0.0
    %3514 = vmatpush1.msra.mxu0 %v3496
    %3515 = vmatprep.subr.mxu0 0.0
    %3516 = vmatpush1.msra.mxu0 %v3497
    %3517 = vmatprep.subr.mxu0 0.0
    %3518 = vmatpush1.msra.mxu0 %v3498
    %3519 = vmatprep.subr.mxu0 0.0
    %3520 = vmatpush1.msra.mxu0 0.0
    %3521 = vmatprep.subr.mxu0 0.0
    %3522 = vmatpush1.msra.mxu0 0.0
    %3523 = vmatprep.subr.mxu0 0.0
    %3524 = vmatpush1.msra.mxu0 0.0
    %3525 = vmatprep.subr.mxu0 0.0
    %3526 = vmatpush1.msra.mxu0 0.0
    %3527 = vmatprep.subr.mxu0 0.0
    %3528 = vmatpush1.msra.mxu0 0.0
    %3529 = vmatprep.subr.mxu0 0.0
    %3530 = vmatpush1.msra.mxu0 0.0
    %3531 = vmatprep.subr.mxu0 0.0
    %3532 = vmatpush1.msra.mxu0 0.0
    %3533 = vmatprep.subr.mxu0 0.0
    %3534 = vmatpush1.msra.mxu0 0.0
    %3535 = vmatprep.subr.mxu0 0.0
    %3536 = vmatpush1.msra.mxu0 0.0
    %3537 = vmatprep.subr.mxu0 0.0
    %3538 = vmatpush1.msra.mxu0 0.0
    %3539 = vmatprep.subr.mxu0 0.0
    %3540 = vmatpush1.msra.mxu0 0.0
    %3541 = vmatprep.subr.mxu0 0.0
    %3542 = vmatpush1.msra.mxu0 0.0
    %3543 = vmatprep.subr.mxu0 0.0
    %3544 = vmatpush1.msra.mxu0 0.0
    %3545 = vmatprep.subr.mxu0 0.0
    %3546 = vmatpush1.msra.mxu0 0.0
    %3547 = vmatprep.subr.mxu0 0.0
    %3548 = vmatpush1.msra.mxu0 0.0
    %3549 = vmatprep.subr.mxu0 0.0
    %3550 = vmatpush1.msra.mxu0 0.0
    %3551 = vmatprep.subr.mxu0 0.0
    %3552 = vmatpush1.msra.mxu0 0.0
    %3553 = vmatprep.subr.mxu0 0.0
    %3554 = vmatpush1.msra.mxu0 0.0
    %3555 = vmatprep.subr.mxu0 0.0
    %3556 = vmatpush1.msra.mxu0 0.0
    %3557 = vmatprep.subr.mxu0 0.0
    %3558 = vmatpush1.msra.mxu0 0.0
    %3559 = vmatprep.subr.mxu0 0.0
    %3560 = vmatpush1.msra.mxu0 0.0
    %3561 = vmatprep.subr.mxu0 0.0
    %3562 = vmatpush1.msra.mxu0 0.0
    %3563 = vmatprep.subr.mxu0 0.0
    %3564 = vmatpush1.msra.mxu0 0.0
    %3565 = vmatprep.subr.mxu0 0.0
    %3566 = vmatpush1.msra.mxu0 0.0
    %3567 = vmatprep.subr.mxu0 0.0
    %3568 = vmatpush1.msra.mxu0 0.0
    %3569 = vmatprep.subr.mxu0 0.0
    %3570 = vmatpush1.msra.mxu0 0.0
    %3571 = vmatprep.subr.mxu0 0.0
    %3572 = vmatpush1.msra.mxu0 0.0
    %3573 = vmatprep.subr.mxu0 0.0
    %3574 = vmatpush1.msra.mxu0 0.0
    %3575 = vmatprep.mubr.f32.mxu0 0.0
    %3576 = vmatmul.mubr.f32.gmra.mrb[0].mxu0 %v3189
    %v3577 = vpop.f32.mrb[0].mxu0
    %v3578 = vadd.f32 0.0, %v3577
    %v3579 = vpop.f32.mrb[0].mxu0
    %3580 = vmatprep.mubr.f32.mxu0 0.0
    %3581 = vmatmul.mubr.f32.gmra.mrb[0].mxu0 %v3192
    %v3582 = vpop.f32.mrb[0].mxu0
    %v3583 = vadd.f32 0.0, %v3582
    %v3584 = vpop.f32.mrb[0].mxu0
    %3585 = vdwg.mxu0
    %3586 = vmatprep.subr.mxu0 0.0
    %3587 = vmatpush1.msra.mxu0 %v3499
    %3588 = vmatprep.subr.mxu0 0.0
    %3589 = vmatpush1.msra.mxu0 %v3500
    %3590 = vmatprep.subr.mxu0 0.0
    %3591 = vmatpush1.msra.mxu0 %v3501
    %3592 = vmatprep.subr.mxu0 0.0
    %3593 = vmatpush1.msra.mxu0 %v3502
    %3594 = vmatprep.subr.mxu0 0.0
    %3595 = vmatpush1.msra.mxu0 0.0
    %3596 = vmatprep.subr.mxu0 0.0
    %3597 = vmatpush1.msra.mxu0 0.0
    %3598 = vmatprep.subr.mxu0 0.0
    %3599 = vmatpush1.msra.mxu0 0.0
    %3600 = vmatprep.subr.mxu0 0.0
    %3601 = vmatpush1.msra.mxu0 0.0
    %3602 = vmatprep.subr.mxu0 0.0
    %3603 = vmatpush1.msra.mxu0 0.0
    %3604 = vmatprep.subr.mxu0 0.0
    %3605 = vmatpush1.msra.mxu0 0.0
    %3606 = vmatprep.subr.mxu0 0.0
    %3607 = vmatpush1.msra.mxu0 0.0
    %3608 = vmatprep.subr.mxu0 0.0
    %3609 = vmatpush1.msra.mxu0 0.0
    %3610 = vmatprep.subr.mxu0 0.0
    %3611 = vmatpush1.msra.mxu0 0.0
    %3612 = vmatprep.subr.mxu0 0.0
    %3613 = vmatpush1.msra.mxu0 0.0
    %3614 = vmatprep.subr.mxu0 0.0
    %3615 = vmatpush1.msra.mxu0 0.0
    %3616 = vmatprep.subr.mxu0 0.0
    %3617 = vmatpush1.msra.mxu0 0.0
    %3618 = vmatprep.subr.mxu0 0.0
    %3619 = vmatpush1.msra.mxu0 0.0
    %3620 = vmatprep.subr.mxu0 0.0
    %3621 = vmatpush1.msra.mxu0 0.0
    %3622 = vmatprep.subr.mxu0 0.0
    %3623 = vmatpush1.msra.mxu0 0.0
    %3624 = vmatprep.subr.mxu0 0.0
    %3625 = vmatpush1.msra.mxu0 0.0
    %3626 = vmatprep.subr.mxu0 0.0
    %3627 = vmatpush1.msra.mxu0 0.0
    %3628 = vmatprep.subr.mxu0 0.0
    %3629 = vmatpush1.msra.mxu0 0.0
    %3630 = vmatprep.subr.mxu0 0.0
    %3631 = vmatpush1.msra.mxu0 0.0
    %3632 = vmatprep.subr.mxu0 0.0
    %3633 = vmatpush1.msra.mxu0 0.0
    %3634 = vmatprep.subr.mxu0 0.0
    %3635 = vmatpush1.msra.mxu0 0.0
    %3636 = vmatprep.subr.mxu0 0.0
    %3637 = vmatpush1.msra.mxu0 0.0
    %3638 = vmatprep.subr.mxu0 0.0
    %3639 = vmatpush1.msra.mxu0 0.0
    %3640 = vmatprep.subr.mxu0 0.0
    %3641 = vmatpush1.msra.mxu0 0.0
    %3642 = vmatprep.subr.mxu0 0.0
    %3643 = vmatpush1.msra.mxu0 0.0
    %3644 = vmatprep.subr.mxu0 0.0
    %3645 = vmatpush1.msra.mxu0 0.0
    %3646 = vmatprep.subr.mxu0 0.0
    %3647 = vmatpush1.msra.mxu0 0.0
    %3648 = vmatprep.subr.mxu0 0.0
    %3649 = vmatpush1.msra.mxu0 0.0
    %3650 = vmatprep.mubr.f32.mxu0 0.0
    %3651 = vmatmul.mubr.f32.gmra.mrb[0].mxu0 %v3189
    %v3652 = vpop.f32.mrb[0].mxu0
    %v3653 = vadd.f32 0.0, %v3652
    %v3654 = vpop.f32.mrb[0].mxu0
    %3655 = vmatprep.mubr.f32.mxu0 0.0
    %3656 = vmatmul.mubr.f32.gmra.mrb[0].mxu0 %v3192
    %v3657 = vpop.f32.mrb[0].mxu0
    %v3658 = vadd.f32 0.0, %v3657
    %v3659 = vpop.f32.mrb[0].mxu0
    %3660 = vdwg.mxu0
    %3661 = vmatprep.subr.mxu0 0.0
    %3662 = vmatpush1.msra.mxu0 %v3503
    %3663 = vmatprep.subr.mxu0 0.0
    %3664 = vmatpush1.msra.mxu0 %v3504
    %3665 = vmatprep.subr.mxu0 0.0
    %3666 = vmatpush1.msra.mxu0 %v3505
    %3667 = vmatprep.subr.mxu0 0.0
    %3668 = vmatpush1.msra.mxu0 %v3506
    %3669 = vmatprep.subr.mxu0 0.0
    %3670 = vmatpush1.msra.mxu0 0.0
    %3671 = vmatprep.subr.mxu0 0.0
    %3672 = vmatpush1.msra.mxu0 0.0
    %3673 = vmatprep.subr.mxu0 0.0
    %3674 = vmatpush1.msra.mxu0 0.0
    %3675 = vmatprep.subr.mxu0 0.0
    %3676 = vmatpush1.msra.mxu0 0.0
    %3677 = vmatprep.subr.mxu0 0.0
    %3678 = vmatpush1.msra.mxu0 0.0
    %3679 = vmatprep.subr.mxu0 0.0
    %3680 = vmatpush1.msra.mxu0 0.0
    %3681 = vmatprep.subr.mxu0 0.0
    %3682 = vmatpush1.msra.mxu0 0.0
    %3683 = vmatprep.subr.mxu0 0.0
    %3684 = vmatpush1.msra.mxu0 0.0
    %3685 = vmatprep.subr.mxu0 0.0
    %3686 = vmatpush1.msra.mxu0 0.0
    %3687 = vmatprep.subr.mxu0 0.0
    %3688 = vmatpush1.msra.mxu0 0.0
    %3689 = vmatprep.subr.mxu0 0.0
    %3690 = vmatpush1.msra.mxu0 0.0
    %3691 = vmatprep.subr.mxu0 0.0
    %3692 = vmatpush1.msra.mxu0 0.0
    %3693 = vmatprep.subr.mxu0 0.0
    %3694 = vmatpush1.msra.mxu0 0.0
    %3695 = vmatprep.subr.mxu0 0.0
    %3696 = vmatpush1.msra.mxu0 0.0
    %3697 = vmatprep.subr.mxu0 0.0
    %3698 = vmatpush1.msra.mxu0 0.0
    %3699 = vmatprep.subr.mxu0 0.0
    %3700 = vmatpush1.msra.mxu0 0.0
    %3701 = vmatprep.subr.mxu0 0.0
    %3702 = vmatpush1.msra.mxu0 0.0
    %3703 = vmatprep.subr.mxu0 0.0
    %3704 = vmatpush1.msra.mxu0 0.0
    %3705 = vmatprep.subr.mxu0 0.0
    %3706 = vmatpush1.msra.mxu0 0.0
    %3707 = vmatprep.subr.mxu0 0.0
    %3708 = vmatpush1.msra.mxu0 0.0
    %3709 = vmatprep.subr.mxu0 0.0
    %3710 = vmatpush1.msra.mxu0 0.0
    %3711 = vmatprep.subr.mxu0 0.0
    %3712 = vmatpush1.msra.mxu0 0.0
    %3713 = vmatprep.subr.mxu0 0.0
    %3714 = vmatpush1.msra.mxu0 0.0
    %3715 = vmatprep.subr.mxu0 0.0
    %3716 = vmatpush1.msra.mxu0 0.0
    %3717 = vmatprep.subr.mxu0 0.0
    %3718 = vmatpush1.msra.mxu0 0.0
    %3719 = vmatprep.subr.mxu0 0.0
    %3720 = vmatpush1.msra.mxu0 0.0
    %3721 = vmatprep.subr.mxu0 0.0
    %3722 = vmatpush1.msra.mxu0 0.0
    %3723 = vmatprep.subr.mxu0 0.0
    %3724 = vmatpush1.msra.mxu0 0.0
    %3725 = vmatprep.mubr.f32.mxu0 0.0
    %3726 = vmatmul.mubr.f32.gmra.mrb[0].mxu0 %v3189
    %v3727 = vpop.f32.mrb[0].mxu0
    %v3728 = vadd.f32 0.0, %v3727
    %v3729 = vpop.f32.mrb[0].mxu0
    %3730 = vmatprep.mubr.f32.mxu0 0.0
    %3731 = vmatmul.mubr.f32.gmra.mrb[0].mxu0 %v3192
    %v3732 = vpop.f32.mrb[0].mxu0
    %v3733 = vadd.f32 0.0, %v3732
    %v3734 = vpop.f32.mrb[0].mxu0
    %3735 = vdwg.mxu0
    %3736 = vmatprep.subr.mxu0 0.0
    %3737 = vmatpush1.msra.mxu0 %v3507
    %3738 = vmatprep.subr.mxu0 0.0
    %3739 = vmatpush1.msra.mxu0 %v3508
    %3740 = vmatprep.subr.mxu0 0.0
    %3741 = vmatpush1.msra.mxu0 %v3509
    %3742 = vmatprep.subr.mxu0 0.0
    %3743 = vmatpush1.msra.mxu0 %v3510
    %3744 = vmatprep.subr.mxu0 0.0
    %3745 = vmatpush1.msra.mxu0 0.0
    %3746 = vmatprep.subr.mxu0 0.0
    %3747 = vmatpush1.msra.mxu0 0.0
    %3748 = vmatprep.subr.mxu0 0.0
    %3749 = vmatpush1.msra.mxu0 0.0
    %3750 = vmatprep.subr.mxu0 0.0
    %3751 = vmatpush1.msra.mxu0 0.0
    %3752 = vmatprep.subr.mxu0 0.0
    %3753 = vmatpush1.msra.mxu0 0.0
    %3754 = vmatprep.subr.mxu0 0.0
    %3755 = vmatpush1.msra.mxu0 0.0
    %3756 = vmatprep.subr.mxu0 0.0
    %3757 = vmatpush1.msra.mxu0 0.0
    %3758 = vmatprep.subr.mxu0 0.0
    %3759 = vmatpush1.msra.mxu0 0.0
    %3760 = vmatprep.subr.mxu0 0.0
    %3761 = vmatpush1.msra.mxu0 0.0
    %3762 = vmatprep.subr.mxu0 0.0
    %3763 = vmatpush1.msra.mxu0 0.0
    %3764 = vmatprep.subr.mxu0 0.0
    %3765 = vmatpush1.msra.mxu0 0.0
    %3766 = vmatprep.subr.mxu0 0.0
    %3767 = vmatpush1.msra.mxu0 0.0
    %3768 = vmatprep.subr.mxu0 0.0
    %3769 = vmatpush1.msra.mxu0 0.0
    %3770 = vmatprep.subr.mxu0 0.0
    %3771 = vmatpush1.msra.mxu0 0.0
    %3772 = vmatprep.subr.mxu0 0.0
    %3773 = vmatpush1.msra.mxu0 0.0
    %3774 = vmatprep.subr.mxu0 0.0
    %3775 = vmatpush1.msra.mxu0 0.0
    %3776 = vmatprep.subr.mxu0 0.0
    %3777 = vmatpush1.msra.mxu0 0.0
    %3778 = vmatprep.subr.mxu0 0.0
    %3779 = vmatpush1.msra.mxu0 0.0
    %3780 = vmatprep.subr.mxu0 0.0
    %3781 = vmatpush1.msra.mxu0 0.0
    %3782 = vmatprep.subr.mxu0 0.0
    %3783 = vmatpush1.msra.mxu0 0.0
    %3784 = vmatprep.subr.mxu0 0.0
    %3785 = vmatpush1.msra.mxu0 0.0
    %3786 = vmatprep.subr.mxu0 0.0
    %3787 = vmatpush1.msra.mxu0 0.0
    %3788 = vmatprep.subr.mxu0 0.0
    %3789 = vmatpush1.msra.mxu0 0.0
    %3790 = vmatprep.subr.mxu0 0.0
    %3791 = vmatpush1.msra.mxu0 0.0
    %3792 = vmatprep.subr.mxu0 0.0
    %3793 = vmatpush1.msra.mxu0 0.0
    %3794 = vmatprep.subr.mxu0 0.0
    %3795 = vmatpush1.msra.mxu0 0.0
    %3796 = vmatprep.subr.mxu0 0.0
    %3797 = vmatpush1.msra.mxu0 0.0
    %3798 = vmatprep.subr.mxu0 0.0
    %3799 = vmatpush1.msra.mxu0 0.0
    %3800 = vmatprep.mubr.f32.mxu0 0.0
    %3801 = vmatmul.mubr.f32.gmra.mrb[0].mxu0 %v3189
    %v3802 = vpop.f32.mrb[0].mxu0
    %v3803 = vadd.f32 0.0, %v3802
    %v3804 = vpop.f32.mrb[0].mxu0
    %3805 = vmatprep.mubr.f32.mxu0 0.0
    %3806 = vmatmul.mubr.f32.gmra.mrb[0].mxu0 %v3192
    %v3807 = vpop.f32.mrb[0].mxu0
    %v3808 = vadd.f32 0.0, %v3807
    %v3809 = vpop.f32.mrb[0].mxu0
    %3810 = vdwg.mxu0
    %s3811 = scalar_lea.vmem %s4, 128
    %v3812 = vld [vmem:[%s3811] sm:$0xff]
    %v3813 = vld [vmem:[%s3811 + $0x8] sm:$0xff]
    %v3814 = vld [vmem:[%s3811 + $0x10] sm:$0xff]
    %v3815 = vld [vmem:[%s3811 + $0x18] sm:$0xff]
    %v3816 = vld [vmem:[%s3811 + $0x20] sm:$0xff]
    %v3817 = vld [vmem:[%s3811 + $0x28] sm:$0xff]
    %v3818 = vld [vmem:[%s3811 + $0x30] sm:$0xff]
    %v3819 = vld [vmem:[%s3811 + $0x38] sm:$0xff]
    %v3820 = vld [vmem:[%s3811 + $0x40] sm:$0xff]
    %v3821 = vld [vmem:[%s3811 + $0x48] sm:$0xff]
    %v3822 = vld [vmem:[%s3811 + $0x50] sm:$0xff]
    %v3823 = vld [vmem:[%s3811 + $0x58] sm:$0xff]
    %v3824 = vld [vmem:[%s3811 + $0x60] sm:$0xff]
    %v3825 = vld [vmem:[%s3811 + $0x68] sm:$0xff]
    %v3826 = vld [vmem:[%s3811 + $0x70] sm:$0xff]
    %v3827 = vld [vmem:[%s3811 + $0x78] sm:$0xff]
    %3828 = vmatprep.subr.mxu0 0.0
    %3829 = vmatpush1.msra.mxu0 %v3812
    %3830 = vmatprep.subr.mxu0 0.0
    %3831 = vmatpush1.msra.mxu0 %v3813
    %3832 = vmatprep.subr.mxu0 0.0
    %3833 = vmatpush1.msra.mxu0 %v3814
    %3834 = vmatprep.subr.mxu0 0.0
    %3835 = vmatpush1.msra.mxu0 %v3815
    %3836 = vmatprep.subr.mxu0 0.0
    %3837 = vmatpush1.msra.mxu0 0.0
    %3838 = vmatprep.subr.mxu0 0.0
    %3839 = vmatpush1.msra.mxu0 0.0
    %3840 = vmatprep.subr.mxu0 0.0
    %3841 = vmatpush1.msra.mxu0 0.0
    %3842 = vmatprep.subr.mxu0 0.0
    %3843 = vmatpush1.msra.mxu0 0.0
    %3844 = vmatprep.subr.mxu0 0.0
    %3845 = vmatpush1.msra.mxu0 0.0
    %3846 = vmatprep.subr.mxu0 0.0
    %3847 = vmatpush1.msra.mxu0 0.0
    %3848 = vmatprep.subr.mxu0 0.0
    %3849 = vmatpush1.msra.mxu0 0.0
    %3850 = vmatprep.subr.mxu0 0.0
    %3851 = vmatpush1.msra.mxu0 0.0
    %3852 = vmatprep.subr.mxu0 0.0
    %3853 = vmatpush1.msra.mxu0 0.0
    %3854 = vmatprep.subr.mxu0 0.0
    %3855 = vmatpush1.msra.mxu0 0.0
    %3856 = vmatprep.subr.mxu0 0.0
    %3857 = vmatpush1.msra.mxu0 0.0
    %3858 = vmatprep.subr.mxu0 0.0
    %3859 = vmatpush1.msra.mxu0 0.0
    %3860 = vmatprep.subr.mxu0 0.0
    %3861 = vmatpush1.msra.mxu0 0.0
    %3862 = vmatprep.subr.mxu0 0.0
    %3863 = vmatpush1.msra.mxu0 0.0
    %3864 = vmatprep.subr.mxu0 0.0
    %3865 = vmatpush1.msra.mxu0 0.0
    %3866 = vmatprep.subr.mxu0 0.0
    %3867 = vmatpush1.msra.mxu0 0.0
    %3868 = vmatprep.subr.mxu0 0.0
    %3869 = vmatpush1.msra.mxu0 0.0
    %3870 = vmatprep.subr.mxu0 0.0
    %3871 = vmatpush1.msra.mxu0 0.0
    %3872 = vmatprep.subr.mxu0 0.0
    %3873 = vmatpush1.msra.mxu0 0.0
    %3874 = vmatprep.subr.mxu0 0.0
    %3875 = vmatpush1.msra.mxu0 0.0
    %3876 = vmatprep.subr.mxu0 0.0
    %3877 = vmatpush1.msra.mxu0 0.0
    %3878 = vmatprep.subr.mxu0 0.0
    %3879 = vmatpush1.msra.mxu0 0.0
    %3880 = vmatprep.subr.mxu0 0.0
    %3881 = vmatpush1.msra.mxu0 0.0
    %3882 = vmatprep.subr.mxu0 0.0
    %3883 = vmatpush1.msra.mxu0 0.0
    %3884 = vmatprep.subr.mxu0 0.0
    %3885 = vmatpush1.msra.mxu0 0.0
    %3886 = vmatprep.subr.mxu0 0.0
    %3887 = vmatpush1.msra.mxu0 0.0
    %3888 = vmatprep.subr.mxu0 0.0
    %3889 = vmatpush1.msra.mxu0 0.0
    %3890 = vmatprep.subr.mxu0 0.0
    %3891 = vmatpush1.msra.mxu0 0.0
    %3892 = vmatprep.mubr.f32.mxu0 0.0
    %3893 = vmatmul.mubr.f32.gmra.mrb[0].mxu0 %v3189
    %v3894 = vpop.f32.mrb[0].mxu0
    %v3895 = vadd.f32 0.0, %v3894
    %v3896 = vpop.f32.mrb[0].mxu0
    %3897 = vmatprep.mubr.f32.mxu0 0.0
    %3898 = vmatmul.mubr.f32.gmra.mrb[0].mxu0 %v3192
    %v3899 = vpop.f32.mrb[0].mxu0
    %v3900 = vadd.f32 0.0, %v3899
    %v3901 = vpop.f32.mrb[0].mxu0
    %3902 = vdwg.mxu0
    %3903 = vmatprep.subr.mxu0 0.0
    %3904 = vmatpush1.msra.mxu0 %v3816
    %3905 = vmatprep.subr.mxu0 0.0
    %3906 = vmatpush1.msra.mxu0 %v3817
    %3907 = vmatprep.subr.mxu0 0.0
    %3908 = vmatpush1.msra.mxu0 %v3818
    %3909 = vmatprep.subr.mxu0 0.0
    %3910 = vmatpush1.msra.mxu0 %v3819
    %3911 = vmatprep.subr.mxu0 0.0
    %3912 = vmatpush1.msra.mxu0 0.0
    %3913 = vmatprep.subr.mxu0 0.0
    %3914 = vmatpush1.msra.mxu0 0.0
    %3915 = vmatprep.subr.mxu0 0.0
    %3916 = vmatpush1.msra.mxu0 0.0
    %3917 = vmatprep.subr.mxu0 0.0
    %3918 = vmatpush1.msra.mxu0 0.0
    %3919 = vmatprep.subr.mxu0 0.0
    %3920 = vmatpush1.msra.mxu0 0.0
    %3921 = vmatprep.subr.mxu0 0.0
    %3922 = vmatpush1.msra.mxu0 0.0
    %3923 = vmatprep.subr.mxu0 0.0
    %3924 = vmatpush1.msra.mxu0 0.0
    %3925 = vmatprep.subr.mxu0 0.0
    %3926 = vmatpush1.msra.mxu0 0.0
    %3927 = vmatprep.subr.mxu0 0.0
    %3928 = vmatpush1.msra.mxu0 0.0
    %3929 = vmatprep.subr.mxu0 0.0
    %3930 = vmatpush1.msra.mxu0 0.0
    %3931 = vmatprep.subr.mxu0 0.0
    %3932 = vmatpush1.msra.mxu0 0.0
    %3933 = vmatprep.subr.mxu0 0.0
    %3934 = vmatpush1.msra.mxu0 0.0
    %3935 = vmatprep.subr.mxu0 0.0
    %3936 = vmatpush1.msra.mxu0 0.0
    %3937 = vmatprep.subr.mxu0 0.0
    %3938 = vmatpush1.msra.mxu0 0.0
    %3939 = vmatprep.subr.mxu0 0.0
    %3940 = vmatpush1.msra.mxu0 0.0
    %3941 = vmatprep.subr.mxu0 0.0
    %3942 = vmatpush1.msra.mxu0 0.0
    %3943 = vmatprep.subr.mxu0 0.0
    %3944 = vmatpush1.msra.mxu0 0.0
    %3945 = vmatprep.subr.mxu0 0.0
    %3946 = vmatpush1.msra.mxu0 0.0
    %3947 = vmatprep.subr.mxu0 0.0
    %3948 = vmatpush1.msra.mxu0 0.0
    %3949 = vmatprep.subr.mxu0 0.0
    %3950 = vmatpush1.msra.mxu0 0.0
    %3951 = vmatprep.subr.mxu0 0.0
    %3952 = vmatpush1.msra.mxu0 0.0
    %3953 = vmatprep.subr.mxu0 0.0
    %3954 = vmatpush1.msra.mxu0 0.0
    %3955 = vmatprep.subr.mxu0 0.0
    %3956 = vmatpush1.msra.mxu0 0.0
    %3957 = vmatprep.subr.mxu0 0.0
    %3958 = vmatpush1.msra.mxu0 0.0
    %3959 = vmatprep.subr.mxu0 0.0
    %3960 = vmatpush1.msra.mxu0 0.0
    %3961 = vmatprep.subr.mxu0 0.0
    %3962 = vmatpush1.msra.mxu0 0.0
    %3963 = vmatprep.subr.mxu0 0.0
    %3964 = vmatpush1.msra.mxu0 0.0
    %3965 = vmatprep.subr.mxu0 0.0
    %3966 = vmatpush1.msra.mxu0 0.0
    %3967 = vmatprep.mubr.f32.mxu0 0.0
    %3968 = vmatmul.mubr.f32.gmra.mrb[0].mxu0 %v3189
    %v3969 = vpop.f32.mrb[0].mxu0
    %v3970 = vadd.f32 0.0, %v3969
    %v3971 = vpop.f32.mrb[0].mxu0
    %3972 = vmatprep.mubr.f32.mxu0 0.0
    %3973 = vmatmul.mubr.f32.gmra.mrb[0].mxu0 %v3192
    %v3974 = vpop.f32.mrb[0].mxu0
    %v3975 = vadd.f32 0.0, %v3974
    %v3976 = vpop.f32.mrb[0].mxu0
    %3977 = vdwg.mxu0
    %3978 = vmatprep.subr.mxu0 0.0
    %3979 = vmatpush1.msra.mxu0 %v3820
    %3980 = vmatprep.subr.mxu0 0.0
    %3981 = vmatpush1.msra.mxu0 %v3821
    %3982 = vmatprep.subr.mxu0 0.0
    %3983 = vmatpush1.msra.mxu0 %v3822
    %3984 = vmatprep.subr.mxu0 0.0
    %3985 = vmatpush1.msra.mxu0 %v3823
    %3986 = vmatprep.subr.mxu0 0.0
    %3987 = vmatpush1.msra.mxu0 0.0
    %3988 = vmatprep.subr.mxu0 0.0
    %3989 = vmatpush1.msra.mxu0 0.0
    %3990 = vmatprep.subr.mxu0 0.0
    %3991 = vmatpush1.msra.mxu0 0.0
    %3992 = vmatprep.subr.mxu0 0.0
    %3993 = vmatpush1.msra.mxu0 0.0
    %3994 = vmatprep.subr.mxu0 0.0
    %3995 = vmatpush1.msra.mxu0 0.0
    %3996 = vmatprep.subr.mxu0 0.0
    %3997 = vmatpush1.msra.mxu0 0.0
    %3998 = vmatprep.subr.mxu0 0.0
    %3999 = vmatpush1.msra.mxu0 0.0
    %4000 = vmatprep.subr.mxu0 0.0
    %4001 = vmatpush1.msra.mxu0 0.0
    %4002 = vmatprep.subr.mxu0 0.0
    %4003 = vmatpush1.msra.mxu0 0.0
    %4004 = vmatprep.subr.mxu0 0.0
    %4005 = vmatpush1.msra.mxu0 0.0
    %4006 = vmatprep.subr.mxu0 0.0
    %4007 = vmatpush1.msra.mxu0 0.0
    %4008 = vmatprep.subr.mxu0 0.0
    %4009 = vmatpush1.msra.mxu0 0.0
    %4010 = vmatprep.subr.mxu0 0.0
    %4011 = vmatpush1.msra.mxu0 0.0
    %4012 = vmatprep.subr.mxu0 0.0
    %4013 = vmatpush1.msra.mxu0 0.0
    %4014 = vmatprep.subr.mxu0 0.0
    %4015 = vmatpush1.msra.mxu0 0.0
    %4016 = vmatprep.subr.mxu0 0.0
    %4017 = vmatpush1.msra.mxu0 0.0
    %4018 = vmatprep.subr.mxu0 0.0
    %4019 = vmatpush1.msra.mxu0 0.0
    %4020 = vmatprep.subr.mxu0 0.0
    %4021 = vmatpush1.msra.mxu0 0.0
    %4022 = vmatprep.subr.mxu0 0.0
    %4023 = vmatpush1.msra.mxu0 0.0
    %4024 = vmatprep.subr.mxu0 0.0
    %4025 = vmatpush1.msra.mxu0 0.0
    %4026 = vmatprep.subr.mxu0 0.0
    %4027 = vmatpush1.msra.mxu0 0.0
    %4028 = vmatprep.subr.mxu0 0.0
    %4029 = vmatpush1.msra.mxu0 0.0
    %4030 = vmatprep.subr.mxu0 0.0
    %4031 = vmatpush1.msra.mxu0 0.0
    %4032 = vmatprep.subr.mxu0 0.0
    %4033 = vmatpush1.msra.mxu0 0.0
    %4034 = vmatprep.subr.mxu0 0.0
    %4035 = vmatpush1.msra.mxu0 0.0
    %4036 = vmatprep.subr.mxu0 0.0
    %4037 = vmatpush1.msra.mxu0 0.0
    %4038 = vmatprep.subr.mxu0 0.0
    %4039 = vmatpush1.msra.mxu0 0.0
    %4040 = vmatprep.subr.mxu0 0.0
    %4041 = vmatpush1.msra.mxu0 0.0
    %4042 = vmatprep.mubr.f32.mxu0 0.0
    %4043 = vmatmul.mubr.f32.gmra.mrb[0].mxu0 %v3189
    %v4044 = vpop.f32.mrb[0].mxu0
    %v4045 = vadd.f32 0.0, %v4044
    %v4046 = vpop.f32.mrb[0].mxu0
    %4047 = vmatprep.mubr.f32.mxu0 0.0
    %4048 = vmatmul.mubr.f32.gmra.mrb[0].mxu0 %v3192
    %v4049 = vpop.f32.mrb[0].mxu0
    %v4050 = vadd.f32 0.0, %v4049
    %v4051 = vpop.f32.mrb[0].mxu0
    %4052 = vdwg.mxu0
    %4053 = vmatprep.subr.mxu0 0.0
    %4054 = vmatpush1.msra.mxu0 %v3824
    %4055 = vmatprep.subr.mxu0 0.0
    %4056 = vmatpush1.msra.mxu0 %v3825
    %4057 = vmatprep.subr.mxu0 0.0
    %4058 = vmatpush1.msra.mxu0 %v3826
    %4059 = vmatprep.subr.mxu0 0.0
    %4060 = vmatpush1.msra.mxu0 %v3827
    %4061 = vmatprep.subr.mxu0 0.0
    %4062 = vmatpush1.msra.mxu0 0.0
    %4063 = vmatprep.subr.mxu0 0.0
    %4064 = vmatpush1.msra.mxu0 0.0
    %4065 = vmatprep.subr.mxu0 0.0
    %4066 = vmatpush1.msra.mxu0 0.0
    %4067 = vmatprep.subr.mxu0 0.0
    %4068 = vmatpush1.msra.mxu0 0.0
    %4069 = vmatprep.subr.mxu0 0.0
    %4070 = vmatpush1.msra.mxu0 0.0
    %4071 = vmatprep.subr.mxu0 0.0
    %4072 = vmatpush1.msra.mxu0 0.0
    %4073 = vmatprep.subr.mxu0 0.0
    %4074 = vmatpush1.msra.mxu0 0.0
    %4075 = vmatprep.subr.mxu0 0.0
    %4076 = vmatpush1.msra.mxu0 0.0
    %4077 = vmatprep.subr.mxu0 0.0
    %4078 = vmatpush1.msra.mxu0 0.0
    %4079 = vmatprep.subr.mxu0 0.0
    %4080 = vmatpush1.msra.mxu0 0.0
    %4081 = vmatprep.subr.mxu0 0.0
    %4082 = vmatpush1.msra.mxu0 0.0
    %4083 = vmatprep.subr.mxu0 0.0
    %4084 = vmatpush1.msra.mxu0 0.0
    %4085 = vmatprep.subr.mxu0 0.0
    %4086 = vmatpush1.msra.mxu0 0.0
    %4087 = vmatprep.subr.mxu0 0.0
    %4088 = vmatpush1.msra.mxu0 0.0
    %4089 = vmatprep.subr.mxu0 0.0
    %4090 = vmatpush1.msra.mxu0 0.0
    %4091 = vmatprep.subr.mxu0 0.0
    %4092 = vmatpush1.msra.mxu0 0.0
    %4093 = vmatprep.subr.mxu0 0.0
    %4094 = vmatpush1.msra.mxu0 0.0
    %4095 = vmatprep.subr.mxu0 0.0
    %4096 = vmatpush1.msra.mxu0 0.0
    %4097 = vmatprep.subr.mxu0 0.0
    %4098 = vmatpush1.msra.mxu0 0.0
    %4099 = vmatprep.subr.mxu0 0.0
    %4100 = vmatpush1.msra.mxu0 0.0
    %4101 = vmatprep.subr.mxu0 0.0
    %4102 = vmatpush1.msra.mxu0 0.0
    %4103 = vmatprep.subr.mxu0 0.0
    %4104 = vmatpush1.msra.mxu0 0.0
    %4105 = vmatprep.subr.mxu0 0.0
    %4106 = vmatpush1.msra.mxu0 0.0
    %4107 = vmatprep.subr.mxu0 0.0
    %4108 = vmatpush1.msra.mxu0 0.0
    %4109 = vmatprep.subr.mxu0 0.0
    %4110 = vmatpush1.msra.mxu0 0.0
    %4111 = vmatprep.subr.mxu0 0.0
    %4112 = vmatpush1.msra.mxu0 0.0
    %4113 = vmatprep.subr.mxu0 0.0
    %4114 = vmatpush1.msra.mxu0 0.0
    %4115 = vmatprep.subr.mxu0 0.0
    %4116 = vmatpush1.msra.mxu0 0.0
    %4117 = vmatprep.mubr.f32.mxu0 0.0
    %4118 = vmatmul.mubr.f32.gmra.mrb[0].mxu0 %v3189
    %v4119 = vpop.f32.mrb[0].mxu0
    %v4120 = vadd.f32 0.0, %v4119
    %v4121 = vpop.f32.mrb[0].mxu0
    %4122 = vmatprep.mubr.f32.mxu0 0.0
    %4123 = vmatmul.mubr.f32.gmra.mrb[0].mxu0 %v3192
    %v4124 = vpop.f32.mrb[0].mxu0
    %v4125 = vadd.f32 0.0, %v4124
    %v4126 = vpop.f32.mrb[0].mxu0
    %4127 = vdwg.mxu0
    %v4128 = vld [vmem:[%s1] sm:$0x1]
    %v4130 = vlaneseq
    %v4131 = vshrl.u32 %v4130, 7
    %v4132 = vsub.s32 0, %v4131
    %v4133 = vrot.slane %v4128, %v4132
    %v4136 = vsel %vm1006, %v3261, 0
    %v4139 = vsel %vm1006, %v3578, 0
    %4141 = vmatprep.subr.mxu0 0.0
    %4142 = vmatpush1.xpose.msra.mxu0 %v4139
    %4143 = vmatprep.subr.mxu0 0.0
    %4144 = vmatpush1.xpose.msra.mxu0 0.0
    %4145 = vmatprep.subr.mxu0 0.0
    %4146 = vmatpush1.xpose.msra.mxu0 0.0
    %4147 = vmatprep.subr.mxu0 0.0
    %4148 = vmatpush1.xpose.msra.mxu0 0.0
    %4149 = vmatprep.subr.mxu0 0.0
    %4150 = vmatpush1.xpose.msra.mxu0 0.0
    %4151 = vmatprep.subr.mxu0 0.0
    %4152 = vmatpush1.xpose.msra.mxu0 0.0
    %4153 = vmatprep.subr.mxu0 0.0
    %4154 = vmatpush1.xpose.msra.mxu0 0.0
    %4155 = vmatprep.subr.mxu0 0.0
    %4156 = vmatpush1.xpose.msra.mxu0 0.0
    %4157 = vmatprep.subr.mxu0 0.0
    %4158 = vmatpush1.xpose.msra.mxu0 0.0
    %4159 = vmatprep.subr.mxu0 0.0
    %4160 = vmatpush1.xpose.msra.mxu0 0.0
    %4161 = vmatprep.subr.mxu0 0.0
    %4162 = vmatpush1.xpose.msra.mxu0 0.0
    %4163 = vmatprep.subr.mxu0 0.0
    %4164 = vmatpush1.xpose.msra.mxu0 0.0
    %4165 = vmatprep.subr.mxu0 0.0
    %4166 = vmatpush1.xpose.msra.mxu0 0.0
    %4167 = vmatprep.subr.mxu0 0.0
    %4168 = vmatpush1.xpose.msra.mxu0 0.0
    %4169 = vmatprep.subr.mxu0 0.0
    %4170 = vmatpush1.xpose.msra.mxu0 0.0
    %4171 = vmatprep.subr.mxu0 0.0
    %4172 = vmatpush1.xpose.msra.mxu0 0.0
    %4173 = vmatprep.subr.mxu0 0.0
    %4174 = vmatpush1.xpose.msra.mxu0 0.0
    %4175 = vmatprep.subr.mxu0 0.0
    %4176 = vmatpush1.xpose.msra.mxu0 0.0
    %4177 = vmatprep.subr.mxu0 0.0
    %4178 = vmatpush1.xpose.msra.mxu0 0.0
    %4179 = vmatprep.subr.mxu0 0.0
    %4180 = vmatpush1.xpose.msra.mxu0 0.0
    %4181 = vmatprep.subr.mxu0 0.0
    %4182 = vmatpush1.xpose.msra.mxu0 0.0
    %4183 = vmatprep.subr.mxu0 0.0
    %4184 = vmatpush1.xpose.msra.mxu0 0.0
    %4185 = vmatprep.subr.mxu0 0.0
    %4186 = vmatpush1.xpose.msra.mxu0 0.0
    %4187 = vmatprep.subr.mxu0 0.0
    %4188 = vmatpush1.xpose.msra.mxu0 0.0
    %4189 = vmatprep.subr.mxu0 0.0
    %4190 = vmatpush1.xpose.msra.mxu0 0.0
    %4191 = vmatprep.subr.mxu0 0.0
    %4192 = vmatpush1.xpose.msra.mxu0 0.0
    %4193 = vmatprep.subr.mxu0 0.0
    %4194 = vmatpush1.xpose.msra.mxu0 0.0
    %4195 = vmatprep.subr.mxu0 0.0
    %4196 = vmatpush1.xpose.msra.mxu0 0.0
    %4197 = vmatprep.subr.mxu0 0.0
    %4198 = vmatpush1.xpose.msra.mxu0 0.0
    %4199 = vmatprep.subr.mxu0 0.0
    %4200 = vmatpush1.xpose.msra.mxu0 0.0
    %4201 = vmatprep.subr.mxu0 0.0
    %4202 = vmatpush1.xpose.msra.mxu0 0.0
    %4203 = vmatprep.subr.mxu0 0.0
    %4204 = vmatpush1.xpose.msra.mxu0 0.0
    %4205 = vmatprep.mubr.f32.mxu0 0.0
    %4206 = vmatmul.mubr.f32.gmra.mrb[0].mxu0 %v4136
    %v4207 = vpop.f32.mrb[0].mxu0
    %v4208 = vadd.f32 %v4133, %v4207
    %v4209 = vpop.f32.mrb[0].mxu0
    %4210 = vdwg.mxu0
    %v4212 = vsel %vm1006, %v3336, 0
    %v4215 = vsel %vm1006, %v3653, 0
    %4217 = vmatprep.subr.mxu0 0.0
    %4218 = vmatpush1.xpose.msra.mxu0 %v4215
    %4219 = vmatprep.subr.mxu0 0.0
    %4220 = vmatpush1.xpose.msra.mxu0 0.0
    %4221 = vmatprep.subr.mxu0 0.0
    %4222 = vmatpush1.xpose.msra.mxu0 0.0
    %4223 = vmatprep.subr.mxu0 0.0
    %4224 = vmatpush1.xpose.msra.mxu0 0.0
    %4225 = vmatprep.subr.mxu0 0.0
    %4226 = vmatpush1.xpose.msra.mxu0 0.0
    %4227 = vmatprep.subr.mxu0 0.0
    %4228 = vmatpush1.xpose.msra.mxu0 0.0
    %4229 = vmatprep.subr.mxu0 0.0
    %4230 = vmatpush1.xpose.msra.mxu0 0.0
    %4231 = vmatprep.subr.mxu0 0.0
    %4232 = vmatpush1.xpose.msra.mxu0 0.0
    %4233 = vmatprep.subr.mxu0 0.0
    %4234 = vmatpush1.xpose.msra.mxu0 0.0
    %4235 = vmatprep.subr.mxu0 0.0
    %4236 = vmatpush1.xpose.msra.mxu0 0.0
    %4237 = vmatprep.subr.mxu0 0.0
    %4238 = vmatpush1.xpose.msra.mxu0 0.0
    %4239 = vmatprep.subr.mxu0 0.0
    %4240 = vmatpush1.xpose.msra.mxu0 0.0
    %4241 = vmatprep.subr.mxu0 0.0
    %4242 = vmatpush1.xpose.msra.mxu0 0.0
    %4243 = vmatprep.subr.mxu0 0.0
    %4244 = vmatpush1.xpose.msra.mxu0 0.0
    %4245 = vmatprep.subr.mxu0 0.0
    %4246 = vmatpush1.xpose.msra.mxu0 0.0
    %4247 = vmatprep.subr.mxu0 0.0
    %4248 = vmatpush1.xpose.msra.mxu0 0.0
    %4249 = vmatprep.subr.mxu0 0.0
    %4250 = vmatpush1.xpose.msra.mxu0 0.0
    %4251 = vmatprep.subr.mxu0 0.0
    %4252 = vmatpush1.xpose.msra.mxu0 0.0
    %4253 = vmatprep.subr.mxu0 0.0
    %4254 = vmatpush1.xpose.msra.mxu0 0.0
    %4255 = vmatprep.subr.mxu0 0.0
    %4256 = vmatpush1.xpose.msra.mxu0 0.0
    %4257 = vmatprep.subr.mxu0 0.0
    %4258 = vmatpush1.xpose.msra.mxu0 0.0
    %4259 = vmatprep.subr.mxu0 0.0
    %4260 = vmatpush1.xpose.msra.mxu0 0.0
    %4261 = vmatprep.subr.mxu0 0.0
    %4262 = vmatpush1.xpose.msra.mxu0 0.0
    %4263 = vmatprep.subr.mxu0 0.0
    %4264 = vmatpush1.xpose.msra.mxu0 0.0
    %4265 = vmatprep.subr.mxu0 0.0
    %4266 = vmatpush1.xpose.msra.mxu0 0.0
    %4267 = vmatprep.subr.mxu0 0.0
    %4268 = vmatpush1.xpose.msra.mxu0 0.0
    %4269 = vmatprep.subr.mxu0 0.0
    %4270 = vmatpush1.xpose.msra.mxu0 0.0
    %4271 = vmatprep.subr.mxu0 0.0
    %4272 = vmatpush1.xpose.msra.mxu0 0.0
    %4273 = vmatprep.subr.mxu0 0.0
    %4274 = vmatpush1.xpose.msra.mxu0 0.0
    %4275 = vmatprep.subr.mxu0 0.0
    %4276 = vmatpush1.xpose.msra.mxu0 0.0
    %4277 = vmatprep.subr.mxu0 0.0
    %4278 = vmatpush1.xpose.msra.mxu0 0.0
    %4279 = vmatprep.subr.mxu0 0.0
    %4280 = vmatpush1.xpose.msra.mxu0 0.0
    %4281 = vmatprep.mubr.f32.mxu0 0.0
    %4282 = vmatmul.mubr.f32.gmra.mrb[0].mxu0 %v4212
    %v4283 = vpop.f32.mrb[0].mxu0
    %v4284 = vadd.f32 %v4133, %v4283
    %v4285 = vpop.f32.mrb[0].mxu0
    %4286 = vdwg.mxu0
    %v4288 = vsel %vm1006, %v3411, 0
    %v4291 = vsel %vm1006, %v3728, 0
    %4293 = vmatprep.subr.mxu0 0.0
    %4294 = vmatpush1.xpose.msra.mxu0 %v4291
    %4295 = vmatprep.subr.mxu0 0.0
    %4296 = vmatpush1.xpose.msra.mxu0 0.0
    %4297 = vmatprep.subr.mxu0 0.0
    %4298 = vmatpush1.xpose.msra.mxu0 0.0
    %4299 = vmatprep.subr.mxu0 0.0
    %4300 = vmatpush1.xpose.msra.mxu0 0.0
    %4301 = vmatprep.subr.mxu0 0.0
    %4302 = vmatpush1.xpose.msra.mxu0 0.0
    %4303 = vmatprep.subr.mxu0 0.0
    %4304 = vmatpush1.xpose.msra.mxu0 0.0
    %4305 = vmatprep.subr.mxu0 0.0
    %4306 = vmatpush1.xpose.msra.mxu0 0.0
    %4307 = vmatprep.subr.mxu0 0.0
    %4308 = vmatpush1.xpose.msra.mxu0 0.0
    %4309 = vmatprep.subr.mxu0 0.0
    %4310 = vmatpush1.xpose.msra.mxu0 0.0
    %4311 = vmatprep.subr.mxu0 0.0
    %4312 = vmatpush1.xpose.msra.mxu0 0.0
    %4313 = vmatprep.subr.mxu0 0.0
    %4314 = vmatpush1.xpose.msra.mxu0 0.0
    %4315 = vmatprep.subr.mxu0 0.0
    %4316 = vmatpush1.xpose.msra.mxu0 0.0
    %4317 = vmatprep.subr.mxu0 0.0
    %4318 = vmatpush1.xpose.msra.mxu0 0.0
    %4319 = vmatprep.subr.mxu0 0.0
    %4320 = vmatpush1.xpose.msra.mxu0 0.0
    %4321 = vmatprep.subr.mxu0 0.0
    %4322 = vmatpush1.xpose.msra.mxu0 0.0
    %4323 = vmatprep.subr.mxu0 0.0
    %4324 = vmatpush1.xpose.msra.mxu0 0.0
    %4325 = vmatprep.subr.mxu0 0.0
    %4326 = vmatpush1.xpose.msra.mxu0 0.0
    %4327 = vmatprep.subr.mxu0 0.0
    %4328 = vmatpush1.xpose.msra.mxu0 0.0
    %4329 = vmatprep.subr.mxu0 0.0
    %4330 = vmatpush1.xpose.msra.mxu0 0.0
    %4331 = vmatprep.subr.mxu0 0.0
    %4332 = vmatpush1.xpose.msra.mxu0 0.0
    %4333 = vmatprep.subr.mxu0 0.0
    %4334 = vmatpush1.xpose.msra.mxu0 0.0
    %4335 = vmatprep.subr.mxu0 0.0
    %4336 = vmatpush1.xpose.msra.mxu0 0.0
    %4337 = vmatprep.subr.mxu0 0.0
    %4338 = vmatpush1.xpose.msra.mxu0 0.0
    %4339 = vmatprep.subr.mxu0 0.0
    %4340 = vmatpush1.xpose.msra.mxu0 0.0
    %4341 = vmatprep.subr.mxu0 0.0
    %4342 = vmatpush1.xpose.msra.mxu0 0.0
    %4343 = vmatprep.subr.mxu0 0.0
    %4344 = vmatpush1.xpose.msra.mxu0 0.0
    %4345 = vmatprep.subr.mxu0 0.0
    %4346 = vmatpush1.xpose.msra.mxu0 0.0
    %4347 = vmatprep.subr.mxu0 0.0
    %4348 = vmatpush1.xpose.msra.mxu0 0.0
    %4349 = vmatprep.subr.mxu0 0.0
    %4350 = vmatpush1.xpose.msra.mxu0 0.0
    %4351 = vmatprep.subr.mxu0 0.0
    %4352 = vmatpush1.xpose.msra.mxu0 0.0
    %4353 = vmatprep.subr.mxu0 0.0
    %4354 = vmatpush1.xpose.msra.mxu0 0.0
    %4355 = vmatprep.subr.mxu0 0.0
    %4356 = vmatpush1.xpose.msra.mxu0 0.0
    %4357 = vmatprep.mubr.f32.mxu0 0.0
    %4358 = vmatmul.mubr.f32.gmra.mrb[0].mxu0 %v4288
    %v4359 = vpop.f32.mrb[0].mxu0
    %v4360 = vadd.f32 %v4133, %v4359
    %v4361 = vpop.f32.mrb[0].mxu0
    %4362 = vdwg.mxu0
    %v4364 = vsel %vm1006, %v3486, 0
    %v4367 = vsel %vm1006, %v3803, 0
    %4369 = vmatprep.subr.mxu0 0.0
    %4370 = vmatpush1.xpose.msra.mxu0 %v4367
    %4371 = vmatprep.subr.mxu0 0.0
    %4372 = vmatpush1.xpose.msra.mxu0 0.0
    %4373 = vmatprep.subr.mxu0 0.0
    %4374 = vmatpush1.xpose.msra.mxu0 0.0
    %4375 = vmatprep.subr.mxu0 0.0
    %4376 = vmatpush1.xpose.msra.mxu0 0.0
    %4377 = vmatprep.subr.mxu0 0.0
    %4378 = vmatpush1.xpose.msra.mxu0 0.0
    %4379 = vmatprep.subr.mxu0 0.0
    %4380 = vmatpush1.xpose.msra.mxu0 0.0
    %4381 = vmatprep.subr.mxu0 0.0
    %4382 = vmatpush1.xpose.msra.mxu0 0.0
    %4383 = vmatprep.subr.mxu0 0.0
    %4384 = vmatpush1.xpose.msra.mxu0 0.0
    %4385 = vmatprep.subr.mxu0 0.0
    %4386 = vmatpush1.xpose.msra.mxu0 0.0
    %4387 = vmatprep.subr.mxu0 0.0
    %4388 = vmatpush1.xpose.msra.mxu0 0.0
    %4389 = vmatprep.subr.mxu0 0.0
    %4390 = vmatpush1.xpose.msra.mxu0 0.0
    %4391 = vmatprep.subr.mxu0 0.0
    %4392 = vmatpush1.xpose.msra.mxu0 0.0
    %4393 = vmatprep.subr.mxu0 0.0
    %4394 = vmatpush1.xpose.msra.mxu0 0.0
    %4395 = vmatprep.subr.mxu0 0.0
    %4396 = vmatpush1.xpose.msra.mxu0 0.0
    %4397 = vmatprep.subr.mxu0 0.0
    %4398 = vmatpush1.xpose.msra.mxu0 0.0
    %4399 = vmatprep.subr.mxu0 0.0
    %4400 = vmatpush1.xpose.msra.mxu0 0.0
    %4401 = vmatprep.subr.mxu0 0.0
    %4402 = vmatpush1.xpose.msra.mxu0 0.0
    %4403 = vmatprep.subr.mxu0 0.0
    %4404 = vmatpush1.xpose.msra.mxu0 0.0
    %4405 = vmatprep.subr.mxu0 0.0
    %4406 = vmatpush1.xpose.msra.mxu0 0.0
    %4407 = vmatprep.subr.mxu0 0.0
    %4408 = vmatpush1.xpose.msra.mxu0 0.0
    %4409 = vmatprep.subr.mxu0 0.0
    %4410 = vmatpush1.xpose.msra.mxu0 0.0
    %4411 = vmatprep.subr.mxu0 0.0
    %4412 = vmatpush1.xpose.msra.mxu0 0.0
    %4413 = vmatprep.subr.mxu0 0.0
    %4414 = vmatpush1.xpose.msra.mxu0 0.0
    %4415 = vmatprep.subr.mxu0 0.0
    %4416 = vmatpush1.xpose.msra.mxu0 0.0
    %4417 = vmatprep.subr.mxu0 0.0
    %4418 = vmatpush1.xpose.msra.mxu0 0.0
    %4419 = vmatprep.subr.mxu0 0.0
    %4420 = vmatpush1.xpose.msra.mxu0 0.0
    %4421 = vmatprep.subr.mxu0 0.0
    %4422 = vmatpush1.xpose.msra.mxu0 0.0
    %4423 = vmatprep.subr.mxu0 0.0
    %4424 = vmatpush1.xpose.msra.mxu0 0.0
    %4425 = vmatprep.subr.mxu0 0.0
    %4426 = vmatpush1.xpose.msra.mxu0 0.0
    %4427 = vmatprep.subr.mxu0 0.0
    %4428 = vmatpush1.xpose.msra.mxu0 0.0
    %4429 = vmatprep.subr.mxu0 0.0
    %4430 = vmatpush1.xpose.msra.mxu0 0.0
    %4431 = vmatprep.subr.mxu0 0.0
    %4432 = vmatpush1.xpose.msra.mxu0 0.0
    %4433 = vmatprep.mubr.f32.mxu0 0.0
    %4434 = vmatmul.mubr.f32.gmra.mrb[0].mxu0 %v4364
    %v4435 = vpop.f32.mrb[0].mxu0
    %v4436 = vadd.f32 %v4133, %v4435
    %v4437 = vpop.f32.mrb[0].mxu0
    %4438 = vdwg.mxu0
    %v4439 = vsel %vm1006, %v4208, -inf
    %4440 = vmax.xlane.f32.xlu0 %v4439
    %v4441 = vpop.xlane.xlu0 %4440
    %v4442 = vsel %vm1006, %v4284, -inf
    %4443 = vmax.xlane.f32.xlu0 %v4442
    %v4444 = vpop.xlane.xlu0 %4443
    %v4445 = vsel %vm1006, %v4360, -inf
    %4446 = vmax.xlane.f32.xlu0 %v4445
    %v4447 = vpop.xlane.xlu0 %4446
    %v4448 = vsel %vm1006, %v4436, -inf
    %4449 = vmax.xlane.f32.xlu0 %v4448
    %v4450 = vpop.xlane.xlu0 %4449
    %v4451 = vsub.f32 %v4208, %v4441
    %v4452 = vsub.f32 %v4284, %v4444
    %v4453 = vsub.f32 %v4360, %v4447
    %v4454 = vsub.f32 %v4436, %v4450
    %v4455 = vmul.f32 %v4451, 1.442695
    %v4456 = vpow.pop %v4455
    %v4457 = vmul.f32 %v4452, 1.442695
    %v4458 = vpow.pop %v4457
    %v4459 = vmul.f32 %v4453, 1.442695
    %v4460 = vpow.pop %v4459
    %v4461 = vmul.f32 %v4454, 1.442695
    %v4462 = vpow.pop %v4461
    %v4463 = vsel %vm1006, %v4456, 0.0
    %4464 = vadd.xlane.f32.xlu0 %v4463
    %v4465 = vpop.xlane.xlu0 %4464
    %v4466 = vsel %vm1006, %v4458, 0.0
    %4467 = vadd.xlane.f32.xlu0 %v4466
    %v4468 = vpop.xlane.xlu0 %4467
    %v4469 = vsel %vm1006, %v4460, 0.0
    %4470 = vadd.xlane.f32.xlu0 %v4469
    %v4471 = vpop.xlane.xlu0 %4470
    %v4472 = vsel %vm1006, %v4462, 0.0
    %4473 = vadd.xlane.f32.xlu0 %v4472
    %v4474 = vpop.xlane.xlu0 %4473
    %v4475 = vrcp.pop %v4465
    %v4476 = vrcp.pop %v4468
    %v4477 = vrcp.pop %v4471
    %v4478 = vrcp.pop %v4474
    %v4479 = vmul.f32 %v4456, %v4475
    %v4480 = vmul.f32 %v4458, %v4476
    %v4481 = vmul.f32 %v4460, %v4477
    %v4482 = vmul.f32 %v4462, %v4478
    %v4484 = vsel %vm1006, %v4479, 0
    %4486 = vmatprep.subr.mxu0 0.0
    %4487 = vmatpush1.msra.mxu0 %v3895
    %4488 = vmatprep.subr.mxu0 0.0
    %4489 = vmatpush1.msra.mxu0 0.0
    %4490 = vmatprep.subr.mxu0 0.0
    %4491 = vmatpush1.msra.mxu0 0.0
    %4492 = vmatprep.subr.mxu0 0.0
    %4493 = vmatpush1.msra.mxu0 0.0
    %4494 = vmatprep.subr.mxu0 0.0
    %4495 = vmatpush1.msra.mxu0 0.0
    %4496 = vmatprep.subr.mxu0 0.0
    %4497 = vmatpush1.msra.mxu0 0.0
    %4498 = vmatprep.subr.mxu0 0.0
    %4499 = vmatpush1.msra.mxu0 0.0
    %4500 = vmatprep.subr.mxu0 0.0
    %4501 = vmatpush1.msra.mxu0 0.0
    %4502 = vmatprep.subr.mxu0 0.0
    %4503 = vmatpush1.msra.mxu0 0.0
    %4504 = vmatprep.subr.mxu0 0.0
    %4505 = vmatpush1.msra.mxu0 0.0
    %4506 = vmatprep.subr.mxu0 0.0
    %4507 = vmatpush1.msra.mxu0 0.0
    %4508 = vmatprep.subr.mxu0 0.0
    %4509 = vmatpush1.msra.mxu0 0.0
    %4510 = vmatprep.subr.mxu0 0.0
    %4511 = vmatpush1.msra.mxu0 0.0
    %4512 = vmatprep.subr.mxu0 0.0
    %4513 = vmatpush1.msra.mxu0 0.0
    %4514 = vmatprep.subr.mxu0 0.0
    %4515 = vmatpush1.msra.mxu0 0.0
    %4516 = vmatprep.subr.mxu0 0.0
    %4517 = vmatpush1.msra.mxu0 0.0
    %4518 = vmatprep.subr.mxu0 0.0
    %4519 = vmatpush1.msra.mxu0 0.0
    %4520 = vmatprep.subr.mxu0 0.0
    %4521 = vmatpush1.msra.mxu0 0.0
    %4522 = vmatprep.subr.mxu0 0.0
    %4523 = vmatpush1.msra.mxu0 0.0
    %4524 = vmatprep.subr.mxu0 0.0
    %4525 = vmatpush1.msra.mxu0 0.0
    %4526 = vmatprep.subr.mxu0 0.0
    %4527 = vmatpush1.msra.mxu0 0.0
    %4528 = vmatprep.subr.mxu0 0.0
    %4529 = vmatpush1.msra.mxu0 0.0
    %4530 = vmatprep.subr.mxu0 0.0
    %4531 = vmatpush1.msra.mxu0 0.0
    %4532 = vmatprep.subr.mxu0 0.0
    %4533 = vmatpush1.msra.mxu0 0.0
    %4534 = vmatprep.subr.mxu0 0.0
    %4535 = vmatpush1.msra.mxu0 0.0
    %4536 = vmatprep.subr.mxu0 0.0
    %4537 = vmatpush1.msra.mxu0 0.0
    %4538 = vmatprep.subr.mxu0 0.0
    %4539 = vmatpush1.msra.mxu0 0.0
    %4540 = vmatprep.subr.mxu0 0.0
    %4541 = vmatpush1.msra.mxu0 0.0
    %4542 = vmatprep.subr.mxu0 0.0
    %4543 = vmatpush1.msra.mxu0 0.0
    %4544 = vmatprep.subr.mxu0 0.0
    %4545 = vmatpush1.msra.mxu0 0.0
    %4546 = vmatprep.subr.mxu0 0.0
    %4547 = vmatpush1.msra.mxu0 0.0
    %4548 = vmatprep.subr.mxu0 0.0
    %4549 = vmatpush1.msra.mxu0 0.0
    %4550 = vmatprep.mubr.f32.mxu0 0.0
    %4551 = vmatmul.mubr.f32.gmra.mrb[0].mxu0 %v4484
    %v4552 = vpop.f32.mrb[0].mxu0
    %v4553 = vadd.f32 0.0, %v4552
    %v4554 = vpop.f32.mrb[0].mxu0
    %4555 = vdwg.mxu0
    %v4557 = vsel %vm1006, %v4480, 0
    %4559 = vmatprep.subr.mxu0 0.0
    %4560 = vmatpush1.msra.mxu0 %v3970
    %4561 = vmatprep.subr.mxu0 0.0
    %4562 = vmatpush1.msra.mxu0 0.0
    %4563 = vmatprep.subr.mxu0 0.0
    %4564 = vmatpush1.msra.mxu0 0.0
    %4565 = vmatprep.subr.mxu0 0.0
    %4566 = vmatpush1.msra.mxu0 0.0
    %4567 = vmatprep.subr.mxu0 0.0
    %4568 = vmatpush1.msra.mxu0 0.0
    %4569 = vmatprep.subr.mxu0 0.0
    %4570 = vmatpush1.msra.mxu0 0.0
    %4571 = vmatprep.subr.mxu0 0.0
    %4572 = vmatpush1.msra.mxu0 0.0
    %4573 = vmatprep.subr.mxu0 0.0
    %4574 = vmatpush1.msra.mxu0 0.0
    %4575 = vmatprep.subr.mxu0 0.0
    %4576 = vmatpush1.msra.mxu0 0.0
    %4577 = vmatprep.subr.mxu0 0.0
    %4578 = vmatpush1.msra.mxu0 0.0
    %4579 = vmatprep.subr.mxu0 0.0
    %4580 = vmatpush1.msra.mxu0 0.0
    %4581 = vmatprep.subr.mxu0 0.0
    %4582 = vmatpush1.msra.mxu0 0.0
    %4583 = vmatprep.subr.mxu0 0.0
    %4584 = vmatpush1.msra.mxu0 0.0
    %4585 = vmatprep.subr.mxu0 0.0
    %4586 = vmatpush1.msra.mxu0 0.0
    %4587 = vmatprep.subr.mxu0 0.0
    %4588 = vmatpush1.msra.mxu0 0.0
    %4589 = vmatprep.subr.mxu0 0.0
    %4590 = vmatpush1.msra.mxu0 0.0
    %4591 = vmatprep.subr.mxu0 0.0
    %4592 = vmatpush1.msra.mxu0 0.0
    %4593 = vmatprep.subr.mxu0 0.0
    %4594 = vmatpush1.msra.mxu0 0.0
    %4595 = vmatprep.subr.mxu0 0.0
    %4596 = vmatpush1.msra.mxu0 0.0
    %4597 = vmatprep.subr.mxu0 0.0
    %4598 = vmatpush1.msra.mxu0 0.0
    %4599 = vmatprep.subr.mxu0 0.0
    %4600 = vmatpush1.msra.mxu0 0.0
    %4601 = vmatprep.subr.mxu0 0.0
    %4602 = vmatpush1.msra.mxu0 0.0
    %4603 = vmatprep.subr.mxu0 0.0
    %4604 = vmatpush1.msra.mxu0 0.0
    %4605 = vmatprep.subr.mxu0 0.0
    %4606 = vmatpush1.msra.mxu0 0.0
    %4607 = vmatprep.subr.mxu0 0.0
    %4608 = vmatpush1.msra.mxu0 0.0
    %4609 = vmatprep.subr.mxu0 0.0
    %4610 = vmatpush1.msra.mxu0 0.0
    %4611 = vmatprep.subr.mxu0 0.0
    %4612 = vmatpush1.msra.mxu0 0.0
    %4613 = vmatprep.subr.mxu0 0.0
    %4614 = vmatpush1.msra.mxu0 0.0
    %4615 = vmatprep.subr.mxu0 0.0
    %4616 = vmatpush1.msra.mxu0 0.0
    %4617 = vmatprep.subr.mxu0 0.0
    %4618 = vmatpush1.msra.mxu0 0.0
    %4619 = vmatprep.subr.mxu0 0.0
    %4620 = vmatpush1.msra.mxu0 0.0
    %4621 = vmatprep.subr.mxu0 0.0
    %4622 = vmatpush1.msra.mxu0 0.0
    %4623 = vmatprep.mubr.f32.mxu0 0.0
    %4624 = vmatmul.mubr.f32.gmra.mrb[0].mxu0 %v4557
    %v4625 = vpop.f32.mrb[0].mxu0
    %v4626 = vadd.f32 0.0, %v4625
    %v4627 = vpop.f32.mrb[0].mxu0
    %4628 = vdwg.mxu0
    %v4630 = vsel %vm1006, %v4481, 0
    %4632 = vmatprep.subr.mxu0 0.0
    %4633 = vmatpush1.msra.mxu0 %v4045
    %4634 = vmatprep.subr.mxu0 0.0
    %4635 = vmatpush1.msra.mxu0 0.0
    %4636 = vmatprep.subr.mxu0 0.0
    %4637 = vmatpush1.msra.mxu0 0.0
    %4638 = vmatprep.subr.mxu0 0.0
    %4639 = vmatpush1.msra.mxu0 0.0
    %4640 = vmatprep.subr.mxu0 0.0
    %4641 = vmatpush1.msra.mxu0 0.0
    %4642 = vmatprep.subr.mxu0 0.0
    %4643 = vmatpush1.msra.mxu0 0.0
    %4644 = vmatprep.subr.mxu0 0.0
    %4645 = vmatpush1.msra.mxu0 0.0
    %4646 = vmatprep.subr.mxu0 0.0
    %4647 = vmatpush1.msra.mxu0 0.0
    %4648 = vmatprep.subr.mxu0 0.0
    %4649 = vmatpush1.msra.mxu0 0.0
    %4650 = vmatprep.subr.mxu0 0.0
    %4651 = vmatpush1.msra.mxu0 0.0
    %4652 = vmatprep.subr.mxu0 0.0
    %4653 = vmatpush1.msra.mxu0 0.0
    %4654 = vmatprep.subr.mxu0 0.0
    %4655 = vmatpush1.msra.mxu0 0.0
    %4656 = vmatprep.subr.mxu0 0.0
    %4657 = vmatpush1.msra.mxu0 0.0
    %4658 = vmatprep.subr.mxu0 0.0
    %4659 = vmatpush1.msra.mxu0 0.0
    %4660 = vmatprep.subr.mxu0 0.0
    %4661 = vmatpush1.msra.mxu0 0.0
    %4662 = vmatprep.subr.mxu0 0.0
    %4663 = vmatpush1.msra.mxu0 0.0
    %4664 = vmatprep.subr.mxu0 0.0
    %4665 = vmatpush1.msra.mxu0 0.0
    %4666 = vmatprep.subr.mxu0 0.0
    %4667 = vmatpush1.msra.mxu0 0.0
    %4668 = vmatprep.subr.mxu0 0.0
    %4669 = vmatpush1.msra.mxu0 0.0
    %4670 = vmatprep.subr.mxu0 0.0
    %4671 = vmatpush1.msra.mxu0 0.0
    %4672 = vmatprep.subr.mxu0 0.0
    %4673 = vmatpush1.msra.mxu0 0.0
    %4674 = vmatprep.subr.mxu0 0.0
    %4675 = vmatpush1.msra.mxu0 0.0
    %4676 = vmatprep.subr.mxu0 0.0
    %4677 = vmatpush1.msra.mxu0 0.0
    %4678 = vmatprep.subr.mxu0 0.0
    %4679 = vmatpush1.msra.mxu0 0.0
    %4680 = vmatprep.subr.mxu0 0.0
    %4681 = vmatpush1.msra.mxu0 0.0
    %4682 = vmatprep.subr.mxu0 0.0
    %4683 = vmatpush1.msra.mxu0 0.0
    %4684 = vmatprep.subr.mxu0 0.0
    %4685 = vmatpush1.msra.mxu0 0.0
    %4686 = vmatprep.subr.mxu0 0.0
    %4687 = vmatpush1.msra.mxu0 0.0
    %4688 = vmatprep.subr.mxu0 0.0
    %4689 = vmatpush1.msra.mxu0 0.0
    %4690 = vmatprep.subr.mxu0 0.0
    %4691 = vmatpush1.msra.mxu0 0.0
    %4692 = vmatprep.subr.mxu0 0.0
    %4693 = vmatpush1.msra.mxu0 0.0
    %4694 = vmatprep.subr.mxu0 0.0
    %4695 = vmatpush1.msra.mxu0 0.0
    %4696 = vmatprep.mubr.f32.mxu0 0.0
    %4697 = vmatmul.mubr.f32.gmra.mrb[0].mxu0 %v4630
    %v4698 = vpop.f32.mrb[0].mxu0
    %v4699 = vadd.f32 0.0, %v4698
    %v4700 = vpop.f32.mrb[0].mxu0
    %4701 = vdwg.mxu0
    %v4703 = vsel %vm1006, %v4482, 0
    %4705 = vmatprep.subr.mxu0 0.0
    %4706 = vmatpush1.msra.mxu0 %v4120
    %4707 = vmatprep.subr.mxu0 0.0
    %4708 = vmatpush1.msra.mxu0 0.0
    %4709 = vmatprep.subr.mxu0 0.0
    %4710 = vmatpush1.msra.mxu0 0.0
    %4711 = vmatprep.subr.mxu0 0.0
    %4712 = vmatpush1.msra.mxu0 0.0
    %4713 = vmatprep.subr.mxu0 0.0
    %4714 = vmatpush1.msra.mxu0 0.0
    %4715 = vmatprep.subr.mxu0 0.0
    %4716 = vmatpush1.msra.mxu0 0.0
    %4717 = vmatprep.subr.mxu0 0.0
    %4718 = vmatpush1.msra.mxu0 0.0
    %4719 = vmatprep.subr.mxu0 0.0
    %4720 = vmatpush1.msra.mxu0 0.0
    %4721 = vmatprep.subr.mxu0 0.0
    %4722 = vmatpush1.msra.mxu0 0.0
    %4723 = vmatprep.subr.mxu0 0.0
    %4724 = vmatpush1.msra.mxu0 0.0
    %4725 = vmatprep.subr.mxu0 0.0
    %4726 = vmatpush1.msra.mxu0 0.0
    %4727 = vmatprep.subr.mxu0 0.0
    %4728 = vmatpush1.msra.mxu0 0.0
    %4729 = vmatprep.subr.mxu0 0.0
    %4730 = vmatpush1.msra.mxu0 0.0
    %4731 = vmatprep.subr.mxu0 0.0
    %4732 = vmatpush1.msra.mxu0 0.0
    %4733 = vmatprep.subr.mxu0 0.0
    %4734 = vmatpush1.msra.mxu0 0.0
    %4735 = vmatprep.subr.mxu0 0.0
    %4736 = vmatpush1.msra.mxu0 0.0
    %4737 = vmatprep.subr.mxu0 0.0
    %4738 = vmatpush1.msra.mxu0 0.0
    %4739 = vmatprep.subr.mxu0 0.0
    %4740 = vmatpush1.msra.mxu0 0.0
    %4741 = vmatprep.subr.mxu0 0.0
    %4742 = vmatpush1.msra.mxu0 0.0
    %4743 = vmatprep.subr.mxu0 0.0
    %4744 = vmatpush1.msra.mxu0 0.0
    %4745 = vmatprep.subr.mxu0 0.0
    %4746 = vmatpush1.msra.mxu0 0.0
    %4747 = vmatprep.subr.mxu0 0.0
    %4748 = vmatpush1.msra.mxu0 0.0
    %4749 = vmatprep.subr.mxu0 0.0
    %4750 = vmatpush1.msra.mxu0 0.0
    %4751 = vmatprep.subr.mxu0 0.0
    %4752 = vmatpush1.msra.mxu0 0.0
    %4753 = vmatprep.subr.mxu0 0.0
    %4754 = vmatpush1.msra.mxu0 0.0
    %4755 = vmatprep.subr.mxu0 0.0
    %4756 = vmatpush1.msra.mxu0 0.0
    %4757 = vmatprep.subr.mxu0 0.0
    %4758 = vmatpush1.msra.mxu0 0.0
    %4759 = vmatprep.subr.mxu0 0.0
    %4760 = vmatpush1.msra.mxu0 0.0
    %4761 = vmatprep.subr.mxu0 0.0
    %4762 = vmatpush1.msra.mxu0 0.0
    %4763 = vmatprep.subr.mxu0 0.0
    %4764 = vmatpush1.msra.mxu0 0.0
    %4765 = vmatprep.subr.mxu0 0.0
    %4766 = vmatpush1.msra.mxu0 0.0
    %4767 = vmatprep.subr.mxu0 0.0
    %4768 = vmatpush1.msra.mxu0 0.0
    %4769 = vmatprep.mubr.f32.mxu0 0.0
    %4770 = vmatmul.mubr.f32.gmra.mrb[0].mxu0 %v4703
    %v4771 = vpop.f32.mrb[0].mxu0
    %v4772 = vadd.f32 0.0, %v4771
    %v4773 = vpop.f32.mrb[0].mxu0
    %4774 = vdwg.mxu0
    %s4775 = scalar_lea.vmem %s5, 32
    %v4776 = vld [vmem:[%s4775] sm:$0xff]
    %v4777 = vld [vmem:[%s4775 + $0x8] sm:$0xff]
    %v4778 = vld [vmem:[%s4775 + $0x10] sm:$0xff]
    %v4779 = vld [vmem:[%s4775 + $0x18] sm:$0xff]
    %v4781 = vsel %vm1006, %v4553, 0
    %4783 = vmatprep.subr.mxu0 0.0
    %4784 = vmatpush1.msra.mxu0 %v4776
    %4785 = vmatprep.subr.mxu0 0.0
    %4786 = vmatpush1.msra.mxu0 0.0
    %4787 = vmatprep.subr.mxu0 0.0
    %4788 = vmatpush1.msra.mxu0 0.0
    %4789 = vmatprep.subr.mxu0 0.0
    %4790 = vmatpush1.msra.mxu0 0.0
    %4791 = vmatprep.subr.mxu0 0.0
    %4792 = vmatpush1.msra.mxu0 0.0
    %4793 = vmatprep.subr.mxu0 0.0
    %4794 = vmatpush1.msra.mxu0 0.0
    %4795 = vmatprep.subr.mxu0 0.0
    %4796 = vmatpush1.msra.mxu0 0.0
    %4797 = vmatprep.subr.mxu0 0.0
    %4798 = vmatpush1.msra.mxu0 0.0
    %4799 = vmatprep.subr.mxu0 0.0
    %4800 = vmatpush1.msra.mxu0 0.0
    %4801 = vmatprep.subr.mxu0 0.0
    %4802 = vmatpush1.msra.mxu0 0.0
    %4803 = vmatprep.subr.mxu0 0.0
    %4804 = vmatpush1.msra.mxu0 0.0
    %4805 = vmatprep.subr.mxu0 0.0
    %4806 = vmatpush1.msra.mxu0 0.0
    %4807 = vmatprep.subr.mxu0 0.0
    %4808 = vmatpush1.msra.mxu0 0.0
    %4809 = vmatprep.subr.mxu0 0.0
    %4810 = vmatpush1.msra.mxu0 0.0
    %4811 = vmatprep.subr.mxu0 0.0
    %4812 = vmatpush1.msra.mxu0 0.0
    %4813 = vmatprep.subr.mxu0 0.0
    %4814 = vmatpush1.msra.mxu0 0.0
    %4815 = vmatprep.subr.mxu0 0.0
    %4816 = vmatpush1.msra.mxu0 0.0
    %4817 = vmatprep.subr.mxu0 0.0
    %4818 = vmatpush1.msra.mxu0 0.0
    %4819 = vmatprep.subr.mxu0 0.0
    %4820 = vmatpush1.msra.mxu0 0.0
    %4821 = vmatprep.subr.mxu0 0.0
    %4822 = vmatpush1.msra.mxu0 0.0
    %4823 = vmatprep.subr.mxu0 0.0
    %4824 = vmatpush1.msra.mxu0 0.0
    %4825 = vmatprep.subr.mxu0 0.0
    %4826 = vmatpush1.msra.mxu0 0.0
    %4827 = vmatprep.subr.mxu0 0.0
    %4828 = vmatpush1.msra.mxu0 0.0
    %4829 = vmatprep.subr.mxu0 0.0
    %4830 = vmatpush1.msra.mxu0 0.0
    %4831 = vmatprep.subr.mxu0 0.0
    %4832 = vmatpush1.msra.mxu0 0.0
    %4833 = vmatprep.subr.mxu0 0.0
    %4834 = vmatpush1.msra.mxu0 0.0
    %4835 = vmatprep.subr.mxu0 0.0
    %4836 = vmatpush1.msra.mxu0 0.0
    %4837 = vmatprep.subr.mxu0 0.0
    %4838 = vmatpush1.msra.mxu0 0.0
    %4839 = vmatprep.subr.mxu0 0.0
    %4840 = vmatpush1.msra.mxu0 0.0
    %4841 = vmatprep.subr.mxu0 0.0
    %4842 = vmatpush1.msra.mxu0 0.0
    %4843 = vmatprep.subr.mxu0 0.0
    %4844 = vmatpush1.msra.mxu0 0.0
    %4845 = vmatprep.subr.mxu0 0.0
    %4846 = vmatpush1.msra.mxu0 0.0
    %4847 = vmatprep.mubr.f32.mxu0 0.0
    %4848 = vmatmul.mubr.f32.gmra.mrb[0].mxu0 %v4781
    %v4849 = vpop.f32.mrb[0].mxu0
    %v4850 = vadd.f32 0.0, %v4849
    %v4851 = vpop.f32.mrb[0].mxu0
    %4852 = vdwg.mxu0
    %v4854 = vsel %vm1006, %v4626, 0
    %4856 = vmatprep.subr.mxu0 0.0
    %4857 = vmatpush1.msra.mxu0 %v4777
    %4858 = vmatprep.subr.mxu0 0.0
    %4859 = vmatpush1.msra.mxu0 0.0
    %4860 = vmatprep.subr.mxu0 0.0
    %4861 = vmatpush1.msra.mxu0 0.0
    %4862 = vmatprep.subr.mxu0 0.0
    %4863 = vmatpush1.msra.mxu0 0.0
    %4864 = vmatprep.subr.mxu0 0.0
    %4865 = vmatpush1.msra.mxu0 0.0
    %4866 = vmatprep.subr.mxu0 0.0
    %4867 = vmatpush1.msra.mxu0 0.0
    %4868 = vmatprep.subr.mxu0 0.0
    %4869 = vmatpush1.msra.mxu0 0.0
    %4870 = vmatprep.subr.mxu0 0.0
    %4871 = vmatpush1.msra.mxu0 0.0
    %4872 = vmatprep.subr.mxu0 0.0
    %4873 = vmatpush1.msra.mxu0 0.0
    %4874 = vmatprep.subr.mxu0 0.0
    %4875 = vmatpush1.msra.mxu0 0.0
    %4876 = vmatprep.subr.mxu0 0.0
    %4877 = vmatpush1.msra.mxu0 0.0
    %4878 = vmatprep.subr.mxu0 0.0
    %4879 = vmatpush1.msra.mxu0 0.0
    %4880 = vmatprep.subr.mxu0 0.0
    %4881 = vmatpush1.msra.mxu0 0.0
    %4882 = vmatprep.subr.mxu0 0.0
    %4883 = vmatpush1.msra.mxu0 0.0
    %4884 = vmatprep.subr.mxu0 0.0
    %4885 = vmatpush1.msra.mxu0 0.0
    %4886 = vmatprep.subr.mxu0 0.0
    %4887 = vmatpush1.msra.mxu0 0.0
    %4888 = vmatprep.subr.mxu0 0.0
    %4889 = vmatpush1.msra.mxu0 0.0
    %4890 = vmatprep.subr.mxu0 0.0
    %4891 = vmatpush1.msra.mxu0 0.0
    %4892 = vmatprep.subr.mxu0 0.0
    %4893 = vmatpush1.msra.mxu0 0.0
    %4894 = vmatprep.subr.mxu0 0.0
    %4895 = vmatpush1.msra.mxu0 0.0
    %4896 = vmatprep.subr.mxu0 0.0
    %4897 = vmatpush1.msra.mxu0 0.0
    %4898 = vmatprep.subr.mxu0 0.0
    %4899 = vmatpush1.msra.mxu0 0.0
    %4900 = vmatprep.subr.mxu0 0.0
    %4901 = vmatpush1.msra.mxu0 0.0
    %4902 = vmatprep.subr.mxu0 0.0
    %4903 = vmatpush1.msra.mxu0 0.0
    %4904 = vmatprep.subr.mxu0 0.0
    %4905 = vmatpush1.msra.mxu0 0.0
    %4906 = vmatprep.subr.mxu0 0.0
    %4907 = vmatpush1.msra.mxu0 0.0
    %4908 = vmatprep.subr.mxu0 0.0
    %4909 = vmatpush1.msra.mxu0 0.0
    %4910 = vmatprep.subr.mxu0 0.0
    %4911 = vmatpush1.msra.mxu0 0.0
    %4912 = vmatprep.subr.mxu0 0.0
    %4913 = vmatpush1.msra.mxu0 0.0
    %4914 = vmatprep.subr.mxu0 0.0
    %4915 = vmatpush1.msra.mxu0 0.0
    %4916 = vmatprep.subr.mxu0 0.0
    %4917 = vmatpush1.msra.mxu0 0.0
    %4918 = vmatprep.subr.mxu0 0.0
    %4919 = vmatpush1.msra.mxu0 0.0
    %4920 = vmatprep.mubr.f32.mxu0 0.0
    %4921 = vmatmul.mubr.f32.gmra.mrb[0].mxu0 %v4854
    %v4922 = vpop.f32.mrb[0].mxu0
    %v4923 = vadd.f32 0.0, %v4922
    %v4924 = vpop.f32.mrb[0].mxu0
    %4925 = vdwg.mxu0
    %v4927 = vsel %vm1006, %v4699, 0
    %4929 = vmatprep.subr.mxu0 0.0
    %4930 = vmatpush1.msra.mxu0 %v4778
    %4931 = vmatprep.subr.mxu0 0.0
    %4932 = vmatpush1.msra.mxu0 0.0
    %4933 = vmatprep.subr.mxu0 0.0
    %4934 = vmatpush1.msra.mxu0 0.0
    %4935 = vmatprep.subr.mxu0 0.0
    %4936 = vmatpush1.msra.mxu0 0.0
    %4937 = vmatprep.subr.mxu0 0.0
    %4938 = vmatpush1.msra.mxu0 0.0
    %4939 = vmatprep.subr.mxu0 0.0
    %4940 = vmatpush1.msra.mxu0 0.0
    %4941 = vmatprep.subr.mxu0 0.0
    %4942 = vmatpush1.msra.mxu0 0.0
    %4943 = vmatprep.subr.mxu0 0.0
    %4944 = vmatpush1.msra.mxu0 0.0
    %4945 = vmatprep.subr.mxu0 0.0
    %4946 = vmatpush1.msra.mxu0 0.0
    %4947 = vmatprep.subr.mxu0 0.0
    %4948 = vmatpush1.msra.mxu0 0.0
    %4949 = vmatprep.subr.mxu0 0.0
    %4950 = vmatpush1.msra.mxu0 0.0
    %4951 = vmatprep.subr.mxu0 0.0
    %4952 = vmatpush1.msra.mxu0 0.0
    %4953 = vmatprep.subr.mxu0 0.0
    %4954 = vmatpush1.msra.mxu0 0.0
    %4955 = vmatprep.subr.mxu0 0.0
    %4956 = vmatpush1.msra.mxu0 0.0
    %4957 = vmatprep.subr.mxu0 0.0
    %4958 = vmatpush1.msra.mxu0 0.0
    %4959 = vmatprep.subr.mxu0 0.0
    %4960 = vmatpush1.msra.mxu0 0.0
    %4961 = vmatprep.subr.mxu0 0.0
    %4962 = vmatpush1.msra.mxu0 0.0
    %4963 = vmatprep.subr.mxu0 0.0
    %4964 = vmatpush1.msra.mxu0 0.0
    %4965 = vmatprep.subr.mxu0 0.0
    %4966 = vmatpush1.msra.mxu0 0.0
    %4967 = vmatprep.subr.mxu0 0.0
    %4968 = vmatpush1.msra.mxu0 0.0
    %4969 = vmatprep.subr.mxu0 0.0
    %4970 = vmatpush1.msra.mxu0 0.0
    %4971 = vmatprep.subr.mxu0 0.0
    %4972 = vmatpush1.msra.mxu0 0.0
    %4973 = vmatprep.subr.mxu0 0.0
    %4974 = vmatpush1.msra.mxu0 0.0
    %4975 = vmatprep.subr.mxu0 0.0
    %4976 = vmatpush1.msra.mxu0 0.0
    %4977 = vmatprep.subr.mxu0 0.0
    %4978 = vmatpush1.msra.mxu0 0.0
    %4979 = vmatprep.subr.mxu0 0.0
    %4980 = vmatpush1.msra.mxu0 0.0
    %4981 = vmatprep.subr.mxu0 0.0
    %4982 = vmatpush1.msra.mxu0 0.0
    %4983 = vmatprep.subr.mxu0 0.0
    %4984 = vmatpush1.msra.mxu0 0.0
    %4985 = vmatprep.subr.mxu0 0.0
    %4986 = vmatpush1.msra.mxu0 0.0
    %4987 = vmatprep.subr.mxu0 0.0
    %4988 = vmatpush1.msra.mxu0 0.0
    %4989 = vmatprep.subr.mxu0 0.0
    %4990 = vmatpush1.msra.mxu0 0.0
    %4991 = vmatprep.subr.mxu0 0.0
    %4992 = vmatpush1.msra.mxu0 0.0
    %4993 = vmatprep.mubr.f32.mxu0 0.0
    %4994 = vmatmul.mubr.f32.gmra.mrb[0].mxu0 %v4927
    %v4995 = vpop.f32.mrb[0].mxu0
    %v4996 = vadd.f32 0.0, %v4995
    %v4997 = vpop.f32.mrb[0].mxu0
    %4998 = vdwg.mxu0
    %v5000 = vsel %vm1006, %v4772, 0
    %5002 = vmatprep.subr.mxu0 0.0
    %5003 = vmatpush1.msra.mxu0 %v4779
    %5004 = vmatprep.subr.mxu0 0.0
    %5005 = vmatpush1.msra.mxu0 0.0
    %5006 = vmatprep.subr.mxu0 0.0
    %5007 = vmatpush1.msra.mxu0 0.0
    %5008 = vmatprep.subr.mxu0 0.0
    %5009 = vmatpush1.msra.mxu0 0.0
    %5010 = vmatprep.subr.mxu0 0.0
    %5011 = vmatpush1.msra.mxu0 0.0
    %5012 = vmatprep.subr.mxu0 0.0
    %5013 = vmatpush1.msra.mxu0 0.0
    %5014 = vmatprep.subr.mxu0 0.0
    %5015 = vmatpush1.msra.mxu0 0.0
    %5016 = vmatprep.subr.mxu0 0.0
    %5017 = vmatpush1.msra.mxu0 0.0
    %5018 = vmatprep.subr.mxu0 0.0
    %5019 = vmatpush1.msra.mxu0 0.0
    %5020 = vmatprep.subr.mxu0 0.0
    %5021 = vmatpush1.msra.mxu0 0.0
    %5022 = vmatprep.subr.mxu0 0.0
    %5023 = vmatpush1.msra.mxu0 0.0
    %5024 = vmatprep.subr.mxu0 0.0
    %5025 = vmatpush1.msra.mxu0 0.0
    %5026 = vmatprep.subr.mxu0 0.0
    %5027 = vmatpush1.msra.mxu0 0.0
    %5028 = vmatprep.subr.mxu0 0.0
    %5029 = vmatpush1.msra.mxu0 0.0
    %5030 = vmatprep.subr.mxu0 0.0
    %5031 = vmatpush1.msra.mxu0 0.0
    %5032 = vmatprep.subr.mxu0 0.0
    %5033 = vmatpush1.msra.mxu0 0.0
    %5034 = vmatprep.subr.mxu0 0.0
    %5035 = vmatpush1.msra.mxu0 0.0
    %5036 = vmatprep.subr.mxu0 0.0
    %5037 = vmatpush1.msra.mxu0 0.0
    %5038 = vmatprep.subr.mxu0 0.0
    %5039 = vmatpush1.msra.mxu0 0.0
    %5040 = vmatprep.subr.mxu0 0.0
    %5041 = vmatpush1.msra.mxu0 0.0
    %5042 = vmatprep.subr.mxu0 0.0
    %5043 = vmatpush1.msra.mxu0 0.0
    %5044 = vmatprep.subr.mxu0 0.0
    %5045 = vmatpush1.msra.mxu0 0.0
    %5046 = vmatprep.subr.mxu0 0.0
    %5047 = vmatpush1.msra.mxu0 0.0
    %5048 = vmatprep.subr.mxu0 0.0
    %5049 = vmatpush1.msra.mxu0 0.0
    %5050 = vmatprep.subr.mxu0 0.0
    %5051 = vmatpush1.msra.mxu0 0.0
    %5052 = vmatprep.subr.mxu0 0.0
    %5053 = vmatpush1.msra.mxu0 0.0
    %5054 = vmatprep.subr.mxu0 0.0
    %5055 = vmatpush1.msra.mxu0 0.0
    %5056 = vmatprep.subr.mxu0 0.0
    %5057 = vmatpush1.msra.mxu0 0.0
    %5058 = vmatprep.subr.mxu0 0.0
    %5059 = vmatpush1.msra.mxu0 0.0
    %5060 = vmatprep.subr.mxu0 0.0
    %5061 = vmatpush1.msra.mxu0 0.0
    %5062 = vmatprep.subr.mxu0 0.0
    %5063 = vmatpush1.msra.mxu0 0.0
    %5064 = vmatprep.subr.mxu0 0.0
    %5065 = vmatpush1.msra.mxu0 0.0
    %5066 = vmatprep.mubr.f32.mxu0 0.0
    %5067 = vmatmul.mubr.f32.gmra.mrb[0].mxu0 %v5000
    %v5068 = vpop.f32.mrb[0].mxu0
    %v5069 = vadd.f32 0.0, %v5068
    %v5070 = vpop.f32.mrb[0].mxu0
    %5071 = vdwg.mxu0
    %v5072 = vsel %vm60, %v4850, 0.0
    %v5073 = vsel %vm60, %v4923, 0.0
    %v5074 = vadd.f32 %v5072, %v5073
    %v5075 = vsel %vm60, %v4996, 0.0
    %v5076 = vadd.f32 %v5074, %v5075
    %v5077 = vsel %vm60, %v5069, 0.0
    %v5078 = vadd.f32 %v5076, %v5077
    %v5079 = vld [vmem:[%s1950] sm:$0x1]
    %v5081 = vlaneseq
    %v5082 = vshrl.u32 %v5081, 7
    %v5083 = vsub.s32 0, %v5082
    %v5084 = vrot.slane %v5079, %v5083
    %v5087 = vsel %vm1006, %v3266, 0
    %v5090 = vsel %vm1006, %v3583, 0
    %5092 = vmatprep.subr.mxu0 0.0
    %5093 = vmatpush1.xpose.msra.mxu0 %v5090
    %5094 = vmatprep.subr.mxu0 0.0
    %5095 = vmatpush1.xpose.msra.mxu0 0.0
    %5096 = vmatprep.subr.mxu0 0.0
    %5097 = vmatpush1.xpose.msra.mxu0 0.0
    %5098 = vmatprep.subr.mxu0 0.0
    %5099 = vmatpush1.xpose.msra.mxu0 0.0
    %5100 = vmatprep.subr.mxu0 0.0
    %5101 = vmatpush1.xpose.msra.mxu0 0.0
    %5102 = vmatprep.subr.mxu0 0.0
    %5103 = vmatpush1.xpose.msra.mxu0 0.0
    %5104 = vmatprep.subr.mxu0 0.0
    %5105 = vmatpush1.xpose.msra.mxu0 0.0
    %5106 = vmatprep.subr.mxu0 0.0
    %5107 = vmatpush1.xpose.msra.mxu0 0.0
    %5108 = vmatprep.subr.mxu0 0.0
    %5109 = vmatpush1.xpose.msra.mxu0 0.0
    %5110 = vmatprep.subr.mxu0 0.0
    %5111 = vmatpush1.xpose.msra.mxu0 0.0
    %5112 = vmatprep.subr.mxu0 0.0
    %5113 = vmatpush1.xpose.msra.mxu0 0.0
    %5114 = vmatprep.subr.mxu0 0.0
    %5115 = vmatpush1.xpose.msra.mxu0 0.0
    %5116 = vmatprep.subr.mxu0 0.0
    %5117 = vmatpush1.xpose.msra.mxu0 0.0
    %5118 = vmatprep.subr.mxu0 0.0
    %5119 = vmatpush1.xpose.msra.mxu0 0.0
    %5120 = vmatprep.subr.mxu0 0.0
    %5121 = vmatpush1.xpose.msra.mxu0 0.0
    %5122 = vmatprep.subr.mxu0 0.0
    %5123 = vmatpush1.xpose.msra.mxu0 0.0
    %5124 = vmatprep.subr.mxu0 0.0
    %5125 = vmatpush1.xpose.msra.mxu0 0.0
    %5126 = vmatprep.subr.mxu0 0.0
    %5127 = vmatpush1.xpose.msra.mxu0 0.0
    %5128 = vmatprep.subr.mxu0 0.0
    %5129 = vmatpush1.xpose.msra.mxu0 0.0
    %5130 = vmatprep.subr.mxu0 0.0
    %5131 = vmatpush1.xpose.msra.mxu0 0.0
    %5132 = vmatprep.subr.mxu0 0.0
    %5133 = vmatpush1.xpose.msra.mxu0 0.0
    %5134 = vmatprep.subr.mxu0 0.0
    %5135 = vmatpush1.xpose.msra.mxu0 0.0
    %5136 = vmatprep.subr.mxu0 0.0
    %5137 = vmatpush1.xpose.msra.mxu0 0.0
    %5138 = vmatprep.subr.mxu0 0.0
    %5139 = vmatpush1.xpose.msra.mxu0 0.0
    %5140 = vmatprep.subr.mxu0 0.0
    %5141 = vmatpush1.xpose.msra.mxu0 0.0
    %5142 = vmatprep.subr.mxu0 0.0
    %5143 = vmatpush1.xpose.msra.mxu0 0.0
    %5144 = vmatprep.subr.mxu0 0.0
    %5145 = vmatpush1.xpose.msra.mxu0 0.0
    %5146 = vmatprep.subr.mxu0 0.0
    %5147 = vmatpush1.xpose.msra.mxu0 0.0
    %5148 = vmatprep.subr.mxu0 0.0
    %5149 = vmatpush1.xpose.msra.mxu0 0.0
    %5150 = vmatprep.subr.mxu0 0.0
    %5151 = vmatpush1.xpose.msra.mxu0 0.0
    %5152 = vmatprep.subr.mxu0 0.0
    %5153 = vmatpush1.xpose.msra.mxu0 0.0
    %5154 = vmatprep.subr.mxu0 0.0
    %5155 = vmatpush1.xpose.msra.mxu0 0.0
    %5156 = vmatprep.mubr.f32.mxu0 0.0
    %5157 = vmatmul.mubr.f32.gmra.mrb[0].mxu0 %v5087
    %v5158 = vpop.f32.mrb[0].mxu0
    %v5159 = vadd.f32 %v5084, %v5158
    %v5160 = vpop.f32.mrb[0].mxu0
    %5161 = vdwg.mxu0
    %v5163 = vsel %vm1006, %v3341, 0
    %v5166 = vsel %vm1006, %v3658, 0
    %5168 = vmatprep.subr.mxu0 0.0
    %5169 = vmatpush1.xpose.msra.mxu0 %v5166
    %5170 = vmatprep.subr.mxu0 0.0
    %5171 = vmatpush1.xpose.msra.mxu0 0.0
    %5172 = vmatprep.subr.mxu0 0.0
    %5173 = vmatpush1.xpose.msra.mxu0 0.0
    %5174 = vmatprep.subr.mxu0 0.0
    %5175 = vmatpush1.xpose.msra.mxu0 0.0
    %5176 = vmatprep.subr.mxu0 0.0
    %5177 = vmatpush1.xpose.msra.mxu0 0.0
    %5178 = vmatprep.subr.mxu0 0.0
    %5179 = vmatpush1.xpose.msra.mxu0 0.0
    %5180 = vmatprep.subr.mxu0 0.0
    %5181 = vmatpush1.xpose.msra.mxu0 0.0
    %5182 = vmatprep.subr.mxu0 0.0
    %5183 = vmatpush1.xpose.msra.mxu0 0.0
    %5184 = vmatprep.subr.mxu0 0.0
    %5185 = vmatpush1.xpose.msra.mxu0 0.0
    %5186 = vmatprep.subr.mxu0 0.0
    %5187 = vmatpush1.xpose.msra.mxu0 0.0
    %5188 = vmatprep.subr.mxu0 0.0
    %5189 = vmatpush1.xpose.msra.mxu0 0.0
    %5190 = vmatprep.subr.mxu0 0.0
    %5191 = vmatpush1.xpose.msra.mxu0 0.0
    %5192 = vmatprep.subr.mxu0 0.0
    %5193 = vmatpush1.xpose.msra.mxu0 0.0
    %5194 = vmatprep.subr.mxu0 0.0
    %5195 = vmatpush1.xpose.msra.mxu0 0.0
    %5196 = vmatprep.subr.mxu0 0.0
    %5197 = vmatpush1.xpose.msra.mxu0 0.0
    %5198 = vmatprep.subr.mxu0 0.0
    %5199 = vmatpush1.xpose.msra.mxu0 0.0
    %5200 = vmatprep.subr.mxu0 0.0
    %5201 = vmatpush1.xpose.msra.mxu0 0.0
    %5202 = vmatprep.subr.mxu0 0.0
    %5203 = vmatpush1.xpose.msra.mxu0 0.0
    %5204 = vmatprep.subr.mxu0 0.0
    %5205 = vmatpush1.xpose.msra.mxu0 0.0
    %5206 = vmatprep.subr.mxu0 0.0
    %5207 = vmatpush1.xpose.msra.mxu0 0.0
    %5208 = vmatprep.subr.mxu0 0.0
    %5209 = vmatpush1.xpose.msra.mxu0 0.0
    %5210 = vmatprep.subr.mxu0 0.0
    %5211 = vmatpush1.xpose.msra.mxu0 0.0
    %5212 = vmatprep.subr.mxu0 0.0
    %5213 = vmatpush1.xpose.msra.mxu0 0.0
    %5214 = vmatprep.subr.mxu0 0.0
    %5215 = vmatpush1.xpose.msra.mxu0 0.0
    %5216 = vmatprep.subr.mxu0 0.0
    %5217 = vmatpush1.xpose.msra.mxu0 0.0
    %5218 = vmatprep.subr.mxu0 0.0
    %5219 = vmatpush1.xpose.msra.mxu0 0.0
    %5220 = vmatprep.subr.mxu0 0.0
    %5221 = vmatpush1.xpose.msra.mxu0 0.0
    %5222 = vmatprep.subr.mxu0 0.0
    %5223 = vmatpush1.xpose.msra.mxu0 0.0
    %5224 = vmatprep.subr.mxu0 0.0
    %5225 = vmatpush1.xpose.msra.mxu0 0.0
    %5226 = vmatprep.subr.mxu0 0.0
    %5227 = vmatpush1.xpose.msra.mxu0 0.0
    %5228 = vmatprep.subr.mxu0 0.0
    %5229 = vmatpush1.xpose.msra.mxu0 0.0
    %5230 = vmatprep.subr.mxu0 0.0
    %5231 = vmatpush1.xpose.msra.mxu0 0.0
    %5232 = vmatprep.mubr.f32.mxu0 0.0
    %5233 = vmatmul.mubr.f32.gmra.mrb[0].mxu0 %v5163
    %v5234 = vpop.f32.mrb[0].mxu0
    %v5235 = vadd.f32 %v5084, %v5234
    %v5236 = vpop.f32.mrb[0].mxu0
    %5237 = vdwg.mxu0
    %v5239 = vsel %vm1006, %v3416, 0
    %v5242 = vsel %vm1006, %v3733, 0
    %5244 = vmatprep.subr.mxu0 0.0
    %5245 = vmatpush1.xpose.msra.mxu0 %v5242
    %5246 = vmatprep.subr.mxu0 0.0
    %5247 = vmatpush1.xpose.msra.mxu0 0.0
    %5248 = vmatprep.subr.mxu0 0.0
    %5249 = vmatpush1.xpose.msra.mxu0 0.0
    %5250 = vmatprep.subr.mxu0 0.0
    %5251 = vmatpush1.xpose.msra.mxu0 0.0
    %5252 = vmatprep.subr.mxu0 0.0
    %5253 = vmatpush1.xpose.msra.mxu0 0.0
    %5254 = vmatprep.subr.mxu0 0.0
    %5255 = vmatpush1.xpose.msra.mxu0 0.0
    %5256 = vmatprep.subr.mxu0 0.0
    %5257 = vmatpush1.xpose.msra.mxu0 0.0
    %5258 = vmatprep.subr.mxu0 0.0
    %5259 = vmatpush1.xpose.msra.mxu0 0.0
    %5260 = vmatprep.subr.mxu0 0.0
    %5261 = vmatpush1.xpose.msra.mxu0 0.0
    %5262 = vmatprep.subr.mxu0 0.0
    %5263 = vmatpush1.xpose.msra.mxu0 0.0
    %5264 = vmatprep.subr.mxu0 0.0
    %5265 = vmatpush1.xpose.msra.mxu0 0.0
    %5266 = vmatprep.subr.mxu0 0.0
    %5267 = vmatpush1.xpose.msra.mxu0 0.0
    %5268 = vmatprep.subr.mxu0 0.0
    %5269 = vmatpush1.xpose.msra.mxu0 0.0
    %5270 = vmatprep.subr.mxu0 0.0
    %5271 = vmatpush1.xpose.msra.mxu0 0.0
    %5272 = vmatprep.subr.mxu0 0.0
    %5273 = vmatpush1.xpose.msra.mxu0 0.0
    %5274 = vmatprep.subr.mxu0 0.0
    %5275 = vmatpush1.xpose.msra.mxu0 0.0
    %5276 = vmatprep.subr.mxu0 0.0
    %5277 = vmatpush1.xpose.msra.mxu0 0.0
    %5278 = vmatprep.subr.mxu0 0.0
    %5279 = vmatpush1.xpose.msra.mxu0 0.0
    %5280 = vmatprep.subr.mxu0 0.0
    %5281 = vmatpush1.xpose.msra.mxu0 0.0
    %5282 = vmatprep.subr.mxu0 0.0
    %5283 = vmatpush1.xpose.msra.mxu0 0.0
    %5284 = vmatprep.subr.mxu0 0.0
    %5285 = vmatpush1.xpose.msra.mxu0 0.0
    %5286 = vmatprep.subr.mxu0 0.0
    %5287 = vmatpush1.xpose.msra.mxu0 0.0
    %5288 = vmatprep.subr.mxu0 0.0
    %5289 = vmatpush1.xpose.msra.mxu0 0.0
    %5290 = vmatprep.subr.mxu0 0.0
    %5291 = vmatpush1.xpose.msra.mxu0 0.0
    %5292 = vmatprep.subr.mxu0 0.0
    %5293 = vmatpush1.xpose.msra.mxu0 0.0
    %5294 = vmatprep.subr.mxu0 0.0
    %5295 = vmatpush1.xpose.msra.mxu0 0.0
    %5296 = vmatprep.subr.mxu0 0.0
    %5297 = vmatpush1.xpose.msra.mxu0 0.0
    %5298 = vmatprep.subr.mxu0 0.0
    %5299 = vmatpush1.xpose.msra.mxu0 0.0
    %5300 = vmatprep.subr.mxu0 0.0
    %5301 = vmatpush1.xpose.msra.mxu0 0.0
    %5302 = vmatprep.subr.mxu0 0.0
    %5303 = vmatpush1.xpose.msra.mxu0 0.0
    %5304 = vmatprep.subr.mxu0 0.0
    %5305 = vmatpush1.xpose.msra.mxu0 0.0
    %5306 = vmatprep.subr.mxu0 0.0
    %5307 = vmatpush1.xpose.msra.mxu0 0.0
    %5308 = vmatprep.mubr.f32.mxu0 0.0
    %5309 = vmatmul.mubr.f32.gmra.mrb[0].mxu0 %v5239
    %v5310 = vpop.f32.mrb[0].mxu0
    %v5311 = vadd.f32 %v5084, %v5310
    %v5312 = vpop.f32.mrb[0].mxu0
    %5313 = vdwg.mxu0
    %v5315 = vsel %vm1006, %v3491, 0
    %v5318 = vsel %vm1006, %v3808, 0
    %5320 = vmatprep.subr.mxu0 0.0
    %5321 = vmatpush1.xpose.msra.mxu0 %v5318
    %5322 = vmatprep.subr.mxu0 0.0
    %5323 = vmatpush1.xpose.msra.mxu0 0.0
    %5324 = vmatprep.subr.mxu0 0.0
    %5325 = vmatpush1.xpose.msra.mxu0 0.0
    %5326 = vmatprep.subr.mxu0 0.0
    %5327 = vmatpush1.xpose.msra.mxu0 0.0
    %5328 = vmatprep.subr.mxu0 0.0
    %5329 = vmatpush1.xpose.msra.mxu0 0.0
    %5330 = vmatprep.subr.mxu0 0.0
    %5331 = vmatpush1.xpose.msra.mxu0 0.0
    %5332 = vmatprep.subr.mxu0 0.0
    %5333 = vmatpush1.xpose.msra.mxu0 0.0
    %5334 = vmatprep.subr.mxu0 0.0
    %5335 = vmatpush1.xpose.msra.mxu0 0.0
    %5336 = vmatprep.subr.mxu0 0.0
    %5337 = vmatpush1.xpose.msra.mxu0 0.0
    %5338 = vmatprep.subr.mxu0 0.0
    %5339 = vmatpush1.xpose.msra.mxu0 0.0
    %5340 = vmatprep.subr.mxu0 0.0
    %5341 = vmatpush1.xpose.msra.mxu0 0.0
    %5342 = vmatprep.subr.mxu0 0.0
    %5343 = vmatpush1.xpose.msra.mxu0 0.0
    %5344 = vmatprep.subr.mxu0 0.0
    %5345 = vmatpush1.xpose.msra.mxu0 0.0
    %5346 = vmatprep.subr.mxu0 0.0
    %5347 = vmatpush1.xpose.msra.mxu0 0.0
    %5348 = vmatprep.subr.mxu0 0.0
    %5349 = vmatpush1.xpose.msra.mxu0 0.0
    %5350 = vmatprep.subr.mxu0 0.0
    %5351 = vmatpush1.xpose.msra.mxu0 0.0
    %5352 = vmatprep.subr.mxu0 0.0
    %5353 = vmatpush1.xpose.msra.mxu0 0.0
    %5354 = vmatprep.subr.mxu0 0.0
    %5355 = vmatpush1.xpose.msra.mxu0 0.0
    %5356 = vmatprep.subr.mxu0 0.0
    %5357 = vmatpush1.xpose.msra.mxu0 0.0
    %5358 = vmatprep.subr.mxu0 0.0
    %5359 = vmatpush1.xpose.msra.mxu0 0.0
    %5360 = vmatprep.subr.mxu0 0.0
    %5361 = vmatpush1.xpose.msra.mxu0 0.0
    %5362 = vmatprep.subr.mxu0 0.0
    %5363 = vmatpush1.xpose.msra.mxu0 0.0
    %5364 = vmatprep.subr.mxu0 0.0
    %5365 = vmatpush1.xpose.msra.mxu0 0.0
    %5366 = vmatprep.subr.mxu0 0.0
    %5367 = vmatpush1.xpose.msra.mxu0 0.0
    %5368 = vmatprep.subr.mxu0 0.0
    %5369 = vmatpush1.xpose.msra.mxu0 0.0
    %5370 = vmatprep.subr.mxu0 0.0
    %5371 = vmatpush1.xpose.msra.mxu0 0.0
    %5372 = vmatprep.subr.mxu0 0.0
    %5373 = vmatpush1.xpose.msra.mxu0 0.0
    %5374 = vmatprep.subr.mxu0 0.0
    %5375 = vmatpush1.xpose.msra.mxu0 0.0
    %5376 = vmatprep.subr.mxu0 0.0
    %5377 = vmatpush1.xpose.msra.mxu0 0.0
    %5378 = vmatprep.subr.mxu0 0.0
    %5379 = vmatpush1.xpose.msra.mxu0 0.0
    %5380 = vmatprep.subr.mxu0 0.0
    %5381 = vmatpush1.xpose.msra.mxu0 0.0
    %5382 = vmatprep.subr.mxu0 0.0
    %5383 = vmatpush1.xpose.msra.mxu0 0.0
    %5384 = vmatprep.mubr.f32.mxu0 0.0
    %5385 = vmatmul.mubr.f32.gmra.mrb[0].mxu0 %v5315
    %v5386 = vpop.f32.mrb[0].mxu0
    %v5387 = vadd.f32 %v5084, %v5386
    %v5388 = vpop.f32.mrb[0].mxu0
    %5389 = vdwg.mxu0
    %v5390 = vsel %vm1006, %v5159, -inf
    %5391 = vmax.xlane.f32.xlu0 %v5390
    %v5392 = vpop.xlane.xlu0 %5391
    %v5393 = vsel %vm1006, %v5235, -inf
    %5394 = vmax.xlane.f32.xlu0 %v5393
    %v5395 = vpop.xlane.xlu0 %5394
    %v5396 = vsel %vm1006, %v5311, -inf
    %5397 = vmax.xlane.f32.xlu0 %v5396
    %v5398 = vpop.xlane.xlu0 %5397
    %v5399 = vsel %vm1006, %v5387, -inf
    %5400 = vmax.xlane.f32.xlu0 %v5399
    %v5401 = vpop.xlane.xlu0 %5400
    %v5402 = vsub.f32 %v5159, %v5392
    %v5403 = vsub.f32 %v5235, %v5395
    %v5404 = vsub.f32 %v5311, %v5398
    %v5405 = vsub.f32 %v5387, %v5401
    %v5406 = vmul.f32 %v5402, 1.442695
    %v5407 = vpow.pop %v5406
    %v5408 = vmul.f32 %v5403, 1.442695
    %v5409 = vpow.pop %v5408
    %v5410 = vmul.f32 %v5404, 1.442695
    %v5411 = vpow.pop %v5410
    %v5412 = vmul.f32 %v5405, 1.442695
    %v5413 = vpow.pop %v5412
    %v5414 = vsel %vm1006, %v5407, 0.0
    %5415 = vadd.xlane.f32.xlu0 %v5414
    %v5416 = vpop.xlane.xlu0 %5415
    %v5417 = vsel %vm1006, %v5409, 0.0
    %5418 = vadd.xlane.f32.xlu0 %v5417
    %v5419 = vpop.xlane.xlu0 %5418
    %v5420 = vsel %vm1006, %v5411, 0.0
    %5421 = vadd.xlane.f32.xlu0 %v5420
    %v5422 = vpop.xlane.xlu0 %5421
    %v5423 = vsel %vm1006, %v5413, 0.0
    %5424 = vadd.xlane.f32.xlu0 %v5423
    %v5425 = vpop.xlane.xlu0 %5424
    %v5426 = vrcp.pop %v5416
    %v5427 = vrcp.pop %v5419
    %v5428 = vrcp.pop %v5422
    %v5429 = vrcp.pop %v5425
    %v5430 = vmul.f32 %v5407, %v5426
    %v5431 = vmul.f32 %v5409, %v5427
    %v5432 = vmul.f32 %v5411, %v5428
    %v5433 = vmul.f32 %v5413, %v5429
    %v5435 = vsel %vm1006, %v5430, 0
    %5437 = vmatprep.subr.mxu0 0.0
    %5438 = vmatpush1.msra.mxu0 %v3900
    %5439 = vmatprep.subr.mxu0 0.0
    %5440 = vmatpush1.msra.mxu0 0.0
    %5441 = vmatprep.subr.mxu0 0.0
    %5442 = vmatpush1.msra.mxu0 0.0
    %5443 = vmatprep.subr.mxu0 0.0
    %5444 = vmatpush1.msra.mxu0 0.0
    %5445 = vmatprep.subr.mxu0 0.0
    %5446 = vmatpush1.msra.mxu0 0.0
    %5447 = vmatprep.subr.mxu0 0.0
    %5448 = vmatpush1.msra.mxu0 0.0
    %5449 = vmatprep.subr.mxu0 0.0
    %5450 = vmatpush1.msra.mxu0 0.0
    %5451 = vmatprep.subr.mxu0 0.0
    %5452 = vmatpush1.msra.mxu0 0.0
    %5453 = vmatprep.subr.mxu0 0.0
    %5454 = vmatpush1.msra.mxu0 0.0
    %5455 = vmatprep.subr.mxu0 0.0
    %5456 = vmatpush1.msra.mxu0 0.0
    %5457 = vmatprep.subr.mxu0 0.0
    %5458 = vmatpush1.msra.mxu0 0.0
    %5459 = vmatprep.subr.mxu0 0.0
    %5460 = vmatpush1.msra.mxu0 0.0
    %5461 = vmatprep.subr.mxu0 0.0
    %5462 = vmatpush1.msra.mxu0 0.0
    %5463 = vmatprep.subr.mxu0 0.0
    %5464 = vmatpush1.msra.mxu0 0.0
    %5465 = vmatprep.subr.mxu0 0.0
    %5466 = vmatpush1.msra.mxu0 0.0
    %5467 = vmatprep.subr.mxu0 0.0
    %5468 = vmatpush1.msra.mxu0 0.0
    %5469 = vmatprep.subr.mxu0 0.0
    %5470 = vmatpush1.msra.mxu0 0.0
    %5471 = vmatprep.subr.mxu0 0.0
    %5472 = vmatpush1.msra.mxu0 0.0
    %5473 = vmatprep.subr.mxu0 0.0
    %5474 = vmatpush1.msra.mxu0 0.0
    %5475 = vmatprep.subr.mxu0 0.0
    %5476 = vmatpush1.msra.mxu0 0.0
    %5477 = vmatprep.subr.mxu0 0.0
    %5478 = vmatpush1.msra.mxu0 0.0
    %5479 = vmatprep.subr.mxu0 0.0
    %5480 = vmatpush1.msra.mxu0 0.0
    %5481 = vmatprep.subr.mxu0 0.0
    %5482 = vmatpush1.msra.mxu0 0.0
    %5483 = vmatprep.subr.mxu0 0.0
    %5484 = vmatpush1.msra.mxu0 0.0
    %5485 = vmatprep.subr.mxu0 0.0
    %5486 = vmatpush1.msra.mxu0 0.0
    %5487 = vmatprep.subr.mxu0 0.0
    %5488 = vmatpush1.msra.mxu0 0.0
    %5489 = vmatprep.subr.mxu0 0.0
    %5490 = vmatpush1.msra.mxu0 0.0
    %5491 = vmatprep.subr.mxu0 0.0
    %5492 = vmatpush1.msra.mxu0 0.0
    %5493 = vmatprep.subr.mxu0 0.0
    %5494 = vmatpush1.msra.mxu0 0.0
    %5495 = vmatprep.subr.mxu0 0.0
    %5496 = vmatpush1.msra.mxu0 0.0
    %5497 = vmatprep.subr.mxu0 0.0
    %5498 = vmatpush1.msra.mxu0 0.0
    %5499 = vmatprep.subr.mxu0 0.0
    %5500 = vmatpush1.msra.mxu0 0.0
    %5501 = vmatprep.mubr.f32.mxu0 0.0
    %5502 = vmatmul.mubr.f32.gmra.mrb[0].mxu0 %v5435
    %v5503 = vpop.f32.mrb[0].mxu0
    %v5504 = vadd.f32 0.0, %v5503
    %v5505 = vpop.f32.mrb[0].mxu0
    %5506 = vdwg.mxu0
    %v5508 = vsel %vm1006, %v5431, 0
    %5510 = vmatprep.subr.mxu0 0.0
    %5511 = vmatpush1.msra.mxu0 %v3975
    %5512 = vmatprep.subr.mxu0 0.0
    %5513 = vmatpush1.msra.mxu0 0.0
    %5514 = vmatprep.subr.mxu0 0.0
    %5515 = vmatpush1.msra.mxu0 0.0
    %5516 = vmatprep.subr.mxu0 0.0
    %5517 = vmatpush1.msra.mxu0 0.0
    %5518 = vmatprep.subr.mxu0 0.0
    %5519 = vmatpush1.msra.mxu0 0.0
    %5520 = vmatprep.subr.mxu0 0.0
    %5521 = vmatpush1.msra.mxu0 0.0
    %5522 = vmatprep.subr.mxu0 0.0
    %5523 = vmatpush1.msra.mxu0 0.0
    %5524 = vmatprep.subr.mxu0 0.0
    %5525 = vmatpush1.msra.mxu0 0.0
    %5526 = vmatprep.subr.mxu0 0.0
    %5527 = vmatpush1.msra.mxu0 0.0
    %5528 = vmatprep.subr.mxu0 0.0
    %5529 = vmatpush1.msra.mxu0 0.0
    %5530 = vmatprep.subr.mxu0 0.0
    %5531 = vmatpush1.msra.mxu0 0.0
    %5532 = vmatprep.subr.mxu0 0.0
    %5533 = vmatpush1.msra.mxu0 0.0
    %5534 = vmatprep.subr.mxu0 0.0
    %5535 = vmatpush1.msra.mxu0 0.0
    %5536 = vmatprep.subr.mxu0 0.0
    %5537 = vmatpush1.msra.mxu0 0.0
    %5538 = vmatprep.subr.mxu0 0.0
    %5539 = vmatpush1.msra.mxu0 0.0
    %5540 = vmatprep.subr.mxu0 0.0
    %5541 = vmatpush1.msra.mxu0 0.0
    %5542 = vmatprep.subr.mxu0 0.0
    %5543 = vmatpush1.msra.mxu0 0.0
    %5544 = vmatprep.subr.mxu0 0.0
    %5545 = vmatpush1.msra.mxu0 0.0
    %5546 = vmatprep.subr.mxu0 0.0
    %5547 = vmatpush1.msra.mxu0 0.0
    %5548 = vmatprep.subr.mxu0 0.0
    %5549 = vmatpush1.msra.mxu0 0.0
    %5550 = vmatprep.subr.mxu0 0.0
    %5551 = vmatpush1.msra.mxu0 0.0
    %5552 = vmatprep.subr.mxu0 0.0
    %5553 = vmatpush1.msra.mxu0 0.0
    %5554 = vmatprep.subr.mxu0 0.0
    %5555 = vmatpush1.msra.mxu0 0.0
    %5556 = vmatprep.subr.mxu0 0.0
    %5557 = vmatpush1.msra.mxu0 0.0
    %5558 = vmatprep.subr.mxu0 0.0
    %5559 = vmatpush1.msra.mxu0 0.0
    %5560 = vmatprep.subr.mxu0 0.0
    %5561 = vmatpush1.msra.mxu0 0.0
    %5562 = vmatprep.subr.mxu0 0.0
    %5563 = vmatpush1.msra.mxu0 0.0
    %5564 = vmatprep.subr.mxu0 0.0
    %5565 = vmatpush1.msra.mxu0 0.0
    %5566 = vmatprep.subr.mxu0 0.0
    %5567 = vmatpush1.msra.mxu0 0.0
    %5568 = vmatprep.subr.mxu0 0.0
    %5569 = vmatpush1.msra.mxu0 0.0
    %5570 = vmatprep.subr.mxu0 0.0
    %5571 = vmatpush1.msra.mxu0 0.0
    %5572 = vmatprep.subr.mxu0 0.0
    %5573 = vmatpush1.msra.mxu0 0.0
    %5574 = vmatprep.mubr.f32.mxu0 0.0
    %5575 = vmatmul.mubr.f32.gmra.mrb[0].mxu0 %v5508
    %v5576 = vpop.f32.mrb[0].mxu0
    %v5577 = vadd.f32 0.0, %v5576
    %v5578 = vpop.f32.mrb[0].mxu0
    %5579 = vdwg.mxu0
    %v5581 = vsel %vm1006, %v5432, 0
    %5583 = vmatprep.subr.mxu0 0.0
    %5584 = vmatpush1.msra.mxu0 %v4050
    %5585 = vmatprep.subr.mxu0 0.0
    %5586 = vmatpush1.msra.mxu0 0.0
    %5587 = vmatprep.subr.mxu0 0.0
    %5588 = vmatpush1.msra.mxu0 0.0
    %5589 = vmatprep.subr.mxu0 0.0
    %5590 = vmatpush1.msra.mxu0 0.0
    %5591 = vmatprep.subr.mxu0 0.0
    %5592 = vmatpush1.msra.mxu0 0.0
    %5593 = vmatprep.subr.mxu0 0.0
    %5594 = vmatpush1.msra.mxu0 0.0
    %5595 = vmatprep.subr.mxu0 0.0
    %5596 = vmatpush1.msra.mxu0 0.0
    %5597 = vmatprep.subr.mxu0 0.0
    %5598 = vmatpush1.msra.mxu0 0.0
    %5599 = vmatprep.subr.mxu0 0.0
    %5600 = vmatpush1.msra.mxu0 0.0
    %5601 = vmatprep.subr.mxu0 0.0
    %5602 = vmatpush1.msra.mxu0 0.0
    %5603 = vmatprep.subr.mxu0 0.0
    %5604 = vmatpush1.msra.mxu0 0.0
    %5605 = vmatprep.subr.mxu0 0.0
    %5606 = vmatpush1.msra.mxu0 0.0
    %5607 = vmatprep.subr.mxu0 0.0
    %5608 = vmatpush1.msra.mxu0 0.0
    %5609 = vmatprep.subr.mxu0 0.0
    %5610 = vmatpush1.msra.mxu0 0.0
    %5611 = vmatprep.subr.mxu0 0.0
    %5612 = vmatpush1.msra.mxu0 0.0
    %5613 = vmatprep.subr.mxu0 0.0
    %5614 = vmatpush1.msra.mxu0 0.0
    %5615 = vmatprep.subr.mxu0 0.0
    %5616 = vmatpush1.msra.mxu0 0.0
    %5617 = vmatprep.subr.mxu0 0.0
    %5618 = vmatpush1.msra.mxu0 0.0
    %5619 = vmatprep.subr.mxu0 0.0
    %5620 = vmatpush1.msra.mxu0 0.0
    %5621 = vmatprep.subr.mxu0 0.0
    %5622 = vmatpush1.msra.mxu0 0.0
    %5623 = vmatprep.subr.mxu0 0.0
    %5624 = vmatpush1.msra.mxu0 0.0
    %5625 = vmatprep.subr.mxu0 0.0
    %5626 = vmatpush1.msra.mxu0 0.0
    %5627 = vmatprep.subr.mxu0 0.0
    %5628 = vmatpush1.msra.mxu0 0.0
    %5629 = vmatprep.subr.mxu0 0.0
    %5630 = vmatpush1.msra.mxu0 0.0
    %5631 = vmatprep.subr.mxu0 0.0
    %5632 = vmatpush1.msra.mxu0 0.0
    %5633 = vmatprep.subr.mxu0 0.0
    %5634 = vmatpush1.msra.mxu0 0.0
    %5635 = vmatprep.subr.mxu0 0.0
    %5636 = vmatpush1.msra.mxu0 0.0
    %5637 = vmatprep.subr.mxu0 0.0
    %5638 = vmatpush1.msra.mxu0 0.0
    %5639 = vmatprep.subr.mxu0 0.0
    %5640 = vmatpush1.msra.mxu0 0.0
    %5641 = vmatprep.subr.mxu0 0.0
    %5642 = vmatpush1.msra.mxu0 0.0
    %5643 = vmatprep.subr.mxu0 0.0
    %5644 = vmatpush1.msra.mxu0 0.0
    %5645 = vmatprep.subr.mxu0 0.0
    %5646 = vmatpush1.msra.mxu0 0.0
    %5647 = vmatprep.mubr.f32.mxu0 0.0
    %5648 = vmatmul.mubr.f32.gmra.mrb[0].mxu0 %v5581
    %v5649 = vpop.f32.mrb[0].mxu0
    %v5650 = vadd.f32 0.0, %v5649
    %v5651 = vpop.f32.mrb[0].mxu0
    %5652 = vdwg.mxu0
    %v5654 = vsel %vm1006, %v5433, 0
    %5656 = vmatprep.subr.mxu0 0.0
    %5657 = vmatpush1.msra.mxu0 %v4125
    %5658 = vmatprep.subr.mxu0 0.0
    %5659 = vmatpush1.msra.mxu0 0.0
    %5660 = vmatprep.subr.mxu0 0.0
    %5661 = vmatpush1.msra.mxu0 0.0
    %5662 = vmatprep.subr.mxu0 0.0
    %5663 = vmatpush1.msra.mxu0 0.0
    %5664 = vmatprep.subr.mxu0 0.0
    %5665 = vmatpush1.msra.mxu0 0.0
    %5666 = vmatprep.subr.mxu0 0.0
    %5667 = vmatpush1.msra.mxu0 0.0
    %5668 = vmatprep.subr.mxu0 0.0
    %5669 = vmatpush1.msra.mxu0 0.0
    %5670 = vmatprep.subr.mxu0 0.0
    %5671 = vmatpush1.msra.mxu0 0.0
    %5672 = vmatprep.subr.mxu0 0.0
    %5673 = vmatpush1.msra.mxu0 0.0
    %5674 = vmatprep.subr.mxu0 0.0
    %5675 = vmatpush1.msra.mxu0 0.0
    %5676 = vmatprep.subr.mxu0 0.0
    %5677 = vmatpush1.msra.mxu0 0.0
    %5678 = vmatprep.subr.mxu0 0.0
    %5679 = vmatpush1.msra.mxu0 0.0
    %5680 = vmatprep.subr.mxu0 0.0
    %5681 = vmatpush1.msra.mxu0 0.0
    %5682 = vmatprep.subr.mxu0 0.0
    %5683 = vmatpush1.msra.mxu0 0.0
    %5684 = vmatprep.subr.mxu0 0.0
    %5685 = vmatpush1.msra.mxu0 0.0
    %5686 = vmatprep.subr.mxu0 0.0
    %5687 = vmatpush1.msra.mxu0 0.0
    %5688 = vmatprep.subr.mxu0 0.0
    %5689 = vmatpush1.msra.mxu0 0.0
    %5690 = vmatprep.subr.mxu0 0.0
    %5691 = vmatpush1.msra.mxu0 0.0
    %5692 = vmatprep.subr.mxu0 0.0
    %5693 = vmatpush1.msra.mxu0 0.0
    %5694 = vmatprep.subr.mxu0 0.0
    %5695 = vmatpush1.msra.mxu0 0.0
    %5696 = vmatprep.subr.mxu0 0.0
    %5697 = vmatpush1.msra.mxu0 0.0
    %5698 = vmatprep.subr.mxu0 0.0
    %5699 = vmatpush1.msra.mxu0 0.0
    %5700 = vmatprep.subr.mxu0 0.0
    %5701 = vmatpush1.msra.mxu0 0.0
    %5702 = vmatprep.subr.mxu0 0.0
    %5703 = vmatpush1.msra.mxu0 0.0
    %5704 = vmatprep.subr.mxu0 0.0
    %5705 = vmatpush1.msra.mxu0 0.0
    %5706 = vmatprep.subr.mxu0 0.0
    %5707 = vmatpush1.msra.mxu0 0.0
    %5708 = vmatprep.subr.mxu0 0.0
    %5709 = vmatpush1.msra.mxu0 0.0
    %5710 = vmatprep.subr.mxu0 0.0
    %5711 = vmatpush1.msra.mxu0 0.0
    %5712 = vmatprep.subr.mxu0 0.0
    %5713 = vmatpush1.msra.mxu0 0.0
    %5714 = vmatprep.subr.mxu0 0.0
    %5715 = vmatpush1.msra.mxu0 0.0
    %5716 = vmatprep.subr.mxu0 0.0
    %5717 = vmatpush1.msra.mxu0 0.0
    %5718 = vmatprep.subr.mxu0 0.0
    %5719 = vmatpush1.msra.mxu0 0.0
    %5720 = vmatprep.mubr.f32.mxu0 0.0
    %5721 = vmatmul.mubr.f32.gmra.mrb[0].mxu0 %v5654
    %v5722 = vpop.f32.mrb[0].mxu0
    %v5723 = vadd.f32 0.0, %v5722
    %v5724 = vpop.f32.mrb[0].mxu0
    %5725 = vdwg.mxu0
    %v5726 = vld [vmem:[%s4775] sm:$0xff]
    %v5727 = vld [vmem:[%s4775 + $0x8] sm:$0xff]
    %v5728 = vld [vmem:[%s4775 + $0x10] sm:$0xff]
    %v5729 = vld [vmem:[%s4775 + $0x18] sm:$0xff]
    %v5731 = vsel %vm1006, %v5504, 0
    %5733 = vmatprep.subr.mxu0 0.0
    %5734 = vmatpush1.msra.mxu0 %v5726
    %5735 = vmatprep.subr.mxu0 0.0
    %5736 = vmatpush1.msra.mxu0 0.0
    %5737 = vmatprep.subr.mxu0 0.0
    %5738 = vmatpush1.msra.mxu0 0.0
    %5739 = vmatprep.subr.mxu0 0.0
    %5740 = vmatpush1.msra.mxu0 0.0
    %5741 = vmatprep.subr.mxu0 0.0
    %5742 = vmatpush1.msra.mxu0 0.0
    %5743 = vmatprep.subr.mxu0 0.0
    %5744 = vmatpush1.msra.mxu0 0.0
    %5745 = vmatprep.subr.mxu0 0.0
    %5746 = vmatpush1.msra.mxu0 0.0
    %5747 = vmatprep.subr.mxu0 0.0
    %5748 = vmatpush1.msra.mxu0 0.0
    %5749 = vmatprep.subr.mxu0 0.0
    %5750 = vmatpush1.msra.mxu0 0.0
    %5751 = vmatprep.subr.mxu0 0.0
    %5752 = vmatpush1.msra.mxu0 0.0
    %5753 = vmatprep.subr.mxu0 0.0
    %5754 = vmatpush1.msra.mxu0 0.0
    %5755 = vmatprep.subr.mxu0 0.0
    %5756 = vmatpush1.msra.mxu0 0.0
    %5757 = vmatprep.subr.mxu0 0.0
    %5758 = vmatpush1.msra.mxu0 0.0
    %5759 = vmatprep.subr.mxu0 0.0
    %5760 = vmatpush1.msra.mxu0 0.0
    %5761 = vmatprep.subr.mxu0 0.0
    %5762 = vmatpush1.msra.mxu0 0.0
    %5763 = vmatprep.subr.mxu0 0.0
    %5764 = vmatpush1.msra.mxu0 0.0
    %5765 = vmatprep.subr.mxu0 0.0
    %5766 = vmatpush1.msra.mxu0 0.0
    %5767 = vmatprep.subr.mxu0 0.0
    %5768 = vmatpush1.msra.mxu0 0.0
    %5769 = vmatprep.subr.mxu0 0.0
    %5770 = vmatpush1.msra.mxu0 0.0
    %5771 = vmatprep.subr.mxu0 0.0
    %5772 = vmatpush1.msra.mxu0 0.0
    %5773 = vmatprep.subr.mxu0 0.0
    %5774 = vmatpush1.msra.mxu0 0.0
    %5775 = vmatprep.subr.mxu0 0.0
    %5776 = vmatpush1.msra.mxu0 0.0
    %5777 = vmatprep.subr.mxu0 0.0
    %5778 = vmatpush1.msra.mxu0 0.0
    %5779 = vmatprep.subr.mxu0 0.0
    %5780 = vmatpush1.msra.mxu0 0.0
    %5781 = vmatprep.subr.mxu0 0.0
    %5782 = vmatpush1.msra.mxu0 0.0
    %5783 = vmatprep.subr.mxu0 0.0
    %5784 = vmatpush1.msra.mxu0 0.0
    %5785 = vmatprep.subr.mxu0 0.0
    %5786 = vmatpush1.msra.mxu0 0.0
    %5787 = vmatprep.subr.mxu0 0.0
    %5788 = vmatpush1.msra.mxu0 0.0
    %5789 = vmatprep.subr.mxu0 0.0
    %5790 = vmatpush1.msra.mxu0 0.0
    %5791 = vmatprep.subr.mxu0 0.0
    %5792 = vmatpush1.msra.mxu0 0.0
    %5793 = vmatprep.subr.mxu0 0.0
    %5794 = vmatpush1.msra.mxu0 0.0
    %5795 = vmatprep.subr.mxu0 0.0
    %5796 = vmatpush1.msra.mxu0 0.0
    %5797 = vmatprep.mubr.f32.mxu0 0.0
    %5798 = vmatmul.mubr.f32.gmra.mrb[0].mxu0 %v5731
    %v5799 = vpop.f32.mrb[0].mxu0
    %v5800 = vadd.f32 0.0, %v5799
    %v5801 = vpop.f32.mrb[0].mxu0
    %5802 = vdwg.mxu0
    %v5804 = vsel %vm1006, %v5577, 0
    %5806 = vmatprep.subr.mxu0 0.0
    %5807 = vmatpush1.msra.mxu0 %v5727
    %5808 = vmatprep.subr.mxu0 0.0
    %5809 = vmatpush1.msra.mxu0 0.0
    %5810 = vmatprep.subr.mxu0 0.0
    %5811 = vmatpush1.msra.mxu0 0.0
    %5812 = vmatprep.subr.mxu0 0.0
    %5813 = vmatpush1.msra.mxu0 0.0
    %5814 = vmatprep.subr.mxu0 0.0
    %5815 = vmatpush1.msra.mxu0 0.0
    %5816 = vmatprep.subr.mxu0 0.0
    %5817 = vmatpush1.msra.mxu0 0.0
    %5818 = vmatprep.subr.mxu0 0.0
    %5819 = vmatpush1.msra.mxu0 0.0
    %5820 = vmatprep.subr.mxu0 0.0
    %5821 = vmatpush1.msra.mxu0 0.0
    %5822 = vmatprep.subr.mxu0 0.0
    %5823 = vmatpush1.msra.mxu0 0.0
    %5824 = vmatprep.subr.mxu0 0.0
    %5825 = vmatpush1.msra.mxu0 0.0
    %5826 = vmatprep.subr.mxu0 0.0
    %5827 = vmatpush1.msra.mxu0 0.0
    %5828 = vmatprep.subr.mxu0 0.0
    %5829 = vmatpush1.msra.mxu0 0.0
    %5830 = vmatprep.subr.mxu0 0.0
    %5831 = vmatpush1.msra.mxu0 0.0
    %5832 = vmatprep.subr.mxu0 0.0
    %5833 = vmatpush1.msra.mxu0 0.0
    %5834 = vmatprep.subr.mxu0 0.0
    %5835 = vmatpush1.msra.mxu0 0.0
    %5836 = vmatprep.subr.mxu0 0.0
    %5837 = vmatpush1.msra.mxu0 0.0
    %5838 = vmatprep.subr.mxu0 0.0
    %5839 = vmatpush1.msra.mxu0 0.0
    %5840 = vmatprep.subr.mxu0 0.0
    %5841 = vmatpush1.msra.mxu0 0.0
    %5842 = vmatprep.subr.mxu0 0.0
    %5843 = vmatpush1.msra.mxu0 0.0
    %5844 = vmatprep.subr.mxu0 0.0
    %5845 = vmatpush1.msra.mxu0 0.0
    %5846 = vmatprep.subr.mxu0 0.0
    %5847 = vmatpush1.msra.mxu0 0.0
    %5848 = vmatprep.subr.mxu0 0.0
    %5849 = vmatpush1.msra.mxu0 0.0
    %5850 = vmatprep.subr.mxu0 0.0
    %5851 = vmatpush1.msra.mxu0 0.0
    %5852 = vmatprep.subr.mxu0 0.0
    %5853 = vmatpush1.msra.mxu0 0.0
    %5854 = vmatprep.subr.mxu0 0.0
    %5855 = vmatpush1.msra.mxu0 0.0
    %5856 = vmatprep.subr.mxu0 0.0
    %5857 = vmatpush1.msra.mxu0 0.0
    %5858 = vmatprep.subr.mxu0 0.0
    %5859 = vmatpush1.msra.mxu0 0.0
    %5860 = vmatprep.subr.mxu0 0.0
    %5861 = vmatpush1.msra.mxu0 0.0
    %5862 = vmatprep.subr.mxu0 0.0
    %5863 = vmatpush1.msra.mxu0 0.0
    %5864 = vmatprep.subr.mxu0 0.0
    %5865 = vmatpush1.msra.mxu0 0.0
    %5866 = vmatprep.subr.mxu0 0.0
    %5867 = vmatpush1.msra.mxu0 0.0
    %5868 = vmatprep.subr.mxu0 0.0
    %5869 = vmatpush1.msra.mxu0 0.0
    %5870 = vmatprep.mubr.f32.mxu0 0.0
    %5871 = vmatmul.mubr.f32.gmra.mrb[0].mxu0 %v5804
    %v5872 = vpop.f32.mrb[0].mxu0
    %v5873 = vadd.f32 0.0, %v5872
    %v5874 = vpop.f32.mrb[0].mxu0
    %5875 = vdwg.mxu0
    %v5877 = vsel %vm1006, %v5650, 0
    %5879 = vmatprep.subr.mxu0 0.0
    %5880 = vmatpush1.msra.mxu0 %v5728
    %5881 = vmatprep.subr.mxu0 0.0
    %5882 = vmatpush1.msra.mxu0 0.0
    %5883 = vmatprep.subr.mxu0 0.0
    %5884 = vmatpush1.msra.mxu0 0.0
    %5885 = vmatprep.subr.mxu0 0.0
    %5886 = vmatpush1.msra.mxu0 0.0
    %5887 = vmatprep.subr.mxu0 0.0
    %5888 = vmatpush1.msra.mxu0 0.0
    %5889 = vmatprep.subr.mxu0 0.0
    %5890 = vmatpush1.msra.mxu0 0.0
    %5891 = vmatprep.subr.mxu0 0.0
    %5892 = vmatpush1.msra.mxu0 0.0
    %5893 = vmatprep.subr.mxu0 0.0
    %5894 = vmatpush1.msra.mxu0 0.0
    %5895 = vmatprep.subr.mxu0 0.0
    %5896 = vmatpush1.msra.mxu0 0.0
    %5897 = vmatprep.subr.mxu0 0.0
    %5898 = vmatpush1.msra.mxu0 0.0
    %5899 = vmatprep.subr.mxu0 0.0
    %5900 = vmatpush1.msra.mxu0 0.0
    %5901 = vmatprep.subr.mxu0 0.0
    %5902 = vmatpush1.msra.mxu0 0.0
    %5903 = vmatprep.subr.mxu0 0.0
    %5904 = vmatpush1.msra.mxu0 0.0
    %5905 = vmatprep.subr.mxu0 0.0
    %5906 = vmatpush1.msra.mxu0 0.0
    %5907 = vmatprep.subr.mxu0 0.0
    %5908 = vmatpush1.msra.mxu0 0.0
    %5909 = vmatprep.subr.mxu0 0.0
    %5910 = vmatpush1.msra.mxu0 0.0
    %5911 = vmatprep.subr.mxu0 0.0
    %5912 = vmatpush1.msra.mxu0 0.0
    %5913 = vmatprep.subr.mxu0 0.0
    %5914 = vmatpush1.msra.mxu0 0.0
    %5915 = vmatprep.subr.mxu0 0.0
    %5916 = vmatpush1.msra.mxu0 0.0
    %5917 = vmatprep.subr.mxu0 0.0
    %5918 = vmatpush1.msra.mxu0 0.0
    %5919 = vmatprep.subr.mxu0 0.0
    %5920 = vmatpush1.msra.mxu0 0.0
    %5921 = vmatprep.subr.mxu0 0.0
    %5922 = vmatpush1.msra.mxu0 0.0
    %5923 = vmatprep.subr.mxu0 0.0
    %5924 = vmatpush1.msra.mxu0 0.0
    %5925 = vmatprep.subr.mxu0 0.0
    %5926 = vmatpush1.msra.mxu0 0.0
    %5927 = vmatprep.subr.mxu0 0.0
    %5928 = vmatpush1.msra.mxu0 0.0
    %5929 = vmatprep.subr.mxu0 0.0
    %5930 = vmatpush1.msra.mxu0 0.0
    %5931 = vmatprep.subr.mxu0 0.0
    %5932 = vmatpush1.msra.mxu0 0.0
    %5933 = vmatprep.subr.mxu0 0.0
    %5934 = vmatpush1.msra.mxu0 0.0
    %5935 = vmatprep.subr.mxu0 0.0
    %5936 = vmatpush1.msra.mxu0 0.0
    %5937 = vmatprep.subr.mxu0 0.0
    %5938 = vmatpush1.msra.mxu0 0.0
    %5939 = vmatprep.subr.mxu0 0.0
    %5940 = vmatpush1.msra.mxu0 0.0
    %5941 = vmatprep.subr.mxu0 0.0
    %5942 = vmatpush1.msra.mxu0 0.0
    %5943 = vmatprep.mubr.f32.mxu0 0.0
    %5944 = vmatmul.mubr.f32.gmra.mrb[0].mxu0 %v5877
    %v5945 = vpop.f32.mrb[0].mxu0
    %v5946 = vadd.f32 0.0, %v5945
    %v5947 = vpop.f32.mrb[0].mxu0
    %5948 = vdwg.mxu0
    %v5950 = vsel %vm1006, %v5723, 0
    %5952 = vmatprep.subr.mxu0 0.0
    %5953 = vmatpush1.msra.mxu0 %v5729
    %5954 = vmatprep.subr.mxu0 0.0
    %5955 = vmatpush1.msra.mxu0 0.0
    %5956 = vmatprep.subr.mxu0 0.0
    %5957 = vmatpush1.msra.mxu0 0.0
    %5958 = vmatprep.subr.mxu0 0.0
    %5959 = vmatpush1.msra.mxu0 0.0
    %5960 = vmatprep.subr.mxu0 0.0
    %5961 = vmatpush1.msra.mxu0 0.0
    %5962 = vmatprep.subr.mxu0 0.0
    %5963 = vmatpush1.msra.mxu0 0.0
    %5964 = vmatprep.subr.mxu0 0.0
    %5965 = vmatpush1.msra.mxu0 0.0
    %5966 = vmatprep.subr.mxu0 0.0
    %5967 = vmatpush1.msra.mxu0 0.0
    %5968 = vmatprep.subr.mxu0 0.0
    %5969 = vmatpush1.msra.mxu0 0.0
    %5970 = vmatprep.subr.mxu0 0.0
    %5971 = vmatpush1.msra.mxu0 0.0
    %5972 = vmatprep.subr.mxu0 0.0
    %5973 = vmatpush1.msra.mxu0 0.0
    %5974 = vmatprep.subr.mxu0 0.0
    %5975 = vmatpush1.msra.mxu0 0.0
    %5976 = vmatprep.subr.mxu0 0.0
    %5977 = vmatpush1.msra.mxu0 0.0
    %5978 = vmatprep.subr.mxu0 0.0
    %5979 = vmatpush1.msra.mxu0 0.0
    %5980 = vmatprep.subr.mxu0 0.0
    %5981 = vmatpush1.msra.mxu0 0.0
    %5982 = vmatprep.subr.mxu0 0.0
    %5983 = vmatpush1.msra.mxu0 0.0
    %5984 = vmatprep.subr.mxu0 0.0
    %5985 = vmatpush1.msra.mxu0 0.0
    %5986 = vmatprep.subr.mxu0 0.0
    %5987 = vmatpush1.msra.mxu0 0.0
    %5988 = vmatprep.subr.mxu0 0.0
    %5989 = vmatpush1.msra.mxu0 0.0
    %5990 = vmatprep.subr.mxu0 0.0
    %5991 = vmatpush1.msra.mxu0 0.0
    %5992 = vmatprep.subr.mxu0 0.0
    %5993 = vmatpush1.msra.mxu0 0.0
    %5994 = vmatprep.subr.mxu0 0.0
    %5995 = vmatpush1.msra.mxu0 0.0
    %5996 = vmatprep.subr.mxu0 0.0
    %5997 = vmatpush1.msra.mxu0 0.0
    %5998 = vmatprep.subr.mxu0 0.0
    %5999 = vmatpush1.msra.mxu0 0.0
    %6000 = vmatprep.subr.mxu0 0.0
    %6001 = vmatpush1.msra.mxu0 0.0
    %6002 = vmatprep.subr.mxu0 0.0
    %6003 = vmatpush1.msra.mxu0 0.0
    %6004 = vmatprep.subr.mxu0 0.0
    %6005 = vmatpush1.msra.mxu0 0.0
    %6006 = vmatprep.subr.mxu0 0.0
    %6007 = vmatpush1.msra.mxu0 0.0
    %6008 = vmatprep.subr.mxu0 0.0
    %6009 = vmatpush1.msra.mxu0 0.0
    %6010 = vmatprep.subr.mxu0 0.0
    %6011 = vmatpush1.msra.mxu0 0.0
    %6012 = vmatprep.subr.mxu0 0.0
    %6013 = vmatpush1.msra.mxu0 0.0
    %6014 = vmatprep.subr.mxu0 0.0
    %6015 = vmatpush1.msra.mxu0 0.0
    %6016 = vmatprep.mubr.f32.mxu0 0.0
    %6017 = vmatmul.mubr.f32.gmra.mrb[0].mxu0 %v5950
    %v6018 = vpop.f32.mrb[0].mxu0
    %v6019 = vadd.f32 0.0, %v6018
    %v6020 = vpop.f32.mrb[0].mxu0
    %6021 = vdwg.mxu0
    %v6022 = vsel %vm60, %v5800, 0.0
    %v6023 = vsel %vm60, %v5873, 0.0
    %v6024 = vadd.f32 %v6022, %v6023
    %v6025 = vsel %vm60, %v5946, 0.0
    %v6026 = vadd.f32 %v6024, %v6025
    %v6027 = vsel %vm60, %v6019, 0.0
    %v6028 = vadd.f32 %v6026, %v6027
    %v6029 = vadd.f32 %v3169, %v5078
    %v6030 = vadd.f32 %v3170, %v6028
    %s6031 = scalar_lea.vmem %s8, 1
    %v6032 = vld [vmem:[%s6031] sm:$0x1]
    %s6033 = scalar_lea.vmem %s9, 1
    %v6034 = vld [vmem:[%s6033] sm:$0x1]
    %v6035 = vsel %vm60, %v6029, 0.0
    %6036 = vadd.xlane.f32.xlu0 %v6035
    %v6037 = vpop.xlane.xlu0 %6036
    %v6038 = vsel %vm60, %v6030, 0.0
    %6039 = vadd.xlane.f32.xlu0 %v6038
    %v6040 = vpop.xlane.xlu0 %6039
    %v6041 = vmul.f32 %v6037, %v2911
    %v6042 = vmul.f32 %v6040, %v2911
    %v6043 = vsub.f32 %v6029, %v6041
    %v6044 = vsub.f32 %v6030, %v6042
    %v6045 = vmul.f32 %v6043, %v6043
    %v6046 = vmul.f32 %v6044, %v6044
    %v6047 = vsel %vm60, %v6045, 0.0
    %6048 = vadd.xlane.f32.xlu0 %v6047
    %v6049 = vpop.xlane.xlu0 %6048
    %v6050 = vsel %vm60, %v6046, 0.0
    %6051 = vadd.xlane.f32.xlu0 %v6050
    %v6052 = vpop.xlane.xlu0 %6051
    %v6053 = vmul.f32 %v6049, %v2911
    %v6054 = vmul.f32 %v6052, %v2911
    %v6055 = vadd.f32 %v6053, 1e-05
    %v6056 = vadd.f32 %v6054, 1e-05
    %v6057 = vrsqrt.pop %v6055
    %v6058 = vrsqrt.pop %v6056
    %v6059 = vmul.f32 %v6043, %v6057
    %v6060 = vmul.f32 %v6044, %v6058
    %v6062 = vlaneseq
    %v6063 = vshrl.u32 %v6062, 7
    %v6064 = vsub.s32 0, %v6063
    %v6065 = vrot.slane %v6032, %v6064
    %v6067 = vmul.f32 %v6059, %v6065
    %v6068 = vmul.f32 %v6060, %v6065
    %v6070 = vlaneseq
    %v6071 = vshrl.u32 %v6070, 7
    %v6072 = vsub.s32 0, %v6071
    %v6073 = vrot.slane %v6034, %v6072
    %v6075 = vadd.f32 %v6067, %v6073
    %v6076 = vadd.f32 %v6068, %v6073
    %s6077 = scalar_lea.vmem %s6, 32
    %v6078 = vld [vmem:[%s6077] sm:$0xff]
    %v6079 = vld [vmem:[%s6077 + $0x8] sm:$0xff]
    %v6080 = vld [vmem:[%s6077 + $0x10] sm:$0xff]
    %v6081 = vld [vmem:[%s6077 + $0x18] sm:$0xff]
    %v6083 = vsel %vm60, %v6075, 0
    %v6086 = vsel %vm60, %v6076, 0
    %6088 = vmatprep.subr.mxu0 0.0
    %6089 = vmatpush1.msra.mxu0 %v6078
    %6090 = vmatprep.subr.mxu0 0.0
    %6091 = vmatpush1.msra.mxu0 %v6079
    %6092 = vmatprep.subr.mxu0 0.0
    %6093 = vmatpush1.msra.mxu0 %v6080
    %6094 = vmatprep.subr.mxu0 0.0
    %6095 = vmatpush1.msra.mxu0 %v6081
    %6096 = vmatprep.subr.mxu0 0.0
    %6097 = vmatpush1.msra.mxu0 0.0
    %6098 = vmatprep.subr.mxu0 0.0
    %6099 = vmatpush1.msra.mxu0 0.0
    %6100 = vmatprep.subr.mxu0 0.0
    %6101 = vmatpush1.msra.mxu0 0.0
    %6102 = vmatprep.subr.mxu0 0.0
    %6103 = vmatpush1.msra.mxu0 0.0
    %6104 = vmatprep.subr.mxu0 0.0
    %6105 = vmatpush1.msra.mxu0 0.0
    %6106 = vmatprep.subr.mxu0 0.0
    %6107 = vmatpush1.msra.mxu0 0.0
    %6108 = vmatprep.subr.mxu0 0.0
    %6109 = vmatpush1.msra.mxu0 0.0
    %6110 = vmatprep.subr.mxu0 0.0
    %6111 = vmatpush1.msra.mxu0 0.0
    %6112 = vmatprep.subr.mxu0 0.0
    %6113 = vmatpush1.msra.mxu0 0.0
    %6114 = vmatprep.subr.mxu0 0.0
    %6115 = vmatpush1.msra.mxu0 0.0
    %6116 = vmatprep.subr.mxu0 0.0
    %6117 = vmatpush1.msra.mxu0 0.0
    %6118 = vmatprep.subr.mxu0 0.0
    %6119 = vmatpush1.msra.mxu0 0.0
    %6120 = vmatprep.subr.mxu0 0.0
    %6121 = vmatpush1.msra.mxu0 0.0
    %6122 = vmatprep.subr.mxu0 0.0
    %6123 = vmatpush1.msra.mxu0 0.0
    %6124 = vmatprep.subr.mxu0 0.0
    %6125 = vmatpush1.msra.mxu0 0.0
    %6126 = vmatprep.subr.mxu0 0.0
    %6127 = vmatpush1.msra.mxu0 0.0
    %6128 = vmatprep.subr.mxu0 0.0
    %6129 = vmatpush1.msra.mxu0 0.0
    %6130 = vmatprep.subr.mxu0 0.0
    %6131 = vmatpush1.msra.mxu0 0.0
    %6132 = vmatprep.subr.mxu0 0.0
    %6133 = vmatpush1.msra.mxu0 0.0
    %6134 = vmatprep.subr.mxu0 0.0
    %6135 = vmatpush1.msra.mxu0 0.0
    %6136 = vmatprep.subr.mxu0 0.0
    %6137 = vmatpush1.msra.mxu0 0.0
    %6138 = vmatprep.subr.mxu0 0.0
    %6139 = vmatpush1.msra.mxu0 0.0
    %6140 = vmatprep.subr.mxu0 0.0
    %6141 = vmatpush1.msra.mxu0 0.0
    %6142 = vmatprep.subr.mxu0 0.0
    %6143 = vmatpush1.msra.mxu0 0.0
    %6144 = vmatprep.subr.mxu0 0.0
    %6145 = vmatpush1.msra.mxu0 0.0
    %6146 = vmatprep.subr.mxu0 0.0
    %6147 = vmatpush1.msra.mxu0 0.0
    %6148 = vmatprep.subr.mxu0 0.0
    %6149 = vmatpush1.msra.mxu0 0.0
    %6150 = vmatprep.subr.mxu0 0.0
    %6151 = vmatpush1.msra.mxu0 0.0
    %6152 = vmatprep.mubr.f32.mxu0 0.0
    %6153 = vmatmul.mubr.f32.gmra.mrb[0].mxu0 %v6083
    %v6154 = vpop.f32.mrb[0].mxu0
    %v6155 = vadd.f32 0.0, %v6154
    %v6156 = vpop.f32.mrb[0].mxu0
    %6157 = vmatprep.mubr.f32.mxu0 0.0
    %6158 = vmatmul.mubr.f32.gmra.mrb[0].mxu0 %v6086
    %v6159 = vpop.f32.mrb[0].mxu0
    %v6160 = vadd.f32 0.0, %v6159
    %v6161 = vpop.f32.mrb[0].mxu0
    %6162 = vdwg.mxu0
    %v6163 = vmax.f32 %v6155, 0.0
    %v6164 = vmax.f32 %v6160, 0.0
    %s6165 = scalar_lea.vmem %s7, 64
    %v6166 = vld [vmem:[%s6165] sm:$0xff]
    %v6167 = vld [vmem:[%s6165 + $0x8] sm:$0xff]
    %v6168 = vld [vmem:[%s6165 + $0x10] sm:$0xff]
    %v6169 = vld [vmem:[%s6165 + $0x18] sm:$0xff]
    %v6170 = vld [vmem:[%s6165 + $0x20] sm:$0xff]
    %v6171 = vld [vmem:[%s6165 + $0x28] sm:$0xff]
    %v6172 = vld [vmem:[%s6165 + $0x30] sm:$0xff]
    %v6173 = vld [vmem:[%s6165 + $0x38] sm:$0xff]
    %v6175 = vsel %vm3043, %v6163, 0
    %v6178 = vsel %vm3043, %v6164, 0
    %6180 = vmatprep.subr.mxu0 0.0
    %6181 = vmatpush1.msra.mxu0 %v6166
    %6182 = vmatprep.subr.mxu0 0.0
    %6183 = vmatpush1.msra.mxu0 %v6167
    %6184 = vmatprep.subr.mxu0 0.0
    %6185 = vmatpush1.msra.mxu0 %v6168
    %6186 = vmatprep.subr.mxu0 0.0
    %6187 = vmatpush1.msra.mxu0 %v6169
    %6188 = vmatprep.subr.mxu0 0.0
    %6189 = vmatpush1.msra.mxu0 %v6170
    %6190 = vmatprep.subr.mxu0 0.0
    %6191 = vmatpush1.msra.mxu0 %v6171
    %6192 = vmatprep.subr.mxu0 0.0
    %6193 = vmatpush1.msra.mxu0 %v6172
    %6194 = vmatprep.subr.mxu0 0.0
    %6195 = vmatpush1.msra.mxu0 %v6173
    %6196 = vmatprep.subr.mxu0 0.0
    %6197 = vmatpush1.msra.mxu0 0.0
    %6198 = vmatprep.subr.mxu0 0.0
    %6199 = vmatpush1.msra.mxu0 0.0
    %6200 = vmatprep.subr.mxu0 0.0
    %6201 = vmatpush1.msra.mxu0 0.0
    %6202 = vmatprep.subr.mxu0 0.0
    %6203 = vmatpush1.msra.mxu0 0.0
    %6204 = vmatprep.subr.mxu0 0.0
    %6205 = vmatpush1.msra.mxu0 0.0
    %6206 = vmatprep.subr.mxu0 0.0
    %6207 = vmatpush1.msra.mxu0 0.0
    %6208 = vmatprep.subr.mxu0 0.0
    %6209 = vmatpush1.msra.mxu0 0.0
    %6210 = vmatprep.subr.mxu0 0.0
    %6211 = vmatpush1.msra.mxu0 0.0
    %6212 = vmatprep.subr.mxu0 0.0
    %6213 = vmatpush1.msra.mxu0 0.0
    %6214 = vmatprep.subr.mxu0 0.0
    %6215 = vmatpush1.msra.mxu0 0.0
    %6216 = vmatprep.subr.mxu0 0.0
    %6217 = vmatpush1.msra.mxu0 0.0
    %6218 = vmatprep.subr.mxu0 0.0
    %6219 = vmatpush1.msra.mxu0 0.0
    %6220 = vmatprep.subr.mxu0 0.0
    %6221 = vmatpush1.msra.mxu0 0.0
    %6222 = vmatprep.subr.mxu0 0.0
    %6223 = vmatpush1.msra.mxu0 0.0
    %6224 = vmatprep.subr.mxu0 0.0
    %6225 = vmatpush1.msra.mxu0 0.0
    %6226 = vmatprep.subr.mxu0 0.0
    %6227 = vmatpush1.msra.mxu0 0.0
    %6228 = vmatprep.subr.mxu0 0.0
    %6229 = vmatpush1.msra.mxu0 0.0
    %6230 = vmatprep.subr.mxu0 0.0
    %6231 = vmatpush1.msra.mxu0 0.0
    %6232 = vmatprep.subr.mxu0 0.0
    %6233 = vmatpush1.msra.mxu0 0.0
    %6234 = vmatprep.subr.mxu0 0.0
    %6235 = vmatpush1.msra.mxu0 0.0
    %6236 = vmatprep.subr.mxu0 0.0
    %6237 = vmatpush1.msra.mxu0 0.0
    %6238 = vmatprep.subr.mxu0 0.0
    %6239 = vmatpush1.msra.mxu0 0.0
    %6240 = vmatprep.subr.mxu0 0.0
    %6241 = vmatpush1.msra.mxu0 0.0
    %6242 = vmatprep.subr.mxu0 0.0
    %6243 = vmatpush1.msra.mxu0 0.0
    %6244 = vmatprep.mubr.f32.mxu0 0.0
    %6245 = vmatmul.mubr.f32.gmra.mrb[0].mxu0 %v6175
    %v6246 = vpop.f32.mrb[0].mxu0
    %v6247 = vadd.f32 0.0, %v6246
    %v6248 = vpop.f32.mrb[0].mxu0
    %6249 = vmatprep.mubr.f32.mxu0 0.0
    %6250 = vmatmul.mubr.f32.gmra.mrb[0].mxu0 %v6178
    %v6251 = vpop.f32.mrb[0].mxu0
    %v6252 = vadd.f32 0.0, %v6251
    %v6253 = vpop.f32.mrb[0].mxu0
    %6254 = vdwg.mxu0
    %v6255 = vadd.f32 %v6075, %v6247
    %v6256 = vadd.f32 %v6076, %v6252
    %s6257 = scalar_lea.vmem %s10, 1
    %v6258 = vld [vmem:[%s6257] sm:$0x1]
    %s6259 = scalar_lea.vmem %s11, 1
    %v6260 = vld [vmem:[%s6259] sm:$0x1]
    %v6261 = vsel %vm60, %v6255, 0.0
    %6262 = vadd.xlane.f32.xlu0 %v6261
    %v6263 = vpop.xlane.xlu0 %6262
    %v6264 = vsel %vm60, %v6256, 0.0
    %6265 = vadd.xlane.f32.xlu0 %v6264
    %v6266 = vpop.xlane.xlu0 %6265
    %v6267 = vmul.f32 %v6263, %v2911
    %v6268 = vmul.f32 %v6266, %v2911
    %v6269 = vsub.f32 %v6255, %v6267
    %v6270 = vsub.f32 %v6256, %v6268
    %v6271 = vmul.f32 %v6269, %v6269
    %v6272 = vmul.f32 %v6270, %v6270
    %v6273 = vsel %vm60, %v6271, 0.0
    %6274 = vadd.xlane.f32.xlu0 %v6273
    %v6275 = vpop.xlane.xlu0 %6274
    %v6276 = vsel %vm60, %v6272, 0.0
    %6277 = vadd.xlane.f32.xlu0 %v6276
    %v6278 = vpop.xlane.xlu0 %6277
    %v6279 = vmul.f32 %v6275, %v2911
    %v6280 = vmul.f32 %v6278, %v2911
    %v6281 = vadd.f32 %v6279, 1e-05
    %v6282 = vadd.f32 %v6280, 1e-05
    %v6283 = vrsqrt.pop %v6281
    %v6284 = vrsqrt.pop %v6282
    %v6285 = vmul.f32 %v6269, %v6283
    %v6286 = vmul.f32 %v6270, %v6284
    %v6288 = vlaneseq
    %v6289 = vshrl.u32 %v6288, 7
    %v6290 = vsub.s32 0, %v6289
    %v6291 = vrot.slane %v6258, %v6290
    %v6293 = vmul.f32 %v6285, %v6291
    %v6294 = vmul.f32 %v6286, %v6291
    %v6296 = vlaneseq
    %v6297 = vshrl.u32 %v6296, 7
    %v6298 = vsub.s32 0, %v6297
    %v6299 = vrot.slane %v6260, %v6298
    %v6301 = vadd.f32 %v6293, %v6299
    %v6302 = vadd.f32 %v6294, %v6299
    %6303 = vst.msk [vmem:[#allocation2] sm:$0xff] %vm60, %v6301
    %6304 = vst.msk [vmem:[#allocation2 + $0x8] sm:$0xff] %vm60, %v6302
    // Predicated region
    $region50: #{tpu_custom_call.1} parent=1 // pred_check
      _
    $region51: #{tpu_custom_call.1} parent=1 // pred_check_branch
      %6306 = sbr.rel (0) target = $region53
    $region52: #{tpu_custom_call.1} parent=1 // pred_region
      %s6308 = ssub.s32 256, 256
      %6309 = vsyncadd [#allocation3], %s6308
      %s6310 = sshll.u32 [#allocation2], 4
      %s6311 = int_to_ptr.vmem [resolvable:$true] %s6310
      %6316 = dma.vmem_to_hbm [thread:$0]  %s6311, 256, %s12, [#allocation3], 128, 128, 8
    $region53: #{tpu_custom_call.1} parent=1 // pred_fallthru
      _
    // Predicated region
    $region54: #{tpu_custom_call.1} parent=1 // pred_check
      _
    $region55: #{tpu_custom_call.1} parent=1 // pred_check_branch
      %6318 = sbr.rel (0) target = $region57
    $region56: #{tpu_custom_call.1} parent=1 // pred_region
      %6319 = dma.done [#allocation3], 256
    $region57: #{tpu_custom_call.1} parent=1 // pred_fallthru
      _
    %6320 = vsyncpa [#allocation3], 1

</llo_original>
